<compile_context>
chip_gen: v7x
topology: tpu7x:2x2x1
jax: 0.10.0
libtpu: 0.0.40
codegen_flags: <defaults>
</compile_context>

<pallas_src>
import functools

import numpy as np
import jax
import jax.numpy as jnp
from jax import lax
from jax.experimental import pallas as pl
from jax.experimental.pallas import tpu as pltpu


# --------------------------------------------------------------------------
# Kernel
# --------------------------------------------------------------------------
def _cnn_kernel(p1_ref, w1_ref, b1_ref, g2_ref, w2_ref, b2_ref,
                wfc_ref, bfc_ref, out_ref, *, n1, n2, n_tap, n_pos, batch):
    f32 = jnp.float32

    # ---- conv1: one fused im2col matmul over all rows, + bias + ReLU
    a1 = jnp.dot(p1_ref[...], w1_ref[...], preferred_element_type=f32)
    a1 = jnp.maximum(a1 + b1_ref[...], 0.0)                          # (4*n1, 16)

    # ---- maxpool1: rows were emitted quadrant-major on the host, so the pool
    #      is an elementwise max of 4 contiguous blocks (no gather matmuls).
    h1 = jnp.maximum(jnp.maximum(a1[0 * n1:1 * n1], a1[1 * n1:2 * n1]),
                     jnp.maximum(a1[2 * n1:3 * n1], a1[3 * n1:4 * n1]))  # (n1, 16)

    # ---- conv2: ONE stacked row-gather matmul (all 25 taps at once; zero rows
    #      encode the zero padding), then 25 per-tap (C_in x C_out) weight
    #      matmuls, accumulated in f32.
    gall = jnp.dot(g2_ref[...], h1, preferred_element_type=f32)      # (25*n1, 16)
    acc = jnp.dot(gall[0:n1], w2_ref[0], preferred_element_type=f32)
    for t in range(1, n_tap):
        acc = acc + jnp.dot(gall[t * n1:(t + 1) * n1], w2_ref[t],
                            preferred_element_type=f32)
    a2 = jnp.maximum(acc + b2_ref[...], 0.0)                         # (n1, 32)

    # ---- maxpool2: gather matrix emitted conv2 rows quadrant-major, so again
    #      a max of 4 contiguous blocks.  Result rows are position-major:
    #      row = p*batch + b.
    h2 = jnp.maximum(jnp.maximum(a2[0 * n2:1 * n2], a2[1 * n2:2 * n2]),
                     jnp.maximum(a2[2 * n2:3 * n2], a2[3 * n2:4 * n2]))  # (n2, 32)

    # ---- fc: out[b, :] = bias + sum_p h2[p*batch + b, :] @ wfc[p]
    #      (reproduces the PyTorch (C, H, W) flatten order without reshapes)
    out = jnp.dot(h2[0:batch], wfc_ref[0], preferred_element_type=f32)
    for p in range(1, n_pos):
        out = out + jnp.dot(h2[p * batch:(p + 1) * batch], wfc_ref[p],
                            preferred_element_type=f32)
    out_ref[...] = out + bfc_ref[...]


# --------------------------------------------------------------------------
# Host-side layout plumbing (constants / weight re-layouts, built once)
# --------------------------------------------------------------------------
def _im2col_conv1_pool_ordered(x, k, pad):
    """x: (B, 1, L, L) -> (B*L*L, k*k) im2col patches, rows grouped into the
    four 2x2-pool quadrants: row = q*(B*L1*L1) + b*L1*L1 + i1*L1 + j1 holds
    the patch centred at input position (2*i1+di, 2*j1+dj), q = di*2 + dj.
    Column order t = dy*k + dx matches the torch conv-weight flatten."""
    b, _, h, w = x.shape
    xp = jnp.pad(x[:, 0], ((0, 0), (pad, pad), (pad, pad)))
    cols = [xp[:, dy:dy + h, dx:dx + w] for dy in range(k) for dx in range(k)]
    pat = jnp.stack(cols, axis=-1)                                  # (B, L, L, k*k)
    quads = [pat[:, di::2, dj::2, :].reshape(-1, k * k)
             for di in range(2) for dj in range(2)]
    return jnp.concatenate(quads, axis=0)                           # (B*L*L, k*k)


def _build_conv2_gather(batch, h, k, pad):
    """Stacked one-hot row-gather matrix for the 5x5/pad-2 conv2 taps.

    Columns index conv2-input rows (order b*h*h + ii*h + jj).  Rows index
    (tap, output) with output rows in pool2-friendly order:
        r = t*N + q*(l2*l2*batch) + (io*l2+jo)*batch + b
    where the output spatial position is (2*io+di, 2*jo+dj), q = di*2+dj and
    N = batch*h*h.  All-zero rows reproduce the zero padding."""
    l2 = h // 2
    n = batch * h * h
    g = np.zeros((k * k * n, n), np.float32)
    for dy in range(k):
        for dx in range(k):
            t = dy * k + dx
            for di in range(2):
                for dj in range(2):
                    q = di * 2 + dj
                    for io in range(l2):
                        for jo in range(l2):
                            i2, j2 = 2 * io + di, 2 * jo + dj
                            ii, jj = i2 + dy - pad, j2 + dx - pad
                            if 0 <= ii < h and 0 <= jj < h:
                                p = io * l2 + jo
                                for bb in range(batch):
                                    r = t * n + q * (l2 * l2 * batch) + p * batch + bb
                                    g[r, bb * h * h + ii * h + jj] = 1.0
    return g


# --------------------------------------------------------------------------
# Wrapper
# --------------------------------------------------------------------------
def cnn_forward(x, params):
    b, cin, l, lw = x.shape
    assert cin == 1 and lw == l and l % 4 == 0
    k, pad = 5, 2
    c1, c2, n_out = 16, 32, 32
    l1, l2 = l // 2, l // 4
    n1 = b * l1 * l1            # rows after pool1 (= conv2 output rows per tap)
    n2 = b * l2 * l2            # rows after pool2
    npos = l2 * l2

    # host-side layout plumbing: quadrant-ordered im2col + weight re-layouts
    p1 = _im2col_conv1_pool_ordered(x, k, pad)                           # (4*n1, 25)
    w1k = params["w1"].reshape(c1, k * k).T                              # (25, 16)
    b1k = params["b1"].reshape(1, c1)
    g2 = jnp.asarray(_build_conv2_gather(b, l1, k, pad))                 # (25*n1, n1)
    w2k = jnp.transpose(params["w2"], (2, 3, 1, 0)).reshape(k * k, c1, c2)  # (25, 16, 32)
    b2k = params["b2"].reshape(1, c2)
    # torch flatten order is (c, i, j): feature = c*(l2*l2) + p
    wfck = params["fc_w"].reshape(n_out, c2, npos).transpose(2, 1, 0)    # (npos, 32, 32)
    bfck = params["fc_b"].reshape(1, n_out)

    args = (p1, w1k, b1k, g2, w2k, b2k, wfck, bfck)
    kernel = functools.partial(_cnn_kernel, n1=n1, n2=n2, n_tap=k * k,
                               n_pos=npos, batch=b)

    def full_spec(a):
        nd = a.ndim
        return pl.BlockSpec(a.shape, lambda i, _nd=nd: (0,) * _nd)

    return pl.pallas_call(
        kernel,
        grid=(1,),  # tiny shapes: everything fits in VMEM, one fused step
        in_specs=[full_spec(a) for a in args],
        out_specs=pl.BlockSpec((b, n_out), lambda i: (0, 0)),
        out_shape=jax.ShapeDtypeStruct((b, n_out), jnp.float32),
        compiler_params=pltpu.CompilerParams(dimension_semantics=("arbitrary",)),
    )(*args)


# --------------------------------------------------------------------------
# Pure-JAX reference (mirrors the PyTorch module) + params
# --------------------------------------------------------------------------
def _reference_forward(x, p):
    dn = ("NCHW", "OIHW", "NCHW")
    y = lax.conv_general_dilated(x, p["w1"], (1, 1), ((2, 2), (2, 2)),
                                 dimension_numbers=dn, precision=lax.Precision.HIGHEST)
    y = jnp.maximum(y + p["b1"][None, :, None, None], 0.0)
    y = lax.reduce_window(y, -jnp.inf, lax.max, (1, 1, 2, 2), (1, 1, 2, 2), "VALID")
    y = lax.conv_general_dilated(y, p["w2"], (1, 1), ((2, 2), (2, 2)),
                                 dimension_numbers=dn, precision=lax.Precision.HIGHEST)
    y = jnp.maximum(y + p["b2"][None, :, None, None], 0.0)
    y = lax.reduce_window(y, -jnp.inf, lax.max, (1, 1, 2, 2), (1, 1, 2, 2), "VALID")
    y = y.reshape(y.shape[0], -1)
    return jnp.dot(y, p["fc_w"].T, precision=lax.Precision.HIGHEST) + p["fc_b"]


def _init_params(key, l):
    def uni(k, shape, fan_in):
        bound = 1.0 / float(np.sqrt(fan_in))
        return jax.random.uniform(k, shape, jnp.float32, -bound, bound)

    feat = 32 * (l // 4) * (l // 4)
    k1, k2, k3, k4, k5, k6 = jax.random.split(key, 6)
    return {
        "w1": uni(k1, (16, 1, 5, 5), 1 * 5 * 5),
        "b1": uni(k2, (16,), 1 * 5 * 5),
        "w2": uni(k3, (32, 16, 5, 5), 16 * 5 * 5),
        "b2": uni(k4, (32,), 16 * 5 * 5),
        "fc_w": uni(k5, (32, feat), feat),
        "fc_b": uni(k6, (32,), feat),
    }


if __name__ == "__main__":
    B, L = 2, 16
    key = jax.random.PRNGKey(0)
    kx, kp = jax.random.split(key)
    x = jax.random.normal(kx, (B, 1, L, L), jnp.float32)
    params = _init_params(kp, L)

    out = cnn_forward(x, params)
    jax.block_until_ready(out)

    ref = _reference_forward(x, params)
    assert out.shape == (B, 32)
    # Loose-ish tolerance: kernel matmuls may use MXU bf16 passes for f32 operands.
    assert jnp.allclose(out, ref, atol=3e-2, rtol=3e-2), float(jnp.max(jnp.abs(out - ref)))

    print("KERNEL_OK")
</pallas_src>

<mosaic_0001>
module attributes {stable_mosaic.version = 11 : i64} {
  func.func @_cnn_kernel(%arg0: i32, %arg1: memref<512x25xf32, #tpu.memory_space<vmem>>, %arg2: memref<25x16xf32, #tpu.memory_space<vmem>>, %arg3: memref<1x16xf32, #tpu.memory_space<vmem>>, %arg4: memref<3200x128xf32, #tpu.memory_space<vmem>>, %arg5: memref<25x16x32xf32, #tpu.memory_space<vmem>>, %arg6: memref<1x32xf32, #tpu.memory_space<vmem>>, %arg7: memref<16x32x32xf32, #tpu.memory_space<vmem>>, %arg8: memref<1x32xf32, #tpu.memory_space<vmem>>, %arg9: memref<2x32xf32, #tpu.memory_space<vmem>>) attributes {dimension_semantics = [#tpu.dimension_semantics<arbitrary>], iteration_bounds = array<i64: 1>, scalar_prefetch = 0 : i64, scratch_operands = 0 : i64, tpu.core_type = #tpu.core_type<tc>, window_params = [{pipeline_mode = #tpu.pipeline_mode<synchronous>, transform_indices = @transform_0, window_bounds = array<i64: 512, 25>}, {pipeline_mode = #tpu.pipeline_mode<synchronous>, transform_indices = @transform_1, window_bounds = array<i64: 25, 16>}, {pipeline_mode = #tpu.pipeline_mode<synchronous>, transform_indices = @transform_2, window_bounds = array<i64: 1, 16>}, {pipeline_mode = #tpu.pipeline_mode<synchronous>, transform_indices = @transform_3, window_bounds = array<i64: 3200, 128>}, {pipeline_mode = #tpu.pipeline_mode<synchronous>, transform_indices = @transform_4, window_bounds = array<i64: 25, 16, 32>}, {pipeline_mode = #tpu.pipeline_mode<synchronous>, transform_indices = @transform_5, window_bounds = array<i64: 1, 32>}, {pipeline_mode = #tpu.pipeline_mode<synchronous>, transform_indices = @transform_6, window_bounds = array<i64: 16, 32, 32>}, {pipeline_mode = #tpu.pipeline_mode<synchronous>, transform_indices = @transform_7, window_bounds = array<i64: 1, 32>}, {pipeline_mode = #tpu.pipeline_mode<synchronous>, transform_indices = @transform_8, window_bounds = array<i64: 2, 32>}]} {
    %c0 = arith.constant 0 : index
    %c0_0 = arith.constant 0 : index
    %0 = vector.load %arg1[%c0, %c0_0] : memref<512x25xf32, #tpu.memory_space<vmem>>, vector<512x25xf32>
    %c0_1 = arith.constant 0 : index
    %c0_2 = arith.constant 0 : index
    %1 = vector.load %arg2[%c0_1, %c0_2] : memref<25x16xf32, #tpu.memory_space<vmem>>, vector<25x16xf32>
    %cst = arith.constant dense<0.000000e+00> : vector<512x16xf32>
    %2 = tpu.matmul %0, %1, %cst {dimension_numbers = #tpu.dot_dimension_numbers<[1], [0], [0], [1], [0, 0, 1, 1], [], []>} : vector<512x25xf32>, vector<25x16xf32>, vector<512x16xf32> -> vector<512x16xf32>
    %c0_3 = arith.constant 0 : index
    %c0_4 = arith.constant 0 : index
    %3 = vector.load %arg3[%c0_3, %c0_4] : memref<1x16xf32, #tpu.memory_space<vmem>>, vector<1x16xf32>
    %4 = vector.broadcast %3 : vector<1x16xf32> to vector<512x16xf32>
    %5 = arith.addf %2, %4 : vector<512x16xf32>
    %cst_5 = arith.constant 0.000000e+00 : f32
    %6 = vector.broadcast %cst_5 : f32 to vector<512x16xf32>
    %7 = arith.maximumf %5, %6 : vector<512x16xf32>
    %8 = vector.extract_strided_slice %7 {offsets = [0, 0], sizes = [128, 16], strides = [1, 1]} : vector<512x16xf32> to vector<128x16xf32>
    %9 = vector.extract_strided_slice %7 {offsets = [128, 0], sizes = [128, 16], strides = [1, 1]} : vector<512x16xf32> to vector<128x16xf32>
    %10 = arith.maximumf %8, %9 : vector<128x16xf32>
    %11 = vector.extract_strided_slice %7 {offsets = [256, 0], sizes = [128, 16], strides = [1, 1]} : vector<512x16xf32> to vector<128x16xf32>
    %12 = vector.extract_strided_slice %7 {offsets = [384, 0], sizes = [128, 16], strides = [1, 1]} : vector<512x16xf32> to vector<128x16xf32>
    %13 = arith.maximumf %11, %12 : vector<128x16xf32>
    %14 = arith.maximumf %10, %13 : vector<128x16xf32>
    %c0_6 = arith.constant 0 : index
    %c0_7 = arith.constant 0 : index
    %15 = vector.load %arg4[%c0_6, %c0_7] : memref<3200x128xf32, #tpu.memory_space<vmem>>, vector<3200x128xf32>
    %cst_8 = arith.constant dense<0.000000e+00> : vector<3200x16xf32>
    %16 = tpu.matmul %15, %14, %cst_8 {dimension_numbers = #tpu.dot_dimension_numbers<[1], [0], [0], [1], [0, 0, 1, 1], [], []>} : vector<3200x128xf32>, vector<128x16xf32>, vector<3200x16xf32> -> vector<3200x16xf32>
    %17 = vector.extract_strided_slice %16 {offsets = [0, 0], sizes = [128, 16], strides = [1, 1]} : vector<3200x16xf32> to vector<128x16xf32>
    %c0_9 = arith.constant 0 : index
    %c0_10 = arith.constant 0 : index
    %c0_11 = arith.constant 0 : index
    %18 = vector.load %arg5[%c0_9, %c0_10, %c0_11] : memref<25x16x32xf32, #tpu.memory_space<vmem>>, vector<1x16x32xf32>
    %19 = vector.shape_cast %18 : vector<1x16x32xf32> to vector<16x32xf32>
    %cst_12 = arith.constant dense<0.000000e+00> : vector<128x32xf32>
    %20 = tpu.matmul %17, %19, %cst_12 {dimension_numbers = #tpu.dot_dimension_numbers<[1], [0], [0], [1], [0, 0, 1, 1], [], []>} : vector<128x16xf32>, vector<16x32xf32>, vector<128x32xf32> -> vector<128x32xf32>
    %21 = vector.extract_strided_slice %16 {offsets = [128, 0], sizes = [128, 16], strides = [1, 1]} : vector<3200x16xf32> to vector<128x16xf32>
    %c1 = arith.constant 1 : index
    %c0_13 = arith.constant 0 : index
    %c0_14 = arith.constant 0 : index
    %22 = vector.load %arg5[%c1, %c0_13, %c0_14] : memref<25x16x32xf32, #tpu.memory_space<vmem>>, vector<1x16x32xf32>
    %23 = vector.shape_cast %22 : vector<1x16x32xf32> to vector<16x32xf32>
    %cst_15 = arith.constant dense<0.000000e+00> : vector<128x32xf32>
    %24 = tpu.matmul %21, %23, %cst_15 {dimension_numbers = #tpu.dot_dimension_numbers<[1], [0], [0], [1], [0, 0, 1, 1], [], []>} : vector<128x16xf32>, vector<16x32xf32>, vector<128x32xf32> -> vector<128x32xf32>
    %25 = arith.addf %20, %24 : vector<128x32xf32>
    %26 = vector.extract_strided_slice %16 {offsets = [256, 0], sizes = [128, 16], strides = [1, 1]} : vector<3200x16xf32> to vector<128x16xf32>
    %c2 = arith.constant 2 : index
    %c0_16 = arith.constant 0 : index
    %c0_17 = arith.constant 0 : index
    %27 = vector.load %arg5[%c2, %c0_16, %c0_17] : memref<25x16x32xf32, #tpu.memory_space<vmem>>, vector<1x16x32xf32>
    %28 = vector.shape_cast %27 : vector<1x16x32xf32> to vector<16x32xf32>
    %cst_18 = arith.constant dense<0.000000e+00> : vector<128x32xf32>
    %29 = tpu.matmul %26, %28, %cst_18 {dimension_numbers = #tpu.dot_dimension_numbers<[1], [0], [0], [1], [0, 0, 1, 1], [], []>} : vector<128x16xf32>, vector<16x32xf32>, vector<128x32xf32> -> vector<128x32xf32>
    %30 = arith.addf %25, %29 : vector<128x32xf32>
    %31 = vector.extract_strided_slice %16 {offsets = [384, 0], sizes = [128, 16], strides = [1, 1]} : vector<3200x16xf32> to vector<128x16xf32>
    %c3 = arith.constant 3 : index
    %c0_19 = arith.constant 0 : index
    %c0_20 = arith.constant 0 : index
    %32 = vector.load %arg5[%c3, %c0_19, %c0_20] : memref<25x16x32xf32, #tpu.memory_space<vmem>>, vector<1x16x32xf32>
    %33 = vector.shape_cast %32 : vector<1x16x32xf32> to vector<16x32xf32>
    %cst_21 = arith.constant dense<0.000000e+00> : vector<128x32xf32>
    %34 = tpu.matmul %31, %33, %cst_21 {dimension_numbers = #tpu.dot_dimension_numbers<[1], [0], [0], [1], [0, 0, 1, 1], [], []>} : vector<128x16xf32>, vector<16x32xf32>, vector<128x32xf32> -> vector<128x32xf32>
    %35 = arith.addf %30, %34 : vector<128x32xf32>
    %36 = vector.extract_strided_slice %16 {offsets = [512, 0], sizes = [128, 16], strides = [1, 1]} : vector<3200x16xf32> to vector<128x16xf32>
    %c4 = arith.constant 4 : index
    %c0_22 = arith.constant 0 : index
    %c0_23 = arith.constant 0 : index
    %37 = vector.load %arg5[%c4, %c0_22, %c0_23] : memref<25x16x32xf32, #tpu.memory_space<vmem>>, vector<1x16x32xf32>
    %38 = vector.shape_cast %37 : vector<1x16x32xf32> to vector<16x32xf32>
    %cst_24 = arith.constant dense<0.000000e+00> : vector<128x32xf32>
    %39 = tpu.matmul %36, %38, %cst_24 {dimension_numbers = #tpu.dot_dimension_numbers<[1], [0], [0], [1], [0, 0, 1, 1], [], []>} : vector<128x16xf32>, vector<16x32xf32>, vector<128x32xf32> -> vector<128x32xf32>
    %40 = arith.addf %35, %39 : vector<128x32xf32>
    %41 = vector.extract_strided_slice %16 {offsets = [640, 0], sizes = [128, 16], strides = [1, 1]} : vector<3200x16xf32> to vector<128x16xf32>
    %c5 = arith.constant 5 : index
    %c0_25 = arith.constant 0 : index
    %c0_26 = arith.constant 0 : index
    %42 = vector.load %arg5[%c5, %c0_25, %c0_26] : memref<25x16x32xf32, #tpu.memory_space<vmem>>, vector<1x16x32xf32>
    %43 = vector.shape_cast %42 : vector<1x16x32xf32> to vector<16x32xf32>
    %cst_27 = arith.constant dense<0.000000e+00> : vector<128x32xf32>
    %44 = tpu.matmul %41, %43, %cst_27 {dimension_numbers = #tpu.dot_dimension_numbers<[1], [0], [0], [1], [0, 0, 1, 1], [], []>} : vector<128x16xf32>, vector<16x32xf32>, vector<128x32xf32> -> vector<128x32xf32>
    %45 = arith.addf %40, %44 : vector<128x32xf32>
    %46 = vector.extract_strided_slice %16 {offsets = [768, 0], sizes = [128, 16], strides = [1, 1]} : vector<3200x16xf32> to vector<128x16xf32>
    %c6 = arith.constant 6 : index
    %c0_28 = arith.constant 0 : index
    %c0_29 = arith.constant 0 : index
    %47 = vector.load %arg5[%c6, %c0_28, %c0_29] : memref<25x16x32xf32, #tpu.memory_space<vmem>>, vector<1x16x32xf32>
    %48 = vector.shape_cast %47 : vector<1x16x32xf32> to vector<16x32xf32>
    %cst_30 = arith.constant dense<0.000000e+00> : vector<128x32xf32>
    %49 = tpu.matmul %46, %48, %cst_30 {dimension_numbers = #tpu.dot_dimension_numbers<[1], [0], [0], [1], [0, 0, 1, 1], [], []>} : vector<128x16xf32>, vector<16x32xf32>, vector<128x32xf32> -> vector<128x32xf32>
    %50 = arith.addf %45, %49 : vector<128x32xf32>
    %51 = vector.extract_strided_slice %16 {offsets = [896, 0], sizes = [128, 16], strides = [1, 1]} : vector<3200x16xf32> to vector<128x16xf32>
    %c7 = arith.constant 7 : index
    %c0_31 = arith.constant 0 : index
    %c0_32 = arith.constant 0 : index
    %52 = vector.load %arg5[%c7, %c0_31, %c0_32] : memref<25x16x32xf32, #tpu.memory_space<vmem>>, vector<1x16x32xf32>
    %53 = vector.shape_cast %52 : vector<1x16x32xf32> to vector<16x32xf32>
    %cst_33 = arith.constant dense<0.000000e+00> : vector<128x32xf32>
    %54 = tpu.matmul %51, %53, %cst_33 {dimension_numbers = #tpu.dot_dimension_numbers<[1], [0], [0], [1], [0, 0, 1, 1], [], []>} : vector<128x16xf32>, vector<16x32xf32>, vector<128x32xf32> -> vector<128x32xf32>
    %55 = arith.addf %50, %54 : vector<128x32xf32>
    %56 = vector.extract_strided_slice %16 {offsets = [1024, 0], sizes = [128, 16], strides = [1, 1]} : vector<3200x16xf32> to vector<128x16xf32>
    %c8 = arith.constant 8 : index
    %c0_34 = arith.constant 0 : index
    %c0_35 = arith.constant 0 : index
    %57 = vector.load %arg5[%c8, %c0_34, %c0_35] : memref<25x16x32xf32, #tpu.memory_space<vmem>>, vector<1x16x32xf32>
    %58 = vector.shape_cast %57 : vector<1x16x32xf32> to vector<16x32xf32>
    %cst_36 = arith.constant dense<0.000000e+00> : vector<128x32xf32>
    %59 = tpu.matmul %56, %58, %cst_36 {dimension_numbers = #tpu.dot_dimension_numbers<[1], [0], [0], [1], [0, 0, 1, 1], [], []>} : vector<128x16xf32>, vector<16x32xf32>, vector<128x32xf32> -> vector<128x32xf32>
    %60 = arith.addf %55, %59 : vector<128x32xf32>
    %61 = vector.extract_strided_slice %16 {offsets = [1152, 0], sizes = [128, 16], strides = [1, 1]} : vector<3200x16xf32> to vector<128x16xf32>
    %c9 = arith.constant 9 : index
    %c0_37 = arith.constant 0 : index
    %c0_38 = arith.constant 0 : index
    %62 = vector.load %arg5[%c9, %c0_37, %c0_38] : memref<25x16x32xf32, #tpu.memory_space<vmem>>, vector<1x16x32xf32>
    %63 = vector.shape_cast %62 : vector<1x16x32xf32> to vector<16x32xf32>
    %cst_39 = arith.constant dense<0.000000e+00> : vector<128x32xf32>
    %64 = tpu.matmul %61, %63, %cst_39 {dimension_numbers = #tpu.dot_dimension_numbers<[1], [0], [0], [1], [0, 0, 1, 1], [], []>} : vector<128x16xf32>, vector<16x32xf32>, vector<128x32xf32> -> vector<128x32xf32>
    %65 = arith.addf %60, %64 : vector<128x32xf32>
    %66 = vector.extract_strided_slice %16 {offsets = [1280, 0], sizes = [128, 16], strides = [1, 1]} : vector<3200x16xf32> to vector<128x16xf32>
    %c10 = arith.constant 10 : index
    %c0_40 = arith.constant 0 : index
    %c0_41 = arith.constant 0 : index
    %67 = vector.load %arg5[%c10, %c0_40, %c0_41] : memref<25x16x32xf32, #tpu.memory_space<vmem>>, vector<1x16x32xf32>
    %68 = vector.shape_cast %67 : vector<1x16x32xf32> to vector<16x32xf32>
    %cst_42 = arith.constant dense<0.000000e+00> : vector<128x32xf32>
    %69 = tpu.matmul %66, %68, %cst_42 {dimension_numbers = #tpu.dot_dimension_numbers<[1], [0], [0], [1], [0, 0, 1, 1], [], []>} : vector<128x16xf32>, vector<16x32xf32>, vector<128x32xf32> -> vector<128x32xf32>
    %70 = arith.addf %65, %69 : vector<128x32xf32>
    %71 = vector.extract_strided_slice %16 {offsets = [1408, 0], sizes = [128, 16], strides = [1, 1]} : vector<3200x16xf32> to vector<128x16xf32>
    %c11 = arith.constant 11 : index
    %c0_43 = arith.constant 0 : index
    %c0_44 = arith.constant 0 : index
    %72 = vector.load %arg5[%c11, %c0_43, %c0_44] : memref<25x16x32xf32, #tpu.memory_space<vmem>>, vector<1x16x32xf32>
    %73 = vector.shape_cast %72 : vector<1x16x32xf32> to vector<16x32xf32>
    %cst_45 = arith.constant dense<0.000000e+00> : vector<128x32xf32>
    %74 = tpu.matmul %71, %73, %cst_45 {dimension_numbers = #tpu.dot_dimension_numbers<[1], [0], [0], [1], [0, 0, 1, 1], [], []>} : vector<128x16xf32>, vector<16x32xf32>, vector<128x32xf32> -> vector<128x32xf32>
    %75 = arith.addf %70, %74 : vector<128x32xf32>
    %76 = vector.extract_strided_slice %16 {offsets = [1536, 0], sizes = [128, 16], strides = [1, 1]} : vector<3200x16xf32> to vector<128x16xf32>
    %c12 = arith.constant 12 : index
    %c0_46 = arith.constant 0 : index
    %c0_47 = arith.constant 0 : index
    %77 = vector.load %arg5[%c12, %c0_46, %c0_47] : memref<25x16x32xf32, #tpu.memory_space<vmem>>, vector<1x16x32xf32>
    %78 = vector.shape_cast %77 : vector<1x16x32xf32> to vector<16x32xf32>
    %cst_48 = arith.constant dense<0.000000e+00> : vector<128x32xf32>
    %79 = tpu.matmul %76, %78, %cst_48 {dimension_numbers = #tpu.dot_dimension_numbers<[1], [0], [0], [1], [0, 0, 1, 1], [], []>} : vector<128x16xf32>, vector<16x32xf32>, vector<128x32xf32> -> vector<128x32xf32>
    %80 = arith.addf %75, %79 : vector<128x32xf32>
    %81 = vector.extract_strided_slice %16 {offsets = [1664, 0], sizes = [128, 16], strides = [1, 1]} : vector<3200x16xf32> to vector<128x16xf32>
    %c13 = arith.constant 13 : index
    %c0_49 = arith.constant 0 : index
    %c0_50 = arith.constant 0 : index
    %82 = vector.load %arg5[%c13, %c0_49, %c0_50] : memref<25x16x32xf32, #tpu.memory_space<vmem>>, vector<1x16x32xf32>
    %83 = vector.shape_cast %82 : vector<1x16x32xf32> to vector<16x32xf32>
    %cst_51 = arith.constant dense<0.000000e+00> : vector<128x32xf32>
    %84 = tpu.matmul %81, %83, %cst_51 {dimension_numbers = #tpu.dot_dimension_numbers<[1], [0], [0], [1], [0, 0, 1, 1], [], []>} : vector<128x16xf32>, vector<16x32xf32>, vector<128x32xf32> -> vector<128x32xf32>
    %85 = arith.addf %80, %84 : vector<128x32xf32>
    %86 = vector.extract_strided_slice %16 {offsets = [1792, 0], sizes = [128, 16], strides = [1, 1]} : vector<3200x16xf32> to vector<128x16xf32>
    %c14 = arith.constant 14 : index
    %c0_52 = arith.constant 0 : index
    %c0_53 = arith.constant 0 : index
    %87 = vector.load %arg5[%c14, %c0_52, %c0_53] : memref<25x16x32xf32, #tpu.memory_space<vmem>>, vector<1x16x32xf32>
    %88 = vector.shape_cast %87 : vector<1x16x32xf32> to vector<16x32xf32>
    %cst_54 = arith.constant dense<0.000000e+00> : vector<128x32xf32>
    %89 = tpu.matmul %86, %88, %cst_54 {dimension_numbers = #tpu.dot_dimension_numbers<[1], [0], [0], [1], [0, 0, 1, 1], [], []>} : vector<128x16xf32>, vector<16x32xf32>, vector<128x32xf32> -> vector<128x32xf32>
    %90 = arith.addf %85, %89 : vector<128x32xf32>
    %91 = vector.extract_strided_slice %16 {offsets = [1920, 0], sizes = [128, 16], strides = [1, 1]} : vector<3200x16xf32> to vector<128x16xf32>
    %c15 = arith.constant 15 : index
    %c0_55 = arith.constant 0 : index
    %c0_56 = arith.constant 0 : index
    %92 = vector.load %arg5[%c15, %c0_55, %c0_56] : memref<25x16x32xf32, #tpu.memory_space<vmem>>, vector<1x16x32xf32>
    %93 = vector.shape_cast %92 : vector<1x16x32xf32> to vector<16x32xf32>
    %cst_57 = arith.constant dense<0.000000e+00> : vector<128x32xf32>
    %94 = tpu.matmul %91, %93, %cst_57 {dimension_numbers = #tpu.dot_dimension_numbers<[1], [0], [0], [1], [0, 0, 1, 1], [], []>} : vector<128x16xf32>, vector<16x32xf32>, vector<128x32xf32> -> vector<128x32xf32>
    %95 = arith.addf %90, %94 : vector<128x32xf32>
    %96 = vector.extract_strided_slice %16 {offsets = [2048, 0], sizes = [128, 16], strides = [1, 1]} : vector<3200x16xf32> to vector<128x16xf32>
    %c16 = arith.constant 16 : index
    %c0_58 = arith.constant 0 : index
    %c0_59 = arith.constant 0 : index
    %97 = vector.load %arg5[%c16, %c0_58, %c0_59] : memref<25x16x32xf32, #tpu.memory_space<vmem>>, vector<1x16x32xf32>
    %98 = vector.shape_cast %97 : vector<1x16x32xf32> to vector<16x32xf32>
    %cst_60 = arith.constant dense<0.000000e+00> : vector<128x32xf32>
    %99 = tpu.matmul %96, %98, %cst_60 {dimension_numbers = #tpu.dot_dimension_numbers<[1], [0], [0], [1], [0, 0, 1, 1], [], []>} : vector<128x16xf32>, vector<16x32xf32>, vector<128x32xf32> -> vector<128x32xf32>
    %100 = arith.addf %95, %99 : vector<128x32xf32>
    %101 = vector.extract_strided_slice %16 {offsets = [2176, 0], sizes = [128, 16], strides = [1, 1]} : vector<3200x16xf32> to vector<128x16xf32>
    %c17 = arith.constant 17 : index
    %c0_61 = arith.constant 0 : index
    %c0_62 = arith.constant 0 : index
    %102 = vector.load %arg5[%c17, %c0_61, %c0_62] : memref<25x16x32xf32, #tpu.memory_space<vmem>>, vector<1x16x32xf32>
    %103 = vector.shape_cast %102 : vector<1x16x32xf32> to vector<16x32xf32>
    %cst_63 = arith.constant dense<0.000000e+00> : vector<128x32xf32>
    %104 = tpu.matmul %101, %103, %cst_63 {dimension_numbers = #tpu.dot_dimension_numbers<[1], [0], [0], [1], [0, 0, 1, 1], [], []>} : vector<128x16xf32>, vector<16x32xf32>, vector<128x32xf32> -> vector<128x32xf32>
    %105 = arith.addf %100, %104 : vector<128x32xf32>
    %106 = vector.extract_strided_slice %16 {offsets = [2304, 0], sizes = [128, 16], strides = [1, 1]} : vector<3200x16xf32> to vector<128x16xf32>
    %c18 = arith.constant 18 : index
    %c0_64 = arith.constant 0 : index
    %c0_65 = arith.constant 0 : index
    %107 = vector.load %arg5[%c18, %c0_64, %c0_65] : memref<25x16x32xf32, #tpu.memory_space<vmem>>, vector<1x16x32xf32>
    %108 = vector.shape_cast %107 : vector<1x16x32xf32> to vector<16x32xf32>
    %cst_66 = arith.constant dense<0.000000e+00> : vector<128x32xf32>
    %109 = tpu.matmul %106, %108, %cst_66 {dimension_numbers = #tpu.dot_dimension_numbers<[1], [0], [0], [1], [0, 0, 1, 1], [], []>} : vector<128x16xf32>, vector<16x32xf32>, vector<128x32xf32> -> vector<128x32xf32>
    %110 = arith.addf %105, %109 : vector<128x32xf32>
    %111 = vector.extract_strided_slice %16 {offsets = [2432, 0], sizes = [128, 16], strides = [1, 1]} : vector<3200x16xf32> to vector<128x16xf32>
    %c19 = arith.constant 19 : index
    %c0_67 = arith.constant 0 : index
    %c0_68 = arith.constant 0 : index
    %112 = vector.load %arg5[%c19, %c0_67, %c0_68] : memref<25x16x32xf32, #tpu.memory_space<vmem>>, vector<1x16x32xf32>
    %113 = vector.shape_cast %112 : vector<1x16x32xf32> to vector<16x32xf32>
    %cst_69 = arith.constant dense<0.000000e+00> : vector<128x32xf32>
    %114 = tpu.matmul %111, %113, %cst_69 {dimension_numbers = #tpu.dot_dimension_numbers<[1], [0], [0], [1], [0, 0, 1, 1], [], []>} : vector<128x16xf32>, vector<16x32xf32>, vector<128x32xf32> -> vector<128x32xf32>
    %115 = arith.addf %110, %114 : vector<128x32xf32>
    %116 = vector.extract_strided_slice %16 {offsets = [2560, 0], sizes = [128, 16], strides = [1, 1]} : vector<3200x16xf32> to vector<128x16xf32>
    %c20 = arith.constant 20 : index
    %c0_70 = arith.constant 0 : index
    %c0_71 = arith.constant 0 : index
    %117 = vector.load %arg5[%c20, %c0_70, %c0_71] : memref<25x16x32xf32, #tpu.memory_space<vmem>>, vector<1x16x32xf32>
    %118 = vector.shape_cast %117 : vector<1x16x32xf32> to vector<16x32xf32>
    %cst_72 = arith.constant dense<0.000000e+00> : vector<128x32xf32>
    %119 = tpu.matmul %116, %118, %cst_72 {dimension_numbers = #tpu.dot_dimension_numbers<[1], [0], [0], [1], [0, 0, 1, 1], [], []>} : vector<128x16xf32>, vector<16x32xf32>, vector<128x32xf32> -> vector<128x32xf32>
    %120 = arith.addf %115, %119 : vector<128x32xf32>
    %121 = vector.extract_strided_slice %16 {offsets = [2688, 0], sizes = [128, 16], strides = [1, 1]} : vector<3200x16xf32> to vector<128x16xf32>
    %c21 = arith.constant 21 : index
    %c0_73 = arith.constant 0 : index
    %c0_74 = arith.constant 0 : index
    %122 = vector.load %arg5[%c21, %c0_73, %c0_74] : memref<25x16x32xf32, #tpu.memory_space<vmem>>, vector<1x16x32xf32>
    %123 = vector.shape_cast %122 : vector<1x16x32xf32> to vector<16x32xf32>
    %cst_75 = arith.constant dense<0.000000e+00> : vector<128x32xf32>
    %124 = tpu.matmul %121, %123, %cst_75 {dimension_numbers = #tpu.dot_dimension_numbers<[1], [0], [0], [1], [0, 0, 1, 1], [], []>} : vector<128x16xf32>, vector<16x32xf32>, vector<128x32xf32> -> vector<128x32xf32>
    %125 = arith.addf %120, %124 : vector<128x32xf32>
    %126 = vector.extract_strided_slice %16 {offsets = [2816, 0], sizes = [128, 16], strides = [1, 1]} : vector<3200x16xf32> to vector<128x16xf32>
    %c22 = arith.constant 22 : index
    %c0_76 = arith.constant 0 : index
    %c0_77 = arith.constant 0 : index
    %127 = vector.load %arg5[%c22, %c0_76, %c0_77] : memref<25x16x32xf32, #tpu.memory_space<vmem>>, vector<1x16x32xf32>
    %128 = vector.shape_cast %127 : vector<1x16x32xf32> to vector<16x32xf32>
    %cst_78 = arith.constant dense<0.000000e+00> : vector<128x32xf32>
    %129 = tpu.matmul %126, %128, %cst_78 {dimension_numbers = #tpu.dot_dimension_numbers<[1], [0], [0], [1], [0, 0, 1, 1], [], []>} : vector<128x16xf32>, vector<16x32xf32>, vector<128x32xf32> -> vector<128x32xf32>
    %130 = arith.addf %125, %129 : vector<128x32xf32>
    %131 = vector.extract_strided_slice %16 {offsets = [2944, 0], sizes = [128, 16], strides = [1, 1]} : vector<3200x16xf32> to vector<128x16xf32>
    %c23 = arith.constant 23 : index
    %c0_79 = arith.constant 0 : index
    %c0_80 = arith.constant 0 : index
    %132 = vector.load %arg5[%c23, %c0_79, %c0_80] : memref<25x16x32xf32, #tpu.memory_space<vmem>>, vector<1x16x32xf32>
    %133 = vector.shape_cast %132 : vector<1x16x32xf32> to vector<16x32xf32>
    %cst_81 = arith.constant dense<0.000000e+00> : vector<128x32xf32>
    %134 = tpu.matmul %131, %133, %cst_81 {dimension_numbers = #tpu.dot_dimension_numbers<[1], [0], [0], [1], [0, 0, 1, 1], [], []>} : vector<128x16xf32>, vector<16x32xf32>, vector<128x32xf32> -> vector<128x32xf32>
    %135 = arith.addf %130, %134 : vector<128x32xf32>
    %136 = vector.extract_strided_slice %16 {offsets = [3072, 0], sizes = [128, 16], strides = [1, 1]} : vector<3200x16xf32> to vector<128x16xf32>
    %c24 = arith.constant 24 : index
    %c0_82 = arith.constant 0 : index
    %c0_83 = arith.constant 0 : index
    %137 = vector.load %arg5[%c24, %c0_82, %c0_83] : memref<25x16x32xf32, #tpu.memory_space<vmem>>, vector<1x16x32xf32>
    %138 = vector.shape_cast %137 : vector<1x16x32xf32> to vector<16x32xf32>
    %cst_84 = arith.constant dense<0.000000e+00> : vector<128x32xf32>
    %139 = tpu.matmul %136, %138, %cst_84 {dimension_numbers = #tpu.dot_dimension_numbers<[1], [0], [0], [1], [0, 0, 1, 1], [], []>} : vector<128x16xf32>, vector<16x32xf32>, vector<128x32xf32> -> vector<128x32xf32>
    %140 = arith.addf %135, %139 : vector<128x32xf32>
    %c0_85 = arith.constant 0 : index
    %c0_86 = arith.constant 0 : index
    %141 = vector.load %arg6[%c0_85, %c0_86] : memref<1x32xf32, #tpu.memory_space<vmem>>, vector<1x32xf32>
    %142 = vector.broadcast %141 : vector<1x32xf32> to vector<128x32xf32>
    %143 = arith.addf %140, %142 : vector<128x32xf32>
    %cst_87 = arith.constant 0.000000e+00 : f32
    %144 = vector.broadcast %cst_87 : f32 to vector<128x32xf32>
    %145 = arith.maximumf %143, %144 : vector<128x32xf32>
    %146 = vector.extract_strided_slice %145 {offsets = [0, 0], sizes = [32, 32], strides = [1, 1]} : vector<128x32xf32> to vector<32x32xf32>
    %147 = vector.extract_strided_slice %145 {offsets = [32, 0], sizes = [32, 32], strides = [1, 1]} : vector<128x32xf32> to vector<32x32xf32>
    %148 = arith.maximumf %146, %147 : vector<32x32xf32>
    %149 = vector.extract_strided_slice %145 {offsets = [64, 0], sizes = [32, 32], strides = [1, 1]} : vector<128x32xf32> to vector<32x32xf32>
    %150 = vector.extract_strided_slice %145 {offsets = [96, 0], sizes = [32, 32], strides = [1, 1]} : vector<128x32xf32> to vector<32x32xf32>
    %151 = arith.maximumf %149, %150 : vector<32x32xf32>
    %152 = arith.maximumf %148, %151 : vector<32x32xf32>
    %153 = vector.extract_strided_slice %152 {offsets = [0, 0], sizes = [2, 32], strides = [1, 1]} : vector<32x32xf32> to vector<2x32xf32>
    %c0_88 = arith.constant 0 : index
    %c0_89 = arith.constant 0 : index
    %c0_90 = arith.constant 0 : index
    %154 = vector.load %arg7[%c0_88, %c0_89, %c0_90] : memref<16x32x32xf32, #tpu.memory_space<vmem>>, vector<1x32x32xf32>
    %155 = vector.shape_cast %154 : vector<1x32x32xf32> to vector<32x32xf32>
    %cst_91 = arith.constant dense<0.000000e+00> : vector<2x32xf32>
    %156 = tpu.matmul %153, %155, %cst_91 {dimension_numbers = #tpu.dot_dimension_numbers<[1], [0], [0], [1], [0, 0, 1, 1], [], []>} : vector<2x32xf32>, vector<32x32xf32>, vector<2x32xf32> -> vector<2x32xf32>
    %157 = vector.extract_strided_slice %152 {offsets = [2, 0], sizes = [2, 32], strides = [1, 1]} : vector<32x32xf32> to vector<2x32xf32>
    %c1_92 = arith.constant 1 : index
    %c0_93 = arith.constant 0 : index
    %c0_94 = arith.constant 0 : index
    %158 = vector.load %arg7[%c1_92, %c0_93, %c0_94] : memref<16x32x32xf32, #tpu.memory_space<vmem>>, vector<1x32x32xf32>
    %159 = vector.shape_cast %158 : vector<1x32x32xf32> to vector<32x32xf32>
    %cst_95 = arith.constant dense<0.000000e+00> : vector<2x32xf32>
    %160 = tpu.matmul %157, %159, %cst_95 {dimension_numbers = #tpu.dot_dimension_numbers<[1], [0], [0], [1], [0, 0, 1, 1], [], []>} : vector<2x32xf32>, vector<32x32xf32>, vector<2x32xf32> -> vector<2x32xf32>
    %161 = arith.addf %156, %160 : vector<2x32xf32>
    %162 = vector.extract_strided_slice %152 {offsets = [4, 0], sizes = [2, 32], strides = [1, 1]} : vector<32x32xf32> to vector<2x32xf32>
    %c2_96 = arith.constant 2 : index
    %c0_97 = arith.constant 0 : index
    %c0_98 = arith.constant 0 : index
    %163 = vector.load %arg7[%c2_96, %c0_97, %c0_98] : memref<16x32x32xf32, #tpu.memory_space<vmem>>, vector<1x32x32xf32>
    %164 = vector.shape_cast %163 : vector<1x32x32xf32> to vector<32x32xf32>
    %cst_99 = arith.constant dense<0.000000e+00> : vector<2x32xf32>
    %165 = tpu.matmul %162, %164, %cst_99 {dimension_numbers = #tpu.dot_dimension_numbers<[1], [0], [0], [1], [0, 0, 1, 1], [], []>} : vector<2x32xf32>, vector<32x32xf32>, vector<2x32xf32> -> vector<2x32xf32>
    %166 = arith.addf %161, %165 : vector<2x32xf32>
    %167 = vector.extract_strided_slice %152 {offsets = [6, 0], sizes = [2, 32], strides = [1, 1]} : vector<32x32xf32> to vector<2x32xf32>
    %c3_100 = arith.constant 3 : index
    %c0_101 = arith.constant 0 : index
    %c0_102 = arith.constant 0 : index
    %168 = vector.load %arg7[%c3_100, %c0_101, %c0_102] : memref<16x32x32xf32, #tpu.memory_space<vmem>>, vector<1x32x32xf32>
    %169 = vector.shape_cast %168 : vector<1x32x32xf32> to vector<32x32xf32>
    %cst_103 = arith.constant dense<0.000000e+00> : vector<2x32xf32>
    %170 = tpu.matmul %167, %169, %cst_103 {dimension_numbers = #tpu.dot_dimension_numbers<[1], [0], [0], [1], [0, 0, 1, 1], [], []>} : vector<2x32xf32>, vector<32x32xf32>, vector<2x32xf32> -> vector<2x32xf32>
    %171 = arith.addf %166, %170 : vector<2x32xf32>
    %172 = vector.extract_strided_slice %152 {offsets = [8, 0], sizes = [2, 32], strides = [1, 1]} : vector<32x32xf32> to vector<2x32xf32>
    %c4_104 = arith.constant 4 : index
    %c0_105 = arith.constant 0 : index
    %c0_106 = arith.constant 0 : index
    %173 = vector.load %arg7[%c4_104, %c0_105, %c0_106] : memref<16x32x32xf32, #tpu.memory_space<vmem>>, vector<1x32x32xf32>
    %174 = vector.shape_cast %173 : vector<1x32x32xf32> to vector<32x32xf32>
    %cst_107 = arith.constant dense<0.000000e+00> : vector<2x32xf32>
    %175 = tpu.matmul %172, %174, %cst_107 {dimension_numbers = #tpu.dot_dimension_numbers<[1], [0], [0], [1], [0, 0, 1, 1], [], []>} : vector<2x32xf32>, vector<32x32xf32>, vector<2x32xf32> -> vector<2x32xf32>
    %176 = arith.addf %171, %175 : vector<2x32xf32>
    %177 = vector.extract_strided_slice %152 {offsets = [10, 0], sizes = [2, 32], strides = [1, 1]} : vector<32x32xf32> to vector<2x32xf32>
    %c5_108 = arith.constant 5 : index
    %c0_109 = arith.constant 0 : index
    %c0_110 = arith.constant 0 : index
    %178 = vector.load %arg7[%c5_108, %c0_109, %c0_110] : memref<16x32x32xf32, #tpu.memory_space<vmem>>, vector<1x32x32xf32>
    %179 = vector.shape_cast %178 : vector<1x32x32xf32> to vector<32x32xf32>
    %cst_111 = arith.constant dense<0.000000e+00> : vector<2x32xf32>
    %180 = tpu.matmul %177, %179, %cst_111 {dimension_numbers = #tpu.dot_dimension_numbers<[1], [0], [0], [1], [0, 0, 1, 1], [], []>} : vector<2x32xf32>, vector<32x32xf32>, vector<2x32xf32> -> vector<2x32xf32>
    %181 = arith.addf %176, %180 : vector<2x32xf32>
    %182 = vector.extract_strided_slice %152 {offsets = [12, 0], sizes = [2, 32], strides = [1, 1]} : vector<32x32xf32> to vector<2x32xf32>
    %c6_112 = arith.constant 6 : index
    %c0_113 = arith.constant 0 : index
    %c0_114 = arith.constant 0 : index
    %183 = vector.load %arg7[%c6_112, %c0_113, %c0_114] : memref<16x32x32xf32, #tpu.memory_space<vmem>>, vector<1x32x32xf32>
    %184 = vector.shape_cast %183 : vector<1x32x32xf32> to vector<32x32xf32>
    %cst_115 = arith.constant dense<0.000000e+00> : vector<2x32xf32>
    %185 = tpu.matmul %182, %184, %cst_115 {dimension_numbers = #tpu.dot_dimension_numbers<[1], [0], [0], [1], [0, 0, 1, 1], [], []>} : vector<2x32xf32>, vector<32x32xf32>, vector<2x32xf32> -> vector<2x32xf32>
    %186 = arith.addf %181, %185 : vector<2x32xf32>
    %187 = vector.extract_strided_slice %152 {offsets = [14, 0], sizes = [2, 32], strides = [1, 1]} : vector<32x32xf32> to vector<2x32xf32>
    %c7_116 = arith.constant 7 : index
    %c0_117 = arith.constant 0 : index
    %c0_118 = arith.constant 0 : index
    %188 = vector.load %arg7[%c7_116, %c0_117, %c0_118] : memref<16x32x32xf32, #tpu.memory_space<vmem>>, vector<1x32x32xf32>
    %189 = vector.shape_cast %188 : vector<1x32x32xf32> to vector<32x32xf32>
    %cst_119 = arith.constant dense<0.000000e+00> : vector<2x32xf32>
    %190 = tpu.matmul %187, %189, %cst_119 {dimension_numbers = #tpu.dot_dimension_numbers<[1], [0], [0], [1], [0, 0, 1, 1], [], []>} : vector<2x32xf32>, vector<32x32xf32>, vector<2x32xf32> -> vector<2x32xf32>
    %191 = arith.addf %186, %190 : vector<2x32xf32>
    %192 = vector.extract_strided_slice %152 {offsets = [16, 0], sizes = [2, 32], strides = [1, 1]} : vector<32x32xf32> to vector<2x32xf32>
    %c8_120 = arith.constant 8 : index
    %c0_121 = arith.constant 0 : index
    %c0_122 = arith.constant 0 : index
    %193 = vector.load %arg7[%c8_120, %c0_121, %c0_122] : memref<16x32x32xf32, #tpu.memory_space<vmem>>, vector<1x32x32xf32>
    %194 = vector.shape_cast %193 : vector<1x32x32xf32> to vector<32x32xf32>
    %cst_123 = arith.constant dense<0.000000e+00> : vector<2x32xf32>
    %195 = tpu.matmul %192, %194, %cst_123 {dimension_numbers = #tpu.dot_dimension_numbers<[1], [0], [0], [1], [0, 0, 1, 1], [], []>} : vector<2x32xf32>, vector<32x32xf32>, vector<2x32xf32> -> vector<2x32xf32>
    %196 = arith.addf %191, %195 : vector<2x32xf32>
    %197 = vector.extract_strided_slice %152 {offsets = [18, 0], sizes = [2, 32], strides = [1, 1]} : vector<32x32xf32> to vector<2x32xf32>
    %c9_124 = arith.constant 9 : index
    %c0_125 = arith.constant 0 : index
    %c0_126 = arith.constant 0 : index
    %198 = vector.load %arg7[%c9_124, %c0_125, %c0_126] : memref<16x32x32xf32, #tpu.memory_space<vmem>>, vector<1x32x32xf32>
    %199 = vector.shape_cast %198 : vector<1x32x32xf32> to vector<32x32xf32>
    %cst_127 = arith.constant dense<0.000000e+00> : vector<2x32xf32>
    %200 = tpu.matmul %197, %199, %cst_127 {dimension_numbers = #tpu.dot_dimension_numbers<[1], [0], [0], [1], [0, 0, 1, 1], [], []>} : vector<2x32xf32>, vector<32x32xf32>, vector<2x32xf32> -> vector<2x32xf32>
    %201 = arith.addf %196, %200 : vector<2x32xf32>
    %202 = vector.extract_strided_slice %152 {offsets = [20, 0], sizes = [2, 32], strides = [1, 1]} : vector<32x32xf32> to vector<2x32xf32>
    %c10_128 = arith.constant 10 : index
    %c0_129 = arith.constant 0 : index
    %c0_130 = arith.constant 0 : index
    %203 = vector.load %arg7[%c10_128, %c0_129, %c0_130] : memref<16x32x32xf32, #tpu.memory_space<vmem>>, vector<1x32x32xf32>
    %204 = vector.shape_cast %203 : vector<1x32x32xf32> to vector<32x32xf32>
    %cst_131 = arith.constant dense<0.000000e+00> : vector<2x32xf32>
    %205 = tpu.matmul %202, %204, %cst_131 {dimension_numbers = #tpu.dot_dimension_numbers<[1], [0], [0], [1], [0, 0, 1, 1], [], []>} : vector<2x32xf32>, vector<32x32xf32>, vector<2x32xf32> -> vector<2x32xf32>
    %206 = arith.addf %201, %205 : vector<2x32xf32>
    %207 = vector.extract_strided_slice %152 {offsets = [22, 0], sizes = [2, 32], strides = [1, 1]} : vector<32x32xf32> to vector<2x32xf32>
    %c11_132 = arith.constant 11 : index
    %c0_133 = arith.constant 0 : index
    %c0_134 = arith.constant 0 : index
    %208 = vector.load %arg7[%c11_132, %c0_133, %c0_134] : memref<16x32x32xf32, #tpu.memory_space<vmem>>, vector<1x32x32xf32>
    %209 = vector.shape_cast %208 : vector<1x32x32xf32> to vector<32x32xf32>
    %cst_135 = arith.constant dense<0.000000e+00> : vector<2x32xf32>
    %210 = tpu.matmul %207, %209, %cst_135 {dimension_numbers = #tpu.dot_dimension_numbers<[1], [0], [0], [1], [0, 0, 1, 1], [], []>} : vector<2x32xf32>, vector<32x32xf32>, vector<2x32xf32> -> vector<2x32xf32>
    %211 = arith.addf %206, %210 : vector<2x32xf32>
    %212 = vector.extract_strided_slice %152 {offsets = [24, 0], sizes = [2, 32], strides = [1, 1]} : vector<32x32xf32> to vector<2x32xf32>
    %c12_136 = arith.constant 12 : index
    %c0_137 = arith.constant 0 : index
    %c0_138 = arith.constant 0 : index
    %213 = vector.load %arg7[%c12_136, %c0_137, %c0_138] : memref<16x32x32xf32, #tpu.memory_space<vmem>>, vector<1x32x32xf32>
    %214 = vector.shape_cast %213 : vector<1x32x32xf32> to vector<32x32xf32>
    %cst_139 = arith.constant dense<0.000000e+00> : vector<2x32xf32>
    %215 = tpu.matmul %212, %214, %cst_139 {dimension_numbers = #tpu.dot_dimension_numbers<[1], [0], [0], [1], [0, 0, 1, 1], [], []>} : vector<2x32xf32>, vector<32x32xf32>, vector<2x32xf32> -> vector<2x32xf32>
    %216 = arith.addf %211, %215 : vector<2x32xf32>
    %217 = vector.extract_strided_slice %152 {offsets = [26, 0], sizes = [2, 32], strides = [1, 1]} : vector<32x32xf32> to vector<2x32xf32>
    %c13_140 = arith.constant 13 : index
    %c0_141 = arith.constant 0 : index
    %c0_142 = arith.constant 0 : index
    %218 = vector.load %arg7[%c13_140, %c0_141, %c0_142] : memref<16x32x32xf32, #tpu.memory_space<vmem>>, vector<1x32x32xf32>
    %219 = vector.shape_cast %218 : vector<1x32x32xf32> to vector<32x32xf32>
    %cst_143 = arith.constant dense<0.000000e+00> : vector<2x32xf32>
    %220 = tpu.matmul %217, %219, %cst_143 {dimension_numbers = #tpu.dot_dimension_numbers<[1], [0], [0], [1], [0, 0, 1, 1], [], []>} : vector<2x32xf32>, vector<32x32xf32>, vector<2x32xf32> -> vector<2x32xf32>
    %221 = arith.addf %216, %220 : vector<2x32xf32>
    %222 = vector.extract_strided_slice %152 {offsets = [28, 0], sizes = [2, 32], strides = [1, 1]} : vector<32x32xf32> to vector<2x32xf32>
    %c14_144 = arith.constant 14 : index
    %c0_145 = arith.constant 0 : index
    %c0_146 = arith.constant 0 : index
    %223 = vector.load %arg7[%c14_144, %c0_145, %c0_146] : memref<16x32x32xf32, #tpu.memory_space<vmem>>, vector<1x32x32xf32>
    %224 = vector.shape_cast %223 : vector<1x32x32xf32> to vector<32x32xf32>
    %cst_147 = arith.constant dense<0.000000e+00> : vector<2x32xf32>
    %225 = tpu.matmul %222, %224, %cst_147 {dimension_numbers = #tpu.dot_dimension_numbers<[1], [0], [0], [1], [0, 0, 1, 1], [], []>} : vector<2x32xf32>, vector<32x32xf32>, vector<2x32xf32> -> vector<2x32xf32>
    %226 = arith.addf %221, %225 : vector<2x32xf32>
    %227 = vector.extract_strided_slice %152 {offsets = [30, 0], sizes = [2, 32], strides = [1, 1]} : vector<32x32xf32> to vector<2x32xf32>
    %c15_148 = arith.constant 15 : index
    %c0_149 = arith.constant 0 : index
    %c0_150 = arith.constant 0 : index
    %228 = vector.load %arg7[%c15_148, %c0_149, %c0_150] : memref<16x32x32xf32, #tpu.memory_space<vmem>>, vector<1x32x32xf32>
    %229 = vector.shape_cast %228 : vector<1x32x32xf32> to vector<32x32xf32>
    %cst_151 = arith.constant dense<0.000000e+00> : vector<2x32xf32>
    %230 = tpu.matmul %227, %229, %cst_151 {dimension_numbers = #tpu.dot_dimension_numbers<[1], [0], [0], [1], [0, 0, 1, 1], [], []>} : vector<2x32xf32>, vector<32x32xf32>, vector<2x32xf32> -> vector<2x32xf32>
    %231 = arith.addf %226, %230 : vector<2x32xf32>
    %c0_152 = arith.constant 0 : index
    %c0_153 = arith.constant 0 : index
    %232 = vector.load %arg8[%c0_152, %c0_153] : memref<1x32xf32, #tpu.memory_space<vmem>>, vector<1x32xf32>
    %233 = vector.broadcast %232 : vector<1x32xf32> to vector<2x32xf32>
    %234 = arith.addf %231, %233 : vector<2x32xf32>
    %c0_154 = arith.constant 0 : index
    %c0_155 = arith.constant 0 : index
    %235 = vector.load %arg9[%c0_154, %c0_155] : memref<2x32xf32, #tpu.memory_space<vmem>>, vector<2x32xf32>
    tpu.vector_store %arg9[%c0_154, %c0_155], %234 {strides = array<i32>} : memref<2x32xf32, #tpu.memory_space<vmem>>, vector<2x32xf32>,
    return
  }
  func.func @transform_0(%arg0: i32) -> (i32, i32) {
    %c0_i32 = arith.constant 0 : i32
    %c0_i32_0 = arith.constant 0 : i32
    %c0_i32_1 = arith.constant 0 : i32
    return %c0_i32, %c0_i32_0 : i32, i32
  }
  func.func @transform_1(%arg0: i32) -> (i32, i32) {
    %c0_i32 = arith.constant 0 : i32
    %c0_i32_0 = arith.constant 0 : i32
    %c0_i32_1 = arith.constant 0 : i32
    return %c0_i32, %c0_i32_0 : i32, i32
  }
  func.func @transform_2(%arg0: i32) -> (i32, i32) {
    %c0_i32 = arith.constant 0 : i32
    %c0_i32_0 = arith.constant 0 : i32
    %c0_i32_1 = arith.constant 0 : i32
    return %c0_i32, %c0_i32_0 : i32, i32
  }
  func.func @transform_3(%arg0: i32) -> (i32, i32) {
    %c0_i32 = arith.constant 0 : i32
    %c0_i32_0 = arith.constant 0 : i32
    %c0_i32_1 = arith.constant 0 : i32
    return %c0_i32, %c0_i32_0 : i32, i32
  }
  func.func @transform_4(%arg0: i32) -> (i32, i32, i32) {
    %c0_i32 = arith.constant 0 : i32
    %c0_i32_0 = arith.constant 0 : i32
    %c0_i32_1 = arith.constant 0 : i32
    %c0_i32_2 = arith.constant 0 : i32
    return %c0_i32, %c0_i32_0, %c0_i32_1 : i32, i32, i32
  }
  func.func @transform_5(%arg0: i32) -> (i32, i32) {
    %c0_i32 = arith.constant 0 : i32
    %c0_i32_0 = arith.constant 0 : i32
    %c0_i32_1 = arith.constant 0 : i32
    return %c0_i32, %c0_i32_0 : i32, i32
  }
  func.func @transform_6(%arg0: i32) -> (i32, i32, i32) {
    %c0_i32 = arith.constant 0 : i32
    %c0_i32_0 = arith.constant 0 : i32
    %c0_i32_1 = arith.constant 0 : i32
    %c0_i32_2 = arith.constant 0 : i32
    return %c0_i32, %c0_i32_0, %c0_i32_1 : i32, i32, i32
  }
  func.func @transform_7(%arg0: i32) -> (i32, i32) {
    %c0_i32 = arith.constant 0 : i32
    %c0_i32_0 = arith.constant 0 : i32
    %c0_i32_1 = arith.constant 0 : i32
    return %c0_i32, %c0_i32_0 : i32, i32
  }
  func.func @transform_8(%arg0: i32) -> (i32, i32) {
    %c0_i32 = arith.constant 0 : i32
    %c0_i32_0 = arith.constant 0 : i32
    %c0_i32_1 = arith.constant 0 : i32
    return %c0_i32, %c0_i32_0 : i32, i32
  }
}

</mosaic_0001>

<llo_original>
// kernel: tpu_custom_call.1
$region0: #{tpu_custom_call.1}
  #allocation0 [shape = 'u32[]', space=smem, size = 0x4, offset = 0x4, fixed_abs, tag = 'smem constant byte address 0x4 - core index']
  #allocation1 [shape = 'u32[144,128]{1,0:T(1,128)}', space=vmem, size = 0x12000, scoped, tag = 'internal scratch']
  %s0 = inlined_call_operand.vmem [shape: f32[512,25], index: 0, kind: input, shape index: {}]
  %s1 = inlined_call_operand.vmem [shape: f32[25,16], index: 1, kind: input, shape index: {}]
  %s2 = inlined_call_operand.hbm [shape: f32[1,16], index: 2, kind: input, shape index: {}]
  %s3 = inlined_call_operand.hbm [shape: f32[3200,128], index: 3, kind: input, shape index: {}]
  %s4 = inlined_call_operand.hbm [shape: f32[25,16,32], index: 4, kind: input, shape index: {}]
  %s5 = inlined_call_operand.hbm [shape: f32[1,32], index: 5, kind: input, shape index: {}]
  %s6 = inlined_call_operand.hbm [shape: f32[16,32,32], index: 6, kind: input, shape index: {}]
  %s7 = inlined_call_operand.hbm [shape: f32[1,32], index: 7, kind: input, shape index: {}]
  %s8 = inlined_call_operand.hbm [shape: f32[2,32], index: 8, kind: output, shape index: {}]
  %s9 = sld [smem:[#allocation0]]
  $region66: #{tpu_custom_call.1} parent=0
    _
  %s11 = ssub.s32 1, %s9
  %s12 = scalar_select 0, %s11, %s9
  $region1: #{tpu_custom_call.1} parent=0
    #allocation2 [shape = 'u8[512]{0}', space=vmem, size = 0x400, scoped, tag = 'input window, operand 2, single buffered']
    #allocation3 [shape = 's32[1]{0}', space=sflag, size = 0x4, scoped, tag = 'scoped memory for tpu_custom_call.1']
    #allocation4 [shape = 's32[1]{0}', space=sflag, size = 0x4, scoped, tag = 'scoped memory for tpu_custom_call.1']
    #allocation5 [shape = 'u8[1638400]{0}', space=vmem, size = 0x190000, scoped, tag = 'input window, operand 3, single buffered']
    #allocation6 [shape = 's32[1]{0}', space=sflag, size = 0x4, scoped, tag = 'scoped memory for tpu_custom_call.1']
    #allocation7 [shape = 'u8[204800]{0}', space=vmem, size = 0x32000, scoped, tag = 'input window, operand 4, single buffered']
    #allocation8 [shape = 'u8[512]{0}', space=vmem, size = 0x400, scoped, tag = 'input window, operand 5, single buffered']
    #allocation9 [shape = 's32[1]{0}', space=sflag, size = 0x4, scoped, tag = 'scoped memory for tpu_custom_call.1']
    #allocation10 [shape = 'u8[262144]{0}', space=vmem, size = 0x40000, scoped, tag = 'input window, operand 6, single buffered']
    #allocation11 [shape = 'u8[512]{0}', space=vmem, size = 0x400, scoped, tag = 'input window, operand 7, single buffered']
    #allocation12 [shape = 's32[1]{0}', space=sflag, size = 0x4, scoped, tag = 'scoped memory for tpu_custom_call.1']
    #allocation13 [shape = 'u8[1024]{0}', space=vmem, size = 0x400, scoped, tag = 'output window, operand 0, single buffered']
    %13 = vsyncpa [#allocation3], 0
    %14 = vsyncpa [#allocation6], 0
    %15 = vsyncpa [#allocation9], 0
    %16 = vsyncpa [#allocation12], 0
    %17 = vsyncpa [#allocation4], 0
    // Predicated region
    $region2: #{tpu_custom_call.1} parent=1 // pred_check
      _
    $region3: #{tpu_custom_call.1} parent=1 // pred_check_branch
      %19 = sbr.rel (0) target = $region5
    $region4: #{tpu_custom_call.1} parent=1 // pred_region
      _
    $region5: #{tpu_custom_call.1} parent=1 // pred_fallthru
      _
    // Predicated region
    $region6: #{tpu_custom_call.1} parent=1 // pred_check
      _
    $region7: #{tpu_custom_call.1} parent=1 // pred_check_branch
      %21 = sbr.rel (0) target = $region9
    $region8: #{tpu_custom_call.1} parent=1 // pred_region
      _
    $region9: #{tpu_custom_call.1} parent=1 // pred_fallthru
      _
    // Predicated region
    $region10: #{tpu_custom_call.1} parent=1 // pred_check
      _
    $region11: #{tpu_custom_call.1} parent=1 // pred_check_branch
      %23 = sbr.rel (0) target = $region13
    $region12: #{tpu_custom_call.1} parent=1 // pred_region
      %s25 = ssub.s32 16, 16
      %26 = vsyncadd [#allocation3], %s25
      %s28 = sshll.u32 [#allocation2], 4
      %s29 = int_to_ptr.vmem [resolvable:$true] %s28
      %31 = dma.hbm_to_vmem [thread:$0]  %s2, 16, %s29, [#allocation3]
    $region13: #{tpu_custom_call.1} parent=1 // pred_fallthru
      _
    // Predicated region
    $region14: #{tpu_custom_call.1} parent=1 // pred_check
      _
    $region15: #{tpu_custom_call.1} parent=1 // pred_check_branch
      %33 = sbr.rel (0) target = $region17
    $region16: #{tpu_custom_call.1} parent=1 // pred_region
      %s35 = ssub.s32 51200, 51200
      %36 = vsyncadd [#allocation6], %s35
      %s37 = sshll.u32 [#allocation5], 4
      %s38 = int_to_ptr.vmem [resolvable:$true] %s37
      %43 = dma.hbm_to_vmem [thread:$0]  %s3, 51200, %s38, [#allocation6], 128, 128, 8
    $region17: #{tpu_custom_call.1} parent=1 // pred_fallthru
      _
    // Predicated region
    $region18: #{tpu_custom_call.1} parent=1 // pred_check
      _
    $region19: #{tpu_custom_call.1} parent=1 // pred_check_branch
      %45 = sbr.rel (0) target = $region21
    $region20: #{tpu_custom_call.1} parent=1 // pred_region
      %s47 = ssub.s32 6400, 6400
      %48 = vsyncadd [#allocation6], %s47
      %s49 = sshll.u32 [#allocation7], 4
      %s50 = int_to_ptr.vmem [resolvable:$true] %s49
      %55 = dma.hbm_to_vmem [thread:$0]  %s4, 6400, %s50, [#allocation6], 128, 128, 8
    $region21: #{tpu_custom_call.1} parent=1 // pred_fallthru
      _
    // Predicated region
    $region22: #{tpu_custom_call.1} parent=1 // pred_check
      _
    $region23: #{tpu_custom_call.1} parent=1 // pred_check_branch
      %57 = sbr.rel (0) target = $region25
    $region24: #{tpu_custom_call.1} parent=1 // pred_region
      %s59 = ssub.s32 16, 16
      %60 = vsyncadd [#allocation9], %s59
      %s62 = sshll.u32 [#allocation8], 4
      %s63 = int_to_ptr.vmem [resolvable:$true] %s62
      %65 = dma.hbm_to_vmem [thread:$0]  %s5, 16, %s63, [#allocation9]
    $region25: #{tpu_custom_call.1} parent=1 // pred_fallthru
      _
    // Predicated region
    $region26: #{tpu_custom_call.1} parent=1 // pred_check
      _
    $region27: #{tpu_custom_call.1} parent=1 // pred_check_branch
      %67 = sbr.rel (0) target = $region29
    $region28: #{tpu_custom_call.1} parent=1 // pred_region
      %s69 = ssub.s32 8192, 8192
      %70 = vsyncadd [#allocation9], %s69
      %s71 = sshll.u32 [#allocation10], 4
      %s72 = int_to_ptr.vmem [resolvable:$true] %s71
      %77 = dma.hbm_to_vmem [thread:$0]  %s6, 8192, %s72, [#allocation9], 128, 128, 8
    $region29: #{tpu_custom_call.1} parent=1 // pred_fallthru
      _
    // Predicated region
    $region30: #{tpu_custom_call.1} parent=1 // pred_check
      _
    $region31: #{tpu_custom_call.1} parent=1 // pred_check_branch
      %79 = sbr.rel (0) target = $region33
    $region32: #{tpu_custom_call.1} parent=1 // pred_region
      %s81 = ssub.s32 16, 16
      %82 = vsyncadd [#allocation12], %s81
      %s84 = sshll.u32 [#allocation11], 4
      %s85 = int_to_ptr.vmem [resolvable:$true] %s84
      %87 = dma.hbm_to_vmem [thread:$0]  %s7, 16, %s85, [#allocation12]
    $region33: #{tpu_custom_call.1} parent=1 // pred_fallthru
      _
    // Predicated region
    $region34: #{tpu_custom_call.1} parent=1 // pred_check
      _
    $region35: #{tpu_custom_call.1} parent=1 // pred_check_branch
      %89 = sbr.rel (0) target = $region37
    $region36: #{tpu_custom_call.1} parent=1 // pred_region
      %90 = dma.done [#allocation3], 16
    $region37: #{tpu_custom_call.1} parent=1 // pred_fallthru
      _
    // Predicated region
    $region38: #{tpu_custom_call.1} parent=1 // pred_check
      _
    $region39: #{tpu_custom_call.1} parent=1 // pred_check_branch
      %92 = sbr.rel (0) target = $region41
    $region40: #{tpu_custom_call.1} parent=1 // pred_region
      %93 = dma.done [#allocation6], 51200
    $region41: #{tpu_custom_call.1} parent=1 // pred_fallthru
      _
    // Predicated region
    $region42: #{tpu_custom_call.1} parent=1 // pred_check
      _
    $region43: #{tpu_custom_call.1} parent=1 // pred_check_branch
      %95 = sbr.rel (0) target = $region45
    $region44: #{tpu_custom_call.1} parent=1 // pred_region
      %96 = dma.done [#allocation6], 6400
    $region45: #{tpu_custom_call.1} parent=1 // pred_fallthru
      _
    // Predicated region
    $region46: #{tpu_custom_call.1} parent=1 // pred_check
      _
    $region47: #{tpu_custom_call.1} parent=1 // pred_check_branch
      %98 = sbr.rel (0) target = $region49
    $region48: #{tpu_custom_call.1} parent=1 // pred_region
      %99 = dma.done [#allocation9], 16
    $region49: #{tpu_custom_call.1} parent=1 // pred_fallthru
      _
    // Predicated region
    $region50: #{tpu_custom_call.1} parent=1 // pred_check
      _
    $region51: #{tpu_custom_call.1} parent=1 // pred_check_branch
      %101 = sbr.rel (0) target = $region53
    $region52: #{tpu_custom_call.1} parent=1 // pred_region
      %102 = dma.done [#allocation9], 8192
    $region53: #{tpu_custom_call.1} parent=1 // pred_fallthru
      _
    // Predicated region
    $region54: #{tpu_custom_call.1} parent=1 // pred_check
      _
    $region55: #{tpu_custom_call.1} parent=1 // pred_check_branch
      %104 = sbr.rel (0) target = $region57
    $region56: #{tpu_custom_call.1} parent=1 // pred_region
      %105 = dma.done [#allocation12], 16
    $region57: #{tpu_custom_call.1} parent=1 // pred_fallthru
      _
    %v106 = vld [vmem:[%s0] sm:$0xff]
    %v107 = vld [vmem:[%s0 + $0x8] sm:$0xff]
    %v108 = vld [vmem:[%s0 + $0x10] sm:$0xff]
    %v109 = vld [vmem:[%s0 + $0x18] sm:$0xff]
    %v110 = vld [vmem:[%s0 + $0x20] sm:$0xff]
    %v111 = vld [vmem:[%s0 + $0x28] sm:$0xff]
    %v112 = vld [vmem:[%s0 + $0x30] sm:$0xff]
    %v113 = vld [vmem:[%s0 + $0x38] sm:$0xff]
    %v114 = vld [vmem:[%s0 + $0x40] sm:$0xff]
    %v115 = vld [vmem:[%s0 + $0x48] sm:$0xff]
    %v116 = vld [vmem:[%s0 + $0x50] sm:$0xff]
    %v117 = vld [vmem:[%s0 + $0x58] sm:$0xff]
    %v118 = vld [vmem:[%s0 + $0x60] sm:$0xff]
    %v119 = vld [vmem:[%s0 + $0x68] sm:$0xff]
    %v120 = vld [vmem:[%s0 + $0x70] sm:$0xff]
    %v121 = vld [vmem:[%s0 + $0x78] sm:$0xff]
    %v122 = vld [vmem:[%s0 + $0x80] sm:$0xff]
    %v123 = vld [vmem:[%s0 + $0x88] sm:$0xff]
    %v124 = vld [vmem:[%s0 + $0x90] sm:$0xff]
    %v125 = vld [vmem:[%s0 + $0x98] sm:$0xff]
    %v126 = vld [vmem:[%s0 + $0xa0] sm:$0xff]
    %v127 = vld [vmem:[%s0 + $0xa8] sm:$0xff]
    %v128 = vld [vmem:[%s0 + $0xb0] sm:$0xff]
    %v129 = vld [vmem:[%s0 + $0xb8] sm:$0xff]
    %v130 = vld [vmem:[%s0 + $0xc0] sm:$0xff]
    %v131 = vld [vmem:[%s0 + $0xc8] sm:$0xff]
    %v132 = vld [vmem:[%s0 + $0xd0] sm:$0xff]
    %v133 = vld [vmem:[%s0 + $0xd8] sm:$0xff]
    %v134 = vld [vmem:[%s0 + $0xe0] sm:$0xff]
    %v135 = vld [vmem:[%s0 + $0xe8] sm:$0xff]
    %v136 = vld [vmem:[%s0 + $0xf0] sm:$0xff]
    %v137 = vld [vmem:[%s0 + $0xf8] sm:$0xff]
    %v138 = vld [vmem:[%s0 + $0x100] sm:$0xff]
    %v139 = vld [vmem:[%s0 + $0x108] sm:$0xff]
    %v140 = vld [vmem:[%s0 + $0x110] sm:$0xff]
    %v141 = vld [vmem:[%s0 + $0x118] sm:$0xff]
    %v142 = vld [vmem:[%s0 + $0x120] sm:$0xff]
    %v143 = vld [vmem:[%s0 + $0x128] sm:$0xff]
    %v144 = vld [vmem:[%s0 + $0x130] sm:$0xff]
    %v145 = vld [vmem:[%s0 + $0x138] sm:$0xff]
    %v146 = vld [vmem:[%s0 + $0x140] sm:$0xff]
    %v147 = vld [vmem:[%s0 + $0x148] sm:$0xff]
    %v148 = vld [vmem:[%s0 + $0x150] sm:$0xff]
    %v149 = vld [vmem:[%s0 + $0x158] sm:$0xff]
    %v150 = vld [vmem:[%s0 + $0x160] sm:$0xff]
    %v151 = vld [vmem:[%s0 + $0x168] sm:$0xff]
    %v152 = vld [vmem:[%s0 + $0x170] sm:$0xff]
    %v153 = vld [vmem:[%s0 + $0x178] sm:$0xff]
    %v154 = vld [vmem:[%s0 + $0x180] sm:$0xff]
    %v155 = vld [vmem:[%s0 + $0x188] sm:$0xff]
    %v156 = vld [vmem:[%s0 + $0x190] sm:$0xff]
    %v157 = vld [vmem:[%s0 + $0x198] sm:$0xff]
    %v158 = vld [vmem:[%s0 + $0x1a0] sm:$0xff]
    %v159 = vld [vmem:[%s0 + $0x1a8] sm:$0xff]
    %v160 = vld [vmem:[%s0 + $0x1b0] sm:$0xff]
    %v161 = vld [vmem:[%s0 + $0x1b8] sm:$0xff]
    %v162 = vld [vmem:[%s0 + $0x1c0] sm:$0xff]
    %v163 = vld [vmem:[%s0 + $0x1c8] sm:$0xff]
    %v164 = vld [vmem:[%s0 + $0x1d0] sm:$0xff]
    %v165 = vld [vmem:[%s0 + $0x1d8] sm:$0xff]
    %v166 = vld [vmem:[%s0 + $0x1e0] sm:$0xff]
    %v167 = vld [vmem:[%s0 + $0x1e8] sm:$0xff]
    %v168 = vld [vmem:[%s0 + $0x1f0] sm:$0xff]
    %v169 = vld [vmem:[%s0 + $0x1f8] sm:$0xff]
    %v170 = vld [vmem:[%s1] sm:$0xff]
    %v171 = vld [vmem:[%s1 + $0x8] sm:$0xff]
    %v172 = vld [vmem:[%s1 + $0x10] sm:$0xff]
    %v173 = vld [vmem:[%s1 + $0x18] sm:$0x1]
    %v174 = vld [vmem:[#allocation2] sm:$0x1]
    %v176 = vlaneseq
    %v177 = vshrl.u32 %v176, 7
    %v178 = vsub.s32 0, %v177
    %v179 = vrot.slane %v174, %v178
    %vm181 = vcmask 203776
    %v183 = vsel %vm181, %v106, 0
    %v186 = vsel %vm181, %v107, 0
    %v189 = vsel %vm181, %v108, 0
    %v192 = vsel %vm181, %v109, 0
    %v195 = vsel %vm181, %v110, 0
    %v198 = vsel %vm181, %v111, 0
    %v201 = vsel %vm181, %v112, 0
    %v204 = vsel %vm181, %v113, 0
    %v207 = vsel %vm181, %v114, 0
    %v210 = vsel %vm181, %v115, 0
    %v213 = vsel %vm181, %v116, 0
    %v216 = vsel %vm181, %v117, 0
    %v219 = vsel %vm181, %v118, 0
    %v222 = vsel %vm181, %v119, 0
    %v225 = vsel %vm181, %v120, 0
    %v228 = vsel %vm181, %v121, 0
    %v231 = vsel %vm181, %v122, 0
    %v234 = vsel %vm181, %v123, 0
    %v237 = vsel %vm181, %v124, 0
    %v240 = vsel %vm181, %v125, 0
    %v243 = vsel %vm181, %v126, 0
    %v246 = vsel %vm181, %v127, 0
    %v249 = vsel %vm181, %v128, 0
    %v252 = vsel %vm181, %v129, 0
    %v255 = vsel %vm181, %v130, 0
    %v258 = vsel %vm181, %v131, 0
    %v261 = vsel %vm181, %v132, 0
    %v264 = vsel %vm181, %v133, 0
    %v267 = vsel %vm181, %v134, 0
    %v270 = vsel %vm181, %v135, 0
    %v273 = vsel %vm181, %v136, 0
    %v276 = vsel %vm181, %v137, 0
    %v279 = vsel %vm181, %v138, 0
    %v282 = vsel %vm181, %v139, 0
    %v285 = vsel %vm181, %v140, 0
    %v288 = vsel %vm181, %v141, 0
    %v291 = vsel %vm181, %v142, 0
    %v294 = vsel %vm181, %v143, 0
    %v297 = vsel %vm181, %v144, 0
    %v300 = vsel %vm181, %v145, 0
    %v303 = vsel %vm181, %v146, 0
    %v306 = vsel %vm181, %v147, 0
    %v309 = vsel %vm181, %v148, 0
    %v312 = vsel %vm181, %v149, 0
    %v315 = vsel %vm181, %v150, 0
    %v318 = vsel %vm181, %v151, 0
    %v321 = vsel %vm181, %v152, 0
    %v324 = vsel %vm181, %v153, 0
    %v327 = vsel %vm181, %v154, 0
    %v330 = vsel %vm181, %v155, 0
    %v333 = vsel %vm181, %v156, 0
    %v336 = vsel %vm181, %v157, 0
    %v339 = vsel %vm181, %v158, 0
    %v342 = vsel %vm181, %v159, 0
    %v345 = vsel %vm181, %v160, 0
    %v348 = vsel %vm181, %v161, 0
    %v351 = vsel %vm181, %v162, 0
    %v354 = vsel %vm181, %v163, 0
    %v357 = vsel %vm181, %v164, 0
    %v360 = vsel %vm181, %v165, 0
    %v363 = vsel %vm181, %v166, 0
    %v366 = vsel %vm181, %v167, 0
    %v369 = vsel %vm181, %v168, 0
    %v372 = vsel %vm181, %v169, 0
    %vm374 = vcmask 1040384
    %v376 = vsel %vm374, %v173, 0
    %378 = vmatprep.subr.mxu0 0.0
    %379 = vmatpush1.msra.mxu0 %v170
    %380 = vmatprep.subr.mxu0 0.0
    %381 = vmatpush1.msra.mxu0 %v171
    %382 = vmatprep.subr.mxu0 0.0
    %383 = vmatpush1.msra.mxu0 %v172
    %384 = vmatprep.subr.mxu0 0.0
    %385 = vmatpush1.msra.mxu0 %v376
    %386 = vmatprep.subr.mxu0 0.0
    %387 = vmatpush1.msra.mxu0 0.0
    %388 = vmatprep.subr.mxu0 0.0
    %389 = vmatpush1.msra.mxu0 0.0
    %390 = vmatprep.subr.mxu0 0.0
    %391 = vmatpush1.msra.mxu0 0.0
    %392 = vmatprep.subr.mxu0 0.0
    %393 = vmatpush1.msra.mxu0 0.0
    %394 = vmatprep.subr.mxu0 0.0
    %395 = vmatpush1.msra.mxu0 0.0
    %396 = vmatprep.subr.mxu0 0.0
    %397 = vmatpush1.msra.mxu0 0.0
    %398 = vmatprep.subr.mxu0 0.0
    %399 = vmatpush1.msra.mxu0 0.0
    %400 = vmatprep.subr.mxu0 0.0
    %401 = vmatpush1.msra.mxu0 0.0
    %402 = vmatprep.subr.mxu0 0.0
    %403 = vmatpush1.msra.mxu0 0.0
    %404 = vmatprep.subr.mxu0 0.0
    %405 = vmatpush1.msra.mxu0 0.0
    %406 = vmatprep.subr.mxu0 0.0
    %407 = vmatpush1.msra.mxu0 0.0
    %408 = vmatprep.subr.mxu0 0.0
    %409 = vmatpush1.msra.mxu0 0.0
    %410 = vmatprep.subr.mxu0 0.0
    %411 = vmatpush1.msra.mxu0 0.0
    %412 = vmatprep.subr.mxu0 0.0
    %413 = vmatpush1.msra.mxu0 0.0
    %414 = vmatprep.subr.mxu0 0.0
    %415 = vmatpush1.msra.mxu0 0.0
    %416 = vmatprep.subr.mxu0 0.0
    %417 = vmatpush1.msra.mxu0 0.0
    %418 = vmatprep.subr.mxu0 0.0
    %419 = vmatpush1.msra.mxu0 0.0
    %420 = vmatprep.subr.mxu0 0.0
    %421 = vmatpush1.msra.mxu0 0.0
    %422 = vmatprep.subr.mxu0 0.0
    %423 = vmatpush1.msra.mxu0 0.0
    %424 = vmatprep.subr.mxu0 0.0
    %425 = vmatpush1.msra.mxu0 0.0
    %426 = vmatprep.subr.mxu0 0.0
    %427 = vmatpush1.msra.mxu0 0.0
    %428 = vmatprep.subr.mxu0 0.0
    %429 = vmatpush1.msra.mxu0 0.0
    %430 = vmatprep.subr.mxu0 0.0
    %431 = vmatpush1.msra.mxu0 0.0
    %432 = vmatprep.subr.mxu0 0.0
    %433 = vmatpush1.msra.mxu0 0.0
    %434 = vmatprep.subr.mxu0 0.0
    %435 = vmatpush1.msra.mxu0 0.0
    %436 = vmatprep.subr.mxu0 0.0
    %437 = vmatpush1.msra.mxu0 0.0
    %438 = vmatprep.subr.mxu0 0.0
    %439 = vmatpush1.msra.mxu0 0.0
    %440 = vmatprep.subr.mxu0 0.0
    %441 = vmatpush1.msra.mxu0 0.0
    %442 = vmatprep.mubr.f32.mxu0 0.0
    %443 = vmatmul.mubr.f32.gmra.mrb[0].mxu0 %v183
    %v444 = vpop.f32.mrb[0].mxu0
    %v445 = vadd.f32 %v179, %v444
    %v446 = vpop.f32.mrb[0].mxu0
    %447 = vmatprep.mubr.f32.mxu0 0.0
    %448 = vmatmul.mubr.f32.gmra.mrb[0].mxu0 %v186
    %v449 = vpop.f32.mrb[0].mxu0
    %v450 = vadd.f32 %v179, %v449
    %v451 = vpop.f32.mrb[0].mxu0
    %452 = vmatprep.mubr.f32.mxu0 0.0
    %453 = vmatmul.mubr.f32.gmra.mrb[0].mxu0 %v189
    %v454 = vpop.f32.mrb[0].mxu0
    %v455 = vadd.f32 %v179, %v454
    %v456 = vpop.f32.mrb[0].mxu0
    %457 = vmatprep.mubr.f32.mxu0 0.0
    %458 = vmatmul.mubr.f32.gmra.mrb[0].mxu0 %v192
    %v459 = vpop.f32.mrb[0].mxu0
    %v460 = vadd.f32 %v179, %v459
    %v461 = vpop.f32.mrb[0].mxu0
    %462 = vmatprep.mubr.f32.mxu0 0.0
    %463 = vmatmul.mubr.f32.gmra.mrb[0].mxu0 %v195
    %v464 = vpop.f32.mrb[0].mxu0
    %v465 = vadd.f32 %v179, %v464
    %v466 = vpop.f32.mrb[0].mxu0
    %467 = vmatprep.mubr.f32.mxu0 0.0
    %468 = vmatmul.mubr.f32.gmra.mrb[0].mxu0 %v198
    %v469 = vpop.f32.mrb[0].mxu0
    %v470 = vadd.f32 %v179, %v469
    %v471 = vpop.f32.mrb[0].mxu0
    %472 = vmatprep.mubr.f32.mxu0 0.0
    %473 = vmatmul.mubr.f32.gmra.mrb[0].mxu0 %v201
    %v474 = vpop.f32.mrb[0].mxu0
    %v475 = vadd.f32 %v179, %v474
    %v476 = vpop.f32.mrb[0].mxu0
    %477 = vmatprep.mubr.f32.mxu0 0.0
    %478 = vmatmul.mubr.f32.gmra.mrb[0].mxu0 %v204
    %v479 = vpop.f32.mrb[0].mxu0
    %v480 = vadd.f32 %v179, %v479
    %v481 = vpop.f32.mrb[0].mxu0
    %482 = vmatprep.mubr.f32.mxu0 0.0
    %483 = vmatmul.mubr.f32.gmra.mrb[0].mxu0 %v207
    %v484 = vpop.f32.mrb[0].mxu0
    %v485 = vadd.f32 %v179, %v484
    %v486 = vpop.f32.mrb[0].mxu0
    %487 = vmatprep.mubr.f32.mxu0 0.0
    %488 = vmatmul.mubr.f32.gmra.mrb[0].mxu0 %v210
    %v489 = vpop.f32.mrb[0].mxu0
    %v490 = vadd.f32 %v179, %v489
    %v491 = vpop.f32.mrb[0].mxu0
    %492 = vmatprep.mubr.f32.mxu0 0.0
    %493 = vmatmul.mubr.f32.gmra.mrb[0].mxu0 %v213
    %v494 = vpop.f32.mrb[0].mxu0
    %v495 = vadd.f32 %v179, %v494
    %v496 = vpop.f32.mrb[0].mxu0
    %497 = vmatprep.mubr.f32.mxu0 0.0
    %498 = vmatmul.mubr.f32.gmra.mrb[0].mxu0 %v216
    %v499 = vpop.f32.mrb[0].mxu0
    %v500 = vadd.f32 %v179, %v499
    %v501 = vpop.f32.mrb[0].mxu0
    %502 = vmatprep.mubr.f32.mxu0 0.0
    %503 = vmatmul.mubr.f32.gmra.mrb[0].mxu0 %v219
    %v504 = vpop.f32.mrb[0].mxu0
    %v505 = vadd.f32 %v179, %v504
    %v506 = vpop.f32.mrb[0].mxu0
    %507 = vmatprep.mubr.f32.mxu0 0.0
    %508 = vmatmul.mubr.f32.gmra.mrb[0].mxu0 %v222
    %v509 = vpop.f32.mrb[0].mxu0
    %v510 = vadd.f32 %v179, %v509
    %v511 = vpop.f32.mrb[0].mxu0
    %512 = vmatprep.mubr.f32.mxu0 0.0
    %513 = vmatmul.mubr.f32.gmra.mrb[0].mxu0 %v225
    %v514 = vpop.f32.mrb[0].mxu0
    %v515 = vadd.f32 %v179, %v514
    %v516 = vpop.f32.mrb[0].mxu0
    %517 = vmatprep.mubr.f32.mxu0 0.0
    %518 = vmatmul.mubr.f32.gmra.mrb[0].mxu0 %v228
    %v519 = vpop.f32.mrb[0].mxu0
    %v520 = vadd.f32 %v179, %v519
    %v521 = vpop.f32.mrb[0].mxu0
    %522 = vmatprep.mubr.f32.mxu0 0.0
    %523 = vmatmul.mubr.f32.gmra.mrb[0].mxu0 %v231
    %v524 = vpop.f32.mrb[0].mxu0
    %v525 = vadd.f32 %v179, %v524
    %v526 = vpop.f32.mrb[0].mxu0
    %527 = vmatprep.mubr.f32.mxu0 0.0
    %528 = vmatmul.mubr.f32.gmra.mrb[0].mxu0 %v234
    %v529 = vpop.f32.mrb[0].mxu0
    %v530 = vadd.f32 %v179, %v529
    %v531 = vpop.f32.mrb[0].mxu0
    %532 = vmatprep.mubr.f32.mxu0 0.0
    %533 = vmatmul.mubr.f32.gmra.mrb[0].mxu0 %v237
    %v534 = vpop.f32.mrb[0].mxu0
    %v535 = vadd.f32 %v179, %v534
    %v536 = vpop.f32.mrb[0].mxu0
    %537 = vmatprep.mubr.f32.mxu0 0.0
    %538 = vmatmul.mubr.f32.gmra.mrb[0].mxu0 %v240
    %v539 = vpop.f32.mrb[0].mxu0
    %v540 = vadd.f32 %v179, %v539
    %v541 = vpop.f32.mrb[0].mxu0
    %542 = vmatprep.mubr.f32.mxu0 0.0
    %543 = vmatmul.mubr.f32.gmra.mrb[0].mxu0 %v243
    %v544 = vpop.f32.mrb[0].mxu0
    %v545 = vadd.f32 %v179, %v544
    %v546 = vpop.f32.mrb[0].mxu0
    %547 = vmatprep.mubr.f32.mxu0 0.0
    %548 = vmatmul.mubr.f32.gmra.mrb[0].mxu0 %v246
    %v549 = vpop.f32.mrb[0].mxu0
    %v550 = vadd.f32 %v179, %v549
    %v551 = vpop.f32.mrb[0].mxu0
    %552 = vmatprep.mubr.f32.mxu0 0.0
    %553 = vmatmul.mubr.f32.gmra.mrb[0].mxu0 %v249
    %v554 = vpop.f32.mrb[0].mxu0
    %v555 = vadd.f32 %v179, %v554
    %v556 = vpop.f32.mrb[0].mxu0
    %557 = vmatprep.mubr.f32.mxu0 0.0
    %558 = vmatmul.mubr.f32.gmra.mrb[0].mxu0 %v252
    %v559 = vpop.f32.mrb[0].mxu0
    %v560 = vadd.f32 %v179, %v559
    %v561 = vpop.f32.mrb[0].mxu0
    %562 = vmatprep.mubr.f32.mxu0 0.0
    %563 = vmatmul.mubr.f32.gmra.mrb[0].mxu0 %v255
    %v564 = vpop.f32.mrb[0].mxu0
    %v565 = vadd.f32 %v179, %v564
    %v566 = vpop.f32.mrb[0].mxu0
    %567 = vmatprep.mubr.f32.mxu0 0.0
    %568 = vmatmul.mubr.f32.gmra.mrb[0].mxu0 %v258
    %v569 = vpop.f32.mrb[0].mxu0
    %v570 = vadd.f32 %v179, %v569
    %v571 = vpop.f32.mrb[0].mxu0
    %572 = vmatprep.mubr.f32.mxu0 0.0
    %573 = vmatmul.mubr.f32.gmra.mrb[0].mxu0 %v261
    %v574 = vpop.f32.mrb[0].mxu0
    %v575 = vadd.f32 %v179, %v574
    %v576 = vpop.f32.mrb[0].mxu0
    %577 = vmatprep.mubr.f32.mxu0 0.0
    %578 = vmatmul.mubr.f32.gmra.mrb[0].mxu0 %v264
    %v579 = vpop.f32.mrb[0].mxu0
    %v580 = vadd.f32 %v179, %v579
    %v581 = vpop.f32.mrb[0].mxu0
    %582 = vmatprep.mubr.f32.mxu0 0.0
    %583 = vmatmul.mubr.f32.gmra.mrb[0].mxu0 %v267
    %v584 = vpop.f32.mrb[0].mxu0
    %v585 = vadd.f32 %v179, %v584
    %v586 = vpop.f32.mrb[0].mxu0
    %587 = vmatprep.mubr.f32.mxu0 0.0
    %588 = vmatmul.mubr.f32.gmra.mrb[0].mxu0 %v270
    %v589 = vpop.f32.mrb[0].mxu0
    %v590 = vadd.f32 %v179, %v589
    %v591 = vpop.f32.mrb[0].mxu0
    %592 = vmatprep.mubr.f32.mxu0 0.0
    %593 = vmatmul.mubr.f32.gmra.mrb[0].mxu0 %v273
    %v594 = vpop.f32.mrb[0].mxu0
    %v595 = vadd.f32 %v179, %v594
    %v596 = vpop.f32.mrb[0].mxu0
    %597 = vmatprep.mubr.f32.mxu0 0.0
    %598 = vmatmul.mubr.f32.gmra.mrb[0].mxu0 %v276
    %v599 = vpop.f32.mrb[0].mxu0
    %v600 = vadd.f32 %v179, %v599
    %v601 = vpop.f32.mrb[0].mxu0
    %602 = vmatprep.mubr.f32.mxu0 0.0
    %603 = vmatmul.mubr.f32.gmra.mrb[0].mxu0 %v279
    %v604 = vpop.f32.mrb[0].mxu0
    %v605 = vadd.f32 %v179, %v604
    %v606 = vpop.f32.mrb[0].mxu0
    %607 = vmatprep.mubr.f32.mxu0 0.0
    %608 = vmatmul.mubr.f32.gmra.mrb[0].mxu0 %v282
    %v609 = vpop.f32.mrb[0].mxu0
    %v610 = vadd.f32 %v179, %v609
    %v611 = vpop.f32.mrb[0].mxu0
    %612 = vmatprep.mubr.f32.mxu0 0.0
    %613 = vmatmul.mubr.f32.gmra.mrb[0].mxu0 %v285
    %v614 = vpop.f32.mrb[0].mxu0
    %v615 = vadd.f32 %v179, %v614
    %v616 = vpop.f32.mrb[0].mxu0
    %617 = vmatprep.mubr.f32.mxu0 0.0
    %618 = vmatmul.mubr.f32.gmra.mrb[0].mxu0 %v288
    %v619 = vpop.f32.mrb[0].mxu0
    %v620 = vadd.f32 %v179, %v619
    %v621 = vpop.f32.mrb[0].mxu0
    %622 = vmatprep.mubr.f32.mxu0 0.0
    %623 = vmatmul.mubr.f32.gmra.mrb[0].mxu0 %v291
    %v624 = vpop.f32.mrb[0].mxu0
    %v625 = vadd.f32 %v179, %v624
    %v626 = vpop.f32.mrb[0].mxu0
    %627 = vmatprep.mubr.f32.mxu0 0.0
    %628 = vmatmul.mubr.f32.gmra.mrb[0].mxu0 %v294
    %v629 = vpop.f32.mrb[0].mxu0
    %v630 = vadd.f32 %v179, %v629
    %v631 = vpop.f32.mrb[0].mxu0
    %632 = vmatprep.mubr.f32.mxu0 0.0
    %633 = vmatmul.mubr.f32.gmra.mrb[0].mxu0 %v297
    %v634 = vpop.f32.mrb[0].mxu0
    %v635 = vadd.f32 %v179, %v634
    %v636 = vpop.f32.mrb[0].mxu0
    %637 = vmatprep.mubr.f32.mxu0 0.0
    %638 = vmatmul.mubr.f32.gmra.mrb[0].mxu0 %v300
    %v639 = vpop.f32.mrb[0].mxu0
    %v640 = vadd.f32 %v179, %v639
    %v641 = vpop.f32.mrb[0].mxu0
    %642 = vmatprep.mubr.f32.mxu0 0.0
    %643 = vmatmul.mubr.f32.gmra.mrb[0].mxu0 %v303
    %v644 = vpop.f32.mrb[0].mxu0
    %v645 = vadd.f32 %v179, %v644
    %v646 = vpop.f32.mrb[0].mxu0
    %647 = vmatprep.mubr.f32.mxu0 0.0
    %648 = vmatmul.mubr.f32.gmra.mrb[0].mxu0 %v306
    %v649 = vpop.f32.mrb[0].mxu0
    %v650 = vadd.f32 %v179, %v649
    %v651 = vpop.f32.mrb[0].mxu0
    %652 = vmatprep.mubr.f32.mxu0 0.0
    %653 = vmatmul.mubr.f32.gmra.mrb[0].mxu0 %v309
    %v654 = vpop.f32.mrb[0].mxu0
    %v655 = vadd.f32 %v179, %v654
    %v656 = vpop.f32.mrb[0].mxu0
    %657 = vmatprep.mubr.f32.mxu0 0.0
    %658 = vmatmul.mubr.f32.gmra.mrb[0].mxu0 %v312
    %v659 = vpop.f32.mrb[0].mxu0
    %v660 = vadd.f32 %v179, %v659
    %v661 = vpop.f32.mrb[0].mxu0
    %662 = vmatprep.mubr.f32.mxu0 0.0
    %663 = vmatmul.mubr.f32.gmra.mrb[0].mxu0 %v315
    %v664 = vpop.f32.mrb[0].mxu0
    %v665 = vadd.f32 %v179, %v664
    %v666 = vpop.f32.mrb[0].mxu0
    %667 = vmatprep.mubr.f32.mxu0 0.0
    %668 = vmatmul.mubr.f32.gmra.mrb[0].mxu0 %v318
    %v669 = vpop.f32.mrb[0].mxu0
    %v670 = vadd.f32 %v179, %v669
    %v671 = vpop.f32.mrb[0].mxu0
    %672 = vmatprep.mubr.f32.mxu0 0.0
    %673 = vmatmul.mubr.f32.gmra.mrb[0].mxu0 %v321
    %v674 = vpop.f32.mrb[0].mxu0
    %v675 = vadd.f32 %v179, %v674
    %v676 = vpop.f32.mrb[0].mxu0
    %677 = vmatprep.mubr.f32.mxu0 0.0
    %678 = vmatmul.mubr.f32.gmra.mrb[0].mxu0 %v324
    %v679 = vpop.f32.mrb[0].mxu0
    %v680 = vadd.f32 %v179, %v679
    %v681 = vpop.f32.mrb[0].mxu0
    %682 = vmatprep.mubr.f32.mxu0 0.0
    %683 = vmatmul.mubr.f32.gmra.mrb[0].mxu0 %v327
    %v684 = vpop.f32.mrb[0].mxu0
    %v685 = vadd.f32 %v179, %v684
    %v686 = vpop.f32.mrb[0].mxu0
    %687 = vmatprep.mubr.f32.mxu0 0.0
    %688 = vmatmul.mubr.f32.gmra.mrb[0].mxu0 %v330
    %v689 = vpop.f32.mrb[0].mxu0
    %v690 = vadd.f32 %v179, %v689
    %v691 = vpop.f32.mrb[0].mxu0
    %692 = vmatprep.mubr.f32.mxu0 0.0
    %693 = vmatmul.mubr.f32.gmra.mrb[0].mxu0 %v333
    %v694 = vpop.f32.mrb[0].mxu0
    %v695 = vadd.f32 %v179, %v694
    %v696 = vpop.f32.mrb[0].mxu0
    %697 = vmatprep.mubr.f32.mxu0 0.0
    %698 = vmatmul.mubr.f32.gmra.mrb[0].mxu0 %v336
    %v699 = vpop.f32.mrb[0].mxu0
    %v700 = vadd.f32 %v179, %v699
    %v701 = vpop.f32.mrb[0].mxu0
    %702 = vmatprep.mubr.f32.mxu0 0.0
    %703 = vmatmul.mubr.f32.gmra.mrb[0].mxu0 %v339
    %v704 = vpop.f32.mrb[0].mxu0
    %v705 = vadd.f32 %v179, %v704
    %v706 = vpop.f32.mrb[0].mxu0
    %707 = vmatprep.mubr.f32.mxu0 0.0
    %708 = vmatmul.mubr.f32.gmra.mrb[0].mxu0 %v342
    %v709 = vpop.f32.mrb[0].mxu0
    %v710 = vadd.f32 %v179, %v709
    %v711 = vpop.f32.mrb[0].mxu0
    %712 = vmatprep.mubr.f32.mxu0 0.0
    %713 = vmatmul.mubr.f32.gmra.mrb[0].mxu0 %v345
    %v714 = vpop.f32.mrb[0].mxu0
    %v715 = vadd.f32 %v179, %v714
    %v716 = vpop.f32.mrb[0].mxu0
    %717 = vmatprep.mubr.f32.mxu0 0.0
    %718 = vmatmul.mubr.f32.gmra.mrb[0].mxu0 %v348
    %v719 = vpop.f32.mrb[0].mxu0
    %v720 = vadd.f32 %v179, %v719
    %v721 = vpop.f32.mrb[0].mxu0
    %722 = vmatprep.mubr.f32.mxu0 0.0
    %723 = vmatmul.mubr.f32.gmra.mrb[0].mxu0 %v351
    %v724 = vpop.f32.mrb[0].mxu0
    %v725 = vadd.f32 %v179, %v724
    %v726 = vpop.f32.mrb[0].mxu0
    %727 = vmatprep.mubr.f32.mxu0 0.0
    %728 = vmatmul.mubr.f32.gmra.mrb[0].mxu0 %v354
    %v729 = vpop.f32.mrb[0].mxu0
    %v730 = vadd.f32 %v179, %v729
    %v731 = vpop.f32.mrb[0].mxu0
    %732 = vmatprep.mubr.f32.mxu0 0.0
    %733 = vmatmul.mubr.f32.gmra.mrb[0].mxu0 %v357
    %v734 = vpop.f32.mrb[0].mxu0
    %v735 = vadd.f32 %v179, %v734
    %v736 = vpop.f32.mrb[0].mxu0
    %737 = vmatprep.mubr.f32.mxu0 0.0
    %738 = vmatmul.mubr.f32.gmra.mrb[0].mxu0 %v360
    %v739 = vpop.f32.mrb[0].mxu0
    %v740 = vadd.f32 %v179, %v739
    %v741 = vpop.f32.mrb[0].mxu0
    %742 = vmatprep.mubr.f32.mxu0 0.0
    %743 = vmatmul.mubr.f32.gmra.mrb[0].mxu0 %v363
    %v744 = vpop.f32.mrb[0].mxu0
    %v745 = vadd.f32 %v179, %v744
    %v746 = vpop.f32.mrb[0].mxu0
    %747 = vmatprep.mubr.f32.mxu0 0.0
    %748 = vmatmul.mubr.f32.gmra.mrb[0].mxu0 %v366
    %v749 = vpop.f32.mrb[0].mxu0
    %v750 = vadd.f32 %v179, %v749
    %v751 = vpop.f32.mrb[0].mxu0
    %752 = vmatprep.mubr.f32.mxu0 0.0
    %753 = vmatmul.mubr.f32.gmra.mrb[0].mxu0 %v369
    %v754 = vpop.f32.mrb[0].mxu0
    %v755 = vadd.f32 %v179, %v754
    %v756 = vpop.f32.mrb[0].mxu0
    %757 = vmatprep.mubr.f32.mxu0 0.0
    %758 = vmatmul.mubr.f32.gmra.mrb[0].mxu0 %v372
    %v759 = vpop.f32.mrb[0].mxu0
    %v760 = vadd.f32 %v179, %v759
    %v761 = vpop.f32.mrb[0].mxu0
    %762 = vdwg.mxu0
    %v763 = vmax.f32 %v445, 0.0
    %v764 = vmax.f32 %v450, 0.0
    %v765 = vmax.f32 %v455, 0.0
    %v766 = vmax.f32 %v460, 0.0
    %v767 = vmax.f32 %v465, 0.0
    %v768 = vmax.f32 %v470, 0.0
    %v769 = vmax.f32 %v475, 0.0
    %v770 = vmax.f32 %v480, 0.0
    %v771 = vmax.f32 %v485, 0.0
    %v772 = vmax.f32 %v490, 0.0
    %v773 = vmax.f32 %v495, 0.0
    %v774 = vmax.f32 %v500, 0.0
    %v775 = vmax.f32 %v505, 0.0
    %v776 = vmax.f32 %v510, 0.0
    %v777 = vmax.f32 %v515, 0.0
    %v778 = vmax.f32 %v520, 0.0
    %v779 = vmax.f32 %v525, 0.0
    %v780 = vmax.f32 %v530, 0.0
    %v781 = vmax.f32 %v535, 0.0
    %v782 = vmax.f32 %v540, 0.0
    %v783 = vmax.f32 %v545, 0.0
    %v784 = vmax.f32 %v550, 0.0
    %v785 = vmax.f32 %v555, 0.0
    %v786 = vmax.f32 %v560, 0.0
    %v787 = vmax.f32 %v565, 0.0
    %v788 = vmax.f32 %v570, 0.0
    %v789 = vmax.f32 %v575, 0.0
    %v790 = vmax.f32 %v580, 0.0
    %v791 = vmax.f32 %v585, 0.0
    %v792 = vmax.f32 %v590, 0.0
    %v793 = vmax.f32 %v595, 0.0
    %v794 = vmax.f32 %v600, 0.0
    %v795 = vmax.f32 %v605, 0.0
    %v796 = vmax.f32 %v610, 0.0
    %v797 = vmax.f32 %v615, 0.0
    %v798 = vmax.f32 %v620, 0.0
    %v799 = vmax.f32 %v625, 0.0
    %v800 = vmax.f32 %v630, 0.0
    %v801 = vmax.f32 %v635, 0.0
    %v802 = vmax.f32 %v640, 0.0
    %v803 = vmax.f32 %v645, 0.0
    %v804 = vmax.f32 %v650, 0.0
    %v805 = vmax.f32 %v655, 0.0
    %v806 = vmax.f32 %v660, 0.0
    %v807 = vmax.f32 %v665, 0.0
    %v808 = vmax.f32 %v670, 0.0
    %v809 = vmax.f32 %v675, 0.0
    %v810 = vmax.f32 %v680, 0.0
    %v811 = vmax.f32 %v685, 0.0
    %v812 = vmax.f32 %v690, 0.0
    %v813 = vmax.f32 %v695, 0.0
    %v814 = vmax.f32 %v700, 0.0
    %v815 = vmax.f32 %v705, 0.0
    %v816 = vmax.f32 %v710, 0.0
    %v817 = vmax.f32 %v715, 0.0
    %v818 = vmax.f32 %v720, 0.0
    %v819 = vmax.f32 %v725, 0.0
    %v820 = vmax.f32 %v730, 0.0
    %v821 = vmax.f32 %v735, 0.0
    %v822 = vmax.f32 %v740, 0.0
    %v823 = vmax.f32 %v745, 0.0
    %v824 = vmax.f32 %v750, 0.0
    %v825 = vmax.f32 %v755, 0.0
    %v826 = vmax.f32 %v760, 0.0
    %v827 = vmax.f32 %v763, %v779
    %v828 = vmax.f32 %v764, %v780
    %v829 = vmax.f32 %v765, %v781
    %v830 = vmax.f32 %v766, %v782
    %v831 = vmax.f32 %v767, %v783
    %v832 = vmax.f32 %v768, %v784
    %v833 = vmax.f32 %v769, %v785
    %v834 = vmax.f32 %v770, %v786
    %v835 = vmax.f32 %v771, %v787
    %v836 = vmax.f32 %v772, %v788
    %v837 = vmax.f32 %v773, %v789
    %v838 = vmax.f32 %v774, %v790
    %v839 = vmax.f32 %v775, %v791
    %v840 = vmax.f32 %v776, %v792
    %v841 = vmax.f32 %v777, %v793
    %v842 = vmax.f32 %v778, %v794
    %v843 = vmax.f32 %v795, %v811
    %v844 = vmax.f32 %v796, %v812
    %v845 = vmax.f32 %v797, %v813
    %v846 = vmax.f32 %v798, %v814
    %v847 = vmax.f32 %v799, %v815
    %v848 = vmax.f32 %v800, %v816
    %v849 = vmax.f32 %v801, %v817
    %v850 = vmax.f32 %v802, %v818
    %v851 = vmax.f32 %v803, %v819
    %v852 = vmax.f32 %v804, %v820
    %v853 = vmax.f32 %v805, %v821
    %v854 = vmax.f32 %v806, %v822
    %v855 = vmax.f32 %v807, %v823
    %v856 = vmax.f32 %v808, %v824
    %v857 = vmax.f32 %v809, %v825
    %v858 = vmax.f32 %v810, %v826
    %v859 = vmax.f32 %v827, %v843
    %v860 = vmax.f32 %v828, %v844
    %v861 = vmax.f32 %v829, %v845
    %v862 = vmax.f32 %v830, %v846
    %v863 = vmax.f32 %v831, %v847
    %v864 = vmax.f32 %v832, %v848
    %v865 = vmax.f32 %v833, %v849
    %v866 = vmax.f32 %v834, %v850
    %v867 = vmax.f32 %v835, %v851
    %v868 = vmax.f32 %v836, %v852
    %v869 = vmax.f32 %v837, %v853
    %v870 = vmax.f32 %v838, %v854
    %v871 = vmax.f32 %v839, %v855
    %v872 = vmax.f32 %v840, %v856
    %v873 = vmax.f32 %v841, %v857
    %v874 = vmax.f32 %v842, %v858
    %v875 = vld [vmem:[#allocation5] sm:$0xff]
    %v876 = vld [vmem:[#allocation5 + $0x8] sm:$0xff]
    %v877 = vld [vmem:[#allocation5 + $0x10] sm:$0xff]
    %v878 = vld [vmem:[#allocation5 + $0x18] sm:$0xff]
    %v879 = vld [vmem:[#allocation5 + $0x20] sm:$0xff]
    %v880 = vld [vmem:[#allocation5 + $0x28] sm:$0xff]
    %v881 = vld [vmem:[#allocation5 + $0x30] sm:$0xff]
    %v882 = vld [vmem:[#allocation5 + $0x38] sm:$0xff]
    %v883 = vld [vmem:[#allocation5 + $0x40] sm:$0xff]
    %v884 = vld [vmem:[#allocation5 + $0x48] sm:$0xff]
    %v885 = vld [vmem:[#allocation5 + $0x50] sm:$0xff]
    %v886 = vld [vmem:[#allocation5 + $0x58] sm:$0xff]
    %v887 = vld [vmem:[#allocation5 + $0x60] sm:$0xff]
    %v888 = vld [vmem:[#allocation5 + $0x68] sm:$0xff]
    %v889 = vld [vmem:[#allocation5 + $0x70] sm:$0xff]
    %v890 = vld [vmem:[#allocation5 + $0x78] sm:$0xff]
    %v891 = vld [vmem:[#allocation5 + $0x80] sm:$0xff]
    %v892 = vld [vmem:[#allocation5 + $0x88] sm:$0xff]
    %v893 = vld [vmem:[#allocation5 + $0x90] sm:$0xff]
    %v894 = vld [vmem:[#allocation5 + $0x98] sm:$0xff]
    %v895 = vld [vmem:[#allocation5 + $0xa0] sm:$0xff]
    %v896 = vld [vmem:[#allocation5 + $0xa8] sm:$0xff]
    %v897 = vld [vmem:[#allocation5 + $0xb0] sm:$0xff]
    %v898 = vld [vmem:[#allocation5 + $0xb8] sm:$0xff]
    %v899 = vld [vmem:[#allocation5 + $0xc0] sm:$0xff]
    %v900 = vld [vmem:[#allocation5 + $0xc8] sm:$0xff]
    %v901 = vld [vmem:[#allocation5 + $0xd0] sm:$0xff]
    %v902 = vld [vmem:[#allocation5 + $0xd8] sm:$0xff]
    %v903 = vld [vmem:[#allocation5 + $0xe0] sm:$0xff]
    %v904 = vld [vmem:[#allocation5 + $0xe8] sm:$0xff]
    %v905 = vld [vmem:[#allocation5 + $0xf0] sm:$0xff]
    %v906 = vld [vmem:[#allocation5 + $0xf8] sm:$0xff]
    %v907 = vld [vmem:[#allocation5 + $0x100] sm:$0xff]
    %v908 = vld [vmem:[#allocation5 + $0x108] sm:$0xff]
    %v909 = vld [vmem:[#allocation5 + $0x110] sm:$0xff]
    %v910 = vld [vmem:[#allocation5 + $0x118] sm:$0xff]
    %v911 = vld [vmem:[#allocation5 + $0x120] sm:$0xff]
    %v912 = vld [vmem:[#allocation5 + $0x128] sm:$0xff]
    %v913 = vld [vmem:[#allocation5 + $0x130] sm:$0xff]
    %v914 = vld [vmem:[#allocation5 + $0x138] sm:$0xff]
    %v915 = vld [vmem:[#allocation5 + $0x140] sm:$0xff]
    %v916 = vld [vmem:[#allocation5 + $0x148] sm:$0xff]
    %v917 = vld [vmem:[#allocation5 + $0x150] sm:$0xff]
    %v918 = vld [vmem:[#allocation5 + $0x158] sm:$0xff]
    %v919 = vld [vmem:[#allocation5 + $0x160] sm:$0xff]
    %v920 = vld [vmem:[#allocation5 + $0x168] sm:$0xff]
    %v921 = vld [vmem:[#allocation5 + $0x170] sm:$0xff]
    %v922 = vld [vmem:[#allocation5 + $0x178] sm:$0xff]
    %v923 = vld [vmem:[#allocation5 + $0x180] sm:$0xff]
    %v924 = vld [vmem:[#allocation5 + $0x188] sm:$0xff]
    %v925 = vld [vmem:[#allocation5 + $0x190] sm:$0xff]
    %v926 = vld [vmem:[#allocation5 + $0x198] sm:$0xff]
    %v927 = vld [vmem:[#allocation5 + $0x1a0] sm:$0xff]
    %v928 = vld [vmem:[#allocation5 + $0x1a8] sm:$0xff]
    %v929 = vld [vmem:[#allocation5 + $0x1b0] sm:$0xff]
    %v930 = vld [vmem:[#allocation5 + $0x1b8] sm:$0xff]
    %v931 = vld [vmem:[#allocation5 + $0x1c0] sm:$0xff]
    %v932 = vld [vmem:[#allocation5 + $0x1c8] sm:$0xff]
    %v933 = vld [vmem:[#allocation5 + $0x1d0] sm:$0xff]
    %v934 = vld [vmem:[#allocation5 + $0x1d8] sm:$0xff]
    %v935 = vld [vmem:[#allocation5 + $0x1e0] sm:$0xff]
    %v936 = vld [vmem:[#allocation5 + $0x1e8] sm:$0xff]
    %v937 = vld [vmem:[#allocation5 + $0x1f0] sm:$0xff]
    %v938 = vld [vmem:[#allocation5 + $0x1f8] sm:$0xff]
    %v939 = vld [vmem:[#allocation5 + $0x200] sm:$0xff]
    %v940 = vld [vmem:[#allocation5 + $0x208] sm:$0xff]
    %v941 = vld [vmem:[#allocation5 + $0x210] sm:$0xff]
    %v942 = vld [vmem:[#allocation5 + $0x218] sm:$0xff]
    %v943 = vld [vmem:[#allocation5 + $0x220] sm:$0xff]
    %v944 = vld [vmem:[#allocation5 + $0x228] sm:$0xff]
    %v945 = vld [vmem:[#allocation5 + $0x230] sm:$0xff]
    %v946 = vld [vmem:[#allocation5 + $0x238] sm:$0xff]
    %v947 = vld [vmem:[#allocation5 + $0x240] sm:$0xff]
    %v948 = vld [vmem:[#allocation5 + $0x248] sm:$0xff]
    %v949 = vld [vmem:[#allocation5 + $0x250] sm:$0xff]
    %v950 = vld [vmem:[#allocation5 + $0x258] sm:$0xff]
    %v951 = vld [vmem:[#allocation5 + $0x260] sm:$0xff]
    %v952 = vld [vmem:[#allocation5 + $0x268] sm:$0xff]
    %v953 = vld [vmem:[#allocation5 + $0x270] sm:$0xff]
    %v954 = vld [vmem:[#allocation5 + $0x278] sm:$0xff]
    %v955 = vld [vmem:[#allocation5 + $0x280] sm:$0xff]
    %v956 = vld [vmem:[#allocation5 + $0x288] sm:$0xff]
    %v957 = vld [vmem:[#allocation5 + $0x290] sm:$0xff]
    %v958 = vld [vmem:[#allocation5 + $0x298] sm:$0xff]
    %v959 = vld [vmem:[#allocation5 + $0x2a0] sm:$0xff]
    %v960 = vld [vmem:[#allocation5 + $0x2a8] sm:$0xff]
    %v961 = vld [vmem:[#allocation5 + $0x2b0] sm:$0xff]
    %v962 = vld [vmem:[#allocation5 + $0x2b8] sm:$0xff]
    %v963 = vld [vmem:[#allocation5 + $0x2c0] sm:$0xff]
    %v964 = vld [vmem:[#allocation5 + $0x2c8] sm:$0xff]
    %v965 = vld [vmem:[#allocation5 + $0x2d0] sm:$0xff]
    %v966 = vld [vmem:[#allocation5 + $0x2d8] sm:$0xff]
    %v967 = vld [vmem:[#allocation5 + $0x2e0] sm:$0xff]
    %v968 = vld [vmem:[#allocation5 + $0x2e8] sm:$0xff]
    %v969 = vld [vmem:[#allocation5 + $0x2f0] sm:$0xff]
    %v970 = vld [vmem:[#allocation5 + $0x2f8] sm:$0xff]
    %v971 = vld [vmem:[#allocation5 + $0x300] sm:$0xff]
    %v972 = vld [vmem:[#allocation5 + $0x308] sm:$0xff]
    %v973 = vld [vmem:[#allocation5 + $0x310] sm:$0xff]
    %v974 = vld [vmem:[#allocation5 + $0x318] sm:$0xff]
    %v975 = vld [vmem:[#allocation5 + $0x320] sm:$0xff]
    %v976 = vld [vmem:[#allocation5 + $0x328] sm:$0xff]
    %v977 = vld [vmem:[#allocation5 + $0x330] sm:$0xff]
    %v978 = vld [vmem:[#allocation5 + $0x338] sm:$0xff]
    %v979 = vld [vmem:[#allocation5 + $0x340] sm:$0xff]
    %v980 = vld [vmem:[#allocation5 + $0x348] sm:$0xff]
    %v981 = vld [vmem:[#allocation5 + $0x350] sm:$0xff]
    %v982 = vld [vmem:[#allocation5 + $0x358] sm:$0xff]
    %v983 = vld [vmem:[#allocation5 + $0x360] sm:$0xff]
    %v984 = vld [vmem:[#allocation5 + $0x368] sm:$0xff]
    %v985 = vld [vmem:[#allocation5 + $0x370] sm:$0xff]
    %v986 = vld [vmem:[#allocation5 + $0x378] sm:$0xff]
    %v987 = vld [vmem:[#allocation5 + $0x380] sm:$0xff]
    %v988 = vld [vmem:[#allocation5 + $0x388] sm:$0xff]
    %v989 = vld [vmem:[#allocation5 + $0x390] sm:$0xff]
    %v990 = vld [vmem:[#allocation5 + $0x398] sm:$0xff]
    %v991 = vld [vmem:[#allocation5 + $0x3a0] sm:$0xff]
    %v992 = vld [vmem:[#allocation5 + $0x3a8] sm:$0xff]
    %v993 = vld [vmem:[#allocation5 + $0x3b0] sm:$0xff]
    %v994 = vld [vmem:[#allocation5 + $0x3b8] sm:$0xff]
    %v995 = vld [vmem:[#allocation5 + $0x3c0] sm:$0xff]
    %v996 = vld [vmem:[#allocation5 + $0x3c8] sm:$0xff]
    %v997 = vld [vmem:[#allocation5 + $0x3d0] sm:$0xff]
    %v998 = vld [vmem:[#allocation5 + $0x3d8] sm:$0xff]
    %v999 = vld [vmem:[#allocation5 + $0x3e0] sm:$0xff]
    %v1000 = vld [vmem:[#allocation5 + $0x3e8] sm:$0xff]
    %v1001 = vld [vmem:[#allocation5 + $0x3f0] sm:$0xff]
    %v1002 = vld [vmem:[#allocation5 + $0x3f8] sm:$0xff]
    %v1003 = vld [vmem:[#allocation5 + $0x400] sm:$0xff]
    %v1004 = vld [vmem:[#allocation5 + $0x408] sm:$0xff]
    %v1005 = vld [vmem:[#allocation5 + $0x410] sm:$0xff]
    %v1006 = vld [vmem:[#allocation5 + $0x418] sm:$0xff]
    %v1007 = vld [vmem:[#allocation5 + $0x420] sm:$0xff]
    %v1008 = vld [vmem:[#allocation5 + $0x428] sm:$0xff]
    %v1009 = vld [vmem:[#allocation5 + $0x430] sm:$0xff]
    %v1010 = vld [vmem:[#allocation5 + $0x438] sm:$0xff]
    %v1011 = vld [vmem:[#allocation5 + $0x440] sm:$0xff]
    %v1012 = vld [vmem:[#allocation5 + $0x448] sm:$0xff]
    %v1013 = vld [vmem:[#allocation5 + $0x450] sm:$0xff]
    %v1014 = vld [vmem:[#allocation5 + $0x458] sm:$0xff]
    %v1015 = vld [vmem:[#allocation5 + $0x460] sm:$0xff]
    %v1016 = vld [vmem:[#allocation5 + $0x468] sm:$0xff]
    %v1017 = vld [vmem:[#allocation5 + $0x470] sm:$0xff]
    %v1018 = vld [vmem:[#allocation5 + $0x478] sm:$0xff]
    %v1019 = vld [vmem:[#allocation5 + $0x480] sm:$0xff]
    %v1020 = vld [vmem:[#allocation5 + $0x488] sm:$0xff]
    %v1021 = vld [vmem:[#allocation5 + $0x490] sm:$0xff]
    %v1022 = vld [vmem:[#allocation5 + $0x498] sm:$0xff]
    %v1023 = vld [vmem:[#allocation5 + $0x4a0] sm:$0xff]
    %v1024 = vld [vmem:[#allocation5 + $0x4a8] sm:$0xff]
    %v1025 = vld [vmem:[#allocation5 + $0x4b0] sm:$0xff]
    %v1026 = vld [vmem:[#allocation5 + $0x4b8] sm:$0xff]
    %v1027 = vld [vmem:[#allocation5 + $0x4c0] sm:$0xff]
    %v1028 = vld [vmem:[#allocation5 + $0x4c8] sm:$0xff]
    %v1029 = vld [vmem:[#allocation5 + $0x4d0] sm:$0xff]
    %v1030 = vld [vmem:[#allocation5 + $0x4d8] sm:$0xff]
    %v1031 = vld [vmem:[#allocation5 + $0x4e0] sm:$0xff]
    %v1032 = vld [vmem:[#allocation5 + $0x4e8] sm:$0xff]
    %v1033 = vld [vmem:[#allocation5 + $0x4f0] sm:$0xff]
    %v1034 = vld [vmem:[#allocation5 + $0x4f8] sm:$0xff]
    %v1035 = vld [vmem:[#allocation5 + $0x500] sm:$0xff]
    %v1036 = vld [vmem:[#allocation5 + $0x508] sm:$0xff]
    %v1037 = vld [vmem:[#allocation5 + $0x510] sm:$0xff]
    %v1038 = vld [vmem:[#allocation5 + $0x518] sm:$0xff]
    %v1039 = vld [vmem:[#allocation5 + $0x520] sm:$0xff]
    %v1040 = vld [vmem:[#allocation5 + $0x528] sm:$0xff]
    %v1041 = vld [vmem:[#allocation5 + $0x530] sm:$0xff]
    %v1042 = vld [vmem:[#allocation5 + $0x538] sm:$0xff]
    %v1043 = vld [vmem:[#allocation5 + $0x540] sm:$0xff]
    %v1044 = vld [vmem:[#allocation5 + $0x548] sm:$0xff]
    %v1045 = vld [vmem:[#allocation5 + $0x550] sm:$0xff]
    %v1046 = vld [vmem:[#allocation5 + $0x558] sm:$0xff]
    %v1047 = vld [vmem:[#allocation5 + $0x560] sm:$0xff]
    %v1048 = vld [vmem:[#allocation5 + $0x568] sm:$0xff]
    %v1049 = vld [vmem:[#allocation5 + $0x570] sm:$0xff]
    %v1050 = vld [vmem:[#allocation5 + $0x578] sm:$0xff]
    %v1051 = vld [vmem:[#allocation5 + $0x580] sm:$0xff]
    %v1052 = vld [vmem:[#allocation5 + $0x588] sm:$0xff]
    %v1053 = vld [vmem:[#allocation5 + $0x590] sm:$0xff]
    %v1054 = vld [vmem:[#allocation5 + $0x598] sm:$0xff]
    %v1055 = vld [vmem:[#allocation5 + $0x5a0] sm:$0xff]
    %v1056 = vld [vmem:[#allocation5 + $0x5a8] sm:$0xff]
    %v1057 = vld [vmem:[#allocation5 + $0x5b0] sm:$0xff]
    %v1058 = vld [vmem:[#allocation5 + $0x5b8] sm:$0xff]
    %v1059 = vld [vmem:[#allocation5 + $0x5c0] sm:$0xff]
    %v1060 = vld [vmem:[#allocation5 + $0x5c8] sm:$0xff]
    %v1061 = vld [vmem:[#allocation5 + $0x5d0] sm:$0xff]
    %v1062 = vld [vmem:[#allocation5 + $0x5d8] sm:$0xff]
    %v1063 = vld [vmem:[#allocation5 + $0x5e0] sm:$0xff]
    %v1064 = vld [vmem:[#allocation5 + $0x5e8] sm:$0xff]
    %v1065 = vld [vmem:[#allocation5 + $0x5f0] sm:$0xff]
    %v1066 = vld [vmem:[#allocation5 + $0x5f8] sm:$0xff]
    %v1067 = vld [vmem:[#allocation5 + $0x600] sm:$0xff]
    %v1068 = vld [vmem:[#allocation5 + $0x608] sm:$0xff]
    %v1069 = vld [vmem:[#allocation5 + $0x610] sm:$0xff]
    %v1070 = vld [vmem:[#allocation5 + $0x618] sm:$0xff]
    %v1071 = vld [vmem:[#allocation5 + $0x620] sm:$0xff]
    %v1072 = vld [vmem:[#allocation5 + $0x628] sm:$0xff]
    %v1073 = vld [vmem:[#allocation5 + $0x630] sm:$0xff]
    %v1074 = vld [vmem:[#allocation5 + $0x638] sm:$0xff]
    %v1075 = vld [vmem:[#allocation5 + $0x640] sm:$0xff]
    %v1076 = vld [vmem:[#allocation5 + $0x648] sm:$0xff]
    %v1077 = vld [vmem:[#allocation5 + $0x650] sm:$0xff]
    %v1078 = vld [vmem:[#allocation5 + $0x658] sm:$0xff]
    %v1079 = vld [vmem:[#allocation5 + $0x660] sm:$0xff]
    %v1080 = vld [vmem:[#allocation5 + $0x668] sm:$0xff]
    %v1081 = vld [vmem:[#allocation5 + $0x670] sm:$0xff]
    %v1082 = vld [vmem:[#allocation5 + $0x678] sm:$0xff]
    %v1083 = vld [vmem:[#allocation5 + $0x680] sm:$0xff]
    %v1084 = vld [vmem:[#allocation5 + $0x688] sm:$0xff]
    %v1085 = vld [vmem:[#allocation5 + $0x690] sm:$0xff]
    %v1086 = vld [vmem:[#allocation5 + $0x698] sm:$0xff]
    %v1087 = vld [vmem:[#allocation5 + $0x6a0] sm:$0xff]
    %v1088 = vld [vmem:[#allocation5 + $0x6a8] sm:$0xff]
    %v1089 = vld [vmem:[#allocation5 + $0x6b0] sm:$0xff]
    %v1090 = vld [vmem:[#allocation5 + $0x6b8] sm:$0xff]
    %v1091 = vld [vmem:[#allocation5 + $0x6c0] sm:$0xff]
    %v1092 = vld [vmem:[#allocation5 + $0x6c8] sm:$0xff]
    %v1093 = vld [vmem:[#allocation5 + $0x6d0] sm:$0xff]
    %v1094 = vld [vmem:[#allocation5 + $0x6d8] sm:$0xff]
    %v1095 = vld [vmem:[#allocation5 + $0x6e0] sm:$0xff]
    %v1096 = vld [vmem:[#allocation5 + $0x6e8] sm:$0xff]
    %v1097 = vld [vmem:[#allocation5 + $0x6f0] sm:$0xff]
    %v1098 = vld [vmem:[#allocation5 + $0x6f8] sm:$0xff]
    %v1099 = vld [vmem:[#allocation5 + $0x700] sm:$0xff]
    %v1100 = vld [vmem:[#allocation5 + $0x708] sm:$0xff]
    %v1101 = vld [vmem:[#allocation5 + $0x710] sm:$0xff]
    %v1102 = vld [vmem:[#allocation5 + $0x718] sm:$0xff]
    %v1103 = vld [vmem:[#allocation5 + $0x720] sm:$0xff]
    %v1104 = vld [vmem:[#allocation5 + $0x728] sm:$0xff]
    %v1105 = vld [vmem:[#allocation5 + $0x730] sm:$0xff]
    %v1106 = vld [vmem:[#allocation5 + $0x738] sm:$0xff]
    %v1107 = vld [vmem:[#allocation5 + $0x740] sm:$0xff]
    %v1108 = vld [vmem:[#allocation5 + $0x748] sm:$0xff]
    %v1109 = vld [vmem:[#allocation5 + $0x750] sm:$0xff]
    %v1110 = vld [vmem:[#allocation5 + $0x758] sm:$0xff]
    %v1111 = vld [vmem:[#allocation5 + $0x760] sm:$0xff]
    %v1112 = vld [vmem:[#allocation5 + $0x768] sm:$0xff]
    %v1113 = vld [vmem:[#allocation5 + $0x770] sm:$0xff]
    %v1114 = vld [vmem:[#allocation5 + $0x778] sm:$0xff]
    %v1115 = vld [vmem:[#allocation5 + $0x780] sm:$0xff]
    %v1116 = vld [vmem:[#allocation5 + $0x788] sm:$0xff]
    %v1117 = vld [vmem:[#allocation5 + $0x790] sm:$0xff]
    %v1118 = vld [vmem:[#allocation5 + $0x798] sm:$0xff]
    %v1119 = vld [vmem:[#allocation5 + $0x7a0] sm:$0xff]
    %v1120 = vld [vmem:[#allocation5 + $0x7a8] sm:$0xff]
    %v1121 = vld [vmem:[#allocation5 + $0x7b0] sm:$0xff]
    %v1122 = vld [vmem:[#allocation5 + $0x7b8] sm:$0xff]
    %v1123 = vld [vmem:[#allocation5 + $0x7c0] sm:$0xff]
    %v1124 = vld [vmem:[#allocation5 + $0x7c8] sm:$0xff]
    %v1125 = vld [vmem:[#allocation5 + $0x7d0] sm:$0xff]
    %v1126 = vld [vmem:[#allocation5 + $0x7d8] sm:$0xff]
    %v1127 = vld [vmem:[#allocation5 + $0x7e0] sm:$0xff]
    %v1128 = vld [vmem:[#allocation5 + $0x7e8] sm:$0xff]
    %v1129 = vld [vmem:[#allocation5 + $0x7f0] sm:$0xff]
    %v1130 = vld [vmem:[#allocation5 + $0x7f8] sm:$0xff]
    %v1131 = vld [vmem:[#allocation5 + $0x800] sm:$0xff]
    %v1132 = vld [vmem:[#allocation5 + $0x808] sm:$0xff]
    %v1133 = vld [vmem:[#allocation5 + $0x810] sm:$0xff]
    %v1134 = vld [vmem:[#allocation5 + $0x818] sm:$0xff]
    %v1135 = vld [vmem:[#allocation5 + $0x820] sm:$0xff]
    %v1136 = vld [vmem:[#allocation5 + $0x828] sm:$0xff]
    %v1137 = vld [vmem:[#allocation5 + $0x830] sm:$0xff]
    %v1138 = vld [vmem:[#allocation5 + $0x838] sm:$0xff]
    %v1139 = vld [vmem:[#allocation5 + $0x840] sm:$0xff]
    %v1140 = vld [vmem:[#allocation5 + $0x848] sm:$0xff]
    %v1141 = vld [vmem:[#allocation5 + $0x850] sm:$0xff]
    %v1142 = vld [vmem:[#allocation5 + $0x858] sm:$0xff]
    %v1143 = vld [vmem:[#allocation5 + $0x860] sm:$0xff]
    %v1144 = vld [vmem:[#allocation5 + $0x868] sm:$0xff]
    %v1145 = vld [vmem:[#allocation5 + $0x870] sm:$0xff]
    %v1146 = vld [vmem:[#allocation5 + $0x878] sm:$0xff]
    %v1147 = vld [vmem:[#allocation5 + $0x880] sm:$0xff]
    %v1148 = vld [vmem:[#allocation5 + $0x888] sm:$0xff]
    %v1149 = vld [vmem:[#allocation5 + $0x890] sm:$0xff]
    %v1150 = vld [vmem:[#allocation5 + $0x898] sm:$0xff]
    %v1151 = vld [vmem:[#allocation5 + $0x8a0] sm:$0xff]
    %v1152 = vld [vmem:[#allocation5 + $0x8a8] sm:$0xff]
    %v1153 = vld [vmem:[#allocation5 + $0x8b0] sm:$0xff]
    %v1154 = vld [vmem:[#allocation5 + $0x8b8] sm:$0xff]
    %v1155 = vld [vmem:[#allocation5 + $0x8c0] sm:$0xff]
    %v1156 = vld [vmem:[#allocation5 + $0x8c8] sm:$0xff]
    %v1157 = vld [vmem:[#allocation5 + $0x8d0] sm:$0xff]
    %v1158 = vld [vmem:[#allocation5 + $0x8d8] sm:$0xff]
    %v1159 = vld [vmem:[#allocation5 + $0x8e0] sm:$0xff]
    %v1160 = vld [vmem:[#allocation5 + $0x8e8] sm:$0xff]
    %v1161 = vld [vmem:[#allocation5 + $0x8f0] sm:$0xff]
    %v1162 = vld [vmem:[#allocation5 + $0x8f8] sm:$0xff]
    %v1163 = vld [vmem:[#allocation5 + $0x900] sm:$0xff]
    %v1164 = vld [vmem:[#allocation5 + $0x908] sm:$0xff]
    %v1165 = vld [vmem:[#allocation5 + $0x910] sm:$0xff]
    %v1166 = vld [vmem:[#allocation5 + $0x918] sm:$0xff]
    %v1167 = vld [vmem:[#allocation5 + $0x920] sm:$0xff]
    %v1168 = vld [vmem:[#allocation5 + $0x928] sm:$0xff]
    %v1169 = vld [vmem:[#allocation5 + $0x930] sm:$0xff]
    %v1170 = vld [vmem:[#allocation5 + $0x938] sm:$0xff]
    %v1171 = vld [vmem:[#allocation5 + $0x940] sm:$0xff]
    %v1172 = vld [vmem:[#allocation5 + $0x948] sm:$0xff]
    %v1173 = vld [vmem:[#allocation5 + $0x950] sm:$0xff]
    %v1174 = vld [vmem:[#allocation5 + $0x958] sm:$0xff]
    %v1175 = vld [vmem:[#allocation5 + $0x960] sm:$0xff]
    %v1176 = vld [vmem:[#allocation5 + $0x968] sm:$0xff]
    %v1177 = vld [vmem:[#allocation5 + $0x970] sm:$0xff]
    %v1178 = vld [vmem:[#allocation5 + $0x978] sm:$0xff]
    %v1179 = vld [vmem:[#allocation5 + $0x980] sm:$0xff]
    %v1180 = vld [vmem:[#allocation5 + $0x988] sm:$0xff]
    %v1181 = vld [vmem:[#allocation5 + $0x990] sm:$0xff]
    %v1182 = vld [vmem:[#allocation5 + $0x998] sm:$0xff]
    %v1183 = vld [vmem:[#allocation5 + $0x9a0] sm:$0xff]
    %v1184 = vld [vmem:[#allocation5 + $0x9a8] sm:$0xff]
    %v1185 = vld [vmem:[#allocation5 + $0x9b0] sm:$0xff]
    %v1186 = vld [vmem:[#allocation5 + $0x9b8] sm:$0xff]
    %v1187 = vld [vmem:[#allocation5 + $0x9c0] sm:$0xff]
    %v1188 = vld [vmem:[#allocation5 + $0x9c8] sm:$0xff]
    %v1189 = vld [vmem:[#allocation5 + $0x9d0] sm:$0xff]
    %v1190 = vld [vmem:[#allocation5 + $0x9d8] sm:$0xff]
    %v1191 = vld [vmem:[#allocation5 + $0x9e0] sm:$0xff]
    %v1192 = vld [vmem:[#allocation5 + $0x9e8] sm:$0xff]
    %v1193 = vld [vmem:[#allocation5 + $0x9f0] sm:$0xff]
    %v1194 = vld [vmem:[#allocation5 + $0x9f8] sm:$0xff]
    %v1195 = vld [vmem:[#allocation5 + $0xa00] sm:$0xff]
    %v1196 = vld [vmem:[#allocation5 + $0xa08] sm:$0xff]
    %v1197 = vld [vmem:[#allocation5 + $0xa10] sm:$0xff]
    %v1198 = vld [vmem:[#allocation5 + $0xa18] sm:$0xff]
    %v1199 = vld [vmem:[#allocation5 + $0xa20] sm:$0xff]
    %v1200 = vld [vmem:[#allocation5 + $0xa28] sm:$0xff]
    %v1201 = vld [vmem:[#allocation5 + $0xa30] sm:$0xff]
    %v1202 = vld [vmem:[#allocation5 + $0xa38] sm:$0xff]
    %v1203 = vld [vmem:[#allocation5 + $0xa40] sm:$0xff]
    %v1204 = vld [vmem:[#allocation5 + $0xa48] sm:$0xff]
    %v1205 = vld [vmem:[#allocation5 + $0xa50] sm:$0xff]
    %v1206 = vld [vmem:[#allocation5 + $0xa58] sm:$0xff]
    %v1207 = vld [vmem:[#allocation5 + $0xa60] sm:$0xff]
    %v1208 = vld [vmem:[#allocation5 + $0xa68] sm:$0xff]
    %v1209 = vld [vmem:[#allocation5 + $0xa70] sm:$0xff]
    %v1210 = vld [vmem:[#allocation5 + $0xa78] sm:$0xff]
    %v1211 = vld [vmem:[#allocation5 + $0xa80] sm:$0xff]
    %v1212 = vld [vmem:[#allocation5 + $0xa88] sm:$0xff]
    %v1213 = vld [vmem:[#allocation5 + $0xa90] sm:$0xff]
    %v1214 = vld [vmem:[#allocation5 + $0xa98] sm:$0xff]
    %v1215 = vld [vmem:[#allocation5 + $0xaa0] sm:$0xff]
    %v1216 = vld [vmem:[#allocation5 + $0xaa8] sm:$0xff]
    %v1217 = vld [vmem:[#allocation5 + $0xab0] sm:$0xff]
    %v1218 = vld [vmem:[#allocation5 + $0xab8] sm:$0xff]
    %v1219 = vld [vmem:[#allocation5 + $0xac0] sm:$0xff]
    %v1220 = vld [vmem:[#allocation5 + $0xac8] sm:$0xff]
    %v1221 = vld [vmem:[#allocation5 + $0xad0] sm:$0xff]
    %v1222 = vld [vmem:[#allocation5 + $0xad8] sm:$0xff]
    %v1223 = vld [vmem:[#allocation5 + $0xae0] sm:$0xff]
    %v1224 = vld [vmem:[#allocation5 + $0xae8] sm:$0xff]
    %v1225 = vld [vmem:[#allocation5 + $0xaf0] sm:$0xff]
    %v1226 = vld [vmem:[#allocation5 + $0xaf8] sm:$0xff]
    %v1227 = vld [vmem:[#allocation5 + $0xb00] sm:$0xff]
    %v1228 = vld [vmem:[#allocation5 + $0xb08] sm:$0xff]
    %v1229 = vld [vmem:[#allocation5 + $0xb10] sm:$0xff]
    %v1230 = vld [vmem:[#allocation5 + $0xb18] sm:$0xff]
    %v1231 = vld [vmem:[#allocation5 + $0xb20] sm:$0xff]
    %v1232 = vld [vmem:[#allocation5 + $0xb28] sm:$0xff]
    %v1233 = vld [vmem:[#allocation5 + $0xb30] sm:$0xff]
    %v1234 = vld [vmem:[#allocation5 + $0xb38] sm:$0xff]
    %v1235 = vld [vmem:[#allocation5 + $0xb40] sm:$0xff]
    %v1236 = vld [vmem:[#allocation5 + $0xb48] sm:$0xff]
    %v1237 = vld [vmem:[#allocation5 + $0xb50] sm:$0xff]
    %v1238 = vld [vmem:[#allocation5 + $0xb58] sm:$0xff]
    %v1239 = vld [vmem:[#allocation5 + $0xb60] sm:$0xff]
    %v1240 = vld [vmem:[#allocation5 + $0xb68] sm:$0xff]
    %v1241 = vld [vmem:[#allocation5 + $0xb70] sm:$0xff]
    %v1242 = vld [vmem:[#allocation5 + $0xb78] sm:$0xff]
    %v1243 = vld [vmem:[#allocation5 + $0xb80] sm:$0xff]
    %v1244 = vld [vmem:[#allocation5 + $0xb88] sm:$0xff]
    %v1245 = vld [vmem:[#allocation5 + $0xb90] sm:$0xff]
    %v1246 = vld [vmem:[#allocation5 + $0xb98] sm:$0xff]
    %v1247 = vld [vmem:[#allocation5 + $0xba0] sm:$0xff]
    %v1248 = vld [vmem:[#allocation5 + $0xba8] sm:$0xff]
    %v1249 = vld [vmem:[#allocation5 + $0xbb0] sm:$0xff]
    %v1250 = vld [vmem:[#allocation5 + $0xbb8] sm:$0xff]
    %v1251 = vld [vmem:[#allocation5 + $0xbc0] sm:$0xff]
    %v1252 = vld [vmem:[#allocation5 + $0xbc8] sm:$0xff]
    %v1253 = vld [vmem:[#allocation5 + $0xbd0] sm:$0xff]
    %v1254 = vld [vmem:[#allocation5 + $0xbd8] sm:$0xff]
    %v1255 = vld [vmem:[#allocation5 + $0xbe0] sm:$0xff]
    %v1256 = vld [vmem:[#allocation5 + $0xbe8] sm:$0xff]
    %v1257 = vld [vmem:[#allocation5 + $0xbf0] sm:$0xff]
    %v1258 = vld [vmem:[#allocation5 + $0xbf8] sm:$0xff]
    %v1259 = vld [vmem:[#allocation5 + $0xc00] sm:$0xff]
    %v1260 = vld [vmem:[#allocation5 + $0xc08] sm:$0xff]
    %v1261 = vld [vmem:[#allocation5 + $0xc10] sm:$0xff]
    %v1262 = vld [vmem:[#allocation5 + $0xc18] sm:$0xff]
    %v1263 = vld [vmem:[#allocation5 + $0xc20] sm:$0xff]
    %v1264 = vld [vmem:[#allocation5 + $0xc28] sm:$0xff]
    %v1265 = vld [vmem:[#allocation5 + $0xc30] sm:$0xff]
    %v1266 = vld [vmem:[#allocation5 + $0xc38] sm:$0xff]
    %v1267 = vld [vmem:[#allocation5 + $0xc40] sm:$0xff]
    %v1268 = vld [vmem:[#allocation5 + $0xc48] sm:$0xff]
    %v1269 = vld [vmem:[#allocation5 + $0xc50] sm:$0xff]
    %v1270 = vld [vmem:[#allocation5 + $0xc58] sm:$0xff]
    %v1271 = vld [vmem:[#allocation5 + $0xc60] sm:$0xff]
    %v1272 = vld [vmem:[#allocation5 + $0xc68] sm:$0xff]
    %v1273 = vld [vmem:[#allocation5 + $0xc70] sm:$0xff]
    %v1274 = vld [vmem:[#allocation5 + $0xc78] sm:$0xff]
    %1275 = vmatprep.subr.mxu0 0.0
    %1276 = vmatpush1.msra.mxu0 %v859
    %1277 = vmatprep.subr.mxu0 0.0
    %1278 = vmatpush1.msra.mxu0 %v860
    %1279 = vmatprep.subr.mxu0 0.0
    %1280 = vmatpush1.msra.mxu0 %v861
    %1281 = vmatprep.subr.mxu0 0.0
    %1282 = vmatpush1.msra.mxu0 %v862
    %1283 = vmatprep.subr.mxu0 0.0
    %1284 = vmatpush1.msra.mxu0 %v863
    %1285 = vmatprep.subr.mxu0 0.0
    %1286 = vmatpush1.msra.mxu0 %v864
    %1287 = vmatprep.subr.mxu0 0.0
    %1288 = vmatpush1.msra.mxu0 %v865
    %1289 = vmatprep.subr.mxu0 0.0
    %1290 = vmatpush1.msra.mxu0 %v866
    %1291 = vmatprep.subr.mxu0 0.0
    %1292 = vmatpush1.msra.mxu0 %v867
    %1293 = vmatprep.subr.mxu0 0.0
    %1294 = vmatpush1.msra.mxu0 %v868
    %1295 = vmatprep.subr.mxu0 0.0
    %1296 = vmatpush1.msra.mxu0 %v869
    %1297 = vmatprep.subr.mxu0 0.0
    %1298 = vmatpush1.msra.mxu0 %v870
    %1299 = vmatprep.subr.mxu0 0.0
    %1300 = vmatpush1.msra.mxu0 %v871
    %1301 = vmatprep.subr.mxu0 0.0
    %1302 = vmatpush1.msra.mxu0 %v872
    %1303 = vmatprep.subr.mxu0 0.0
    %1304 = vmatpush1.msra.mxu0 %v873
    %1305 = vmatprep.subr.mxu0 0.0
    %1306 = vmatpush1.msra.mxu0 %v874
    %1307 = vmatprep.subr.mxu0 0.0
    %1308 = vmatpush1.msra.mxu0 0.0
    %1309 = vmatprep.subr.mxu0 0.0
    %1310 = vmatpush1.msra.mxu0 0.0
    %1311 = vmatprep.subr.mxu0 0.0
    %1312 = vmatpush1.msra.mxu0 0.0
    %1313 = vmatprep.subr.mxu0 0.0
    %1314 = vmatpush1.msra.mxu0 0.0
    %1315 = vmatprep.subr.mxu0 0.0
    %1316 = vmatpush1.msra.mxu0 0.0
    %1317 = vmatprep.subr.mxu0 0.0
    %1318 = vmatpush1.msra.mxu0 0.0
    %1319 = vmatprep.subr.mxu0 0.0
    %1320 = vmatpush1.msra.mxu0 0.0
    %1321 = vmatprep.subr.mxu0 0.0
    %1322 = vmatpush1.msra.mxu0 0.0
    %1323 = vmatprep.subr.mxu0 0.0
    %1324 = vmatpush1.msra.mxu0 0.0
    %1325 = vmatprep.subr.mxu0 0.0
    %1326 = vmatpush1.msra.mxu0 0.0
    %1327 = vmatprep.subr.mxu0 0.0
    %1328 = vmatpush1.msra.mxu0 0.0
    %1329 = vmatprep.subr.mxu0 0.0
    %1330 = vmatpush1.msra.mxu0 0.0
    %1331 = vmatprep.subr.mxu0 0.0
    %1332 = vmatpush1.msra.mxu0 0.0
    %1333 = vmatprep.subr.mxu0 0.0
    %1334 = vmatpush1.msra.mxu0 0.0
    %1335 = vmatprep.subr.mxu0 0.0
    %1336 = vmatpush1.msra.mxu0 0.0
    %1337 = vmatprep.subr.mxu0 0.0
    %1338 = vmatpush1.msra.mxu0 0.0
    %1339 = vmatprep.mubr.f32.mxu0 0.0
    %1340 = vmatmul.mubr.f32.gmra.mrb[0].mxu0 %v875
    %v1341 = vpop.f32.mrb[0].mxu0
    %v1342 = vadd.f32 0.0, %v1341
    %v1343 = vpop.f32.mrb[0].mxu0
    %1344 = vmatprep.mubr.f32.mxu0 0.0
    %1345 = vmatmul.mubr.f32.gmra.mrb[0].mxu0 %v876
    %v1346 = vpop.f32.mrb[0].mxu0
    %v1347 = vadd.f32 0.0, %v1346
    %v1348 = vpop.f32.mrb[0].mxu0
    %1349 = vmatprep.mubr.f32.mxu0 0.0
    %1350 = vmatmul.mubr.f32.gmra.mrb[0].mxu0 %v877
    %v1351 = vpop.f32.mrb[0].mxu0
    %v1352 = vadd.f32 0.0, %v1351
    %v1353 = vpop.f32.mrb[0].mxu0
    %1354 = vmatprep.mubr.f32.mxu0 0.0
    %1355 = vmatmul.mubr.f32.gmra.mrb[0].mxu0 %v878
    %v1356 = vpop.f32.mrb[0].mxu0
    %v1357 = vadd.f32 0.0, %v1356
    %v1358 = vpop.f32.mrb[0].mxu0
    %1359 = vmatprep.mubr.f32.mxu0 0.0
    %1360 = vmatmul.mubr.f32.gmra.mrb[0].mxu0 %v879
    %v1361 = vpop.f32.mrb[0].mxu0
    %v1362 = vadd.f32 0.0, %v1361
    %v1363 = vpop.f32.mrb[0].mxu0
    %1364 = vmatprep.mubr.f32.mxu0 0.0
    %1365 = vmatmul.mubr.f32.gmra.mrb[0].mxu0 %v880
    %v1366 = vpop.f32.mrb[0].mxu0
    %v1367 = vadd.f32 0.0, %v1366
    %v1368 = vpop.f32.mrb[0].mxu0
    %1369 = vmatprep.mubr.f32.mxu0 0.0
    %1370 = vmatmul.mubr.f32.gmra.mrb[0].mxu0 %v881
    %v1371 = vpop.f32.mrb[0].mxu0
    %v1372 = vadd.f32 0.0, %v1371
    %v1373 = vpop.f32.mrb[0].mxu0
    %1374 = vmatprep.mubr.f32.mxu0 0.0
    %1375 = vmatmul.mubr.f32.gmra.mrb[0].mxu0 %v882
    %v1376 = vpop.f32.mrb[0].mxu0
    %v1377 = vadd.f32 0.0, %v1376
    %v1378 = vpop.f32.mrb[0].mxu0
    %1379 = vmatprep.mubr.f32.mxu0 0.0
    %1380 = vmatmul.mubr.f32.gmra.mrb[0].mxu0 %v883
    %v1381 = vpop.f32.mrb[0].mxu0
    %v1382 = vadd.f32 0.0, %v1381
    %v1383 = vpop.f32.mrb[0].mxu0
    %1384 = vmatprep.mubr.f32.mxu0 0.0
    %1385 = vmatmul.mubr.f32.gmra.mrb[0].mxu0 %v884
    %v1386 = vpop.f32.mrb[0].mxu0
    %v1387 = vadd.f32 0.0, %v1386
    %v1388 = vpop.f32.mrb[0].mxu0
    %1389 = vmatprep.mubr.f32.mxu0 0.0
    %1390 = vmatmul.mubr.f32.gmra.mrb[0].mxu0 %v885
    %v1391 = vpop.f32.mrb[0].mxu0
    %v1392 = vadd.f32 0.0, %v1391
    %v1393 = vpop.f32.mrb[0].mxu0
    %1394 = vmatprep.mubr.f32.mxu0 0.0
    %1395 = vmatmul.mubr.f32.gmra.mrb[0].mxu0 %v886
    %v1396 = vpop.f32.mrb[0].mxu0
    %v1397 = vadd.f32 0.0, %v1396
    %v1398 = vpop.f32.mrb[0].mxu0
    %1399 = vmatprep.mubr.f32.mxu0 0.0
    %1400 = vmatmul.mubr.f32.gmra.mrb[0].mxu0 %v887
    %v1401 = vpop.f32.mrb[0].mxu0
    %v1402 = vadd.f32 0.0, %v1401
    %v1403 = vpop.f32.mrb[0].mxu0
    %1404 = vmatprep.mubr.f32.mxu0 0.0
    %1405 = vmatmul.mubr.f32.gmra.mrb[0].mxu0 %v888
    %v1406 = vpop.f32.mrb[0].mxu0
    %v1407 = vadd.f32 0.0, %v1406
    %v1408 = vpop.f32.mrb[0].mxu0
    %1409 = vmatprep.mubr.f32.mxu0 0.0
    %1410 = vmatmul.mubr.f32.gmra.mrb[0].mxu0 %v889
    %v1411 = vpop.f32.mrb[0].mxu0
    %v1412 = vadd.f32 0.0, %v1411
    %v1413 = vpop.f32.mrb[0].mxu0
    %1414 = vmatprep.mubr.f32.mxu0 0.0
    %1415 = vmatmul.mubr.f32.gmra.mrb[0].mxu0 %v890
    %v1416 = vpop.f32.mrb[0].mxu0
    %v1417 = vadd.f32 0.0, %v1416
    %v1418 = vpop.f32.mrb[0].mxu0
    %1419 = vmatprep.mubr.f32.mxu0 0.0
    %1420 = vmatmul.mubr.f32.gmra.mrb[0].mxu0 %v891
    %v1421 = vpop.f32.mrb[0].mxu0
    %v1422 = vadd.f32 0.0, %v1421
    %v1423 = vpop.f32.mrb[0].mxu0
    %1424 = vmatprep.mubr.f32.mxu0 0.0
    %1425 = vmatmul.mubr.f32.gmra.mrb[0].mxu0 %v892
    %v1426 = vpop.f32.mrb[0].mxu0
    %v1427 = vadd.f32 0.0, %v1426
    %v1428 = vpop.f32.mrb[0].mxu0
    %1429 = vmatprep.mubr.f32.mxu0 0.0
    %1430 = vmatmul.mubr.f32.gmra.mrb[0].mxu0 %v893
    %v1431 = vpop.f32.mrb[0].mxu0
    %v1432 = vadd.f32 0.0, %v1431
    %v1433 = vpop.f32.mrb[0].mxu0
    %1434 = vmatprep.mubr.f32.mxu0 0.0
    %1435 = vmatmul.mubr.f32.gmra.mrb[0].mxu0 %v894
    %v1436 = vpop.f32.mrb[0].mxu0
    %v1437 = vadd.f32 0.0, %v1436
    %v1438 = vpop.f32.mrb[0].mxu0
    %1439 = vmatprep.mubr.f32.mxu0 0.0
    %1440 = vmatmul.mubr.f32.gmra.mrb[0].mxu0 %v895
    %v1441 = vpop.f32.mrb[0].mxu0
    %v1442 = vadd.f32 0.0, %v1441
    %v1443 = vpop.f32.mrb[0].mxu0
    %1444 = vmatprep.mubr.f32.mxu0 0.0
    %1445 = vmatmul.mubr.f32.gmra.mrb[0].mxu0 %v896
    %v1446 = vpop.f32.mrb[0].mxu0
    %v1447 = vadd.f32 0.0, %v1446
    %v1448 = vpop.f32.mrb[0].mxu0
    %1449 = vmatprep.mubr.f32.mxu0 0.0
    %1450 = vmatmul.mubr.f32.gmra.mrb[0].mxu0 %v897
    %v1451 = vpop.f32.mrb[0].mxu0
    %v1452 = vadd.f32 0.0, %v1451
    %v1453 = vpop.f32.mrb[0].mxu0
    %1454 = vmatprep.mubr.f32.mxu0 0.0
    %1455 = vmatmul.mubr.f32.gmra.mrb[0].mxu0 %v898
    %v1456 = vpop.f32.mrb[0].mxu0
    %v1457 = vadd.f32 0.0, %v1456
    %v1458 = vpop.f32.mrb[0].mxu0
    %1459 = vmatprep.mubr.f32.mxu0 0.0
    %1460 = vmatmul.mubr.f32.gmra.mrb[0].mxu0 %v899
    %v1461 = vpop.f32.mrb[0].mxu0
    %v1462 = vadd.f32 0.0, %v1461
    %v1463 = vpop.f32.mrb[0].mxu0
    %1464 = vmatprep.mubr.f32.mxu0 0.0
    %1465 = vmatmul.mubr.f32.gmra.mrb[0].mxu0 %v900
    %v1466 = vpop.f32.mrb[0].mxu0
    %v1467 = vadd.f32 0.0, %v1466
    %v1468 = vpop.f32.mrb[0].mxu0
    %1469 = vmatprep.mubr.f32.mxu0 0.0
    %1470 = vmatmul.mubr.f32.gmra.mrb[0].mxu0 %v901
    %v1471 = vpop.f32.mrb[0].mxu0
    %v1472 = vadd.f32 0.0, %v1471
    %v1473 = vpop.f32.mrb[0].mxu0
    %1474 = vmatprep.mubr.f32.mxu0 0.0
    %1475 = vmatmul.mubr.f32.gmra.mrb[0].mxu0 %v902
    %v1476 = vpop.f32.mrb[0].mxu0
    %v1477 = vadd.f32 0.0, %v1476
    %v1478 = vpop.f32.mrb[0].mxu0
    %1479 = vmatprep.mubr.f32.mxu0 0.0
    %1480 = vmatmul.mubr.f32.gmra.mrb[0].mxu0 %v903
    %v1481 = vpop.f32.mrb[0].mxu0
    %v1482 = vadd.f32 0.0, %v1481
    %v1483 = vpop.f32.mrb[0].mxu0
    %1484 = vmatprep.mubr.f32.mxu0 0.0
    %1485 = vmatmul.mubr.f32.gmra.mrb[0].mxu0 %v904
    %v1486 = vpop.f32.mrb[0].mxu0
    %v1487 = vadd.f32 0.0, %v1486
    %v1488 = vpop.f32.mrb[0].mxu0
    %1489 = vmatprep.mubr.f32.mxu0 0.0
    %1490 = vmatmul.mubr.f32.gmra.mrb[0].mxu0 %v905
    %v1491 = vpop.f32.mrb[0].mxu0
    %v1492 = vadd.f32 0.0, %v1491
    %v1493 = vpop.f32.mrb[0].mxu0
    %1494 = vmatprep.mubr.f32.mxu0 0.0
    %1495 = vmatmul.mubr.f32.gmra.mrb[0].mxu0 %v906
    %v1496 = vpop.f32.mrb[0].mxu0
    %v1497 = vadd.f32 0.0, %v1496
    %v1498 = vpop.f32.mrb[0].mxu0
    %1499 = vmatprep.mubr.f32.mxu0 0.0
    %1500 = vmatmul.mubr.f32.gmra.mrb[0].mxu0 %v907
    %v1501 = vpop.f32.mrb[0].mxu0
    %v1502 = vadd.f32 0.0, %v1501
    %v1503 = vpop.f32.mrb[0].mxu0
    %1504 = vmatprep.mubr.f32.mxu0 0.0
    %1505 = vmatmul.mubr.f32.gmra.mrb[0].mxu0 %v908
    %v1506 = vpop.f32.mrb[0].mxu0
    %v1507 = vadd.f32 0.0, %v1506
    %v1508 = vpop.f32.mrb[0].mxu0
    %1509 = vmatprep.mubr.f32.mxu0 0.0
    %1510 = vmatmul.mubr.f32.gmra.mrb[0].mxu0 %v909
    %v1511 = vpop.f32.mrb[0].mxu0
    %v1512 = vadd.f32 0.0, %v1511
    %v1513 = vpop.f32.mrb[0].mxu0
    %1514 = vmatprep.mubr.f32.mxu0 0.0
    %1515 = vmatmul.mubr.f32.gmra.mrb[0].mxu0 %v910
    %v1516 = vpop.f32.mrb[0].mxu0
    %v1517 = vadd.f32 0.0, %v1516
    %v1518 = vpop.f32.mrb[0].mxu0
    %1519 = vmatprep.mubr.f32.mxu0 0.0
    %1520 = vmatmul.mubr.f32.gmra.mrb[0].mxu0 %v911
    %v1521 = vpop.f32.mrb[0].mxu0
    %v1522 = vadd.f32 0.0, %v1521
    %v1523 = vpop.f32.mrb[0].mxu0
    %1524 = vmatprep.mubr.f32.mxu0 0.0
    %1525 = vmatmul.mubr.f32.gmra.mrb[0].mxu0 %v912
    %v1526 = vpop.f32.mrb[0].mxu0
    %v1527 = vadd.f32 0.0, %v1526
    %v1528 = vpop.f32.mrb[0].mxu0
    %1529 = vmatprep.mubr.f32.mxu0 0.0
    %1530 = vmatmul.mubr.f32.gmra.mrb[0].mxu0 %v913
    %v1531 = vpop.f32.mrb[0].mxu0
    %v1532 = vadd.f32 0.0, %v1531
    %v1533 = vpop.f32.mrb[0].mxu0
    %1534 = vmatprep.mubr.f32.mxu0 0.0
    %1535 = vmatmul.mubr.f32.gmra.mrb[0].mxu0 %v914
    %v1536 = vpop.f32.mrb[0].mxu0
    %v1537 = vadd.f32 0.0, %v1536
    %v1538 = vpop.f32.mrb[0].mxu0
    %1539 = vmatprep.mubr.f32.mxu0 0.0
    %1540 = vmatmul.mubr.f32.gmra.mrb[0].mxu0 %v915
    %v1541 = vpop.f32.mrb[0].mxu0
    %v1542 = vadd.f32 0.0, %v1541
    %v1543 = vpop.f32.mrb[0].mxu0
    %1544 = vmatprep.mubr.f32.mxu0 0.0
    %1545 = vmatmul.mubr.f32.gmra.mrb[0].mxu0 %v916
    %v1546 = vpop.f32.mrb[0].mxu0
    %v1547 = vadd.f32 0.0, %v1546
    %v1548 = vpop.f32.mrb[0].mxu0
    %1549 = vmatprep.mubr.f32.mxu0 0.0
    %1550 = vmatmul.mubr.f32.gmra.mrb[0].mxu0 %v917
    %v1551 = vpop.f32.mrb[0].mxu0
    %v1552 = vadd.f32 0.0, %v1551
    %v1553 = vpop.f32.mrb[0].mxu0
    %1554 = vmatprep.mubr.f32.mxu0 0.0
    %1555 = vmatmul.mubr.f32.gmra.mrb[0].mxu0 %v918
    %v1556 = vpop.f32.mrb[0].mxu0
    %v1557 = vadd.f32 0.0, %v1556
    %v1558 = vpop.f32.mrb[0].mxu0
    %1559 = vmatprep.mubr.f32.mxu0 0.0
    %1560 = vmatmul.mubr.f32.gmra.mrb[0].mxu0 %v919
    %v1561 = vpop.f32.mrb[0].mxu0
    %v1562 = vadd.f32 0.0, %v1561
    %v1563 = vpop.f32.mrb[0].mxu0
    %1564 = vmatprep.mubr.f32.mxu0 0.0
    %1565 = vmatmul.mubr.f32.gmra.mrb[0].mxu0 %v920
    %v1566 = vpop.f32.mrb[0].mxu0
    %v1567 = vadd.f32 0.0, %v1566
    %v1568 = vpop.f32.mrb[0].mxu0
    %1569 = vmatprep.mubr.f32.mxu0 0.0
    %1570 = vmatmul.mubr.f32.gmra.mrb[0].mxu0 %v921
    %v1571 = vpop.f32.mrb[0].mxu0
    %v1572 = vadd.f32 0.0, %v1571
    %v1573 = vpop.f32.mrb[0].mxu0
    %1574 = vmatprep.mubr.f32.mxu0 0.0
    %1575 = vmatmul.mubr.f32.gmra.mrb[0].mxu0 %v922
    %v1576 = vpop.f32.mrb[0].mxu0
    %v1577 = vadd.f32 0.0, %v1576
    %v1578 = vpop.f32.mrb[0].mxu0
    %1579 = vmatprep.mubr.f32.mxu0 0.0
    %1580 = vmatmul.mubr.f32.gmra.mrb[0].mxu0 %v923
    %v1581 = vpop.f32.mrb[0].mxu0
    %v1582 = vadd.f32 0.0, %v1581
    %v1583 = vpop.f32.mrb[0].mxu0
    %1584 = vmatprep.mubr.f32.mxu0 0.0
    %1585 = vmatmul.mubr.f32.gmra.mrb[0].mxu0 %v924
    %v1586 = vpop.f32.mrb[0].mxu0
    %v1587 = vadd.f32 0.0, %v1586
    %v1588 = vpop.f32.mrb[0].mxu0
    %1589 = vmatprep.mubr.f32.mxu0 0.0
    %1590 = vmatmul.mubr.f32.gmra.mrb[0].mxu0 %v925
    %v1591 = vpop.f32.mrb[0].mxu0
    %v1592 = vadd.f32 0.0, %v1591
    %v1593 = vpop.f32.mrb[0].mxu0
    %1594 = vmatprep.mubr.f32.mxu0 0.0
    %1595 = vmatmul.mubr.f32.gmra.mrb[0].mxu0 %v926
    %v1596 = vpop.f32.mrb[0].mxu0
    %v1597 = vadd.f32 0.0, %v1596
    %v1598 = vpop.f32.mrb[0].mxu0
    %1599 = vmatprep.mubr.f32.mxu0 0.0
    %1600 = vmatmul.mubr.f32.gmra.mrb[0].mxu0 %v927
    %v1601 = vpop.f32.mrb[0].mxu0
    %v1602 = vadd.f32 0.0, %v1601
    %v1603 = vpop.f32.mrb[0].mxu0
    %1604 = vmatprep.mubr.f32.mxu0 0.0
    %1605 = vmatmul.mubr.f32.gmra.mrb[0].mxu0 %v928
    %v1606 = vpop.f32.mrb[0].mxu0
    %v1607 = vadd.f32 0.0, %v1606
    %v1608 = vpop.f32.mrb[0].mxu0
    %1609 = vmatprep.mubr.f32.mxu0 0.0
    %1610 = vmatmul.mubr.f32.gmra.mrb[0].mxu0 %v929
    %v1611 = vpop.f32.mrb[0].mxu0
    %v1612 = vadd.f32 0.0, %v1611
    %v1613 = vpop.f32.mrb[0].mxu0
    %1614 = vmatprep.mubr.f32.mxu0 0.0
    %1615 = vmatmul.mubr.f32.gmra.mrb[0].mxu0 %v930
    %v1616 = vpop.f32.mrb[0].mxu0
    %v1617 = vadd.f32 0.0, %v1616
    %v1618 = vpop.f32.mrb[0].mxu0
    %1619 = vmatprep.mubr.f32.mxu0 0.0
    %1620 = vmatmul.mubr.f32.gmra.mrb[0].mxu0 %v931
    %v1621 = vpop.f32.mrb[0].mxu0
    %v1622 = vadd.f32 0.0, %v1621
    %v1623 = vpop.f32.mrb[0].mxu0
    %1624 = vmatprep.mubr.f32.mxu0 0.0
    %1625 = vmatmul.mubr.f32.gmra.mrb[0].mxu0 %v932
    %v1626 = vpop.f32.mrb[0].mxu0
    %v1627 = vadd.f32 0.0, %v1626
    %v1628 = vpop.f32.mrb[0].mxu0
    %1629 = vmatprep.mubr.f32.mxu0 0.0
    %1630 = vmatmul.mubr.f32.gmra.mrb[0].mxu0 %v933
    %v1631 = vpop.f32.mrb[0].mxu0
    %v1632 = vadd.f32 0.0, %v1631
    %v1633 = vpop.f32.mrb[0].mxu0
    %1634 = vmatprep.mubr.f32.mxu0 0.0
    %1635 = vmatmul.mubr.f32.gmra.mrb[0].mxu0 %v934
    %v1636 = vpop.f32.mrb[0].mxu0
    %v1637 = vadd.f32 0.0, %v1636
    %v1638 = vpop.f32.mrb[0].mxu0
    %1639 = vmatprep.mubr.f32.mxu0 0.0
    %1640 = vmatmul.mubr.f32.gmra.mrb[0].mxu0 %v935
    %v1641 = vpop.f32.mrb[0].mxu0
    %v1642 = vadd.f32 0.0, %v1641
    %v1643 = vpop.f32.mrb[0].mxu0
    %1644 = vmatprep.mubr.f32.mxu0 0.0
    %1645 = vmatmul.mubr.f32.gmra.mrb[0].mxu0 %v936
    %v1646 = vpop.f32.mrb[0].mxu0
    %v1647 = vadd.f32 0.0, %v1646
    %v1648 = vpop.f32.mrb[0].mxu0
    %1649 = vmatprep.mubr.f32.mxu0 0.0
    %1650 = vmatmul.mubr.f32.gmra.mrb[0].mxu0 %v937
    %v1651 = vpop.f32.mrb[0].mxu0
    %v1652 = vadd.f32 0.0, %v1651
    %v1653 = vpop.f32.mrb[0].mxu0
    %1654 = vmatprep.mubr.f32.mxu0 0.0
    %1655 = vmatmul.mubr.f32.gmra.mrb[0].mxu0 %v938
    %v1656 = vpop.f32.mrb[0].mxu0
    %v1657 = vadd.f32 0.0, %v1656
    %v1658 = vpop.f32.mrb[0].mxu0
    %1659 = vmatprep.mubr.f32.mxu0 0.0
    %1660 = vmatmul.mubr.f32.gmra.mrb[0].mxu0 %v939
    %v1661 = vpop.f32.mrb[0].mxu0
    %v1662 = vadd.f32 0.0, %v1661
    %v1663 = vpop.f32.mrb[0].mxu0
    %1664 = vmatprep.mubr.f32.mxu0 0.0
    %1665 = vmatmul.mubr.f32.gmra.mrb[0].mxu0 %v940
    %v1666 = vpop.f32.mrb[0].mxu0
    %v1667 = vadd.f32 0.0, %v1666
    %v1668 = vpop.f32.mrb[0].mxu0
    %1669 = vmatprep.mubr.f32.mxu0 0.0
    %1670 = vmatmul.mubr.f32.gmra.mrb[0].mxu0 %v941
    %v1671 = vpop.f32.mrb[0].mxu0
    %v1672 = vadd.f32 0.0, %v1671
    %v1673 = vpop.f32.mrb[0].mxu0
    %1674 = vmatprep.mubr.f32.mxu0 0.0
    %1675 = vmatmul.mubr.f32.gmra.mrb[0].mxu0 %v942
    %v1676 = vpop.f32.mrb[0].mxu0
    %v1677 = vadd.f32 0.0, %v1676
    %v1678 = vpop.f32.mrb[0].mxu0
    %1679 = vmatprep.mubr.f32.mxu0 0.0
    %1680 = vmatmul.mubr.f32.gmra.mrb[0].mxu0 %v943
    %v1681 = vpop.f32.mrb[0].mxu0
    %v1682 = vadd.f32 0.0, %v1681
    %v1683 = vpop.f32.mrb[0].mxu0
    %1684 = vmatprep.mubr.f32.mxu0 0.0
    %1685 = vmatmul.mubr.f32.gmra.mrb[0].mxu0 %v944
    %v1686 = vpop.f32.mrb[0].mxu0
    %v1687 = vadd.f32 0.0, %v1686
    %v1688 = vpop.f32.mrb[0].mxu0
    %1689 = vmatprep.mubr.f32.mxu0 0.0
    %1690 = vmatmul.mubr.f32.gmra.mrb[0].mxu0 %v945
    %v1691 = vpop.f32.mrb[0].mxu0
    %v1692 = vadd.f32 0.0, %v1691
    %v1693 = vpop.f32.mrb[0].mxu0
    %1694 = vmatprep.mubr.f32.mxu0 0.0
    %1695 = vmatmul.mubr.f32.gmra.mrb[0].mxu0 %v946
    %v1696 = vpop.f32.mrb[0].mxu0
    %v1697 = vadd.f32 0.0, %v1696
    %v1698 = vpop.f32.mrb[0].mxu0
    %1699 = vmatprep.mubr.f32.mxu0 0.0
    %1700 = vmatmul.mubr.f32.gmra.mrb[0].mxu0 %v947
    %v1701 = vpop.f32.mrb[0].mxu0
    %v1702 = vadd.f32 0.0, %v1701
    %v1703 = vpop.f32.mrb[0].mxu0
    %1704 = vmatprep.mubr.f32.mxu0 0.0
    %1705 = vmatmul.mubr.f32.gmra.mrb[0].mxu0 %v948
    %v1706 = vpop.f32.mrb[0].mxu0
    %v1707 = vadd.f32 0.0, %v1706
    %v1708 = vpop.f32.mrb[0].mxu0
    %1709 = vmatprep.mubr.f32.mxu0 0.0
    %1710 = vmatmul.mubr.f32.gmra.mrb[0].mxu0 %v949
    %v1711 = vpop.f32.mrb[0].mxu0
    %v1712 = vadd.f32 0.0, %v1711
    %v1713 = vpop.f32.mrb[0].mxu0
    %1714 = vmatprep.mubr.f32.mxu0 0.0
    %1715 = vmatmul.mubr.f32.gmra.mrb[0].mxu0 %v950
    %v1716 = vpop.f32.mrb[0].mxu0
    %v1717 = vadd.f32 0.0, %v1716
    %v1718 = vpop.f32.mrb[0].mxu0
    %1719 = vmatprep.mubr.f32.mxu0 0.0
    %1720 = vmatmul.mubr.f32.gmra.mrb[0].mxu0 %v951
    %v1721 = vpop.f32.mrb[0].mxu0
    %v1722 = vadd.f32 0.0, %v1721
    %v1723 = vpop.f32.mrb[0].mxu0
    %1724 = vmatprep.mubr.f32.mxu0 0.0
    %1725 = vmatmul.mubr.f32.gmra.mrb[0].mxu0 %v952
    %v1726 = vpop.f32.mrb[0].mxu0
    %v1727 = vadd.f32 0.0, %v1726
    %v1728 = vpop.f32.mrb[0].mxu0
    %1729 = vmatprep.mubr.f32.mxu0 0.0
    %1730 = vmatmul.mubr.f32.gmra.mrb[0].mxu0 %v953
    %v1731 = vpop.f32.mrb[0].mxu0
    %v1732 = vadd.f32 0.0, %v1731
    %v1733 = vpop.f32.mrb[0].mxu0
    %1734 = vmatprep.mubr.f32.mxu0 0.0
    %1735 = vmatmul.mubr.f32.gmra.mrb[0].mxu0 %v954
    %v1736 = vpop.f32.mrb[0].mxu0
    %v1737 = vadd.f32 0.0, %v1736
    %v1738 = vpop.f32.mrb[0].mxu0
    %1739 = vmatprep.mubr.f32.mxu0 0.0
    %1740 = vmatmul.mubr.f32.gmra.mrb[0].mxu0 %v955
    %v1741 = vpop.f32.mrb[0].mxu0
    %v1742 = vadd.f32 0.0, %v1741
    %v1743 = vpop.f32.mrb[0].mxu0
    %1744 = vmatprep.mubr.f32.mxu0 0.0
    %1745 = vmatmul.mubr.f32.gmra.mrb[0].mxu0 %v956
    %v1746 = vpop.f32.mrb[0].mxu0
    %v1747 = vadd.f32 0.0, %v1746
    %v1748 = vpop.f32.mrb[0].mxu0
    %1749 = vmatprep.mubr.f32.mxu0 0.0
    %1750 = vmatmul.mubr.f32.gmra.mrb[0].mxu0 %v957
    %v1751 = vpop.f32.mrb[0].mxu0
    %v1752 = vadd.f32 0.0, %v1751
    %v1753 = vpop.f32.mrb[0].mxu0
    %1754 = vmatprep.mubr.f32.mxu0 0.0
    %1755 = vmatmul.mubr.f32.gmra.mrb[0].mxu0 %v958
    %v1756 = vpop.f32.mrb[0].mxu0
    %v1757 = vadd.f32 0.0, %v1756
    %v1758 = vpop.f32.mrb[0].mxu0
    %1759 = vmatprep.mubr.f32.mxu0 0.0
    %1760 = vmatmul.mubr.f32.gmra.mrb[0].mxu0 %v959
    %v1761 = vpop.f32.mrb[0].mxu0
    %v1762 = vadd.f32 0.0, %v1761
    %v1763 = vpop.f32.mrb[0].mxu0
    %1764 = vmatprep.mubr.f32.mxu0 0.0
    %1765 = vmatmul.mubr.f32.gmra.mrb[0].mxu0 %v960
    %v1766 = vpop.f32.mrb[0].mxu0
    %v1767 = vadd.f32 0.0, %v1766
    %v1768 = vpop.f32.mrb[0].mxu0
    %1769 = vmatprep.mubr.f32.mxu0 0.0
    %1770 = vmatmul.mubr.f32.gmra.mrb[0].mxu0 %v961
    %v1771 = vpop.f32.mrb[0].mxu0
    %v1772 = vadd.f32 0.0, %v1771
    %v1773 = vpop.f32.mrb[0].mxu0
    %1774 = vmatprep.mubr.f32.mxu0 0.0
    %1775 = vmatmul.mubr.f32.gmra.mrb[0].mxu0 %v962
    %v1776 = vpop.f32.mrb[0].mxu0
    %v1777 = vadd.f32 0.0, %v1776
    %v1778 = vpop.f32.mrb[0].mxu0
    %1779 = vmatprep.mubr.f32.mxu0 0.0
    %1780 = vmatmul.mubr.f32.gmra.mrb[0].mxu0 %v963
    %v1781 = vpop.f32.mrb[0].mxu0
    %v1782 = vadd.f32 0.0, %v1781
    %v1783 = vpop.f32.mrb[0].mxu0
    %1784 = vmatprep.mubr.f32.mxu0 0.0
    %1785 = vmatmul.mubr.f32.gmra.mrb[0].mxu0 %v964
    %v1786 = vpop.f32.mrb[0].mxu0
    %v1787 = vadd.f32 0.0, %v1786
    %v1788 = vpop.f32.mrb[0].mxu0
    %1789 = vmatprep.mubr.f32.mxu0 0.0
    %1790 = vmatmul.mubr.f32.gmra.mrb[0].mxu0 %v965
    %v1791 = vpop.f32.mrb[0].mxu0
    %v1792 = vadd.f32 0.0, %v1791
    %v1793 = vpop.f32.mrb[0].mxu0
    %1794 = vmatprep.mubr.f32.mxu0 0.0
    %1795 = vmatmul.mubr.f32.gmra.mrb[0].mxu0 %v966
    %v1796 = vpop.f32.mrb[0].mxu0
    %v1797 = vadd.f32 0.0, %v1796
    %v1798 = vpop.f32.mrb[0].mxu0
    %1799 = vmatprep.mubr.f32.mxu0 0.0
    %1800 = vmatmul.mubr.f32.gmra.mrb[0].mxu0 %v967
    %v1801 = vpop.f32.mrb[0].mxu0
    %v1802 = vadd.f32 0.0, %v1801
    %v1803 = vpop.f32.mrb[0].mxu0
    %1804 = vmatprep.mubr.f32.mxu0 0.0
    %1805 = vmatmul.mubr.f32.gmra.mrb[0].mxu0 %v968
    %v1806 = vpop.f32.mrb[0].mxu0
    %v1807 = vadd.f32 0.0, %v1806
    %v1808 = vpop.f32.mrb[0].mxu0
    %1809 = vmatprep.mubr.f32.mxu0 0.0
    %1810 = vmatmul.mubr.f32.gmra.mrb[0].mxu0 %v969
    %v1811 = vpop.f32.mrb[0].mxu0
    %v1812 = vadd.f32 0.0, %v1811
    %v1813 = vpop.f32.mrb[0].mxu0
    %1814 = vmatprep.mubr.f32.mxu0 0.0
    %1815 = vmatmul.mubr.f32.gmra.mrb[0].mxu0 %v970
    %v1816 = vpop.f32.mrb[0].mxu0
    %v1817 = vadd.f32 0.0, %v1816
    %v1818 = vpop.f32.mrb[0].mxu0
    %1819 = vmatprep.mubr.f32.mxu0 0.0
    %1820 = vmatmul.mubr.f32.gmra.mrb[0].mxu0 %v971
    %v1821 = vpop.f32.mrb[0].mxu0
    %v1822 = vadd.f32 0.0, %v1821
    %v1823 = vpop.f32.mrb[0].mxu0
    %1824 = vmatprep.mubr.f32.mxu0 0.0
    %1825 = vmatmul.mubr.f32.gmra.mrb[0].mxu0 %v972
    %v1826 = vpop.f32.mrb[0].mxu0
    %v1827 = vadd.f32 0.0, %v1826
    %v1828 = vpop.f32.mrb[0].mxu0
    %1829 = vmatprep.mubr.f32.mxu0 0.0
    %1830 = vmatmul.mubr.f32.gmra.mrb[0].mxu0 %v973
    %v1831 = vpop.f32.mrb[0].mxu0
    %v1832 = vadd.f32 0.0, %v1831
    %v1833 = vpop.f32.mrb[0].mxu0
    %1834 = vmatprep.mubr.f32.mxu0 0.0
    %1835 = vmatmul.mubr.f32.gmra.mrb[0].mxu0 %v974
    %v1836 = vpop.f32.mrb[0].mxu0
    %v1837 = vadd.f32 0.0, %v1836
    %v1838 = vpop.f32.mrb[0].mxu0
    %1839 = vmatprep.mubr.f32.mxu0 0.0
    %1840 = vmatmul.mubr.f32.gmra.mrb[0].mxu0 %v975
    %v1841 = vpop.f32.mrb[0].mxu0
    %v1842 = vadd.f32 0.0, %v1841
    %v1843 = vpop.f32.mrb[0].mxu0
    %1844 = vmatprep.mubr.f32.mxu0 0.0
    %1845 = vmatmul.mubr.f32.gmra.mrb[0].mxu0 %v976
    %v1846 = vpop.f32.mrb[0].mxu0
    %v1847 = vadd.f32 0.0, %v1846
    %v1848 = vpop.f32.mrb[0].mxu0
    %1849 = vmatprep.mubr.f32.mxu0 0.0
    %1850 = vmatmul.mubr.f32.gmra.mrb[0].mxu0 %v977
    %v1851 = vpop.f32.mrb[0].mxu0
    %v1852 = vadd.f32 0.0, %v1851
    %v1853 = vpop.f32.mrb[0].mxu0
    %1854 = vmatprep.mubr.f32.mxu0 0.0
    %1855 = vmatmul.mubr.f32.gmra.mrb[0].mxu0 %v978
    %v1856 = vpop.f32.mrb[0].mxu0
    %v1857 = vadd.f32 0.0, %v1856
    %v1858 = vpop.f32.mrb[0].mxu0
    %1859 = vmatprep.mubr.f32.mxu0 0.0
    %1860 = vmatmul.mubr.f32.gmra.mrb[0].mxu0 %v979
    %v1861 = vpop.f32.mrb[0].mxu0
    %v1862 = vadd.f32 0.0, %v1861
    %v1863 = vpop.f32.mrb[0].mxu0
    %1864 = vmatprep.mubr.f32.mxu0 0.0
    %1865 = vmatmul.mubr.f32.gmra.mrb[0].mxu0 %v980
    %v1866 = vpop.f32.mrb[0].mxu0
    %v1867 = vadd.f32 0.0, %v1866
    %v1868 = vpop.f32.mrb[0].mxu0
    %1869 = vmatprep.mubr.f32.mxu0 0.0
    %1870 = vmatmul.mubr.f32.gmra.mrb[0].mxu0 %v981
    %v1871 = vpop.f32.mrb[0].mxu0
    %v1872 = vadd.f32 0.0, %v1871
    %v1873 = vpop.f32.mrb[0].mxu0
    %1874 = vmatprep.mubr.f32.mxu0 0.0
    %1875 = vmatmul.mubr.f32.gmra.mrb[0].mxu0 %v982
    %v1876 = vpop.f32.mrb[0].mxu0
    %v1877 = vadd.f32 0.0, %v1876
    %v1878 = vpop.f32.mrb[0].mxu0
    %1879 = vmatprep.mubr.f32.mxu0 0.0
    %1880 = vmatmul.mubr.f32.gmra.mrb[0].mxu0 %v983
    %v1881 = vpop.f32.mrb[0].mxu0
    %v1882 = vadd.f32 0.0, %v1881
    %v1883 = vpop.f32.mrb[0].mxu0
    %1884 = vmatprep.mubr.f32.mxu0 0.0
    %1885 = vmatmul.mubr.f32.gmra.mrb[0].mxu0 %v984
    %v1886 = vpop.f32.mrb[0].mxu0
    %v1887 = vadd.f32 0.0, %v1886
    %v1888 = vpop.f32.mrb[0].mxu0
    %1889 = vmatprep.mubr.f32.mxu0 0.0
    %1890 = vmatmul.mubr.f32.gmra.mrb[0].mxu0 %v985
    %v1891 = vpop.f32.mrb[0].mxu0
    %v1892 = vadd.f32 0.0, %v1891
    %v1893 = vpop.f32.mrb[0].mxu0
    %1894 = vmatprep.mubr.f32.mxu0 0.0
    %1895 = vmatmul.mubr.f32.gmra.mrb[0].mxu0 %v986
    %v1896 = vpop.f32.mrb[0].mxu0
    %v1897 = vadd.f32 0.0, %v1896
    %v1898 = vpop.f32.mrb[0].mxu0
    %1899 = vmatprep.mubr.f32.mxu0 0.0
    %1900 = vmatmul.mubr.f32.gmra.mrb[0].mxu0 %v987
    %v1901 = vpop.f32.mrb[0].mxu0
    %v1902 = vadd.f32 0.0, %v1901
    %v1903 = vpop.f32.mrb[0].mxu0
    %1904 = vmatprep.mubr.f32.mxu0 0.0
    %1905 = vmatmul.mubr.f32.gmra.mrb[0].mxu0 %v988
    %v1906 = vpop.f32.mrb[0].mxu0
    %v1907 = vadd.f32 0.0, %v1906
    %v1908 = vpop.f32.mrb[0].mxu0
    %1909 = vmatprep.mubr.f32.mxu0 0.0
    %1910 = vmatmul.mubr.f32.gmra.mrb[0].mxu0 %v989
    %v1911 = vpop.f32.mrb[0].mxu0
    %v1912 = vadd.f32 0.0, %v1911
    %v1913 = vpop.f32.mrb[0].mxu0
    %1914 = vmatprep.mubr.f32.mxu0 0.0
    %1915 = vmatmul.mubr.f32.gmra.mrb[0].mxu0 %v990
    %v1916 = vpop.f32.mrb[0].mxu0
    %v1917 = vadd.f32 0.0, %v1916
    %v1918 = vpop.f32.mrb[0].mxu0
    %1919 = vmatprep.mubr.f32.mxu0 0.0
    %1920 = vmatmul.mubr.f32.gmra.mrb[0].mxu0 %v991
    %v1921 = vpop.f32.mrb[0].mxu0
    %v1922 = vadd.f32 0.0, %v1921
    %v1923 = vpop.f32.mrb[0].mxu0
    %1924 = vmatprep.mubr.f32.mxu0 0.0
    %1925 = vmatmul.mubr.f32.gmra.mrb[0].mxu0 %v992
    %v1926 = vpop.f32.mrb[0].mxu0
    %v1927 = vadd.f32 0.0, %v1926
    %v1928 = vpop.f32.mrb[0].mxu0
    %1929 = vmatprep.mubr.f32.mxu0 0.0
    %1930 = vmatmul.mubr.f32.gmra.mrb[0].mxu0 %v993
    %v1931 = vpop.f32.mrb[0].mxu0
    %v1932 = vadd.f32 0.0, %v1931
    %v1933 = vpop.f32.mrb[0].mxu0
    %1934 = vmatprep.mubr.f32.mxu0 0.0
    %1935 = vmatmul.mubr.f32.gmra.mrb[0].mxu0 %v994
    %v1936 = vpop.f32.mrb[0].mxu0
    %v1937 = vadd.f32 0.0, %v1936
    %v1938 = vpop.f32.mrb[0].mxu0
    %1939 = vmatprep.mubr.f32.mxu0 0.0
    %1940 = vmatmul.mubr.f32.gmra.mrb[0].mxu0 %v995
    %v1941 = vpop.f32.mrb[0].mxu0
    %v1942 = vadd.f32 0.0, %v1941
    %v1943 = vpop.f32.mrb[0].mxu0
    %1944 = vmatprep.mubr.f32.mxu0 0.0
    %1945 = vmatmul.mubr.f32.gmra.mrb[0].mxu0 %v996
    %v1946 = vpop.f32.mrb[0].mxu0
    %v1947 = vadd.f32 0.0, %v1946
    %v1948 = vpop.f32.mrb[0].mxu0
    %1949 = vmatprep.mubr.f32.mxu0 0.0
    %1950 = vmatmul.mubr.f32.gmra.mrb[0].mxu0 %v997
    %v1951 = vpop.f32.mrb[0].mxu0
    %v1952 = vadd.f32 0.0, %v1951
    %v1953 = vpop.f32.mrb[0].mxu0
    %1954 = vmatprep.mubr.f32.mxu0 0.0
    %1955 = vmatmul.mubr.f32.gmra.mrb[0].mxu0 %v998
    %v1956 = vpop.f32.mrb[0].mxu0
    %v1957 = vadd.f32 0.0, %v1956
    %v1958 = vpop.f32.mrb[0].mxu0
    %1959 = vmatprep.mubr.f32.mxu0 0.0
    %1960 = vmatmul.mubr.f32.gmra.mrb[0].mxu0 %v999
    %v1961 = vpop.f32.mrb[0].mxu0
    %v1962 = vadd.f32 0.0, %v1961
    %v1963 = vpop.f32.mrb[0].mxu0
    %1964 = vmatprep.mubr.f32.mxu0 0.0
    %1965 = vmatmul.mubr.f32.gmra.mrb[0].mxu0 %v1000
    %v1966 = vpop.f32.mrb[0].mxu0
    %v1967 = vadd.f32 0.0, %v1966
    %v1968 = vpop.f32.mrb[0].mxu0
    %1969 = vmatprep.mubr.f32.mxu0 0.0
    %1970 = vmatmul.mubr.f32.gmra.mrb[0].mxu0 %v1001
    %v1971 = vpop.f32.mrb[0].mxu0
    %v1972 = vadd.f32 0.0, %v1971
    %v1973 = vpop.f32.mrb[0].mxu0
    %1974 = vmatprep.mubr.f32.mxu0 0.0
    %1975 = vmatmul.mubr.f32.gmra.mrb[0].mxu0 %v1002
    %v1976 = vpop.f32.mrb[0].mxu0
    %v1977 = vadd.f32 0.0, %v1976
    %v1978 = vpop.f32.mrb[0].mxu0
    %1979 = vmatprep.mubr.f32.mxu0 0.0
    %1980 = vmatmul.mubr.f32.gmra.mrb[0].mxu0 %v1003
    %v1981 = vpop.f32.mrb[0].mxu0
    %v1982 = vadd.f32 0.0, %v1981
    %v1983 = vpop.f32.mrb[0].mxu0
    %1984 = vmatprep.mubr.f32.mxu0 0.0
    %1985 = vmatmul.mubr.f32.gmra.mrb[0].mxu0 %v1004
    %v1986 = vpop.f32.mrb[0].mxu0
    %v1987 = vadd.f32 0.0, %v1986
    %v1988 = vpop.f32.mrb[0].mxu0
    %1989 = vmatprep.mubr.f32.mxu0 0.0
    %1990 = vmatmul.mubr.f32.gmra.mrb[0].mxu0 %v1005
    %v1991 = vpop.f32.mrb[0].mxu0
    %v1992 = vadd.f32 0.0, %v1991
    %v1993 = vpop.f32.mrb[0].mxu0
    %1994 = vmatprep.mubr.f32.mxu0 0.0
    %1995 = vmatmul.mubr.f32.gmra.mrb[0].mxu0 %v1006
    %v1996 = vpop.f32.mrb[0].mxu0
    %v1997 = vadd.f32 0.0, %v1996
    %v1998 = vpop.f32.mrb[0].mxu0
    %1999 = vmatprep.mubr.f32.mxu0 0.0
    %2000 = vmatmul.mubr.f32.gmra.mrb[0].mxu0 %v1007
    %v2001 = vpop.f32.mrb[0].mxu0
    %v2002 = vadd.f32 0.0, %v2001
    %v2003 = vpop.f32.mrb[0].mxu0
    %2004 = vmatprep.mubr.f32.mxu0 0.0
    %2005 = vmatmul.mubr.f32.gmra.mrb[0].mxu0 %v1008
    %v2006 = vpop.f32.mrb[0].mxu0
    %v2007 = vadd.f32 0.0, %v2006
    %v2008 = vpop.f32.mrb[0].mxu0
    %2009 = vmatprep.mubr.f32.mxu0 0.0
    %2010 = vmatmul.mubr.f32.gmra.mrb[0].mxu0 %v1009
    %v2011 = vpop.f32.mrb[0].mxu0
    %v2012 = vadd.f32 0.0, %v2011
    %v2013 = vpop.f32.mrb[0].mxu0
    %2014 = vmatprep.mubr.f32.mxu0 0.0
    %2015 = vmatmul.mubr.f32.gmra.mrb[0].mxu0 %v1010
    %v2016 = vpop.f32.mrb[0].mxu0
    %v2017 = vadd.f32 0.0, %v2016
    %v2018 = vpop.f32.mrb[0].mxu0
    %2019 = vmatprep.mubr.f32.mxu0 0.0
    %2020 = vmatmul.mubr.f32.gmra.mrb[0].mxu0 %v1011
    %v2021 = vpop.f32.mrb[0].mxu0
    %v2022 = vadd.f32 0.0, %v2021
    %v2023 = vpop.f32.mrb[0].mxu0
    %2024 = vmatprep.mubr.f32.mxu0 0.0
    %2025 = vmatmul.mubr.f32.gmra.mrb[0].mxu0 %v1012
    %v2026 = vpop.f32.mrb[0].mxu0
    %v2027 = vadd.f32 0.0, %v2026
    %v2028 = vpop.f32.mrb[0].mxu0
    %2029 = vmatprep.mubr.f32.mxu0 0.0
    %2030 = vmatmul.mubr.f32.gmra.mrb[0].mxu0 %v1013
    %v2031 = vpop.f32.mrb[0].mxu0
    %v2032 = vadd.f32 0.0, %v2031
    %v2033 = vpop.f32.mrb[0].mxu0
    %2034 = vmatprep.mubr.f32.mxu0 0.0
    %2035 = vmatmul.mubr.f32.gmra.mrb[0].mxu0 %v1014
    %v2036 = vpop.f32.mrb[0].mxu0
    %v2037 = vadd.f32 0.0, %v2036
    %v2038 = vpop.f32.mrb[0].mxu0
    %2039 = vmatprep.mubr.f32.mxu0 0.0
    %2040 = vmatmul.mubr.f32.gmra.mrb[0].mxu0 %v1015
    %v2041 = vpop.f32.mrb[0].mxu0
    %v2042 = vadd.f32 0.0, %v2041
    %v2043 = vpop.f32.mrb[0].mxu0
    %2044 = vmatprep.mubr.f32.mxu0 0.0
    %2045 = vmatmul.mubr.f32.gmra.mrb[0].mxu0 %v1016
    %v2046 = vpop.f32.mrb[0].mxu0
    %v2047 = vadd.f32 0.0, %v2046
    %v2048 = vpop.f32.mrb[0].mxu0
    %2049 = vmatprep.mubr.f32.mxu0 0.0
    %2050 = vmatmul.mubr.f32.gmra.mrb[0].mxu0 %v1017
    %v2051 = vpop.f32.mrb[0].mxu0
    %v2052 = vadd.f32 0.0, %v2051
    %v2053 = vpop.f32.mrb[0].mxu0
    %2054 = vmatprep.mubr.f32.mxu0 0.0
    %2055 = vmatmul.mubr.f32.gmra.mrb[0].mxu0 %v1018
    %v2056 = vpop.f32.mrb[0].mxu0
    %v2057 = vadd.f32 0.0, %v2056
    %v2058 = vpop.f32.mrb[0].mxu0
    %2059 = vmatprep.mubr.f32.mxu0 0.0
    %2060 = vmatmul.mubr.f32.gmra.mrb[0].mxu0 %v1019
    %v2061 = vpop.f32.mrb[0].mxu0
    %v2062 = vadd.f32 0.0, %v2061
    %v2063 = vpop.f32.mrb[0].mxu0
    %2064 = vmatprep.mubr.f32.mxu0 0.0
    %2065 = vmatmul.mubr.f32.gmra.mrb[0].mxu0 %v1020
    %v2066 = vpop.f32.mrb[0].mxu0
    %v2067 = vadd.f32 0.0, %v2066
    %v2068 = vpop.f32.mrb[0].mxu0
    %2069 = vmatprep.mubr.f32.mxu0 0.0
    %2070 = vmatmul.mubr.f32.gmra.mrb[0].mxu0 %v1021
    %v2071 = vpop.f32.mrb[0].mxu0
    %v2072 = vadd.f32 0.0, %v2071
    %v2073 = vpop.f32.mrb[0].mxu0
    %2074 = vmatprep.mubr.f32.mxu0 0.0
    %2075 = vmatmul.mubr.f32.gmra.mrb[0].mxu0 %v1022
    %v2076 = vpop.f32.mrb[0].mxu0
    %v2077 = vadd.f32 0.0, %v2076
    %v2078 = vpop.f32.mrb[0].mxu0
    %2079 = vmatprep.mubr.f32.mxu0 0.0
    %2080 = vmatmul.mubr.f32.gmra.mrb[0].mxu0 %v1023
    %v2081 = vpop.f32.mrb[0].mxu0
    %v2082 = vadd.f32 0.0, %v2081
    %v2083 = vpop.f32.mrb[0].mxu0
    %2084 = vmatprep.mubr.f32.mxu0 0.0
    %2085 = vmatmul.mubr.f32.gmra.mrb[0].mxu0 %v1024
    %v2086 = vpop.f32.mrb[0].mxu0
    %v2087 = vadd.f32 0.0, %v2086
    %v2088 = vpop.f32.mrb[0].mxu0
    %2089 = vmatprep.mubr.f32.mxu0 0.0
    %2090 = vmatmul.mubr.f32.gmra.mrb[0].mxu0 %v1025
    %v2091 = vpop.f32.mrb[0].mxu0
    %v2092 = vadd.f32 0.0, %v2091
    %v2093 = vpop.f32.mrb[0].mxu0
    %2094 = vmatprep.mubr.f32.mxu0 0.0
    %2095 = vmatmul.mubr.f32.gmra.mrb[0].mxu0 %v1026
    %v2096 = vpop.f32.mrb[0].mxu0
    %v2097 = vadd.f32 0.0, %v2096
    %v2098 = vpop.f32.mrb[0].mxu0
    %2099 = vmatprep.mubr.f32.mxu0 0.0
    %2100 = vmatmul.mubr.f32.gmra.mrb[0].mxu0 %v1027
    %v2101 = vpop.f32.mrb[0].mxu0
    %v2102 = vadd.f32 0.0, %v2101
    %v2103 = vpop.f32.mrb[0].mxu0
    %2104 = vmatprep.mubr.f32.mxu0 0.0
    %2105 = vmatmul.mubr.f32.gmra.mrb[0].mxu0 %v1028
    %v2106 = vpop.f32.mrb[0].mxu0
    %v2107 = vadd.f32 0.0, %v2106
    %v2108 = vpop.f32.mrb[0].mxu0
    %2109 = vmatprep.mubr.f32.mxu0 0.0
    %2110 = vmatmul.mubr.f32.gmra.mrb[0].mxu0 %v1029
    %v2111 = vpop.f32.mrb[0].mxu0
    %v2112 = vadd.f32 0.0, %v2111
    %v2113 = vpop.f32.mrb[0].mxu0
    %2114 = vmatprep.mubr.f32.mxu0 0.0
    %2115 = vmatmul.mubr.f32.gmra.mrb[0].mxu0 %v1030
    %v2116 = vpop.f32.mrb[0].mxu0
    %v2117 = vadd.f32 0.0, %v2116
    %v2118 = vpop.f32.mrb[0].mxu0
    %2119 = vmatprep.mubr.f32.mxu0 0.0
    %2120 = vmatmul.mubr.f32.gmra.mrb[0].mxu0 %v1031
    %v2121 = vpop.f32.mrb[0].mxu0
    %v2122 = vadd.f32 0.0, %v2121
    %v2123 = vpop.f32.mrb[0].mxu0
    %2124 = vmatprep.mubr.f32.mxu0 0.0
    %2125 = vmatmul.mubr.f32.gmra.mrb[0].mxu0 %v1032
    %v2126 = vpop.f32.mrb[0].mxu0
    %v2127 = vadd.f32 0.0, %v2126
    %v2128 = vpop.f32.mrb[0].mxu0
    %2129 = vmatprep.mubr.f32.mxu0 0.0
    %2130 = vmatmul.mubr.f32.gmra.mrb[0].mxu0 %v1033
    %v2131 = vpop.f32.mrb[0].mxu0
    %v2132 = vadd.f32 0.0, %v2131
    %v2133 = vpop.f32.mrb[0].mxu0
    %2134 = vmatprep.mubr.f32.mxu0 0.0
    %2135 = vmatmul.mubr.f32.gmra.mrb[0].mxu0 %v1034
    %v2136 = vpop.f32.mrb[0].mxu0
    %v2137 = vadd.f32 0.0, %v2136
    %v2138 = vpop.f32.mrb[0].mxu0
    %2139 = vmatprep.mubr.f32.mxu0 0.0
    %2140 = vmatmul.mubr.f32.gmra.mrb[0].mxu0 %v1035
    %v2141 = vpop.f32.mrb[0].mxu0
    %v2142 = vadd.f32 0.0, %v2141
    %v2143 = vpop.f32.mrb[0].mxu0
    %2144 = vmatprep.mubr.f32.mxu0 0.0
    %2145 = vmatmul.mubr.f32.gmra.mrb[0].mxu0 %v1036
    %v2146 = vpop.f32.mrb[0].mxu0
    %v2147 = vadd.f32 0.0, %v2146
    %v2148 = vpop.f32.mrb[0].mxu0
    %2149 = vmatprep.mubr.f32.mxu0 0.0
    %2150 = vmatmul.mubr.f32.gmra.mrb[0].mxu0 %v1037
    %v2151 = vpop.f32.mrb[0].mxu0
    %v2152 = vadd.f32 0.0, %v2151
    %v2153 = vpop.f32.mrb[0].mxu0
    %2154 = vmatprep.mubr.f32.mxu0 0.0
    %2155 = vmatmul.mubr.f32.gmra.mrb[0].mxu0 %v1038
    %v2156 = vpop.f32.mrb[0].mxu0
    %v2157 = vadd.f32 0.0, %v2156
    %v2158 = vpop.f32.mrb[0].mxu0
    %2159 = vmatprep.mubr.f32.mxu0 0.0
    %2160 = vmatmul.mubr.f32.gmra.mrb[0].mxu0 %v1039
    %v2161 = vpop.f32.mrb[0].mxu0
    %v2162 = vadd.f32 0.0, %v2161
    %v2163 = vpop.f32.mrb[0].mxu0
    %2164 = vmatprep.mubr.f32.mxu0 0.0
    %2165 = vmatmul.mubr.f32.gmra.mrb[0].mxu0 %v1040
    %v2166 = vpop.f32.mrb[0].mxu0
    %v2167 = vadd.f32 0.0, %v2166
    %v2168 = vpop.f32.mrb[0].mxu0
    %2169 = vmatprep.mubr.f32.mxu0 0.0
    %2170 = vmatmul.mubr.f32.gmra.mrb[0].mxu0 %v1041
    %v2171 = vpop.f32.mrb[0].mxu0
    %v2172 = vadd.f32 0.0, %v2171
    %v2173 = vpop.f32.mrb[0].mxu0
    %2174 = vmatprep.mubr.f32.mxu0 0.0
    %2175 = vmatmul.mubr.f32.gmra.mrb[0].mxu0 %v1042
    %v2176 = vpop.f32.mrb[0].mxu0
    %v2177 = vadd.f32 0.0, %v2176
    %v2178 = vpop.f32.mrb[0].mxu0
    %2179 = vmatprep.mubr.f32.mxu0 0.0
    %2180 = vmatmul.mubr.f32.gmra.mrb[0].mxu0 %v1043
    %v2181 = vpop.f32.mrb[0].mxu0
    %v2182 = vadd.f32 0.0, %v2181
    %v2183 = vpop.f32.mrb[0].mxu0
    %2184 = vmatprep.mubr.f32.mxu0 0.0
    %2185 = vmatmul.mubr.f32.gmra.mrb[0].mxu0 %v1044
    %v2186 = vpop.f32.mrb[0].mxu0
    %v2187 = vadd.f32 0.0, %v2186
    %v2188 = vpop.f32.mrb[0].mxu0
    %2189 = vmatprep.mubr.f32.mxu0 0.0
    %2190 = vmatmul.mubr.f32.gmra.mrb[0].mxu0 %v1045
    %v2191 = vpop.f32.mrb[0].mxu0
    %v2192 = vadd.f32 0.0, %v2191
    %v2193 = vpop.f32.mrb[0].mxu0
    %2194 = vmatprep.mubr.f32.mxu0 0.0
    %2195 = vmatmul.mubr.f32.gmra.mrb[0].mxu0 %v1046
    %v2196 = vpop.f32.mrb[0].mxu0
    %v2197 = vadd.f32 0.0, %v2196
    %v2198 = vpop.f32.mrb[0].mxu0
    %2199 = vmatprep.mubr.f32.mxu0 0.0
    %2200 = vmatmul.mubr.f32.gmra.mrb[0].mxu0 %v1047
    %v2201 = vpop.f32.mrb[0].mxu0
    %v2202 = vadd.f32 0.0, %v2201
    %v2203 = vpop.f32.mrb[0].mxu0
    %2204 = vmatprep.mubr.f32.mxu0 0.0
    %2205 = vmatmul.mubr.f32.gmra.mrb[0].mxu0 %v1048
    %v2206 = vpop.f32.mrb[0].mxu0
    %v2207 = vadd.f32 0.0, %v2206
    %v2208 = vpop.f32.mrb[0].mxu0
    %2209 = vmatprep.mubr.f32.mxu0 0.0
    %2210 = vmatmul.mubr.f32.gmra.mrb[0].mxu0 %v1049
    %v2211 = vpop.f32.mrb[0].mxu0
    %v2212 = vadd.f32 0.0, %v2211
    %v2213 = vpop.f32.mrb[0].mxu0
    %2214 = vmatprep.mubr.f32.mxu0 0.0
    %2215 = vmatmul.mubr.f32.gmra.mrb[0].mxu0 %v1050
    %v2216 = vpop.f32.mrb[0].mxu0
    %v2217 = vadd.f32 0.0, %v2216
    %v2218 = vpop.f32.mrb[0].mxu0
    %2219 = vmatprep.mubr.f32.mxu0 0.0
    %2220 = vmatmul.mubr.f32.gmra.mrb[0].mxu0 %v1051
    %v2221 = vpop.f32.mrb[0].mxu0
    %v2222 = vadd.f32 0.0, %v2221
    %v2223 = vpop.f32.mrb[0].mxu0
    %2224 = vmatprep.mubr.f32.mxu0 0.0
    %2225 = vmatmul.mubr.f32.gmra.mrb[0].mxu0 %v1052
    %v2226 = vpop.f32.mrb[0].mxu0
    %v2227 = vadd.f32 0.0, %v2226
    %v2228 = vpop.f32.mrb[0].mxu0
    %2229 = vmatprep.mubr.f32.mxu0 0.0
    %2230 = vmatmul.mubr.f32.gmra.mrb[0].mxu0 %v1053
    %v2231 = vpop.f32.mrb[0].mxu0
    %v2232 = vadd.f32 0.0, %v2231
    %v2233 = vpop.f32.mrb[0].mxu0
    %2234 = vmatprep.mubr.f32.mxu0 0.0
    %2235 = vmatmul.mubr.f32.gmra.mrb[0].mxu0 %v1054
    %v2236 = vpop.f32.mrb[0].mxu0
    %v2237 = vadd.f32 0.0, %v2236
    %v2238 = vpop.f32.mrb[0].mxu0
    %2239 = vmatprep.mubr.f32.mxu0 0.0
    %2240 = vmatmul.mubr.f32.gmra.mrb[0].mxu0 %v1055
    %v2241 = vpop.f32.mrb[0].mxu0
    %v2242 = vadd.f32 0.0, %v2241
    %v2243 = vpop.f32.mrb[0].mxu0
    %2244 = vmatprep.mubr.f32.mxu0 0.0
    %2245 = vmatmul.mubr.f32.gmra.mrb[0].mxu0 %v1056
    %v2246 = vpop.f32.mrb[0].mxu0
    %v2247 = vadd.f32 0.0, %v2246
    %v2248 = vpop.f32.mrb[0].mxu0
    %2249 = vmatprep.mubr.f32.mxu0 0.0
    %2250 = vmatmul.mubr.f32.gmra.mrb[0].mxu0 %v1057
    %v2251 = vpop.f32.mrb[0].mxu0
    %v2252 = vadd.f32 0.0, %v2251
    %v2253 = vpop.f32.mrb[0].mxu0
    %2254 = vmatprep.mubr.f32.mxu0 0.0
    %2255 = vmatmul.mubr.f32.gmra.mrb[0].mxu0 %v1058
    %v2256 = vpop.f32.mrb[0].mxu0
    %v2257 = vadd.f32 0.0, %v2256
    %v2258 = vpop.f32.mrb[0].mxu0
    %2259 = vmatprep.mubr.f32.mxu0 0.0
    %2260 = vmatmul.mubr.f32.gmra.mrb[0].mxu0 %v1059
    %v2261 = vpop.f32.mrb[0].mxu0
    %v2262 = vadd.f32 0.0, %v2261
    %v2263 = vpop.f32.mrb[0].mxu0
    %2264 = vmatprep.mubr.f32.mxu0 0.0
    %2265 = vmatmul.mubr.f32.gmra.mrb[0].mxu0 %v1060
    %v2266 = vpop.f32.mrb[0].mxu0
    %v2267 = vadd.f32 0.0, %v2266
    %v2268 = vpop.f32.mrb[0].mxu0
    %2269 = vmatprep.mubr.f32.mxu0 0.0
    %2270 = vmatmul.mubr.f32.gmra.mrb[0].mxu0 %v1061
    %v2271 = vpop.f32.mrb[0].mxu0
    %v2272 = vadd.f32 0.0, %v2271
    %v2273 = vpop.f32.mrb[0].mxu0
    %2274 = vmatprep.mubr.f32.mxu0 0.0
    %2275 = vmatmul.mubr.f32.gmra.mrb[0].mxu0 %v1062
    %v2276 = vpop.f32.mrb[0].mxu0
    %v2277 = vadd.f32 0.0, %v2276
    %v2278 = vpop.f32.mrb[0].mxu0
    %2279 = vmatprep.mubr.f32.mxu0 0.0
    %2280 = vmatmul.mubr.f32.gmra.mrb[0].mxu0 %v1063
    %v2281 = vpop.f32.mrb[0].mxu0
    %v2282 = vadd.f32 0.0, %v2281
    %v2283 = vpop.f32.mrb[0].mxu0
    %2284 = vmatprep.mubr.f32.mxu0 0.0
    %2285 = vmatmul.mubr.f32.gmra.mrb[0].mxu0 %v1064
    %v2286 = vpop.f32.mrb[0].mxu0
    %v2287 = vadd.f32 0.0, %v2286
    %v2288 = vpop.f32.mrb[0].mxu0
    %2289 = vmatprep.mubr.f32.mxu0 0.0
    %2290 = vmatmul.mubr.f32.gmra.mrb[0].mxu0 %v1065
    %v2291 = vpop.f32.mrb[0].mxu0
    %v2292 = vadd.f32 0.0, %v2291
    %v2293 = vpop.f32.mrb[0].mxu0
    %2294 = vmatprep.mubr.f32.mxu0 0.0
    %2295 = vmatmul.mubr.f32.gmra.mrb[0].mxu0 %v1066
    %v2296 = vpop.f32.mrb[0].mxu0
    %v2297 = vadd.f32 0.0, %v2296
    %v2298 = vpop.f32.mrb[0].mxu0
    %2299 = vmatprep.mubr.f32.mxu0 0.0
    %2300 = vmatmul.mubr.f32.gmra.mrb[0].mxu0 %v1067
    %v2301 = vpop.f32.mrb[0].mxu0
    %v2302 = vadd.f32 0.0, %v2301
    %v2303 = vpop.f32.mrb[0].mxu0
    %2304 = vmatprep.mubr.f32.mxu0 0.0
    %2305 = vmatmul.mubr.f32.gmra.mrb[0].mxu0 %v1068
    %v2306 = vpop.f32.mrb[0].mxu0
    %v2307 = vadd.f32 0.0, %v2306
    %v2308 = vpop.f32.mrb[0].mxu0
    %2309 = vmatprep.mubr.f32.mxu0 0.0
    %2310 = vmatmul.mubr.f32.gmra.mrb[0].mxu0 %v1069
    %v2311 = vpop.f32.mrb[0].mxu0
    %v2312 = vadd.f32 0.0, %v2311
    %v2313 = vpop.f32.mrb[0].mxu0
    %2314 = vmatprep.mubr.f32.mxu0 0.0
    %2315 = vmatmul.mubr.f32.gmra.mrb[0].mxu0 %v1070
    %v2316 = vpop.f32.mrb[0].mxu0
    %v2317 = vadd.f32 0.0, %v2316
    %v2318 = vpop.f32.mrb[0].mxu0
    %2319 = vmatprep.mubr.f32.mxu0 0.0
    %2320 = vmatmul.mubr.f32.gmra.mrb[0].mxu0 %v1071
    %v2321 = vpop.f32.mrb[0].mxu0
    %v2322 = vadd.f32 0.0, %v2321
    %v2323 = vpop.f32.mrb[0].mxu0
    %2324 = vmatprep.mubr.f32.mxu0 0.0
    %2325 = vmatmul.mubr.f32.gmra.mrb[0].mxu0 %v1072
    %v2326 = vpop.f32.mrb[0].mxu0
    %v2327 = vadd.f32 0.0, %v2326
    %v2328 = vpop.f32.mrb[0].mxu0
    %2329 = vmatprep.mubr.f32.mxu0 0.0
    %2330 = vmatmul.mubr.f32.gmra.mrb[0].mxu0 %v1073
    %v2331 = vpop.f32.mrb[0].mxu0
    %v2332 = vadd.f32 0.0, %v2331
    %v2333 = vpop.f32.mrb[0].mxu0
    %2334 = vmatprep.mubr.f32.mxu0 0.0
    %2335 = vmatmul.mubr.f32.gmra.mrb[0].mxu0 %v1074
    %v2336 = vpop.f32.mrb[0].mxu0
    %v2337 = vadd.f32 0.0, %v2336
    %v2338 = vpop.f32.mrb[0].mxu0
    %2339 = vmatprep.mubr.f32.mxu0 0.0
    %2340 = vmatmul.mubr.f32.gmra.mrb[0].mxu0 %v1075
    %v2341 = vpop.f32.mrb[0].mxu0
    %v2342 = vadd.f32 0.0, %v2341
    %v2343 = vpop.f32.mrb[0].mxu0
    %2344 = vmatprep.mubr.f32.mxu0 0.0
    %2345 = vmatmul.mubr.f32.gmra.mrb[0].mxu0 %v1076
    %v2346 = vpop.f32.mrb[0].mxu0
    %v2347 = vadd.f32 0.0, %v2346
    %v2348 = vpop.f32.mrb[0].mxu0
    %2349 = vmatprep.mubr.f32.mxu0 0.0
    %2350 = vmatmul.mubr.f32.gmra.mrb[0].mxu0 %v1077
    %v2351 = vpop.f32.mrb[0].mxu0
    %v2352 = vadd.f32 0.0, %v2351
    %v2353 = vpop.f32.mrb[0].mxu0
    %2354 = vmatprep.mubr.f32.mxu0 0.0
    %2355 = vmatmul.mubr.f32.gmra.mrb[0].mxu0 %v1078
    %v2356 = vpop.f32.mrb[0].mxu0
    %v2357 = vadd.f32 0.0, %v2356
    %v2358 = vpop.f32.mrb[0].mxu0
    %2359 = vmatprep.mubr.f32.mxu0 0.0
    %2360 = vmatmul.mubr.f32.gmra.mrb[0].mxu0 %v1079
    %v2361 = vpop.f32.mrb[0].mxu0
    %v2362 = vadd.f32 0.0, %v2361
    %v2363 = vpop.f32.mrb[0].mxu0
    %2364 = vmatprep.mubr.f32.mxu0 0.0
    %2365 = vmatmul.mubr.f32.gmra.mrb[0].mxu0 %v1080
    %v2366 = vpop.f32.mrb[0].mxu0
    %v2367 = vadd.f32 0.0, %v2366
    %v2368 = vpop.f32.mrb[0].mxu0
    %2369 = vmatprep.mubr.f32.mxu0 0.0
    %2370 = vmatmul.mubr.f32.gmra.mrb[0].mxu0 %v1081
    %v2371 = vpop.f32.mrb[0].mxu0
    %v2372 = vadd.f32 0.0, %v2371
    %v2373 = vpop.f32.mrb[0].mxu0
    %2374 = vmatprep.mubr.f32.mxu0 0.0
    %2375 = vmatmul.mubr.f32.gmra.mrb[0].mxu0 %v1082
    %v2376 = vpop.f32.mrb[0].mxu0
    %v2377 = vadd.f32 0.0, %v2376
    %v2378 = vpop.f32.mrb[0].mxu0
    %2379 = vmatprep.mubr.f32.mxu0 0.0
    %2380 = vmatmul.mubr.f32.gmra.mrb[0].mxu0 %v1083
    %v2381 = vpop.f32.mrb[0].mxu0
    %v2382 = vadd.f32 0.0, %v2381
    %v2383 = vpop.f32.mrb[0].mxu0
    %2384 = vmatprep.mubr.f32.mxu0 0.0
    %2385 = vmatmul.mubr.f32.gmra.mrb[0].mxu0 %v1084
    %v2386 = vpop.f32.mrb[0].mxu0
    %v2387 = vadd.f32 0.0, %v2386
    %v2388 = vpop.f32.mrb[0].mxu0
    %2389 = vmatprep.mubr.f32.mxu0 0.0
    %2390 = vmatmul.mubr.f32.gmra.mrb[0].mxu0 %v1085
    %v2391 = vpop.f32.mrb[0].mxu0
    %v2392 = vadd.f32 0.0, %v2391
    %v2393 = vpop.f32.mrb[0].mxu0
    %2394 = vmatprep.mubr.f32.mxu0 0.0
    %2395 = vmatmul.mubr.f32.gmra.mrb[0].mxu0 %v1086
    %v2396 = vpop.f32.mrb[0].mxu0
    %v2397 = vadd.f32 0.0, %v2396
    %v2398 = vpop.f32.mrb[0].mxu0
    %2399 = vmatprep.mubr.f32.mxu0 0.0
    %2400 = vmatmul.mubr.f32.gmra.mrb[0].mxu0 %v1087
    %v2401 = vpop.f32.mrb[0].mxu0
    %v2402 = vadd.f32 0.0, %v2401
    %v2403 = vpop.f32.mrb[0].mxu0
    %2404 = vmatprep.mubr.f32.mxu0 0.0
    %2405 = vmatmul.mubr.f32.gmra.mrb[0].mxu0 %v1088
    %v2406 = vpop.f32.mrb[0].mxu0
    %v2407 = vadd.f32 0.0, %v2406
    %v2408 = vpop.f32.mrb[0].mxu0
    %2409 = vmatprep.mubr.f32.mxu0 0.0
    %2410 = vmatmul.mubr.f32.gmra.mrb[0].mxu0 %v1089
    %v2411 = vpop.f32.mrb[0].mxu0
    %v2412 = vadd.f32 0.0, %v2411
    %v2413 = vpop.f32.mrb[0].mxu0
    %2414 = vmatprep.mubr.f32.mxu0 0.0
    %2415 = vmatmul.mubr.f32.gmra.mrb[0].mxu0 %v1090
    %v2416 = vpop.f32.mrb[0].mxu0
    %v2417 = vadd.f32 0.0, %v2416
    %v2418 = vpop.f32.mrb[0].mxu0
    %2419 = vmatprep.mubr.f32.mxu0 0.0
    %2420 = vmatmul.mubr.f32.gmra.mrb[0].mxu0 %v1091
    %v2421 = vpop.f32.mrb[0].mxu0
    %v2422 = vadd.f32 0.0, %v2421
    %v2423 = vpop.f32.mrb[0].mxu0
    %2424 = vmatprep.mubr.f32.mxu0 0.0
    %2425 = vmatmul.mubr.f32.gmra.mrb[0].mxu0 %v1092
    %v2426 = vpop.f32.mrb[0].mxu0
    %v2427 = vadd.f32 0.0, %v2426
    %v2428 = vpop.f32.mrb[0].mxu0
    %2429 = vmatprep.mubr.f32.mxu0 0.0
    %2430 = vmatmul.mubr.f32.gmra.mrb[0].mxu0 %v1093
    %v2431 = vpop.f32.mrb[0].mxu0
    %v2432 = vadd.f32 0.0, %v2431
    %v2433 = vpop.f32.mrb[0].mxu0
    %2434 = vmatprep.mubr.f32.mxu0 0.0
    %2435 = vmatmul.mubr.f32.gmra.mrb[0].mxu0 %v1094
    %v2436 = vpop.f32.mrb[0].mxu0
    %v2437 = vadd.f32 0.0, %v2436
    %v2438 = vpop.f32.mrb[0].mxu0
    %2439 = vmatprep.mubr.f32.mxu0 0.0
    %2440 = vmatmul.mubr.f32.gmra.mrb[0].mxu0 %v1095
    %v2441 = vpop.f32.mrb[0].mxu0
    %v2442 = vadd.f32 0.0, %v2441
    %v2443 = vpop.f32.mrb[0].mxu0
    %2444 = vmatprep.mubr.f32.mxu0 0.0
    %2445 = vmatmul.mubr.f32.gmra.mrb[0].mxu0 %v1096
    %v2446 = vpop.f32.mrb[0].mxu0
    %v2447 = vadd.f32 0.0, %v2446
    %v2448 = vpop.f32.mrb[0].mxu0
    %2449 = vmatprep.mubr.f32.mxu0 0.0
    %2450 = vmatmul.mubr.f32.gmra.mrb[0].mxu0 %v1097
    %v2451 = vpop.f32.mrb[0].mxu0
    %v2452 = vadd.f32 0.0, %v2451
    %v2453 = vpop.f32.mrb[0].mxu0
    %2454 = vmatprep.mubr.f32.mxu0 0.0
    %2455 = vmatmul.mubr.f32.gmra.mrb[0].mxu0 %v1098
    %v2456 = vpop.f32.mrb[0].mxu0
    %v2457 = vadd.f32 0.0, %v2456
    %v2458 = vpop.f32.mrb[0].mxu0
    %2459 = vmatprep.mubr.f32.mxu0 0.0
    %2460 = vmatmul.mubr.f32.gmra.mrb[0].mxu0 %v1099
    %v2461 = vpop.f32.mrb[0].mxu0
    %v2462 = vadd.f32 0.0, %v2461
    %v2463 = vpop.f32.mrb[0].mxu0
    %2464 = vmatprep.mubr.f32.mxu0 0.0
    %2465 = vmatmul.mubr.f32.gmra.mrb[0].mxu0 %v1100
    %v2466 = vpop.f32.mrb[0].mxu0
    %v2467 = vadd.f32 0.0, %v2466
    %v2468 = vpop.f32.mrb[0].mxu0
    %2469 = vmatprep.mubr.f32.mxu0 0.0
    %2470 = vmatmul.mubr.f32.gmra.mrb[0].mxu0 %v1101
    %v2471 = vpop.f32.mrb[0].mxu0
    %v2472 = vadd.f32 0.0, %v2471
    %v2473 = vpop.f32.mrb[0].mxu0
    %2474 = vmatprep.mubr.f32.mxu0 0.0
    %2475 = vmatmul.mubr.f32.gmra.mrb[0].mxu0 %v1102
    %v2476 = vpop.f32.mrb[0].mxu0
    %v2477 = vadd.f32 0.0, %v2476
    %v2478 = vpop.f32.mrb[0].mxu0
    %2479 = vmatprep.mubr.f32.mxu0 0.0
    %2480 = vmatmul.mubr.f32.gmra.mrb[0].mxu0 %v1103
    %v2481 = vpop.f32.mrb[0].mxu0
    %v2482 = vadd.f32 0.0, %v2481
    %v2483 = vpop.f32.mrb[0].mxu0
    %2484 = vmatprep.mubr.f32.mxu0 0.0
    %2485 = vmatmul.mubr.f32.gmra.mrb[0].mxu0 %v1104
    %v2486 = vpop.f32.mrb[0].mxu0
    %v2487 = vadd.f32 0.0, %v2486
    %v2488 = vpop.f32.mrb[0].mxu0
    %2489 = vmatprep.mubr.f32.mxu0 0.0
    %2490 = vmatmul.mubr.f32.gmra.mrb[0].mxu0 %v1105
    %v2491 = vpop.f32.mrb[0].mxu0
    %v2492 = vadd.f32 0.0, %v2491
    %v2493 = vpop.f32.mrb[0].mxu0
    %2494 = vmatprep.mubr.f32.mxu0 0.0
    %2495 = vmatmul.mubr.f32.gmra.mrb[0].mxu0 %v1106
    %v2496 = vpop.f32.mrb[0].mxu0
    %v2497 = vadd.f32 0.0, %v2496
    %v2498 = vpop.f32.mrb[0].mxu0
    %2499 = vmatprep.mubr.f32.mxu0 0.0
    %2500 = vmatmul.mubr.f32.gmra.mrb[0].mxu0 %v1107
    %v2501 = vpop.f32.mrb[0].mxu0
    %v2502 = vadd.f32 0.0, %v2501
    %v2503 = vpop.f32.mrb[0].mxu0
    %2504 = vmatprep.mubr.f32.mxu0 0.0
    %2505 = vmatmul.mubr.f32.gmra.mrb[0].mxu0 %v1108
    %v2506 = vpop.f32.mrb[0].mxu0
    %v2507 = vadd.f32 0.0, %v2506
    %v2508 = vpop.f32.mrb[0].mxu0
    %2509 = vmatprep.mubr.f32.mxu0 0.0
    %2510 = vmatmul.mubr.f32.gmra.mrb[0].mxu0 %v1109
    %v2511 = vpop.f32.mrb[0].mxu0
    %v2512 = vadd.f32 0.0, %v2511
    %v2513 = vpop.f32.mrb[0].mxu0
    %2514 = vmatprep.mubr.f32.mxu0 0.0
    %2515 = vmatmul.mubr.f32.gmra.mrb[0].mxu0 %v1110
    %v2516 = vpop.f32.mrb[0].mxu0
    %v2517 = vadd.f32 0.0, %v2516
    %v2518 = vpop.f32.mrb[0].mxu0
    %2519 = vmatprep.mubr.f32.mxu0 0.0
    %2520 = vmatmul.mubr.f32.gmra.mrb[0].mxu0 %v1111
    %v2521 = vpop.f32.mrb[0].mxu0
    %v2522 = vadd.f32 0.0, %v2521
    %v2523 = vpop.f32.mrb[0].mxu0
    %2524 = vmatprep.mubr.f32.mxu0 0.0
    %2525 = vmatmul.mubr.f32.gmra.mrb[0].mxu0 %v1112
    %v2526 = vpop.f32.mrb[0].mxu0
    %v2527 = vadd.f32 0.0, %v2526
    %v2528 = vpop.f32.mrb[0].mxu0
    %2529 = vmatprep.mubr.f32.mxu0 0.0
    %2530 = vmatmul.mubr.f32.gmra.mrb[0].mxu0 %v1113
    %v2531 = vpop.f32.mrb[0].mxu0
    %v2532 = vadd.f32 0.0, %v2531
    %v2533 = vpop.f32.mrb[0].mxu0
    %2534 = vmatprep.mubr.f32.mxu0 0.0
    %2535 = vmatmul.mubr.f32.gmra.mrb[0].mxu0 %v1114
    %v2536 = vpop.f32.mrb[0].mxu0
    %v2537 = vadd.f32 0.0, %v2536
    %v2538 = vpop.f32.mrb[0].mxu0
    %2539 = vmatprep.mubr.f32.mxu0 0.0
    %2540 = vmatmul.mubr.f32.gmra.mrb[0].mxu0 %v1115
    %v2541 = vpop.f32.mrb[0].mxu0
    %v2542 = vadd.f32 0.0, %v2541
    %v2543 = vpop.f32.mrb[0].mxu0
    %2544 = vmatprep.mubr.f32.mxu0 0.0
    %2545 = vmatmul.mubr.f32.gmra.mrb[0].mxu0 %v1116
    %v2546 = vpop.f32.mrb[0].mxu0
    %v2547 = vadd.f32 0.0, %v2546
    %v2548 = vpop.f32.mrb[0].mxu0
    %2549 = vmatprep.mubr.f32.mxu0 0.0
    %2550 = vmatmul.mubr.f32.gmra.mrb[0].mxu0 %v1117
    %v2551 = vpop.f32.mrb[0].mxu0
    %v2552 = vadd.f32 0.0, %v2551
    %v2553 = vpop.f32.mrb[0].mxu0
    %2554 = vmatprep.mubr.f32.mxu0 0.0
    %2555 = vmatmul.mubr.f32.gmra.mrb[0].mxu0 %v1118
    %v2556 = vpop.f32.mrb[0].mxu0
    %v2557 = vadd.f32 0.0, %v2556
    %v2558 = vpop.f32.mrb[0].mxu0
    %2559 = vmatprep.mubr.f32.mxu0 0.0
    %2560 = vmatmul.mubr.f32.gmra.mrb[0].mxu0 %v1119
    %v2561 = vpop.f32.mrb[0].mxu0
    %v2562 = vadd.f32 0.0, %v2561
    %v2563 = vpop.f32.mrb[0].mxu0
    %2564 = vmatprep.mubr.f32.mxu0 0.0
    %2565 = vmatmul.mubr.f32.gmra.mrb[0].mxu0 %v1120
    %v2566 = vpop.f32.mrb[0].mxu0
    %v2567 = vadd.f32 0.0, %v2566
    %v2568 = vpop.f32.mrb[0].mxu0
    %2569 = vmatprep.mubr.f32.mxu0 0.0
    %2570 = vmatmul.mubr.f32.gmra.mrb[0].mxu0 %v1121
    %v2571 = vpop.f32.mrb[0].mxu0
    %v2572 = vadd.f32 0.0, %v2571
    %v2573 = vpop.f32.mrb[0].mxu0
    %2574 = vmatprep.mubr.f32.mxu0 0.0
    %2575 = vmatmul.mubr.f32.gmra.mrb[0].mxu0 %v1122
    %v2576 = vpop.f32.mrb[0].mxu0
    %v2577 = vadd.f32 0.0, %v2576
    %v2578 = vpop.f32.mrb[0].mxu0
    %2579 = vmatprep.mubr.f32.mxu0 0.0
    %2580 = vmatmul.mubr.f32.gmra.mrb[0].mxu0 %v1123
    %v2581 = vpop.f32.mrb[0].mxu0
    %v2582 = vadd.f32 0.0, %v2581
    %v2583 = vpop.f32.mrb[0].mxu0
    %2584 = vmatprep.mubr.f32.mxu0 0.0
    %2585 = vmatmul.mubr.f32.gmra.mrb[0].mxu0 %v1124
    %v2586 = vpop.f32.mrb[0].mxu0
    %v2587 = vadd.f32 0.0, %v2586
    %v2588 = vpop.f32.mrb[0].mxu0
    %2589 = vmatprep.mubr.f32.mxu0 0.0
    %2590 = vmatmul.mubr.f32.gmra.mrb[0].mxu0 %v1125
    %v2591 = vpop.f32.mrb[0].mxu0
    %v2592 = vadd.f32 0.0, %v2591
    %v2593 = vpop.f32.mrb[0].mxu0
    %2594 = vmatprep.mubr.f32.mxu0 0.0
    %2595 = vmatmul.mubr.f32.gmra.mrb[0].mxu0 %v1126
    %v2596 = vpop.f32.mrb[0].mxu0
    %v2597 = vadd.f32 0.0, %v2596
    %v2598 = vpop.f32.mrb[0].mxu0
    %2599 = vmatprep.mubr.f32.mxu0 0.0
    %2600 = vmatmul.mubr.f32.gmra.mrb[0].mxu0 %v1127
    %v2601 = vpop.f32.mrb[0].mxu0
    %v2602 = vadd.f32 0.0, %v2601
    %v2603 = vpop.f32.mrb[0].mxu0
    %2604 = vmatprep.mubr.f32.mxu0 0.0
    %2605 = vmatmul.mubr.f32.gmra.mrb[0].mxu0 %v1128
    %v2606 = vpop.f32.mrb[0].mxu0
    %v2607 = vadd.f32 0.0, %v2606
    %v2608 = vpop.f32.mrb[0].mxu0
    %2609 = vmatprep.mubr.f32.mxu0 0.0
    %2610 = vmatmul.mubr.f32.gmra.mrb[0].mxu0 %v1129
    %v2611 = vpop.f32.mrb[0].mxu0
    %v2612 = vadd.f32 0.0, %v2611
    %v2613 = vpop.f32.mrb[0].mxu0
    %2614 = vmatprep.mubr.f32.mxu0 0.0
    %2615 = vmatmul.mubr.f32.gmra.mrb[0].mxu0 %v1130
    %v2616 = vpop.f32.mrb[0].mxu0
    %v2617 = vadd.f32 0.0, %v2616
    %v2618 = vpop.f32.mrb[0].mxu0
    %2619 = vmatprep.mubr.f32.mxu0 0.0
    %2620 = vmatmul.mubr.f32.gmra.mrb[0].mxu0 %v1131
    %v2621 = vpop.f32.mrb[0].mxu0
    %v2622 = vadd.f32 0.0, %v2621
    %v2623 = vpop.f32.mrb[0].mxu0
    %2624 = vmatprep.mubr.f32.mxu0 0.0
    %2625 = vmatmul.mubr.f32.gmra.mrb[0].mxu0 %v1132
    %v2626 = vpop.f32.mrb[0].mxu0
    %v2627 = vadd.f32 0.0, %v2626
    %v2628 = vpop.f32.mrb[0].mxu0
    %2629 = vmatprep.mubr.f32.mxu0 0.0
    %2630 = vmatmul.mubr.f32.gmra.mrb[0].mxu0 %v1133
    %v2631 = vpop.f32.mrb[0].mxu0
    %v2632 = vadd.f32 0.0, %v2631
    %v2633 = vpop.f32.mrb[0].mxu0
    %2634 = vmatprep.mubr.f32.mxu0 0.0
    %2635 = vmatmul.mubr.f32.gmra.mrb[0].mxu0 %v1134
    %v2636 = vpop.f32.mrb[0].mxu0
    %v2637 = vadd.f32 0.0, %v2636
    %v2638 = vpop.f32.mrb[0].mxu0
    %2639 = vmatprep.mubr.f32.mxu0 0.0
    %2640 = vmatmul.mubr.f32.gmra.mrb[0].mxu0 %v1135
    %v2641 = vpop.f32.mrb[0].mxu0
    %v2642 = vadd.f32 0.0, %v2641
    %v2643 = vpop.f32.mrb[0].mxu0
    %2644 = vmatprep.mubr.f32.mxu0 0.0
    %2645 = vmatmul.mubr.f32.gmra.mrb[0].mxu0 %v1136
    %v2646 = vpop.f32.mrb[0].mxu0
    %v2647 = vadd.f32 0.0, %v2646
    %v2648 = vpop.f32.mrb[0].mxu0
    %2649 = vmatprep.mubr.f32.mxu0 0.0
    %2650 = vmatmul.mubr.f32.gmra.mrb[0].mxu0 %v1137
    %v2651 = vpop.f32.mrb[0].mxu0
    %v2652 = vadd.f32 0.0, %v2651
    %v2653 = vpop.f32.mrb[0].mxu0
    %2654 = vmatprep.mubr.f32.mxu0 0.0
    %2655 = vmatmul.mubr.f32.gmra.mrb[0].mxu0 %v1138
    %v2656 = vpop.f32.mrb[0].mxu0
    %v2657 = vadd.f32 0.0, %v2656
    %v2658 = vpop.f32.mrb[0].mxu0
    %2659 = vmatprep.mubr.f32.mxu0 0.0
    %2660 = vmatmul.mubr.f32.gmra.mrb[0].mxu0 %v1139
    %v2661 = vpop.f32.mrb[0].mxu0
    %v2662 = vadd.f32 0.0, %v2661
    %v2663 = vpop.f32.mrb[0].mxu0
    %2664 = vmatprep.mubr.f32.mxu0 0.0
    %2665 = vmatmul.mubr.f32.gmra.mrb[0].mxu0 %v1140
    %v2666 = vpop.f32.mrb[0].mxu0
    %v2667 = vadd.f32 0.0, %v2666
    %v2668 = vpop.f32.mrb[0].mxu0
    %2669 = vmatprep.mubr.f32.mxu0 0.0
    %2670 = vmatmul.mubr.f32.gmra.mrb[0].mxu0 %v1141
    %v2671 = vpop.f32.mrb[0].mxu0
    %v2672 = vadd.f32 0.0, %v2671
    %v2673 = vpop.f32.mrb[0].mxu0
    %2674 = vmatprep.mubr.f32.mxu0 0.0
    %2675 = vmatmul.mubr.f32.gmra.mrb[0].mxu0 %v1142
    %v2676 = vpop.f32.mrb[0].mxu0
    %v2677 = vadd.f32 0.0, %v2676
    %v2678 = vpop.f32.mrb[0].mxu0
    %2679 = vmatprep.mubr.f32.mxu0 0.0
    %2680 = vmatmul.mubr.f32.gmra.mrb[0].mxu0 %v1143
    %v2681 = vpop.f32.mrb[0].mxu0
    %v2682 = vadd.f32 0.0, %v2681
    %v2683 = vpop.f32.mrb[0].mxu0
    %2684 = vmatprep.mubr.f32.mxu0 0.0
    %2685 = vmatmul.mubr.f32.gmra.mrb[0].mxu0 %v1144
    %v2686 = vpop.f32.mrb[0].mxu0
    %v2687 = vadd.f32 0.0, %v2686
    %v2688 = vpop.f32.mrb[0].mxu0
    %2689 = vmatprep.mubr.f32.mxu0 0.0
    %2690 = vmatmul.mubr.f32.gmra.mrb[0].mxu0 %v1145
    %v2691 = vpop.f32.mrb[0].mxu0
    %v2692 = vadd.f32 0.0, %v2691
    %v2693 = vpop.f32.mrb[0].mxu0
    %2694 = vmatprep.mubr.f32.mxu0 0.0
    %2695 = vmatmul.mubr.f32.gmra.mrb[0].mxu0 %v1146
    %v2696 = vpop.f32.mrb[0].mxu0
    %v2697 = vadd.f32 0.0, %v2696
    %v2698 = vpop.f32.mrb[0].mxu0
    %2699 = vmatprep.mubr.f32.mxu0 0.0
    %2700 = vmatmul.mubr.f32.gmra.mrb[0].mxu0 %v1147
    %v2701 = vpop.f32.mrb[0].mxu0
    %v2702 = vadd.f32 0.0, %v2701
    %v2703 = vpop.f32.mrb[0].mxu0
    %2704 = vmatprep.mubr.f32.mxu0 0.0
    %2705 = vmatmul.mubr.f32.gmra.mrb[0].mxu0 %v1148
    %v2706 = vpop.f32.mrb[0].mxu0
    %v2707 = vadd.f32 0.0, %v2706
    %v2708 = vpop.f32.mrb[0].mxu0
    %2709 = vmatprep.mubr.f32.mxu0 0.0
    %2710 = vmatmul.mubr.f32.gmra.mrb[0].mxu0 %v1149
    %v2711 = vpop.f32.mrb[0].mxu0
    %v2712 = vadd.f32 0.0, %v2711
    %v2713 = vpop.f32.mrb[0].mxu0
    %2714 = vmatprep.mubr.f32.mxu0 0.0
    %2715 = vmatmul.mubr.f32.gmra.mrb[0].mxu0 %v1150
    %v2716 = vpop.f32.mrb[0].mxu0
    %v2717 = vadd.f32 0.0, %v2716
    %v2718 = vpop.f32.mrb[0].mxu0
    %2719 = vmatprep.mubr.f32.mxu0 0.0
    %2720 = vmatmul.mubr.f32.gmra.mrb[0].mxu0 %v1151
    %v2721 = vpop.f32.mrb[0].mxu0
    %v2722 = vadd.f32 0.0, %v2721
    %v2723 = vpop.f32.mrb[0].mxu0
    %2724 = vmatprep.mubr.f32.mxu0 0.0
    %2725 = vmatmul.mubr.f32.gmra.mrb[0].mxu0 %v1152
    %v2726 = vpop.f32.mrb[0].mxu0
    %v2727 = vadd.f32 0.0, %v2726
    %v2728 = vpop.f32.mrb[0].mxu0
    %2729 = vmatprep.mubr.f32.mxu0 0.0
    %2730 = vmatmul.mubr.f32.gmra.mrb[0].mxu0 %v1153
    %v2731 = vpop.f32.mrb[0].mxu0
    %v2732 = vadd.f32 0.0, %v2731
    %v2733 = vpop.f32.mrb[0].mxu0
    %2734 = vmatprep.mubr.f32.mxu0 0.0
    %2735 = vmatmul.mubr.f32.gmra.mrb[0].mxu0 %v1154
    %v2736 = vpop.f32.mrb[0].mxu0
    %v2737 = vadd.f32 0.0, %v2736
    %v2738 = vpop.f32.mrb[0].mxu0
    %2739 = vmatprep.mubr.f32.mxu0 0.0
    %2740 = vmatmul.mubr.f32.gmra.mrb[0].mxu0 %v1155
    %v2741 = vpop.f32.mrb[0].mxu0
    %v2742 = vadd.f32 0.0, %v2741
    %v2743 = vpop.f32.mrb[0].mxu0
    %2744 = vmatprep.mubr.f32.mxu0 0.0
    %2745 = vmatmul.mubr.f32.gmra.mrb[0].mxu0 %v1156
    %v2746 = vpop.f32.mrb[0].mxu0
    %v2747 = vadd.f32 0.0, %v2746
    %v2748 = vpop.f32.mrb[0].mxu0
    %2749 = vmatprep.mubr.f32.mxu0 0.0
    %2750 = vmatmul.mubr.f32.gmra.mrb[0].mxu0 %v1157
    %v2751 = vpop.f32.mrb[0].mxu0
    %v2752 = vadd.f32 0.0, %v2751
    %v2753 = vpop.f32.mrb[0].mxu0
    %2754 = vmatprep.mubr.f32.mxu0 0.0
    %2755 = vmatmul.mubr.f32.gmra.mrb[0].mxu0 %v1158
    %v2756 = vpop.f32.mrb[0].mxu0
    %v2757 = vadd.f32 0.0, %v2756
    %v2758 = vpop.f32.mrb[0].mxu0
    %2759 = vmatprep.mubr.f32.mxu0 0.0
    %2760 = vmatmul.mubr.f32.gmra.mrb[0].mxu0 %v1159
    %v2761 = vpop.f32.mrb[0].mxu0
    %v2762 = vadd.f32 0.0, %v2761
    %v2763 = vpop.f32.mrb[0].mxu0
    %2764 = vmatprep.mubr.f32.mxu0 0.0
    %2765 = vmatmul.mubr.f32.gmra.mrb[0].mxu0 %v1160
    %v2766 = vpop.f32.mrb[0].mxu0
    %v2767 = vadd.f32 0.0, %v2766
    %v2768 = vpop.f32.mrb[0].mxu0
    %2769 = vmatprep.mubr.f32.mxu0 0.0
    %2770 = vmatmul.mubr.f32.gmra.mrb[0].mxu0 %v1161
    %v2771 = vpop.f32.mrb[0].mxu0
    %v2772 = vadd.f32 0.0, %v2771
    %v2773 = vpop.f32.mrb[0].mxu0
    %2774 = vmatprep.mubr.f32.mxu0 0.0
    %2775 = vmatmul.mubr.f32.gmra.mrb[0].mxu0 %v1162
    %v2776 = vpop.f32.mrb[0].mxu0
    %v2777 = vadd.f32 0.0, %v2776
    %v2778 = vpop.f32.mrb[0].mxu0
    %2779 = vmatprep.mubr.f32.mxu0 0.0
    %2780 = vmatmul.mubr.f32.gmra.mrb[0].mxu0 %v1163
    %v2781 = vpop.f32.mrb[0].mxu0
    %v2782 = vadd.f32 0.0, %v2781
    %v2783 = vpop.f32.mrb[0].mxu0
    %2784 = vmatprep.mubr.f32.mxu0 0.0
    %2785 = vmatmul.mubr.f32.gmra.mrb[0].mxu0 %v1164
    %v2786 = vpop.f32.mrb[0].mxu0
    %v2787 = vadd.f32 0.0, %v2786
    %v2788 = vpop.f32.mrb[0].mxu0
    %2789 = vmatprep.mubr.f32.mxu0 0.0
    %2790 = vmatmul.mubr.f32.gmra.mrb[0].mxu0 %v1165
    %v2791 = vpop.f32.mrb[0].mxu0
    %v2792 = vadd.f32 0.0, %v2791
    %v2793 = vpop.f32.mrb[0].mxu0
    %2794 = vmatprep.mubr.f32.mxu0 0.0
    %2795 = vmatmul.mubr.f32.gmra.mrb[0].mxu0 %v1166
    %v2796 = vpop.f32.mrb[0].mxu0
    %v2797 = vadd.f32 0.0, %v2796
    %v2798 = vpop.f32.mrb[0].mxu0
    %2799 = vmatprep.mubr.f32.mxu0 0.0
    %2800 = vmatmul.mubr.f32.gmra.mrb[0].mxu0 %v1167
    %v2801 = vpop.f32.mrb[0].mxu0
    %v2802 = vadd.f32 0.0, %v2801
    %v2803 = vpop.f32.mrb[0].mxu0
    %2804 = vmatprep.mubr.f32.mxu0 0.0
    %2805 = vmatmul.mubr.f32.gmra.mrb[0].mxu0 %v1168
    %v2806 = vpop.f32.mrb[0].mxu0
    %v2807 = vadd.f32 0.0, %v2806
    %v2808 = vpop.f32.mrb[0].mxu0
    %2809 = vmatprep.mubr.f32.mxu0 0.0
    %2810 = vmatmul.mubr.f32.gmra.mrb[0].mxu0 %v1169
    %v2811 = vpop.f32.mrb[0].mxu0
    %v2812 = vadd.f32 0.0, %v2811
    %v2813 = vpop.f32.mrb[0].mxu0
    %2814 = vmatprep.mubr.f32.mxu0 0.0
    %2815 = vmatmul.mubr.f32.gmra.mrb[0].mxu0 %v1170
    %v2816 = vpop.f32.mrb[0].mxu0
    %v2817 = vadd.f32 0.0, %v2816
    %v2818 = vpop.f32.mrb[0].mxu0
    %2819 = vmatprep.mubr.f32.mxu0 0.0
    %2820 = vmatmul.mubr.f32.gmra.mrb[0].mxu0 %v1171
    %v2821 = vpop.f32.mrb[0].mxu0
    %v2822 = vadd.f32 0.0, %v2821
    %v2823 = vpop.f32.mrb[0].mxu0
    %2824 = vmatprep.mubr.f32.mxu0 0.0
    %2825 = vmatmul.mubr.f32.gmra.mrb[0].mxu0 %v1172
    %v2826 = vpop.f32.mrb[0].mxu0
    %v2827 = vadd.f32 0.0, %v2826
    %v2828 = vpop.f32.mrb[0].mxu0
    %2829 = vmatprep.mubr.f32.mxu0 0.0
    %2830 = vmatmul.mubr.f32.gmra.mrb[0].mxu0 %v1173
    %v2831 = vpop.f32.mrb[0].mxu0
    %v2832 = vadd.f32 0.0, %v2831
    %v2833 = vpop.f32.mrb[0].mxu0
    %2834 = vmatprep.mubr.f32.mxu0 0.0
    %2835 = vmatmul.mubr.f32.gmra.mrb[0].mxu0 %v1174
    %v2836 = vpop.f32.mrb[0].mxu0
    %v2837 = vadd.f32 0.0, %v2836
    %v2838 = vpop.f32.mrb[0].mxu0
    %2839 = vmatprep.mubr.f32.mxu0 0.0
    %2840 = vmatmul.mubr.f32.gmra.mrb[0].mxu0 %v1175
    %v2841 = vpop.f32.mrb[0].mxu0
    %v2842 = vadd.f32 0.0, %v2841
    %v2843 = vpop.f32.mrb[0].mxu0
    %2844 = vmatprep.mubr.f32.mxu0 0.0
    %2845 = vmatmul.mubr.f32.gmra.mrb[0].mxu0 %v1176
    %v2846 = vpop.f32.mrb[0].mxu0
    %v2847 = vadd.f32 0.0, %v2846
    %v2848 = vpop.f32.mrb[0].mxu0
    %2849 = vmatprep.mubr.f32.mxu0 0.0
    %2850 = vmatmul.mubr.f32.gmra.mrb[0].mxu0 %v1177
    %v2851 = vpop.f32.mrb[0].mxu0
    %v2852 = vadd.f32 0.0, %v2851
    %v2853 = vpop.f32.mrb[0].mxu0
    %2854 = vmatprep.mubr.f32.mxu0 0.0
    %2855 = vmatmul.mubr.f32.gmra.mrb[0].mxu0 %v1178
    %v2856 = vpop.f32.mrb[0].mxu0
    %v2857 = vadd.f32 0.0, %v2856
    %v2858 = vpop.f32.mrb[0].mxu0
    %2859 = vmatprep.mubr.f32.mxu0 0.0
    %2860 = vmatmul.mubr.f32.gmra.mrb[0].mxu0 %v1179
    %v2861 = vpop.f32.mrb[0].mxu0
    %v2862 = vadd.f32 0.0, %v2861
    %v2863 = vpop.f32.mrb[0].mxu0
    %2864 = vmatprep.mubr.f32.mxu0 0.0
    %2865 = vmatmul.mubr.f32.gmra.mrb[0].mxu0 %v1180
    %v2866 = vpop.f32.mrb[0].mxu0
    %v2867 = vadd.f32 0.0, %v2866
    %v2868 = vpop.f32.mrb[0].mxu0
    %2869 = vmatprep.mubr.f32.mxu0 0.0
    %2870 = vmatmul.mubr.f32.gmra.mrb[0].mxu0 %v1181
    %v2871 = vpop.f32.mrb[0].mxu0
    %v2872 = vadd.f32 0.0, %v2871
    %v2873 = vpop.f32.mrb[0].mxu0
    %2874 = vmatprep.mubr.f32.mxu0 0.0
    %2875 = vmatmul.mubr.f32.gmra.mrb[0].mxu0 %v1182
    %v2876 = vpop.f32.mrb[0].mxu0
    %v2877 = vadd.f32 0.0, %v2876
    %v2878 = vpop.f32.mrb[0].mxu0
    %2879 = vmatprep.mubr.f32.mxu0 0.0
    %2880 = vmatmul.mubr.f32.gmra.mrb[0].mxu0 %v1183
    %v2881 = vpop.f32.mrb[0].mxu0
    %v2882 = vadd.f32 0.0, %v2881
    %v2883 = vpop.f32.mrb[0].mxu0
    %2884 = vmatprep.mubr.f32.mxu0 0.0
    %2885 = vmatmul.mubr.f32.gmra.mrb[0].mxu0 %v1184
    %v2886 = vpop.f32.mrb[0].mxu0
    %v2887 = vadd.f32 0.0, %v2886
    %v2888 = vpop.f32.mrb[0].mxu0
    %2889 = vmatprep.mubr.f32.mxu0 0.0
    %2890 = vmatmul.mubr.f32.gmra.mrb[0].mxu0 %v1185
    %v2891 = vpop.f32.mrb[0].mxu0
    %v2892 = vadd.f32 0.0, %v2891
    %v2893 = vpop.f32.mrb[0].mxu0
    %2894 = vmatprep.mubr.f32.mxu0 0.0
    %2895 = vmatmul.mubr.f32.gmra.mrb[0].mxu0 %v1186
    %v2896 = vpop.f32.mrb[0].mxu0
    %v2897 = vadd.f32 0.0, %v2896
    %v2898 = vpop.f32.mrb[0].mxu0
    %2899 = vmatprep.mubr.f32.mxu0 0.0
    %2900 = vmatmul.mubr.f32.gmra.mrb[0].mxu0 %v1187
    %v2901 = vpop.f32.mrb[0].mxu0
    %v2902 = vadd.f32 0.0, %v2901
    %v2903 = vpop.f32.mrb[0].mxu0
    %2904 = vmatprep.mubr.f32.mxu0 0.0
    %2905 = vmatmul.mubr.f32.gmra.mrb[0].mxu0 %v1188
    %v2906 = vpop.f32.mrb[0].mxu0
    %v2907 = vadd.f32 0.0, %v2906
    %v2908 = vpop.f32.mrb[0].mxu0
    %2909 = vmatprep.mubr.f32.mxu0 0.0
    %2910 = vmatmul.mubr.f32.gmra.mrb[0].mxu0 %v1189
    %v2911 = vpop.f32.mrb[0].mxu0
    %v2912 = vadd.f32 0.0, %v2911
    %v2913 = vpop.f32.mrb[0].mxu0
    %2914 = vmatprep.mubr.f32.mxu0 0.0
    %2915 = vmatmul.mubr.f32.gmra.mrb[0].mxu0 %v1190
    %v2916 = vpop.f32.mrb[0].mxu0
    %v2917 = vadd.f32 0.0, %v2916
    %v2918 = vpop.f32.mrb[0].mxu0
    %2919 = vmatprep.mubr.f32.mxu0 0.0
    %2920 = vmatmul.mubr.f32.gmra.mrb[0].mxu0 %v1191
    %v2921 = vpop.f32.mrb[0].mxu0
    %v2922 = vadd.f32 0.0, %v2921
    %v2923 = vpop.f32.mrb[0].mxu0
    %2924 = vmatprep.mubr.f32.mxu0 0.0
    %2925 = vmatmul.mubr.f32.gmra.mrb[0].mxu0 %v1192
    %v2926 = vpop.f32.mrb[0].mxu0
    %v2927 = vadd.f32 0.0, %v2926
    %v2928 = vpop.f32.mrb[0].mxu0
    %2929 = vmatprep.mubr.f32.mxu0 0.0
    %2930 = vmatmul.mubr.f32.gmra.mrb[0].mxu0 %v1193
    %v2931 = vpop.f32.mrb[0].mxu0
    %v2932 = vadd.f32 0.0, %v2931
    %v2933 = vpop.f32.mrb[0].mxu0
    %2934 = vmatprep.mubr.f32.mxu0 0.0
    %2935 = vmatmul.mubr.f32.gmra.mrb[0].mxu0 %v1194
    %v2936 = vpop.f32.mrb[0].mxu0
    %v2937 = vadd.f32 0.0, %v2936
    %v2938 = vpop.f32.mrb[0].mxu0
    %2939 = vmatprep.mubr.f32.mxu0 0.0
    %2940 = vmatmul.mubr.f32.gmra.mrb[0].mxu0 %v1195
    %v2941 = vpop.f32.mrb[0].mxu0
    %v2942 = vadd.f32 0.0, %v2941
    %v2943 = vpop.f32.mrb[0].mxu0
    %2944 = vmatprep.mubr.f32.mxu0 0.0
    %2945 = vmatmul.mubr.f32.gmra.mrb[0].mxu0 %v1196
    %v2946 = vpop.f32.mrb[0].mxu0
    %v2947 = vadd.f32 0.0, %v2946
    %v2948 = vpop.f32.mrb[0].mxu0
    %2949 = vmatprep.mubr.f32.mxu0 0.0
    %2950 = vmatmul.mubr.f32.gmra.mrb[0].mxu0 %v1197
    %v2951 = vpop.f32.mrb[0].mxu0
    %v2952 = vadd.f32 0.0, %v2951
    %v2953 = vpop.f32.mrb[0].mxu0
    %2954 = vmatprep.mubr.f32.mxu0 0.0
    %2955 = vmatmul.mubr.f32.gmra.mrb[0].mxu0 %v1198
    %v2956 = vpop.f32.mrb[0].mxu0
    %v2957 = vadd.f32 0.0, %v2956
    %v2958 = vpop.f32.mrb[0].mxu0
    %2959 = vmatprep.mubr.f32.mxu0 0.0
    %2960 = vmatmul.mubr.f32.gmra.mrb[0].mxu0 %v1199
    %v2961 = vpop.f32.mrb[0].mxu0
    %v2962 = vadd.f32 0.0, %v2961
    %v2963 = vpop.f32.mrb[0].mxu0
    %2964 = vmatprep.mubr.f32.mxu0 0.0
    %2965 = vmatmul.mubr.f32.gmra.mrb[0].mxu0 %v1200
    %v2966 = vpop.f32.mrb[0].mxu0
    %v2967 = vadd.f32 0.0, %v2966
    %v2968 = vpop.f32.mrb[0].mxu0
    %2969 = vmatprep.mubr.f32.mxu0 0.0
    %2970 = vmatmul.mubr.f32.gmra.mrb[0].mxu0 %v1201
    %v2971 = vpop.f32.mrb[0].mxu0
    %v2972 = vadd.f32 0.0, %v2971
    %v2973 = vpop.f32.mrb[0].mxu0
    %2974 = vmatprep.mubr.f32.mxu0 0.0
    %2975 = vmatmul.mubr.f32.gmra.mrb[0].mxu0 %v1202
    %v2976 = vpop.f32.mrb[0].mxu0
    %v2977 = vadd.f32 0.0, %v2976
    %v2978 = vpop.f32.mrb[0].mxu0
    %2979 = vmatprep.mubr.f32.mxu0 0.0
    %2980 = vmatmul.mubr.f32.gmra.mrb[0].mxu0 %v1203
    %v2981 = vpop.f32.mrb[0].mxu0
    %v2982 = vadd.f32 0.0, %v2981
    %v2983 = vpop.f32.mrb[0].mxu0
    %2984 = vmatprep.mubr.f32.mxu0 0.0
    %2985 = vmatmul.mubr.f32.gmra.mrb[0].mxu0 %v1204
    %v2986 = vpop.f32.mrb[0].mxu0
    %v2987 = vadd.f32 0.0, %v2986
    %v2988 = vpop.f32.mrb[0].mxu0
    %2989 = vmatprep.mubr.f32.mxu0 0.0
    %2990 = vmatmul.mubr.f32.gmra.mrb[0].mxu0 %v1205
    %v2991 = vpop.f32.mrb[0].mxu0
    %v2992 = vadd.f32 0.0, %v2991
    %v2993 = vpop.f32.mrb[0].mxu0
    %2994 = vmatprep.mubr.f32.mxu0 0.0
    %2995 = vmatmul.mubr.f32.gmra.mrb[0].mxu0 %v1206
    %v2996 = vpop.f32.mrb[0].mxu0
    %v2997 = vadd.f32 0.0, %v2996
    %v2998 = vpop.f32.mrb[0].mxu0
    %2999 = vmatprep.mubr.f32.mxu0 0.0
    %3000 = vmatmul.mubr.f32.gmra.mrb[0].mxu0 %v1207
    %v3001 = vpop.f32.mrb[0].mxu0
    %v3002 = vadd.f32 0.0, %v3001
    %v3003 = vpop.f32.mrb[0].mxu0
    %3004 = vmatprep.mubr.f32.mxu0 0.0
    %3005 = vmatmul.mubr.f32.gmra.mrb[0].mxu0 %v1208
    %v3006 = vpop.f32.mrb[0].mxu0
    %v3007 = vadd.f32 0.0, %v3006
    %v3008 = vpop.f32.mrb[0].mxu0
    %3009 = vmatprep.mubr.f32.mxu0 0.0
    %3010 = vmatmul.mubr.f32.gmra.mrb[0].mxu0 %v1209
    %v3011 = vpop.f32.mrb[0].mxu0
    %v3012 = vadd.f32 0.0, %v3011
    %v3013 = vpop.f32.mrb[0].mxu0
    %3014 = vmatprep.mubr.f32.mxu0 0.0
    %3015 = vmatmul.mubr.f32.gmra.mrb[0].mxu0 %v1210
    %v3016 = vpop.f32.mrb[0].mxu0
    %v3017 = vadd.f32 0.0, %v3016
    %v3018 = vpop.f32.mrb[0].mxu0
    %3019 = vmatprep.mubr.f32.mxu0 0.0
    %3020 = vmatmul.mubr.f32.gmra.mrb[0].mxu0 %v1211
    %v3021 = vpop.f32.mrb[0].mxu0
    %v3022 = vadd.f32 0.0, %v3021
    %v3023 = vpop.f32.mrb[0].mxu0
    %3024 = vmatprep.mubr.f32.mxu0 0.0
    %3025 = vmatmul.mubr.f32.gmra.mrb[0].mxu0 %v1212
    %v3026 = vpop.f32.mrb[0].mxu0
    %v3027 = vadd.f32 0.0, %v3026
    %v3028 = vpop.f32.mrb[0].mxu0
    %3029 = vmatprep.mubr.f32.mxu0 0.0
    %3030 = vmatmul.mubr.f32.gmra.mrb[0].mxu0 %v1213
    %v3031 = vpop.f32.mrb[0].mxu0
    %v3032 = vadd.f32 0.0, %v3031
    %v3033 = vpop.f32.mrb[0].mxu0
    %3034 = vmatprep.mubr.f32.mxu0 0.0
    %3035 = vmatmul.mubr.f32.gmra.mrb[0].mxu0 %v1214
    %v3036 = vpop.f32.mrb[0].mxu0
    %v3037 = vadd.f32 0.0, %v3036
    %v3038 = vpop.f32.mrb[0].mxu0
    %3039 = vmatprep.mubr.f32.mxu0 0.0
    %3040 = vmatmul.mubr.f32.gmra.mrb[0].mxu0 %v1215
    %v3041 = vpop.f32.mrb[0].mxu0
    %v3042 = vadd.f32 0.0, %v3041
    %v3043 = vpop.f32.mrb[0].mxu0
    %3044 = vmatprep.mubr.f32.mxu0 0.0
    %3045 = vmatmul.mubr.f32.gmra.mrb[0].mxu0 %v1216
    %v3046 = vpop.f32.mrb[0].mxu0
    %v3047 = vadd.f32 0.0, %v3046
    %v3048 = vpop.f32.mrb[0].mxu0
    %3049 = vmatprep.mubr.f32.mxu0 0.0
    %3050 = vmatmul.mubr.f32.gmra.mrb[0].mxu0 %v1217
    %v3051 = vpop.f32.mrb[0].mxu0
    %v3052 = vadd.f32 0.0, %v3051
    %v3053 = vpop.f32.mrb[0].mxu0
    %3054 = vmatprep.mubr.f32.mxu0 0.0
    %3055 = vmatmul.mubr.f32.gmra.mrb[0].mxu0 %v1218
    %v3056 = vpop.f32.mrb[0].mxu0
    %v3057 = vadd.f32 0.0, %v3056
    %v3058 = vpop.f32.mrb[0].mxu0
    %3059 = vmatprep.mubr.f32.mxu0 0.0
    %3060 = vmatmul.mubr.f32.gmra.mrb[0].mxu0 %v1219
    %v3061 = vpop.f32.mrb[0].mxu0
    %v3062 = vadd.f32 0.0, %v3061
    %v3063 = vpop.f32.mrb[0].mxu0
    %3064 = vmatprep.mubr.f32.mxu0 0.0
    %3065 = vmatmul.mubr.f32.gmra.mrb[0].mxu0 %v1220
    %v3066 = vpop.f32.mrb[0].mxu0
    %v3067 = vadd.f32 0.0, %v3066
    %v3068 = vpop.f32.mrb[0].mxu0
    %3069 = vmatprep.mubr.f32.mxu0 0.0
    %3070 = vmatmul.mubr.f32.gmra.mrb[0].mxu0 %v1221
    %v3071 = vpop.f32.mrb[0].mxu0
    %v3072 = vadd.f32 0.0, %v3071
    %v3073 = vpop.f32.mrb[0].mxu0
    %3074 = vmatprep.mubr.f32.mxu0 0.0
    %3075 = vmatmul.mubr.f32.gmra.mrb[0].mxu0 %v1222
    %v3076 = vpop.f32.mrb[0].mxu0
    %v3077 = vadd.f32 0.0, %v3076
    %v3078 = vpop.f32.mrb[0].mxu0
    %3079 = vmatprep.mubr.f32.mxu0 0.0
    %3080 = vmatmul.mubr.f32.gmra.mrb[0].mxu0 %v1223
    %v3081 = vpop.f32.mrb[0].mxu0
    %v3082 = vadd.f32 0.0, %v3081
    %v3083 = vpop.f32.mrb[0].mxu0
    %3084 = vmatprep.mubr.f32.mxu0 0.0
    %3085 = vmatmul.mubr.f32.gmra.mrb[0].mxu0 %v1224
    %v3086 = vpop.f32.mrb[0].mxu0
    %v3087 = vadd.f32 0.0, %v3086
    %v3088 = vpop.f32.mrb[0].mxu0
    %3089 = vmatprep.mubr.f32.mxu0 0.0
    %3090 = vmatmul.mubr.f32.gmra.mrb[0].mxu0 %v1225
    %v3091 = vpop.f32.mrb[0].mxu0
    %v3092 = vadd.f32 0.0, %v3091
    %v3093 = vpop.f32.mrb[0].mxu0
    %3094 = vmatprep.mubr.f32.mxu0 0.0
    %3095 = vmatmul.mubr.f32.gmra.mrb[0].mxu0 %v1226
    %v3096 = vpop.f32.mrb[0].mxu0
    %v3097 = vadd.f32 0.0, %v3096
    %v3098 = vpop.f32.mrb[0].mxu0
    %3099 = vmatprep.mubr.f32.mxu0 0.0
    %3100 = vmatmul.mubr.f32.gmra.mrb[0].mxu0 %v1227
    %v3101 = vpop.f32.mrb[0].mxu0
    %v3102 = vadd.f32 0.0, %v3101
    %v3103 = vpop.f32.mrb[0].mxu0
    %3104 = vmatprep.mubr.f32.mxu0 0.0
    %3105 = vmatmul.mubr.f32.gmra.mrb[0].mxu0 %v1228
    %v3106 = vpop.f32.mrb[0].mxu0
    %v3107 = vadd.f32 0.0, %v3106
    %v3108 = vpop.f32.mrb[0].mxu0
    %3109 = vmatprep.mubr.f32.mxu0 0.0
    %3110 = vmatmul.mubr.f32.gmra.mrb[0].mxu0 %v1229
    %v3111 = vpop.f32.mrb[0].mxu0
    %v3112 = vadd.f32 0.0, %v3111
    %v3113 = vpop.f32.mrb[0].mxu0
    %3114 = vmatprep.mubr.f32.mxu0 0.0
    %3115 = vmatmul.mubr.f32.gmra.mrb[0].mxu0 %v1230
    %v3116 = vpop.f32.mrb[0].mxu0
    %v3117 = vadd.f32 0.0, %v3116
    %v3118 = vpop.f32.mrb[0].mxu0
    %3119 = vmatprep.mubr.f32.mxu0 0.0
    %3120 = vmatmul.mubr.f32.gmra.mrb[0].mxu0 %v1231
    %v3121 = vpop.f32.mrb[0].mxu0
    %v3122 = vadd.f32 0.0, %v3121
    %v3123 = vpop.f32.mrb[0].mxu0
    %3124 = vmatprep.mubr.f32.mxu0 0.0
    %3125 = vmatmul.mubr.f32.gmra.mrb[0].mxu0 %v1232
    %v3126 = vpop.f32.mrb[0].mxu0
    %v3127 = vadd.f32 0.0, %v3126
    %v3128 = vpop.f32.mrb[0].mxu0
    %3129 = vmatprep.mubr.f32.mxu0 0.0
    %3130 = vmatmul.mubr.f32.gmra.mrb[0].mxu0 %v1233
    %v3131 = vpop.f32.mrb[0].mxu0
    %v3132 = vadd.f32 0.0, %v3131
    %v3133 = vpop.f32.mrb[0].mxu0
    %3134 = vmatprep.mubr.f32.mxu0 0.0
    %3135 = vmatmul.mubr.f32.gmra.mrb[0].mxu0 %v1234
    %v3136 = vpop.f32.mrb[0].mxu0
    %v3137 = vadd.f32 0.0, %v3136
    %v3138 = vpop.f32.mrb[0].mxu0
    %3139 = vmatprep.mubr.f32.mxu0 0.0
    %3140 = vmatmul.mubr.f32.gmra.mrb[0].mxu0 %v1235
    %v3141 = vpop.f32.mrb[0].mxu0
    %v3142 = vadd.f32 0.0, %v3141
    %v3143 = vpop.f32.mrb[0].mxu0
    %3144 = vmatprep.mubr.f32.mxu0 0.0
    %3145 = vmatmul.mubr.f32.gmra.mrb[0].mxu0 %v1236
    %v3146 = vpop.f32.mrb[0].mxu0
    %v3147 = vadd.f32 0.0, %v3146
    %v3148 = vpop.f32.mrb[0].mxu0
    %3149 = vmatprep.mubr.f32.mxu0 0.0
    %3150 = vmatmul.mubr.f32.gmra.mrb[0].mxu0 %v1237
    %v3151 = vpop.f32.mrb[0].mxu0
    %v3152 = vadd.f32 0.0, %v3151
    %v3153 = vpop.f32.mrb[0].mxu0
    %3154 = vmatprep.mubr.f32.mxu0 0.0
    %3155 = vmatmul.mubr.f32.gmra.mrb[0].mxu0 %v1238
    %v3156 = vpop.f32.mrb[0].mxu0
    %v3157 = vadd.f32 0.0, %v3156
    %v3158 = vpop.f32.mrb[0].mxu0
    %3159 = vmatprep.mubr.f32.mxu0 0.0
    %3160 = vmatmul.mubr.f32.gmra.mrb[0].mxu0 %v1239
    %v3161 = vpop.f32.mrb[0].mxu0
    %v3162 = vadd.f32 0.0, %v3161
    %v3163 = vpop.f32.mrb[0].mxu0
    %3164 = vmatprep.mubr.f32.mxu0 0.0
    %3165 = vmatmul.mubr.f32.gmra.mrb[0].mxu0 %v1240
    %v3166 = vpop.f32.mrb[0].mxu0
    %v3167 = vadd.f32 0.0, %v3166
    %v3168 = vpop.f32.mrb[0].mxu0
    %3169 = vmatprep.mubr.f32.mxu0 0.0
    %3170 = vmatmul.mubr.f32.gmra.mrb[0].mxu0 %v1241
    %v3171 = vpop.f32.mrb[0].mxu0
    %v3172 = vadd.f32 0.0, %v3171
    %v3173 = vpop.f32.mrb[0].mxu0
    %3174 = vmatprep.mubr.f32.mxu0 0.0
    %3175 = vmatmul.mubr.f32.gmra.mrb[0].mxu0 %v1242
    %v3176 = vpop.f32.mrb[0].mxu0
    %v3177 = vadd.f32 0.0, %v3176
    %v3178 = vpop.f32.mrb[0].mxu0
    %3179 = vmatprep.mubr.f32.mxu0 0.0
    %3180 = vmatmul.mubr.f32.gmra.mrb[0].mxu0 %v1243
    %v3181 = vpop.f32.mrb[0].mxu0
    %v3182 = vadd.f32 0.0, %v3181
    %v3183 = vpop.f32.mrb[0].mxu0
    %3184 = vmatprep.mubr.f32.mxu0 0.0
    %3185 = vmatmul.mubr.f32.gmra.mrb[0].mxu0 %v1244
    %v3186 = vpop.f32.mrb[0].mxu0
    %v3187 = vadd.f32 0.0, %v3186
    %v3188 = vpop.f32.mrb[0].mxu0
    %3189 = vmatprep.mubr.f32.mxu0 0.0
    %3190 = vmatmul.mubr.f32.gmra.mrb[0].mxu0 %v1245
    %v3191 = vpop.f32.mrb[0].mxu0
    %v3192 = vadd.f32 0.0, %v3191
    %v3193 = vpop.f32.mrb[0].mxu0
    %3194 = vmatprep.mubr.f32.mxu0 0.0
    %3195 = vmatmul.mubr.f32.gmra.mrb[0].mxu0 %v1246
    %v3196 = vpop.f32.mrb[0].mxu0
    %v3197 = vadd.f32 0.0, %v3196
    %v3198 = vpop.f32.mrb[0].mxu0
    %3199 = vmatprep.mubr.f32.mxu0 0.0
    %3200 = vmatmul.mubr.f32.gmra.mrb[0].mxu0 %v1247
    %v3201 = vpop.f32.mrb[0].mxu0
    %v3202 = vadd.f32 0.0, %v3201
    %v3203 = vpop.f32.mrb[0].mxu0
    %3204 = vmatprep.mubr.f32.mxu0 0.0
    %3205 = vmatmul.mubr.f32.gmra.mrb[0].mxu0 %v1248
    %v3206 = vpop.f32.mrb[0].mxu0
    %v3207 = vadd.f32 0.0, %v3206
    %v3208 = vpop.f32.mrb[0].mxu0
    %3209 = vmatprep.mubr.f32.mxu0 0.0
    %3210 = vmatmul.mubr.f32.gmra.mrb[0].mxu0 %v1249
    %v3211 = vpop.f32.mrb[0].mxu0
    %v3212 = vadd.f32 0.0, %v3211
    %v3213 = vpop.f32.mrb[0].mxu0
    %3214 = vmatprep.mubr.f32.mxu0 0.0
    %3215 = vmatmul.mubr.f32.gmra.mrb[0].mxu0 %v1250
    %v3216 = vpop.f32.mrb[0].mxu0
    %v3217 = vadd.f32 0.0, %v3216
    %v3218 = vpop.f32.mrb[0].mxu0
    %3219 = vmatprep.mubr.f32.mxu0 0.0
    %3220 = vmatmul.mubr.f32.gmra.mrb[0].mxu0 %v1251
    %v3221 = vpop.f32.mrb[0].mxu0
    %v3222 = vadd.f32 0.0, %v3221
    %v3223 = vpop.f32.mrb[0].mxu0
    %3224 = vmatprep.mubr.f32.mxu0 0.0
    %3225 = vmatmul.mubr.f32.gmra.mrb[0].mxu0 %v1252
    %v3226 = vpop.f32.mrb[0].mxu0
    %v3227 = vadd.f32 0.0, %v3226
    %v3228 = vpop.f32.mrb[0].mxu0
    %3229 = vmatprep.mubr.f32.mxu0 0.0
    %3230 = vmatmul.mubr.f32.gmra.mrb[0].mxu0 %v1253
    %v3231 = vpop.f32.mrb[0].mxu0
    %v3232 = vadd.f32 0.0, %v3231
    %v3233 = vpop.f32.mrb[0].mxu0
    %3234 = vmatprep.mubr.f32.mxu0 0.0
    %3235 = vmatmul.mubr.f32.gmra.mrb[0].mxu0 %v1254
    %v3236 = vpop.f32.mrb[0].mxu0
    %v3237 = vadd.f32 0.0, %v3236
    %v3238 = vpop.f32.mrb[0].mxu0
    %3239 = vmatprep.mubr.f32.mxu0 0.0
    %3240 = vmatmul.mubr.f32.gmra.mrb[0].mxu0 %v1255
    %v3241 = vpop.f32.mrb[0].mxu0
    %v3242 = vadd.f32 0.0, %v3241
    %v3243 = vpop.f32.mrb[0].mxu0
    %3244 = vmatprep.mubr.f32.mxu0 0.0
    %3245 = vmatmul.mubr.f32.gmra.mrb[0].mxu0 %v1256
    %v3246 = vpop.f32.mrb[0].mxu0
    %v3247 = vadd.f32 0.0, %v3246
    %v3248 = vpop.f32.mrb[0].mxu0
    %3249 = vmatprep.mubr.f32.mxu0 0.0
    %3250 = vmatmul.mubr.f32.gmra.mrb[0].mxu0 %v1257
    %v3251 = vpop.f32.mrb[0].mxu0
    %v3252 = vadd.f32 0.0, %v3251
    %v3253 = vpop.f32.mrb[0].mxu0
    %3254 = vmatprep.mubr.f32.mxu0 0.0
    %3255 = vmatmul.mubr.f32.gmra.mrb[0].mxu0 %v1258
    %v3256 = vpop.f32.mrb[0].mxu0
    %v3257 = vadd.f32 0.0, %v3256
    %v3258 = vpop.f32.mrb[0].mxu0
    %3259 = vmatprep.mubr.f32.mxu0 0.0
    %3260 = vmatmul.mubr.f32.gmra.mrb[0].mxu0 %v1259
    %v3261 = vpop.f32.mrb[0].mxu0
    %v3262 = vadd.f32 0.0, %v3261
    %v3263 = vpop.f32.mrb[0].mxu0
    %3264 = vmatprep.mubr.f32.mxu0 0.0
    %3265 = vmatmul.mubr.f32.gmra.mrb[0].mxu0 %v1260
    %v3266 = vpop.f32.mrb[0].mxu0
    %v3267 = vadd.f32 0.0, %v3266
    %v3268 = vpop.f32.mrb[0].mxu0
    %3269 = vmatprep.mubr.f32.mxu0 0.0
    %3270 = vmatmul.mubr.f32.gmra.mrb[0].mxu0 %v1261
    %v3271 = vpop.f32.mrb[0].mxu0
    %v3272 = vadd.f32 0.0, %v3271
    %v3273 = vpop.f32.mrb[0].mxu0
    %3274 = vmatprep.mubr.f32.mxu0 0.0
    %3275 = vmatmul.mubr.f32.gmra.mrb[0].mxu0 %v1262
    %v3276 = vpop.f32.mrb[0].mxu0
    %v3277 = vadd.f32 0.0, %v3276
    %v3278 = vpop.f32.mrb[0].mxu0
    %3279 = vmatprep.mubr.f32.mxu0 0.0
    %3280 = vmatmul.mubr.f32.gmra.mrb[0].mxu0 %v1263
    %v3281 = vpop.f32.mrb[0].mxu0
    %v3282 = vadd.f32 0.0, %v3281
    %v3283 = vpop.f32.mrb[0].mxu0
    %3284 = vmatprep.mubr.f32.mxu0 0.0
    %3285 = vmatmul.mubr.f32.gmra.mrb[0].mxu0 %v1264
    %v3286 = vpop.f32.mrb[0].mxu0
    %v3287 = vadd.f32 0.0, %v3286
    %v3288 = vpop.f32.mrb[0].mxu0
    %3289 = vmatprep.mubr.f32.mxu0 0.0
    %3290 = vmatmul.mubr.f32.gmra.mrb[0].mxu0 %v1265
    %v3291 = vpop.f32.mrb[0].mxu0
    %v3292 = vadd.f32 0.0, %v3291
    %v3293 = vpop.f32.mrb[0].mxu0
    %3294 = vmatprep.mubr.f32.mxu0 0.0
    %3295 = vmatmul.mubr.f32.gmra.mrb[0].mxu0 %v1266
    %v3296 = vpop.f32.mrb[0].mxu0
    %v3297 = vadd.f32 0.0, %v3296
    %v3298 = vpop.f32.mrb[0].mxu0
    %3299 = vmatprep.mubr.f32.mxu0 0.0
    %3300 = vmatmul.mubr.f32.gmra.mrb[0].mxu0 %v1267
    %v3301 = vpop.f32.mrb[0].mxu0
    %v3302 = vadd.f32 0.0, %v3301
    %v3303 = vpop.f32.mrb[0].mxu0
    %3304 = vmatprep.mubr.f32.mxu0 0.0
    %3305 = vmatmul.mubr.f32.gmra.mrb[0].mxu0 %v1268
    %v3306 = vpop.f32.mrb[0].mxu0
    %v3307 = vadd.f32 0.0, %v3306
    %v3308 = vpop.f32.mrb[0].mxu0
    %3309 = vmatprep.mubr.f32.mxu0 0.0
    %3310 = vmatmul.mubr.f32.gmra.mrb[0].mxu0 %v1269
    %v3311 = vpop.f32.mrb[0].mxu0
    %v3312 = vadd.f32 0.0, %v3311
    %v3313 = vpop.f32.mrb[0].mxu0
    %3314 = vmatprep.mubr.f32.mxu0 0.0
    %3315 = vmatmul.mubr.f32.gmra.mrb[0].mxu0 %v1270
    %v3316 = vpop.f32.mrb[0].mxu0
    %v3317 = vadd.f32 0.0, %v3316
    %v3318 = vpop.f32.mrb[0].mxu0
    %3319 = vmatprep.mubr.f32.mxu0 0.0
    %3320 = vmatmul.mubr.f32.gmra.mrb[0].mxu0 %v1271
    %v3321 = vpop.f32.mrb[0].mxu0
    %v3322 = vadd.f32 0.0, %v3321
    %v3323 = vpop.f32.mrb[0].mxu0
    %3324 = vmatprep.mubr.f32.mxu0 0.0
    %3325 = vmatmul.mubr.f32.gmra.mrb[0].mxu0 %v1272
    %v3326 = vpop.f32.mrb[0].mxu0
    %v3327 = vadd.f32 0.0, %v3326
    %v3328 = vpop.f32.mrb[0].mxu0
    %3329 = vmatprep.mubr.f32.mxu0 0.0
    %3330 = vmatmul.mubr.f32.gmra.mrb[0].mxu0 %v1273
    %v3331 = vpop.f32.mrb[0].mxu0
    %v3332 = vadd.f32 0.0, %v3331
    %v3333 = vpop.f32.mrb[0].mxu0
    %3334 = vmatprep.mubr.f32.mxu0 0.0
    %3335 = vmatmul.mubr.f32.gmra.mrb[0].mxu0 %v1274
    %v3336 = vpop.f32.mrb[0].mxu0
    %v3337 = vadd.f32 0.0, %v3336
    %v3338 = vpop.f32.mrb[0].mxu0
    %3339 = vdwg.mxu0
    %v3340 = vld [vmem:[#allocation7] sm:$0xff]
    %v3341 = vld [vmem:[#allocation7 + $0x8] sm:$0xff]
    %s3342 = scalar_lea.vmem [#allocation7], 16
    %v3343 = vld [vmem:[%s3342] sm:$0xff]
    %v3344 = vld [vmem:[%s3342 + $0x8] sm:$0xff]
    %vm3345 = vcmask 130048
    %v3347 = vsel %vm3345, %v1422, 0
    %v3350 = vsel %vm3345, %v1427, 0
    %v3353 = vsel %vm3345, %v1432, 0
    %v3356 = vsel %vm3345, %v1437, 0
    %v3359 = vsel %vm3345, %v1442, 0
    %v3362 = vsel %vm3345, %v1447, 0
    %v3365 = vsel %vm3345, %v1452, 0
    %v3368 = vsel %vm3345, %v1457, 0
    %v3371 = vsel %vm3345, %v1462, 0
    %v3374 = vsel %vm3345, %v1467, 0
    %v3377 = vsel %vm3345, %v1472, 0
    %v3380 = vsel %vm3345, %v1477, 0
    %v3383 = vsel %vm3345, %v1482, 0
    %v3386 = vsel %vm3345, %v1487, 0
    %v3389 = vsel %vm3345, %v1492, 0
    %v3392 = vsel %vm3345, %v1497, 0
    %3394 = vmatprep.subr.mxu0 0.0
    %3395 = vmatpush1.msra.mxu0 %v3343
    %3396 = vmatprep.subr.mxu0 0.0
    %3397 = vmatpush1.msra.mxu0 %v3344
    %3398 = vmatprep.subr.mxu0 0.0
    %3399 = vmatpush1.msra.mxu0 0.0
    %3400 = vmatprep.subr.mxu0 0.0
    %3401 = vmatpush1.msra.mxu0 0.0
    %3402 = vmatprep.subr.mxu0 0.0
    %3403 = vmatpush1.msra.mxu0 0.0
    %3404 = vmatprep.subr.mxu0 0.0
    %3405 = vmatpush1.msra.mxu0 0.0
    %3406 = vmatprep.subr.mxu0 0.0
    %3407 = vmatpush1.msra.mxu0 0.0
    %3408 = vmatprep.subr.mxu0 0.0
    %3409 = vmatpush1.msra.mxu0 0.0
    %3410 = vmatprep.subr.mxu0 0.0
    %3411 = vmatpush1.msra.mxu0 0.0
    %3412 = vmatprep.subr.mxu0 0.0
    %3413 = vmatpush1.msra.mxu0 0.0
    %3414 = vmatprep.subr.mxu0 0.0
    %3415 = vmatpush1.msra.mxu0 0.0
    %3416 = vmatprep.subr.mxu0 0.0
    %3417 = vmatpush1.msra.mxu0 0.0
    %3418 = vmatprep.subr.mxu0 0.0
    %3419 = vmatpush1.msra.mxu0 0.0
    %3420 = vmatprep.subr.mxu0 0.0
    %3421 = vmatpush1.msra.mxu0 0.0
    %3422 = vmatprep.subr.mxu0 0.0
    %3423 = vmatpush1.msra.mxu0 0.0
    %3424 = vmatprep.subr.mxu0 0.0
    %3425 = vmatpush1.msra.mxu0 0.0
    %3426 = vmatprep.subr.mxu0 0.0
    %3427 = vmatpush1.msra.mxu0 0.0
    %3428 = vmatprep.subr.mxu0 0.0
    %3429 = vmatpush1.msra.mxu0 0.0
    %3430 = vmatprep.subr.mxu0 0.0
    %3431 = vmatpush1.msra.mxu0 0.0
    %3432 = vmatprep.subr.mxu0 0.0
    %3433 = vmatpush1.msra.mxu0 0.0
    %3434 = vmatprep.subr.mxu0 0.0
    %3435 = vmatpush1.msra.mxu0 0.0
    %3436 = vmatprep.subr.mxu0 0.0
    %3437 = vmatpush1.msra.mxu0 0.0
    %3438 = vmatprep.subr.mxu0 0.0
    %3439 = vmatpush1.msra.mxu0 0.0
    %3440 = vmatprep.subr.mxu0 0.0
    %3441 = vmatpush1.msra.mxu0 0.0
    %3442 = vmatprep.subr.mxu0 0.0
    %3443 = vmatpush1.msra.mxu0 0.0
    %3444 = vmatprep.subr.mxu0 0.0
    %3445 = vmatpush1.msra.mxu0 0.0
    %3446 = vmatprep.subr.mxu0 0.0
    %3447 = vmatpush1.msra.mxu0 0.0
    %3448 = vmatprep.subr.mxu0 0.0
    %3449 = vmatpush1.msra.mxu0 0.0
    %3450 = vmatprep.subr.mxu0 0.0
    %3451 = vmatpush1.msra.mxu0 0.0
    %3452 = vmatprep.subr.mxu0 0.0
    %3453 = vmatpush1.msra.mxu0 0.0
    %3454 = vmatprep.subr.mxu0 0.0
    %3455 = vmatpush1.msra.mxu0 0.0
    %3456 = vmatprep.subr.mxu0 0.0
    %3457 = vmatpush1.msra.mxu0 0.0
    %3458 = vmatprep.mubr.f32.mxu0 0.0
    %3459 = vmatmul.mubr.f32.gmra.mrb[0].mxu0 %v3347
    %v3460 = vpop.f32.mrb[0].mxu0
    %v3461 = vadd.f32 0.0, %v3460
    %v3462 = vpop.f32.mrb[0].mxu0
    %3463 = vmatprep.mubr.f32.mxu0 0.0
    %3464 = vmatmul.mubr.f32.gmra.mrb[0].mxu0 %v3350
    %v3465 = vpop.f32.mrb[0].mxu0
    %v3466 = vadd.f32 0.0, %v3465
    %v3467 = vpop.f32.mrb[0].mxu0
    %3468 = vmatprep.mubr.f32.mxu0 0.0
    %3469 = vmatmul.mubr.f32.gmra.mrb[0].mxu0 %v3353
    %v3470 = vpop.f32.mrb[0].mxu0
    %v3471 = vadd.f32 0.0, %v3470
    %v3472 = vpop.f32.mrb[0].mxu0
    %3473 = vmatprep.mubr.f32.mxu0 0.0
    %3474 = vmatmul.mubr.f32.gmra.mrb[0].mxu0 %v3356
    %v3475 = vpop.f32.mrb[0].mxu0
    %v3476 = vadd.f32 0.0, %v3475
    %v3477 = vpop.f32.mrb[0].mxu0
    %3478 = vmatprep.mubr.f32.mxu0 0.0
    %3479 = vmatmul.mubr.f32.gmra.mrb[0].mxu0 %v3359
    %v3480 = vpop.f32.mrb[0].mxu0
    %v3481 = vadd.f32 0.0, %v3480
    %v3482 = vpop.f32.mrb[0].mxu0
    %3483 = vmatprep.mubr.f32.mxu0 0.0
    %3484 = vmatmul.mubr.f32.gmra.mrb[0].mxu0 %v3362
    %v3485 = vpop.f32.mrb[0].mxu0
    %v3486 = vadd.f32 0.0, %v3485
    %v3487 = vpop.f32.mrb[0].mxu0
    %3488 = vmatprep.mubr.f32.mxu0 0.0
    %3489 = vmatmul.mubr.f32.gmra.mrb[0].mxu0 %v3365
    %v3490 = vpop.f32.mrb[0].mxu0
    %v3491 = vadd.f32 0.0, %v3490
    %v3492 = vpop.f32.mrb[0].mxu0
    %3493 = vmatprep.mubr.f32.mxu0 0.0
    %3494 = vmatmul.mubr.f32.gmra.mrb[0].mxu0 %v3368
    %v3495 = vpop.f32.mrb[0].mxu0
    %v3496 = vadd.f32 0.0, %v3495
    %v3497 = vpop.f32.mrb[0].mxu0
    %3498 = vmatprep.mubr.f32.mxu0 0.0
    %3499 = vmatmul.mubr.f32.gmra.mrb[0].mxu0 %v3371
    %v3500 = vpop.f32.mrb[0].mxu0
    %v3501 = vadd.f32 0.0, %v3500
    %v3502 = vpop.f32.mrb[0].mxu0
    %3503 = vmatprep.mubr.f32.mxu0 0.0
    %3504 = vmatmul.mubr.f32.gmra.mrb[0].mxu0 %v3374
    %v3505 = vpop.f32.mrb[0].mxu0
    %v3506 = vadd.f32 0.0, %v3505
    %v3507 = vpop.f32.mrb[0].mxu0
    %3508 = vmatprep.mubr.f32.mxu0 0.0
    %3509 = vmatmul.mubr.f32.gmra.mrb[0].mxu0 %v3377
    %v3510 = vpop.f32.mrb[0].mxu0
    %v3511 = vadd.f32 0.0, %v3510
    %v3512 = vpop.f32.mrb[0].mxu0
    %3513 = vmatprep.mubr.f32.mxu0 0.0
    %3514 = vmatmul.mubr.f32.gmra.mrb[0].mxu0 %v3380
    %v3515 = vpop.f32.mrb[0].mxu0
    %v3516 = vadd.f32 0.0, %v3515
    %v3517 = vpop.f32.mrb[0].mxu0
    %3518 = vmatprep.mubr.f32.mxu0 0.0
    %3519 = vmatmul.mubr.f32.gmra.mrb[0].mxu0 %v3383
    %v3520 = vpop.f32.mrb[0].mxu0
    %v3521 = vadd.f32 0.0, %v3520
    %v3522 = vpop.f32.mrb[0].mxu0
    %3523 = vmatprep.mubr.f32.mxu0 0.0
    %3524 = vmatmul.mubr.f32.gmra.mrb[0].mxu0 %v3386
    %v3525 = vpop.f32.mrb[0].mxu0
    %v3526 = vadd.f32 0.0, %v3525
    %v3527 = vpop.f32.mrb[0].mxu0
    %3528 = vmatprep.mubr.f32.mxu0 0.0
    %3529 = vmatmul.mubr.f32.gmra.mrb[0].mxu0 %v3389
    %v3530 = vpop.f32.mrb[0].mxu0
    %v3531 = vadd.f32 0.0, %v3530
    %v3532 = vpop.f32.mrb[0].mxu0
    %3533 = vmatprep.mubr.f32.mxu0 0.0
    %3534 = vmatmul.mubr.f32.gmra.mrb[0].mxu0 %v3392
    %v3535 = vpop.f32.mrb[0].mxu0
    %v3536 = vadd.f32 0.0, %v3535
    %v3537 = vpop.f32.mrb[0].mxu0
    %3538 = vdwg.mxu0
    %v3540 = vsel %vm3345, %v1342, 0
    %v3543 = vsel %vm3345, %v1347, 0
    %v3546 = vsel %vm3345, %v1352, 0
    %v3549 = vsel %vm3345, %v1357, 0
    %v3552 = vsel %vm3345, %v1362, 0
    %v3555 = vsel %vm3345, %v1367, 0
    %v3558 = vsel %vm3345, %v1372, 0
    %v3561 = vsel %vm3345, %v1377, 0
    %v3564 = vsel %vm3345, %v1382, 0
    %v3567 = vsel %vm3345, %v1387, 0
    %v3570 = vsel %vm3345, %v1392, 0
    %v3573 = vsel %vm3345, %v1397, 0
    %v3576 = vsel %vm3345, %v1402, 0
    %v3579 = vsel %vm3345, %v1407, 0
    %v3582 = vsel %vm3345, %v1412, 0
    %v3585 = vsel %vm3345, %v1417, 0
    %3587 = vmatprep.subr.mxu0 0.0
    %3588 = vmatpush1.msra.mxu0 %v3340
    %3589 = vmatprep.subr.mxu0 0.0
    %3590 = vmatpush1.msra.mxu0 %v3341
    %3591 = vmatprep.subr.mxu0 0.0
    %3592 = vmatpush1.msra.mxu0 0.0
    %3593 = vmatprep.subr.mxu0 0.0
    %3594 = vmatpush1.msra.mxu0 0.0
    %3595 = vmatprep.subr.mxu0 0.0
    %3596 = vmatpush1.msra.mxu0 0.0
    %3597 = vmatprep.subr.mxu0 0.0
    %3598 = vmatpush1.msra.mxu0 0.0
    %3599 = vmatprep.subr.mxu0 0.0
    %3600 = vmatpush1.msra.mxu0 0.0
    %3601 = vmatprep.subr.mxu0 0.0
    %3602 = vmatpush1.msra.mxu0 0.0
    %3603 = vmatprep.subr.mxu0 0.0
    %3604 = vmatpush1.msra.mxu0 0.0
    %3605 = vmatprep.subr.mxu0 0.0
    %3606 = vmatpush1.msra.mxu0 0.0
    %3607 = vmatprep.subr.mxu0 0.0
    %3608 = vmatpush1.msra.mxu0 0.0
    %3609 = vmatprep.subr.mxu0 0.0
    %3610 = vmatpush1.msra.mxu0 0.0
    %3611 = vmatprep.subr.mxu0 0.0
    %3612 = vmatpush1.msra.mxu0 0.0
    %3613 = vmatprep.subr.mxu0 0.0
    %3614 = vmatpush1.msra.mxu0 0.0
    %3615 = vmatprep.subr.mxu0 0.0
    %3616 = vmatpush1.msra.mxu0 0.0
    %3617 = vmatprep.subr.mxu0 0.0
    %3618 = vmatpush1.msra.mxu0 0.0
    %3619 = vmatprep.subr.mxu0 0.0
    %3620 = vmatpush1.msra.mxu0 0.0
    %3621 = vmatprep.subr.mxu0 0.0
    %3622 = vmatpush1.msra.mxu0 0.0
    %3623 = vmatprep.subr.mxu0 0.0
    %3624 = vmatpush1.msra.mxu0 0.0
    %3625 = vmatprep.subr.mxu0 0.0
    %3626 = vmatpush1.msra.mxu0 0.0
    %3627 = vmatprep.subr.mxu0 0.0
    %3628 = vmatpush1.msra.mxu0 0.0
    %3629 = vmatprep.subr.mxu0 0.0
    %3630 = vmatpush1.msra.mxu0 0.0
    %3631 = vmatprep.subr.mxu0 0.0
    %3632 = vmatpush1.msra.mxu0 0.0
    %3633 = vmatprep.subr.mxu0 0.0
    %3634 = vmatpush1.msra.mxu0 0.0
    %3635 = vmatprep.subr.mxu0 0.0
    %3636 = vmatpush1.msra.mxu0 0.0
    %3637 = vmatprep.subr.mxu0 0.0
    %3638 = vmatpush1.msra.mxu0 0.0
    %3639 = vmatprep.subr.mxu0 0.0
    %3640 = vmatpush1.msra.mxu0 0.0
    %3641 = vmatprep.subr.mxu0 0.0
    %3642 = vmatpush1.msra.mxu0 0.0
    %3643 = vmatprep.subr.mxu0 0.0
    %3644 = vmatpush1.msra.mxu0 0.0
    %3645 = vmatprep.subr.mxu0 0.0
    %3646 = vmatpush1.msra.mxu0 0.0
    %3647 = vmatprep.subr.mxu0 0.0
    %3648 = vmatpush1.msra.mxu0 0.0
    %3649 = vmatprep.subr.mxu0 0.0
    %3650 = vmatpush1.msra.mxu0 0.0
    %3651 = vmatprep.mubr.f32.mxu0 0.0
    %3652 = vmatmul.mubr.f32.gmra.mrb[0].mxu0 %v3540
    %v3653 = vpop.f32.mrb[0].mxu0
    %v3654 = vadd.f32 %v3461, %v3653
    %v3655 = vpop.f32.mrb[0].mxu0
    %3656 = vmatprep.mubr.f32.mxu0 0.0
    %3657 = vmatmul.mubr.f32.gmra.mrb[0].mxu0 %v3543
    %v3658 = vpop.f32.mrb[0].mxu0
    %v3659 = vadd.f32 %v3466, %v3658
    %v3660 = vpop.f32.mrb[0].mxu0
    %3661 = vmatprep.mubr.f32.mxu0 0.0
    %3662 = vmatmul.mubr.f32.gmra.mrb[0].mxu0 %v3546
    %v3663 = vpop.f32.mrb[0].mxu0
    %v3664 = vadd.f32 %v3471, %v3663
    %v3665 = vpop.f32.mrb[0].mxu0
    %3666 = vmatprep.mubr.f32.mxu0 0.0
    %3667 = vmatmul.mubr.f32.gmra.mrb[0].mxu0 %v3549
    %v3668 = vpop.f32.mrb[0].mxu0
    %v3669 = vadd.f32 %v3476, %v3668
    %v3670 = vpop.f32.mrb[0].mxu0
    %3671 = vmatprep.mubr.f32.mxu0 0.0
    %3672 = vmatmul.mubr.f32.gmra.mrb[0].mxu0 %v3552
    %v3673 = vpop.f32.mrb[0].mxu0
    %v3674 = vadd.f32 %v3481, %v3673
    %v3675 = vpop.f32.mrb[0].mxu0
    %3676 = vmatprep.mubr.f32.mxu0 0.0
    %3677 = vmatmul.mubr.f32.gmra.mrb[0].mxu0 %v3555
    %v3678 = vpop.f32.mrb[0].mxu0
    %v3679 = vadd.f32 %v3486, %v3678
    %v3680 = vpop.f32.mrb[0].mxu0
    %3681 = vmatprep.mubr.f32.mxu0 0.0
    %3682 = vmatmul.mubr.f32.gmra.mrb[0].mxu0 %v3558
    %v3683 = vpop.f32.mrb[0].mxu0
    %v3684 = vadd.f32 %v3491, %v3683
    %v3685 = vpop.f32.mrb[0].mxu0
    %3686 = vmatprep.mubr.f32.mxu0 0.0
    %3687 = vmatmul.mubr.f32.gmra.mrb[0].mxu0 %v3561
    %v3688 = vpop.f32.mrb[0].mxu0
    %v3689 = vadd.f32 %v3496, %v3688
    %v3690 = vpop.f32.mrb[0].mxu0
    %3691 = vmatprep.mubr.f32.mxu0 0.0
    %3692 = vmatmul.mubr.f32.gmra.mrb[0].mxu0 %v3564
    %v3693 = vpop.f32.mrb[0].mxu0
    %v3694 = vadd.f32 %v3501, %v3693
    %v3695 = vpop.f32.mrb[0].mxu0
    %3696 = vmatprep.mubr.f32.mxu0 0.0
    %3697 = vmatmul.mubr.f32.gmra.mrb[0].mxu0 %v3567
    %v3698 = vpop.f32.mrb[0].mxu0
    %v3699 = vadd.f32 %v3506, %v3698
    %v3700 = vpop.f32.mrb[0].mxu0
    %3701 = vmatprep.mubr.f32.mxu0 0.0
    %3702 = vmatmul.mubr.f32.gmra.mrb[0].mxu0 %v3570
    %v3703 = vpop.f32.mrb[0].mxu0
    %v3704 = vadd.f32 %v3511, %v3703
    %v3705 = vpop.f32.mrb[0].mxu0
    %3706 = vmatprep.mubr.f32.mxu0 0.0
    %3707 = vmatmul.mubr.f32.gmra.mrb[0].mxu0 %v3573
    %v3708 = vpop.f32.mrb[0].mxu0
    %v3709 = vadd.f32 %v3516, %v3708
    %v3710 = vpop.f32.mrb[0].mxu0
    %3711 = vmatprep.mubr.f32.mxu0 0.0
    %3712 = vmatmul.mubr.f32.gmra.mrb[0].mxu0 %v3576
    %v3713 = vpop.f32.mrb[0].mxu0
    %v3714 = vadd.f32 %v3521, %v3713
    %v3715 = vpop.f32.mrb[0].mxu0
    %3716 = vmatprep.mubr.f32.mxu0 0.0
    %3717 = vmatmul.mubr.f32.gmra.mrb[0].mxu0 %v3579
    %v3718 = vpop.f32.mrb[0].mxu0
    %v3719 = vadd.f32 %v3526, %v3718
    %v3720 = vpop.f32.mrb[0].mxu0
    %3721 = vmatprep.mubr.f32.mxu0 0.0
    %3722 = vmatmul.mubr.f32.gmra.mrb[0].mxu0 %v3582
    %v3723 = vpop.f32.mrb[0].mxu0
    %v3724 = vadd.f32 %v3531, %v3723
    %v3725 = vpop.f32.mrb[0].mxu0
    %3726 = vmatprep.mubr.f32.mxu0 0.0
    %3727 = vmatmul.mubr.f32.gmra.mrb[0].mxu0 %v3585
    %v3728 = vpop.f32.mrb[0].mxu0
    %v3729 = vadd.f32 %v3536, %v3728
    %v3730 = vpop.f32.mrb[0].mxu0
    %3731 = vdwg.mxu0
    %s3732 = scalar_lea.vmem [#allocation7], 32
    %v3733 = vld [vmem:[%s3732] sm:$0xff]
    %v3734 = vld [vmem:[%s3732 + $0x8] sm:$0xff]
    %v3736 = vsel %vm3345, %v1502, 0
    %v3739 = vsel %vm3345, %v1507, 0
    %v3742 = vsel %vm3345, %v1512, 0
    %v3745 = vsel %vm3345, %v1517, 0
    %v3748 = vsel %vm3345, %v1522, 0
    %v3751 = vsel %vm3345, %v1527, 0
    %v3754 = vsel %vm3345, %v1532, 0
    %v3757 = vsel %vm3345, %v1537, 0
    %v3760 = vsel %vm3345, %v1542, 0
    %v3763 = vsel %vm3345, %v1547, 0
    %v3766 = vsel %vm3345, %v1552, 0
    %v3769 = vsel %vm3345, %v1557, 0
    %v3772 = vsel %vm3345, %v1562, 0
    %v3775 = vsel %vm3345, %v1567, 0
    %v3778 = vsel %vm3345, %v1572, 0
    %v3781 = vsel %vm3345, %v1577, 0
    %3783 = vmatprep.subr.mxu0 0.0
    %3784 = vmatpush1.msra.mxu0 %v3733
    %3785 = vmatprep.subr.mxu0 0.0
    %3786 = vmatpush1.msra.mxu0 %v3734
    %3787 = vmatprep.subr.mxu0 0.0
    %3788 = vmatpush1.msra.mxu0 0.0
    %3789 = vmatprep.subr.mxu0 0.0
    %3790 = vmatpush1.msra.mxu0 0.0
    %3791 = vmatprep.subr.mxu0 0.0
    %3792 = vmatpush1.msra.mxu0 0.0
    %3793 = vmatprep.subr.mxu0 0.0
    %3794 = vmatpush1.msra.mxu0 0.0
    %3795 = vmatprep.subr.mxu0 0.0
    %3796 = vmatpush1.msra.mxu0 0.0
    %3797 = vmatprep.subr.mxu0 0.0
    %3798 = vmatpush1.msra.mxu0 0.0
    %3799 = vmatprep.subr.mxu0 0.0
    %3800 = vmatpush1.msra.mxu0 0.0
    %3801 = vmatprep.subr.mxu0 0.0
    %3802 = vmatpush1.msra.mxu0 0.0
    %3803 = vmatprep.subr.mxu0 0.0
    %3804 = vmatpush1.msra.mxu0 0.0
    %3805 = vmatprep.subr.mxu0 0.0
    %3806 = vmatpush1.msra.mxu0 0.0
    %3807 = vmatprep.subr.mxu0 0.0
    %3808 = vmatpush1.msra.mxu0 0.0
    %3809 = vmatprep.subr.mxu0 0.0
    %3810 = vmatpush1.msra.mxu0 0.0
    %3811 = vmatprep.subr.mxu0 0.0
    %3812 = vmatpush1.msra.mxu0 0.0
    %3813 = vmatprep.subr.mxu0 0.0
    %3814 = vmatpush1.msra.mxu0 0.0
    %3815 = vmatprep.subr.mxu0 0.0
    %3816 = vmatpush1.msra.mxu0 0.0
    %3817 = vmatprep.subr.mxu0 0.0
    %3818 = vmatpush1.msra.mxu0 0.0
    %3819 = vmatprep.subr.mxu0 0.0
    %3820 = vmatpush1.msra.mxu0 0.0
    %3821 = vmatprep.subr.mxu0 0.0
    %3822 = vmatpush1.msra.mxu0 0.0
    %3823 = vmatprep.subr.mxu0 0.0
    %3824 = vmatpush1.msra.mxu0 0.0
    %3825 = vmatprep.subr.mxu0 0.0
    %3826 = vmatpush1.msra.mxu0 0.0
    %3827 = vmatprep.subr.mxu0 0.0
    %3828 = vmatpush1.msra.mxu0 0.0
    %3829 = vmatprep.subr.mxu0 0.0
    %3830 = vmatpush1.msra.mxu0 0.0
    %3831 = vmatprep.subr.mxu0 0.0
    %3832 = vmatpush1.msra.mxu0 0.0
    %3833 = vmatprep.subr.mxu0 0.0
    %3834 = vmatpush1.msra.mxu0 0.0
    %3835 = vmatprep.subr.mxu0 0.0
    %3836 = vmatpush1.msra.mxu0 0.0
    %3837 = vmatprep.subr.mxu0 0.0
    %3838 = vmatpush1.msra.mxu0 0.0
    %3839 = vmatprep.subr.mxu0 0.0
    %3840 = vmatpush1.msra.mxu0 0.0
    %3841 = vmatprep.subr.mxu0 0.0
    %3842 = vmatpush1.msra.mxu0 0.0
    %3843 = vmatprep.subr.mxu0 0.0
    %3844 = vmatpush1.msra.mxu0 0.0
    %3845 = vmatprep.subr.mxu0 0.0
    %3846 = vmatpush1.msra.mxu0 0.0
    %3847 = vmatprep.mubr.f32.mxu0 0.0
    %3848 = vmatmul.mubr.f32.gmra.mrb[0].mxu0 %v3736
    %v3849 = vpop.f32.mrb[0].mxu0
    %v3850 = vadd.f32 0.0, %v3849
    %v3851 = vpop.f32.mrb[0].mxu0
    %3852 = vmatprep.mubr.f32.mxu0 0.0
    %3853 = vmatmul.mubr.f32.gmra.mrb[0].mxu0 %v3739
    %v3854 = vpop.f32.mrb[0].mxu0
    %v3855 = vadd.f32 0.0, %v3854
    %v3856 = vpop.f32.mrb[0].mxu0
    %3857 = vmatprep.mubr.f32.mxu0 0.0
    %3858 = vmatmul.mubr.f32.gmra.mrb[0].mxu0 %v3742
    %v3859 = vpop.f32.mrb[0].mxu0
    %v3860 = vadd.f32 0.0, %v3859
    %v3861 = vpop.f32.mrb[0].mxu0
    %3862 = vmatprep.mubr.f32.mxu0 0.0
    %3863 = vmatmul.mubr.f32.gmra.mrb[0].mxu0 %v3745
    %v3864 = vpop.f32.mrb[0].mxu0
    %v3865 = vadd.f32 0.0, %v3864
    %v3866 = vpop.f32.mrb[0].mxu0
    %3867 = vmatprep.mubr.f32.mxu0 0.0
    %3868 = vmatmul.mubr.f32.gmra.mrb[0].mxu0 %v3748
    %v3869 = vpop.f32.mrb[0].mxu0
    %v3870 = vadd.f32 0.0, %v3869
    %v3871 = vpop.f32.mrb[0].mxu0
    %3872 = vmatprep.mubr.f32.mxu0 0.0
    %3873 = vmatmul.mubr.f32.gmra.mrb[0].mxu0 %v3751
    %v3874 = vpop.f32.mrb[0].mxu0
    %v3875 = vadd.f32 0.0, %v3874
    %v3876 = vpop.f32.mrb[0].mxu0
    %3877 = vmatprep.mubr.f32.mxu0 0.0
    %3878 = vmatmul.mubr.f32.gmra.mrb[0].mxu0 %v3754
    %v3879 = vpop.f32.mrb[0].mxu0
    %v3880 = vadd.f32 0.0, %v3879
    %v3881 = vpop.f32.mrb[0].mxu0
    %3882 = vmatprep.mubr.f32.mxu0 0.0
    %3883 = vmatmul.mubr.f32.gmra.mrb[0].mxu0 %v3757
    %v3884 = vpop.f32.mrb[0].mxu0
    %v3885 = vadd.f32 0.0, %v3884
    %v3886 = vpop.f32.mrb[0].mxu0
    %3887 = vmatprep.mubr.f32.mxu0 0.0
    %3888 = vmatmul.mubr.f32.gmra.mrb[0].mxu0 %v3760
    %v3889 = vpop.f32.mrb[0].mxu0
    %v3890 = vadd.f32 0.0, %v3889
    %v3891 = vpop.f32.mrb[0].mxu0
    %3892 = vmatprep.mubr.f32.mxu0 0.0
    %3893 = vmatmul.mubr.f32.gmra.mrb[0].mxu0 %v3763
    %v3894 = vpop.f32.mrb[0].mxu0
    %v3895 = vadd.f32 0.0, %v3894
    %v3896 = vpop.f32.mrb[0].mxu0
    %3897 = vmatprep.mubr.f32.mxu0 0.0
    %3898 = vmatmul.mubr.f32.gmra.mrb[0].mxu0 %v3766
    %v3899 = vpop.f32.mrb[0].mxu0
    %v3900 = vadd.f32 0.0, %v3899
    %v3901 = vpop.f32.mrb[0].mxu0
    %3902 = vmatprep.mubr.f32.mxu0 0.0
    %3903 = vmatmul.mubr.f32.gmra.mrb[0].mxu0 %v3769
    %v3904 = vpop.f32.mrb[0].mxu0
    %v3905 = vadd.f32 0.0, %v3904
    %v3906 = vpop.f32.mrb[0].mxu0
    %3907 = vmatprep.mubr.f32.mxu0 0.0
    %3908 = vmatmul.mubr.f32.gmra.mrb[0].mxu0 %v3772
    %v3909 = vpop.f32.mrb[0].mxu0
    %v3910 = vadd.f32 0.0, %v3909
    %v3911 = vpop.f32.mrb[0].mxu0
    %3912 = vmatprep.mubr.f32.mxu0 0.0
    %3913 = vmatmul.mubr.f32.gmra.mrb[0].mxu0 %v3775
    %v3914 = vpop.f32.mrb[0].mxu0
    %v3915 = vadd.f32 0.0, %v3914
    %v3916 = vpop.f32.mrb[0].mxu0
    %3917 = vmatprep.mubr.f32.mxu0 0.0
    %3918 = vmatmul.mubr.f32.gmra.mrb[0].mxu0 %v3778
    %v3919 = vpop.f32.mrb[0].mxu0
    %v3920 = vadd.f32 0.0, %v3919
    %v3921 = vpop.f32.mrb[0].mxu0
    %3922 = vmatprep.mubr.f32.mxu0 0.0
    %3923 = vmatmul.mubr.f32.gmra.mrb[0].mxu0 %v3781
    %v3924 = vpop.f32.mrb[0].mxu0
    %v3925 = vadd.f32 0.0, %v3924
    %v3926 = vpop.f32.mrb[0].mxu0
    %3927 = vdwg.mxu0
    %v3928 = vadd.f32 %v3654, %v3850
    %v3929 = vadd.f32 %v3659, %v3855
    %v3930 = vadd.f32 %v3664, %v3860
    %v3931 = vadd.f32 %v3669, %v3865
    %v3932 = vadd.f32 %v3674, %v3870
    %v3933 = vadd.f32 %v3679, %v3875
    %v3934 = vadd.f32 %v3684, %v3880
    %v3935 = vadd.f32 %v3689, %v3885
    %v3936 = vadd.f32 %v3694, %v3890
    %v3937 = vadd.f32 %v3699, %v3895
    %v3938 = vadd.f32 %v3704, %v3900
    %v3939 = vadd.f32 %v3709, %v3905
    %v3940 = vadd.f32 %v3714, %v3910
    %v3941 = vadd.f32 %v3719, %v3915
    %v3942 = vadd.f32 %v3724, %v3920
    %v3943 = vadd.f32 %v3729, %v3925
    %s3944 = scalar_lea.vmem [#allocation7], 48
    %v3945 = vld [vmem:[%s3944] sm:$0xff]
    %v3946 = vld [vmem:[%s3944 + $0x8] sm:$0xff]
    %v3948 = vsel %vm3345, %v1582, 0
    %v3951 = vsel %vm3345, %v1587, 0
    %v3954 = vsel %vm3345, %v1592, 0
    %v3957 = vsel %vm3345, %v1597, 0
    %v3960 = vsel %vm3345, %v1602, 0
    %v3963 = vsel %vm3345, %v1607, 0
    %v3966 = vsel %vm3345, %v1612, 0
    %v3969 = vsel %vm3345, %v1617, 0
    %v3972 = vsel %vm3345, %v1622, 0
    %v3975 = vsel %vm3345, %v1627, 0
    %v3978 = vsel %vm3345, %v1632, 0
    %v3981 = vsel %vm3345, %v1637, 0
    %v3984 = vsel %vm3345, %v1642, 0
    %v3987 = vsel %vm3345, %v1647, 0
    %v3990 = vsel %vm3345, %v1652, 0
    %v3993 = vsel %vm3345, %v1657, 0
    %3995 = vmatprep.subr.mxu0 0.0
    %3996 = vmatpush1.msra.mxu0 %v3945
    %3997 = vmatprep.subr.mxu0 0.0
    %3998 = vmatpush1.msra.mxu0 %v3946
    %3999 = vmatprep.subr.mxu0 0.0
    %4000 = vmatpush1.msra.mxu0 0.0
    %4001 = vmatprep.subr.mxu0 0.0
    %4002 = vmatpush1.msra.mxu0 0.0
    %4003 = vmatprep.subr.mxu0 0.0
    %4004 = vmatpush1.msra.mxu0 0.0
    %4005 = vmatprep.subr.mxu0 0.0
    %4006 = vmatpush1.msra.mxu0 0.0
    %4007 = vmatprep.subr.mxu0 0.0
    %4008 = vmatpush1.msra.mxu0 0.0
    %4009 = vmatprep.subr.mxu0 0.0
    %4010 = vmatpush1.msra.mxu0 0.0
    %4011 = vmatprep.subr.mxu0 0.0
    %4012 = vmatpush1.msra.mxu0 0.0
    %4013 = vmatprep.subr.mxu0 0.0
    %4014 = vmatpush1.msra.mxu0 0.0
    %4015 = vmatprep.subr.mxu0 0.0
    %4016 = vmatpush1.msra.mxu0 0.0
    %4017 = vmatprep.subr.mxu0 0.0
    %4018 = vmatpush1.msra.mxu0 0.0
    %4019 = vmatprep.subr.mxu0 0.0
    %4020 = vmatpush1.msra.mxu0 0.0
    %4021 = vmatprep.subr.mxu0 0.0
    %4022 = vmatpush1.msra.mxu0 0.0
    %4023 = vmatprep.subr.mxu0 0.0
    %4024 = vmatpush1.msra.mxu0 0.0
    %4025 = vmatprep.subr.mxu0 0.0
    %4026 = vmatpush1.msra.mxu0 0.0
    %4027 = vmatprep.subr.mxu0 0.0
    %4028 = vmatpush1.msra.mxu0 0.0
    %4029 = vmatprep.subr.mxu0 0.0
    %4030 = vmatpush1.msra.mxu0 0.0
    %4031 = vmatprep.subr.mxu0 0.0
    %4032 = vmatpush1.msra.mxu0 0.0
    %4033 = vmatprep.subr.mxu0 0.0
    %4034 = vmatpush1.msra.mxu0 0.0
    %4035 = vmatprep.subr.mxu0 0.0
    %4036 = vmatpush1.msra.mxu0 0.0
    %4037 = vmatprep.subr.mxu0 0.0
    %4038 = vmatpush1.msra.mxu0 0.0
    %4039 = vmatprep.subr.mxu0 0.0
    %4040 = vmatpush1.msra.mxu0 0.0
    %4041 = vmatprep.subr.mxu0 0.0
    %4042 = vmatpush1.msra.mxu0 0.0
    %4043 = vmatprep.subr.mxu0 0.0
    %4044 = vmatpush1.msra.mxu0 0.0
    %4045 = vmatprep.subr.mxu0 0.0
    %4046 = vmatpush1.msra.mxu0 0.0
    %4047 = vmatprep.subr.mxu0 0.0
    %4048 = vmatpush1.msra.mxu0 0.0
    %4049 = vmatprep.subr.mxu0 0.0
    %4050 = vmatpush1.msra.mxu0 0.0
    %4051 = vmatprep.subr.mxu0 0.0
    %4052 = vmatpush1.msra.mxu0 0.0
    %4053 = vmatprep.subr.mxu0 0.0
    %4054 = vmatpush1.msra.mxu0 0.0
    %4055 = vmatprep.subr.mxu0 0.0
    %4056 = vmatpush1.msra.mxu0 0.0
    %4057 = vmatprep.subr.mxu0 0.0
    %4058 = vmatpush1.msra.mxu0 0.0
    %4059 = vmatprep.mubr.f32.mxu0 0.0
    %4060 = vmatmul.mubr.f32.gmra.mrb[0].mxu0 %v3948
    %v4061 = vpop.f32.mrb[0].mxu0
    %v4062 = vadd.f32 0.0, %v4061
    %v4063 = vpop.f32.mrb[0].mxu0
    %4064 = vmatprep.mubr.f32.mxu0 0.0
    %4065 = vmatmul.mubr.f32.gmra.mrb[0].mxu0 %v3951
    %v4066 = vpop.f32.mrb[0].mxu0
    %v4067 = vadd.f32 0.0, %v4066
    %v4068 = vpop.f32.mrb[0].mxu0
    %4069 = vmatprep.mubr.f32.mxu0 0.0
    %4070 = vmatmul.mubr.f32.gmra.mrb[0].mxu0 %v3954
    %v4071 = vpop.f32.mrb[0].mxu0
    %v4072 = vadd.f32 0.0, %v4071
    %v4073 = vpop.f32.mrb[0].mxu0
    %4074 = vmatprep.mubr.f32.mxu0 0.0
    %4075 = vmatmul.mubr.f32.gmra.mrb[0].mxu0 %v3957
    %v4076 = vpop.f32.mrb[0].mxu0
    %v4077 = vadd.f32 0.0, %v4076
    %v4078 = vpop.f32.mrb[0].mxu0
    %4079 = vmatprep.mubr.f32.mxu0 0.0
    %4080 = vmatmul.mubr.f32.gmra.mrb[0].mxu0 %v3960
    %v4081 = vpop.f32.mrb[0].mxu0
    %v4082 = vadd.f32 0.0, %v4081
    %v4083 = vpop.f32.mrb[0].mxu0
    %4084 = vmatprep.mubr.f32.mxu0 0.0
    %4085 = vmatmul.mubr.f32.gmra.mrb[0].mxu0 %v3963
    %v4086 = vpop.f32.mrb[0].mxu0
    %v4087 = vadd.f32 0.0, %v4086
    %v4088 = vpop.f32.mrb[0].mxu0
    %4089 = vmatprep.mubr.f32.mxu0 0.0
    %4090 = vmatmul.mubr.f32.gmra.mrb[0].mxu0 %v3966
    %v4091 = vpop.f32.mrb[0].mxu0
    %v4092 = vadd.f32 0.0, %v4091
    %v4093 = vpop.f32.mrb[0].mxu0
    %4094 = vmatprep.mubr.f32.mxu0 0.0
    %4095 = vmatmul.mubr.f32.gmra.mrb[0].mxu0 %v3969
    %v4096 = vpop.f32.mrb[0].mxu0
    %v4097 = vadd.f32 0.0, %v4096
    %v4098 = vpop.f32.mrb[0].mxu0
    %4099 = vmatprep.mubr.f32.mxu0 0.0
    %4100 = vmatmul.mubr.f32.gmra.mrb[0].mxu0 %v3972
    %v4101 = vpop.f32.mrb[0].mxu0
    %v4102 = vadd.f32 0.0, %v4101
    %v4103 = vpop.f32.mrb[0].mxu0
    %4104 = vmatprep.mubr.f32.mxu0 0.0
    %4105 = vmatmul.mubr.f32.gmra.mrb[0].mxu0 %v3975
    %v4106 = vpop.f32.mrb[0].mxu0
    %v4107 = vadd.f32 0.0, %v4106
    %v4108 = vpop.f32.mrb[0].mxu0
    %4109 = vmatprep.mubr.f32.mxu0 0.0
    %4110 = vmatmul.mubr.f32.gmra.mrb[0].mxu0 %v3978
    %v4111 = vpop.f32.mrb[0].mxu0
    %v4112 = vadd.f32 0.0, %v4111
    %v4113 = vpop.f32.mrb[0].mxu0
    %4114 = vmatprep.mubr.f32.mxu0 0.0
    %4115 = vmatmul.mubr.f32.gmra.mrb[0].mxu0 %v3981
    %v4116 = vpop.f32.mrb[0].mxu0
    %v4117 = vadd.f32 0.0, %v4116
    %v4118 = vpop.f32.mrb[0].mxu0
    %4119 = vmatprep.mubr.f32.mxu0 0.0
    %4120 = vmatmul.mubr.f32.gmra.mrb[0].mxu0 %v3984
    %v4121 = vpop.f32.mrb[0].mxu0
    %v4122 = vadd.f32 0.0, %v4121
    %v4123 = vpop.f32.mrb[0].mxu0
    %4124 = vmatprep.mubr.f32.mxu0 0.0
    %4125 = vmatmul.mubr.f32.gmra.mrb[0].mxu0 %v3987
    %v4126 = vpop.f32.mrb[0].mxu0
    %v4127 = vadd.f32 0.0, %v4126
    %v4128 = vpop.f32.mrb[0].mxu0
    %4129 = vmatprep.mubr.f32.mxu0 0.0
    %4130 = vmatmul.mubr.f32.gmra.mrb[0].mxu0 %v3990
    %v4131 = vpop.f32.mrb[0].mxu0
    %v4132 = vadd.f32 0.0, %v4131
    %v4133 = vpop.f32.mrb[0].mxu0
    %4134 = vmatprep.mubr.f32.mxu0 0.0
    %4135 = vmatmul.mubr.f32.gmra.mrb[0].mxu0 %v3993
    %v4136 = vpop.f32.mrb[0].mxu0
    %v4137 = vadd.f32 0.0, %v4136
    %v4138 = vpop.f32.mrb[0].mxu0
    %4139 = vdwg.mxu0
    %v4140 = vadd.f32 %v3928, %v4062
    %v4141 = vadd.f32 %v3929, %v4067
    %v4142 = vadd.f32 %v3930, %v4072
    %v4143 = vadd.f32 %v3931, %v4077
    %v4144 = vadd.f32 %v3932, %v4082
    %v4145 = vadd.f32 %v3933, %v4087
    %v4146 = vadd.f32 %v3934, %v4092
    %v4147 = vadd.f32 %v3935, %v4097
    %v4148 = vadd.f32 %v3936, %v4102
    %v4149 = vadd.f32 %v3937, %v4107
    %v4150 = vadd.f32 %v3938, %v4112
    %v4151 = vadd.f32 %v3939, %v4117
    %v4152 = vadd.f32 %v3940, %v4122
    %v4153 = vadd.f32 %v3941, %v4127
    %v4154 = vadd.f32 %v3942, %v4132
    %v4155 = vadd.f32 %v3943, %v4137
    %s4156 = scalar_lea.vmem [#allocation7], 64
    %v4157 = vld [vmem:[%s4156] sm:$0xff]
    %v4158 = vld [vmem:[%s4156 + $0x8] sm:$0xff]
    %v4160 = vsel %vm3345, %v1662, 0
    %v4163 = vsel %vm3345, %v1667, 0
    %v4166 = vsel %vm3345, %v1672, 0
    %v4169 = vsel %vm3345, %v1677, 0
    %v4172 = vsel %vm3345, %v1682, 0
    %v4175 = vsel %vm3345, %v1687, 0
    %v4178 = vsel %vm3345, %v1692, 0
    %v4181 = vsel %vm3345, %v1697, 0
    %v4184 = vsel %vm3345, %v1702, 0
    %v4187 = vsel %vm3345, %v1707, 0
    %v4190 = vsel %vm3345, %v1712, 0
    %v4193 = vsel %vm3345, %v1717, 0
    %v4196 = vsel %vm3345, %v1722, 0
    %v4199 = vsel %vm3345, %v1727, 0
    %v4202 = vsel %vm3345, %v1732, 0
    %v4205 = vsel %vm3345, %v1737, 0
    %4207 = vmatprep.subr.mxu0 0.0
    %4208 = vmatpush1.msra.mxu0 %v4157
    %4209 = vmatprep.subr.mxu0 0.0
    %4210 = vmatpush1.msra.mxu0 %v4158
    %4211 = vmatprep.subr.mxu0 0.0
    %4212 = vmatpush1.msra.mxu0 0.0
    %4213 = vmatprep.subr.mxu0 0.0
    %4214 = vmatpush1.msra.mxu0 0.0
    %4215 = vmatprep.subr.mxu0 0.0
    %4216 = vmatpush1.msra.mxu0 0.0
    %4217 = vmatprep.subr.mxu0 0.0
    %4218 = vmatpush1.msra.mxu0 0.0
    %4219 = vmatprep.subr.mxu0 0.0
    %4220 = vmatpush1.msra.mxu0 0.0
    %4221 = vmatprep.subr.mxu0 0.0
    %4222 = vmatpush1.msra.mxu0 0.0
    %4223 = vmatprep.subr.mxu0 0.0
    %4224 = vmatpush1.msra.mxu0 0.0
    %4225 = vmatprep.subr.mxu0 0.0
    %4226 = vmatpush1.msra.mxu0 0.0
    %4227 = vmatprep.subr.mxu0 0.0
    %4228 = vmatpush1.msra.mxu0 0.0
    %4229 = vmatprep.subr.mxu0 0.0
    %4230 = vmatpush1.msra.mxu0 0.0
    %4231 = vmatprep.subr.mxu0 0.0
    %4232 = vmatpush1.msra.mxu0 0.0
    %4233 = vmatprep.subr.mxu0 0.0
    %4234 = vmatpush1.msra.mxu0 0.0
    %4235 = vmatprep.subr.mxu0 0.0
    %4236 = vmatpush1.msra.mxu0 0.0
    %4237 = vmatprep.subr.mxu0 0.0
    %4238 = vmatpush1.msra.mxu0 0.0
    %4239 = vmatprep.subr.mxu0 0.0
    %4240 = vmatpush1.msra.mxu0 0.0
    %4241 = vmatprep.subr.mxu0 0.0
    %4242 = vmatpush1.msra.mxu0 0.0
    %4243 = vmatprep.subr.mxu0 0.0
    %4244 = vmatpush1.msra.mxu0 0.0
    %4245 = vmatprep.subr.mxu0 0.0
    %4246 = vmatpush1.msra.mxu0 0.0
    %4247 = vmatprep.subr.mxu0 0.0
    %4248 = vmatpush1.msra.mxu0 0.0
    %4249 = vmatprep.subr.mxu0 0.0
    %4250 = vmatpush1.msra.mxu0 0.0
    %4251 = vmatprep.subr.mxu0 0.0
    %4252 = vmatpush1.msra.mxu0 0.0
    %4253 = vmatprep.subr.mxu0 0.0
    %4254 = vmatpush1.msra.mxu0 0.0
    %4255 = vmatprep.subr.mxu0 0.0
    %4256 = vmatpush1.msra.mxu0 0.0
    %4257 = vmatprep.subr.mxu0 0.0
    %4258 = vmatpush1.msra.mxu0 0.0
    %4259 = vmatprep.subr.mxu0 0.0
    %4260 = vmatpush1.msra.mxu0 0.0
    %4261 = vmatprep.subr.mxu0 0.0
    %4262 = vmatpush1.msra.mxu0 0.0
    %4263 = vmatprep.subr.mxu0 0.0
    %4264 = vmatpush1.msra.mxu0 0.0
    %4265 = vmatprep.subr.mxu0 0.0
    %4266 = vmatpush1.msra.mxu0 0.0
    %4267 = vmatprep.subr.mxu0 0.0
    %4268 = vmatpush1.msra.mxu0 0.0
    %4269 = vmatprep.subr.mxu0 0.0
    %4270 = vmatpush1.msra.mxu0 0.0
    %4271 = vmatprep.mubr.f32.mxu0 0.0
    %4272 = vmatmul.mubr.f32.gmra.mrb[0].mxu0 %v4160
    %v4273 = vpop.f32.mrb[0].mxu0
    %v4274 = vadd.f32 0.0, %v4273
    %v4275 = vpop.f32.mrb[0].mxu0
    %4276 = vmatprep.mubr.f32.mxu0 0.0
    %4277 = vmatmul.mubr.f32.gmra.mrb[0].mxu0 %v4163
    %v4278 = vpop.f32.mrb[0].mxu0
    %v4279 = vadd.f32 0.0, %v4278
    %v4280 = vpop.f32.mrb[0].mxu0
    %4281 = vmatprep.mubr.f32.mxu0 0.0
    %4282 = vmatmul.mubr.f32.gmra.mrb[0].mxu0 %v4166
    %v4283 = vpop.f32.mrb[0].mxu0
    %v4284 = vadd.f32 0.0, %v4283
    %v4285 = vpop.f32.mrb[0].mxu0
    %4286 = vmatprep.mubr.f32.mxu0 0.0
    %4287 = vmatmul.mubr.f32.gmra.mrb[0].mxu0 %v4169
    %v4288 = vpop.f32.mrb[0].mxu0
    %v4289 = vadd.f32 0.0, %v4288
    %v4290 = vpop.f32.mrb[0].mxu0
    %4291 = vmatprep.mubr.f32.mxu0 0.0
    %4292 = vmatmul.mubr.f32.gmra.mrb[0].mxu0 %v4172
    %v4293 = vpop.f32.mrb[0].mxu0
    %v4294 = vadd.f32 0.0, %v4293
    %v4295 = vpop.f32.mrb[0].mxu0
    %4296 = vmatprep.mubr.f32.mxu0 0.0
    %4297 = vmatmul.mubr.f32.gmra.mrb[0].mxu0 %v4175
    %v4298 = vpop.f32.mrb[0].mxu0
    %v4299 = vadd.f32 0.0, %v4298
    %v4300 = vpop.f32.mrb[0].mxu0
    %4301 = vmatprep.mubr.f32.mxu0 0.0
    %4302 = vmatmul.mubr.f32.gmra.mrb[0].mxu0 %v4178
    %v4303 = vpop.f32.mrb[0].mxu0
    %v4304 = vadd.f32 0.0, %v4303
    %v4305 = vpop.f32.mrb[0].mxu0
    %4306 = vmatprep.mubr.f32.mxu0 0.0
    %4307 = vmatmul.mubr.f32.gmra.mrb[0].mxu0 %v4181
    %v4308 = vpop.f32.mrb[0].mxu0
    %v4309 = vadd.f32 0.0, %v4308
    %v4310 = vpop.f32.mrb[0].mxu0
    %4311 = vmatprep.mubr.f32.mxu0 0.0
    %4312 = vmatmul.mubr.f32.gmra.mrb[0].mxu0 %v4184
    %v4313 = vpop.f32.mrb[0].mxu0
    %v4314 = vadd.f32 0.0, %v4313
    %v4315 = vpop.f32.mrb[0].mxu0
    %4316 = vmatprep.mubr.f32.mxu0 0.0
    %4317 = vmatmul.mubr.f32.gmra.mrb[0].mxu0 %v4187
    %v4318 = vpop.f32.mrb[0].mxu0
    %v4319 = vadd.f32 0.0, %v4318
    %v4320 = vpop.f32.mrb[0].mxu0
    %4321 = vmatprep.mubr.f32.mxu0 0.0
    %4322 = vmatmul.mubr.f32.gmra.mrb[0].mxu0 %v4190
    %v4323 = vpop.f32.mrb[0].mxu0
    %v4324 = vadd.f32 0.0, %v4323
    %v4325 = vpop.f32.mrb[0].mxu0
    %4326 = vmatprep.mubr.f32.mxu0 0.0
    %4327 = vmatmul.mubr.f32.gmra.mrb[0].mxu0 %v4193
    %v4328 = vpop.f32.mrb[0].mxu0
    %v4329 = vadd.f32 0.0, %v4328
    %v4330 = vpop.f32.mrb[0].mxu0
    %4331 = vmatprep.mubr.f32.mxu0 0.0
    %4332 = vmatmul.mubr.f32.gmra.mrb[0].mxu0 %v4196
    %v4333 = vpop.f32.mrb[0].mxu0
    %v4334 = vadd.f32 0.0, %v4333
    %v4335 = vpop.f32.mrb[0].mxu0
    %4336 = vmatprep.mubr.f32.mxu0 0.0
    %4337 = vmatmul.mubr.f32.gmra.mrb[0].mxu0 %v4199
    %v4338 = vpop.f32.mrb[0].mxu0
    %v4339 = vadd.f32 0.0, %v4338
    %v4340 = vpop.f32.mrb[0].mxu0
    %4341 = vmatprep.mubr.f32.mxu0 0.0
    %4342 = vmatmul.mubr.f32.gmra.mrb[0].mxu0 %v4202
    %v4343 = vpop.f32.mrb[0].mxu0
    %v4344 = vadd.f32 0.0, %v4343
    %v4345 = vpop.f32.mrb[0].mxu0
    %4346 = vmatprep.mubr.f32.mxu0 0.0
    %4347 = vmatmul.mubr.f32.gmra.mrb[0].mxu0 %v4205
    %v4348 = vpop.f32.mrb[0].mxu0
    %v4349 = vadd.f32 0.0, %v4348
    %v4350 = vpop.f32.mrb[0].mxu0
    %4351 = vdwg.mxu0
    %v4352 = vadd.f32 %v4140, %v4274
    %v4353 = vadd.f32 %v4141, %v4279
    %v4354 = vadd.f32 %v4142, %v4284
    %v4355 = vadd.f32 %v4143, %v4289
    %v4356 = vadd.f32 %v4144, %v4294
    %v4357 = vadd.f32 %v4145, %v4299
    %v4358 = vadd.f32 %v4146, %v4304
    %v4359 = vadd.f32 %v4147, %v4309
    %v4360 = vadd.f32 %v4148, %v4314
    %v4361 = vadd.f32 %v4149, %v4319
    %v4362 = vadd.f32 %v4150, %v4324
    %v4363 = vadd.f32 %v4151, %v4329
    %v4364 = vadd.f32 %v4152, %v4334
    %v4365 = vadd.f32 %v4153, %v4339
    %v4366 = vadd.f32 %v4154, %v4344
    %v4367 = vadd.f32 %v4155, %v4349
    %s4368 = scalar_lea.vmem [#allocation7], 80
    %v4369 = vld [vmem:[%s4368] sm:$0xff]
    %v4370 = vld [vmem:[%s4368 + $0x8] sm:$0xff]
    %v4372 = vsel %vm3345, %v1742, 0
    %v4375 = vsel %vm3345, %v1747, 0
    %v4378 = vsel %vm3345, %v1752, 0
    %v4381 = vsel %vm3345, %v1757, 0
    %v4384 = vsel %vm3345, %v1762, 0
    %v4387 = vsel %vm3345, %v1767, 0
    %v4390 = vsel %vm3345, %v1772, 0
    %v4393 = vsel %vm3345, %v1777, 0
    %v4396 = vsel %vm3345, %v1782, 0
    %v4399 = vsel %vm3345, %v1787, 0
    %v4402 = vsel %vm3345, %v1792, 0
    %v4405 = vsel %vm3345, %v1797, 0
    %v4408 = vsel %vm3345, %v1802, 0
    %v4411 = vsel %vm3345, %v1807, 0
    %v4414 = vsel %vm3345, %v1812, 0
    %v4417 = vsel %vm3345, %v1817, 0
    %4419 = vmatprep.subr.mxu0 0.0
    %4420 = vmatpush1.msra.mxu0 %v4369
    %4421 = vmatprep.subr.mxu0 0.0
    %4422 = vmatpush1.msra.mxu0 %v4370
    %4423 = vmatprep.subr.mxu0 0.0
    %4424 = vmatpush1.msra.mxu0 0.0
    %4425 = vmatprep.subr.mxu0 0.0
    %4426 = vmatpush1.msra.mxu0 0.0
    %4427 = vmatprep.subr.mxu0 0.0
    %4428 = vmatpush1.msra.mxu0 0.0
    %4429 = vmatprep.subr.mxu0 0.0
    %4430 = vmatpush1.msra.mxu0 0.0
    %4431 = vmatprep.subr.mxu0 0.0
    %4432 = vmatpush1.msra.mxu0 0.0
    %4433 = vmatprep.subr.mxu0 0.0
    %4434 = vmatpush1.msra.mxu0 0.0
    %4435 = vmatprep.subr.mxu0 0.0
    %4436 = vmatpush1.msra.mxu0 0.0
    %4437 = vmatprep.subr.mxu0 0.0
    %4438 = vmatpush1.msra.mxu0 0.0
    %4439 = vmatprep.subr.mxu0 0.0
    %4440 = vmatpush1.msra.mxu0 0.0
    %4441 = vmatprep.subr.mxu0 0.0
    %4442 = vmatpush1.msra.mxu0 0.0
    %4443 = vmatprep.subr.mxu0 0.0
    %4444 = vmatpush1.msra.mxu0 0.0
    %4445 = vmatprep.subr.mxu0 0.0
    %4446 = vmatpush1.msra.mxu0 0.0
    %4447 = vmatprep.subr.mxu0 0.0
    %4448 = vmatpush1.msra.mxu0 0.0
    %4449 = vmatprep.subr.mxu0 0.0
    %4450 = vmatpush1.msra.mxu0 0.0
    %4451 = vmatprep.subr.mxu0 0.0
    %4452 = vmatpush1.msra.mxu0 0.0
    %4453 = vmatprep.subr.mxu0 0.0
    %4454 = vmatpush1.msra.mxu0 0.0
    %4455 = vmatprep.subr.mxu0 0.0
    %4456 = vmatpush1.msra.mxu0 0.0
    %4457 = vmatprep.subr.mxu0 0.0
    %4458 = vmatpush1.msra.mxu0 0.0
    %4459 = vmatprep.subr.mxu0 0.0
    %4460 = vmatpush1.msra.mxu0 0.0
    %4461 = vmatprep.subr.mxu0 0.0
    %4462 = vmatpush1.msra.mxu0 0.0
    %4463 = vmatprep.subr.mxu0 0.0
    %4464 = vmatpush1.msra.mxu0 0.0
    %4465 = vmatprep.subr.mxu0 0.0
    %4466 = vmatpush1.msra.mxu0 0.0
    %4467 = vmatprep.subr.mxu0 0.0
    %4468 = vmatpush1.msra.mxu0 0.0
    %4469 = vmatprep.subr.mxu0 0.0
    %4470 = vmatpush1.msra.mxu0 0.0
    %4471 = vmatprep.subr.mxu0 0.0
    %4472 = vmatpush1.msra.mxu0 0.0
    %4473 = vmatprep.subr.mxu0 0.0
    %4474 = vmatpush1.msra.mxu0 0.0
    %4475 = vmatprep.subr.mxu0 0.0
    %4476 = vmatpush1.msra.mxu0 0.0
    %4477 = vmatprep.subr.mxu0 0.0
    %4478 = vmatpush1.msra.mxu0 0.0
    %4479 = vmatprep.subr.mxu0 0.0
    %4480 = vmatpush1.msra.mxu0 0.0
    %4481 = vmatprep.subr.mxu0 0.0
    %4482 = vmatpush1.msra.mxu0 0.0
    %4483 = vmatprep.mubr.f32.mxu0 0.0
    %4484 = vmatmul.mubr.f32.gmra.mrb[0].mxu0 %v4372
    %v4485 = vpop.f32.mrb[0].mxu0
    %v4486 = vadd.f32 0.0, %v4485
    %v4487 = vpop.f32.mrb[0].mxu0
    %4488 = vmatprep.mubr.f32.mxu0 0.0
    %4489 = vmatmul.mubr.f32.gmra.mrb[0].mxu0 %v4375
    %v4490 = vpop.f32.mrb[0].mxu0
    %v4491 = vadd.f32 0.0, %v4490
    %v4492 = vpop.f32.mrb[0].mxu0
    %4493 = vmatprep.mubr.f32.mxu0 0.0
    %4494 = vmatmul.mubr.f32.gmra.mrb[0].mxu0 %v4378
    %v4495 = vpop.f32.mrb[0].mxu0
    %v4496 = vadd.f32 0.0, %v4495
    %v4497 = vpop.f32.mrb[0].mxu0
    %4498 = vmatprep.mubr.f32.mxu0 0.0
    %4499 = vmatmul.mubr.f32.gmra.mrb[0].mxu0 %v4381
    %v4500 = vpop.f32.mrb[0].mxu0
    %v4501 = vadd.f32 0.0, %v4500
    %v4502 = vpop.f32.mrb[0].mxu0
    %4503 = vmatprep.mubr.f32.mxu0 0.0
    %4504 = vmatmul.mubr.f32.gmra.mrb[0].mxu0 %v4384
    %v4505 = vpop.f32.mrb[0].mxu0
    %v4506 = vadd.f32 0.0, %v4505
    %v4507 = vpop.f32.mrb[0].mxu0
    %4508 = vmatprep.mubr.f32.mxu0 0.0
    %4509 = vmatmul.mubr.f32.gmra.mrb[0].mxu0 %v4387
    %v4510 = vpop.f32.mrb[0].mxu0
    %v4511 = vadd.f32 0.0, %v4510
    %v4512 = vpop.f32.mrb[0].mxu0
    %4513 = vmatprep.mubr.f32.mxu0 0.0
    %4514 = vmatmul.mubr.f32.gmra.mrb[0].mxu0 %v4390
    %v4515 = vpop.f32.mrb[0].mxu0
    %v4516 = vadd.f32 0.0, %v4515
    %v4517 = vpop.f32.mrb[0].mxu0
    %4518 = vmatprep.mubr.f32.mxu0 0.0
    %4519 = vmatmul.mubr.f32.gmra.mrb[0].mxu0 %v4393
    %v4520 = vpop.f32.mrb[0].mxu0
    %v4521 = vadd.f32 0.0, %v4520
    %v4522 = vpop.f32.mrb[0].mxu0
    %4523 = vmatprep.mubr.f32.mxu0 0.0
    %4524 = vmatmul.mubr.f32.gmra.mrb[0].mxu0 %v4396
    %v4525 = vpop.f32.mrb[0].mxu0
    %v4526 = vadd.f32 0.0, %v4525
    %v4527 = vpop.f32.mrb[0].mxu0
    %4528 = vmatprep.mubr.f32.mxu0 0.0
    %4529 = vmatmul.mubr.f32.gmra.mrb[0].mxu0 %v4399
    %v4530 = vpop.f32.mrb[0].mxu0
    %v4531 = vadd.f32 0.0, %v4530
    %v4532 = vpop.f32.mrb[0].mxu0
    %4533 = vmatprep.mubr.f32.mxu0 0.0
    %4534 = vmatmul.mubr.f32.gmra.mrb[0].mxu0 %v4402
    %v4535 = vpop.f32.mrb[0].mxu0
    %v4536 = vadd.f32 0.0, %v4535
    %v4537 = vpop.f32.mrb[0].mxu0
    %4538 = vmatprep.mubr.f32.mxu0 0.0
    %4539 = vmatmul.mubr.f32.gmra.mrb[0].mxu0 %v4405
    %v4540 = vpop.f32.mrb[0].mxu0
    %v4541 = vadd.f32 0.0, %v4540
    %v4542 = vpop.f32.mrb[0].mxu0
    %4543 = vmatprep.mubr.f32.mxu0 0.0
    %4544 = vmatmul.mubr.f32.gmra.mrb[0].mxu0 %v4408
    %v4545 = vpop.f32.mrb[0].mxu0
    %v4546 = vadd.f32 0.0, %v4545
    %v4547 = vpop.f32.mrb[0].mxu0
    %4548 = vmatprep.mubr.f32.mxu0 0.0
    %4549 = vmatmul.mubr.f32.gmra.mrb[0].mxu0 %v4411
    %v4550 = vpop.f32.mrb[0].mxu0
    %v4551 = vadd.f32 0.0, %v4550
    %v4552 = vpop.f32.mrb[0].mxu0
    %4553 = vmatprep.mubr.f32.mxu0 0.0
    %4554 = vmatmul.mubr.f32.gmra.mrb[0].mxu0 %v4414
    %v4555 = vpop.f32.mrb[0].mxu0
    %v4556 = vadd.f32 0.0, %v4555
    %v4557 = vpop.f32.mrb[0].mxu0
    %4558 = vmatprep.mubr.f32.mxu0 0.0
    %4559 = vmatmul.mubr.f32.gmra.mrb[0].mxu0 %v4417
    %v4560 = vpop.f32.mrb[0].mxu0
    %v4561 = vadd.f32 0.0, %v4560
    %v4562 = vpop.f32.mrb[0].mxu0
    %4563 = vdwg.mxu0
    %v4564 = vadd.f32 %v4352, %v4486
    %v4565 = vadd.f32 %v4353, %v4491
    %v4566 = vadd.f32 %v4354, %v4496
    %v4567 = vadd.f32 %v4355, %v4501
    %v4568 = vadd.f32 %v4356, %v4506
    %v4569 = vadd.f32 %v4357, %v4511
    %v4570 = vadd.f32 %v4358, %v4516
    %v4571 = vadd.f32 %v4359, %v4521
    %v4572 = vadd.f32 %v4360, %v4526
    %v4573 = vadd.f32 %v4361, %v4531
    %v4574 = vadd.f32 %v4362, %v4536
    %v4575 = vadd.f32 %v4363, %v4541
    %v4576 = vadd.f32 %v4364, %v4546
    %v4577 = vadd.f32 %v4365, %v4551
    %v4578 = vadd.f32 %v4366, %v4556
    %v4579 = vadd.f32 %v4367, %v4561
    %s4580 = scalar_lea.vmem [#allocation7], 96
    %v4581 = vld [vmem:[%s4580] sm:$0xff]
    %v4582 = vld [vmem:[%s4580 + $0x8] sm:$0xff]
    %v4584 = vsel %vm3345, %v1822, 0
    %v4587 = vsel %vm3345, %v1827, 0
    %v4590 = vsel %vm3345, %v1832, 0
    %v4593 = vsel %vm3345, %v1837, 0
    %v4596 = vsel %vm3345, %v1842, 0
    %v4599 = vsel %vm3345, %v1847, 0
    %v4602 = vsel %vm3345, %v1852, 0
    %v4605 = vsel %vm3345, %v1857, 0
    %v4608 = vsel %vm3345, %v1862, 0
    %v4611 = vsel %vm3345, %v1867, 0
    %v4614 = vsel %vm3345, %v1872, 0
    %v4617 = vsel %vm3345, %v1877, 0
    %v4620 = vsel %vm3345, %v1882, 0
    %v4623 = vsel %vm3345, %v1887, 0
    %v4626 = vsel %vm3345, %v1892, 0
    %v4629 = vsel %vm3345, %v1897, 0
    %4631 = vmatprep.subr.mxu0 0.0
    %4632 = vmatpush1.msra.mxu0 %v4581
    %4633 = vmatprep.subr.mxu0 0.0
    %4634 = vmatpush1.msra.mxu0 %v4582
    %4635 = vmatprep.subr.mxu0 0.0
    %4636 = vmatpush1.msra.mxu0 0.0
    %4637 = vmatprep.subr.mxu0 0.0
    %4638 = vmatpush1.msra.mxu0 0.0
    %4639 = vmatprep.subr.mxu0 0.0
    %4640 = vmatpush1.msra.mxu0 0.0
    %4641 = vmatprep.subr.mxu0 0.0
    %4642 = vmatpush1.msra.mxu0 0.0
    %4643 = vmatprep.subr.mxu0 0.0
    %4644 = vmatpush1.msra.mxu0 0.0
    %4645 = vmatprep.subr.mxu0 0.0
    %4646 = vmatpush1.msra.mxu0 0.0
    %4647 = vmatprep.subr.mxu0 0.0
    %4648 = vmatpush1.msra.mxu0 0.0
    %4649 = vmatprep.subr.mxu0 0.0
    %4650 = vmatpush1.msra.mxu0 0.0
    %4651 = vmatprep.subr.mxu0 0.0
    %4652 = vmatpush1.msra.mxu0 0.0
    %4653 = vmatprep.subr.mxu0 0.0
    %4654 = vmatpush1.msra.mxu0 0.0
    %4655 = vmatprep.subr.mxu0 0.0
    %4656 = vmatpush1.msra.mxu0 0.0
    %4657 = vmatprep.subr.mxu0 0.0
    %4658 = vmatpush1.msra.mxu0 0.0
    %4659 = vmatprep.subr.mxu0 0.0
    %4660 = vmatpush1.msra.mxu0 0.0
    %4661 = vmatprep.subr.mxu0 0.0
    %4662 = vmatpush1.msra.mxu0 0.0
    %4663 = vmatprep.subr.mxu0 0.0
    %4664 = vmatpush1.msra.mxu0 0.0
    %4665 = vmatprep.subr.mxu0 0.0
    %4666 = vmatpush1.msra.mxu0 0.0
    %4667 = vmatprep.subr.mxu0 0.0
    %4668 = vmatpush1.msra.mxu0 0.0
    %4669 = vmatprep.subr.mxu0 0.0
    %4670 = vmatpush1.msra.mxu0 0.0
    %4671 = vmatprep.subr.mxu0 0.0
    %4672 = vmatpush1.msra.mxu0 0.0
    %4673 = vmatprep.subr.mxu0 0.0
    %4674 = vmatpush1.msra.mxu0 0.0
    %4675 = vmatprep.subr.mxu0 0.0
    %4676 = vmatpush1.msra.mxu0 0.0
    %4677 = vmatprep.subr.mxu0 0.0
    %4678 = vmatpush1.msra.mxu0 0.0
    %4679 = vmatprep.subr.mxu0 0.0
    %4680 = vmatpush1.msra.mxu0 0.0
    %4681 = vmatprep.subr.mxu0 0.0
    %4682 = vmatpush1.msra.mxu0 0.0
    %4683 = vmatprep.subr.mxu0 0.0
    %4684 = vmatpush1.msra.mxu0 0.0
    %4685 = vmatprep.subr.mxu0 0.0
    %4686 = vmatpush1.msra.mxu0 0.0
    %4687 = vmatprep.subr.mxu0 0.0
    %4688 = vmatpush1.msra.mxu0 0.0
    %4689 = vmatprep.subr.mxu0 0.0
    %4690 = vmatpush1.msra.mxu0 0.0
    %4691 = vmatprep.subr.mxu0 0.0
    %4692 = vmatpush1.msra.mxu0 0.0
    %4693 = vmatprep.subr.mxu0 0.0
    %4694 = vmatpush1.msra.mxu0 0.0
    %4695 = vmatprep.mubr.f32.mxu0 0.0
    %4696 = vmatmul.mubr.f32.gmra.mrb[0].mxu0 %v4584
    %v4697 = vpop.f32.mrb[0].mxu0
    %v4698 = vadd.f32 0.0, %v4697
    %v4699 = vpop.f32.mrb[0].mxu0
    %4700 = vmatprep.mubr.f32.mxu0 0.0
    %4701 = vmatmul.mubr.f32.gmra.mrb[0].mxu0 %v4587
    %v4702 = vpop.f32.mrb[0].mxu0
    %v4703 = vadd.f32 0.0, %v4702
    %v4704 = vpop.f32.mrb[0].mxu0
    %4705 = vmatprep.mubr.f32.mxu0 0.0
    %4706 = vmatmul.mubr.f32.gmra.mrb[0].mxu0 %v4590
    %v4707 = vpop.f32.mrb[0].mxu0
    %v4708 = vadd.f32 0.0, %v4707
    %v4709 = vpop.f32.mrb[0].mxu0
    %4710 = vmatprep.mubr.f32.mxu0 0.0
    %4711 = vmatmul.mubr.f32.gmra.mrb[0].mxu0 %v4593
    %v4712 = vpop.f32.mrb[0].mxu0
    %v4713 = vadd.f32 0.0, %v4712
    %v4714 = vpop.f32.mrb[0].mxu0
    %4715 = vmatprep.mubr.f32.mxu0 0.0
    %4716 = vmatmul.mubr.f32.gmra.mrb[0].mxu0 %v4596
    %v4717 = vpop.f32.mrb[0].mxu0
    %v4718 = vadd.f32 0.0, %v4717
    %v4719 = vpop.f32.mrb[0].mxu0
    %4720 = vmatprep.mubr.f32.mxu0 0.0
    %4721 = vmatmul.mubr.f32.gmra.mrb[0].mxu0 %v4599
    %v4722 = vpop.f32.mrb[0].mxu0
    %v4723 = vadd.f32 0.0, %v4722
    %v4724 = vpop.f32.mrb[0].mxu0
    %4725 = vmatprep.mubr.f32.mxu0 0.0
    %4726 = vmatmul.mubr.f32.gmra.mrb[0].mxu0 %v4602
    %v4727 = vpop.f32.mrb[0].mxu0
    %v4728 = vadd.f32 0.0, %v4727
    %v4729 = vpop.f32.mrb[0].mxu0
    %4730 = vmatprep.mubr.f32.mxu0 0.0
    %4731 = vmatmul.mubr.f32.gmra.mrb[0].mxu0 %v4605
    %v4732 = vpop.f32.mrb[0].mxu0
    %v4733 = vadd.f32 0.0, %v4732
    %v4734 = vpop.f32.mrb[0].mxu0
    %4735 = vmatprep.mubr.f32.mxu0 0.0
    %4736 = vmatmul.mubr.f32.gmra.mrb[0].mxu0 %v4608
    %v4737 = vpop.f32.mrb[0].mxu0
    %v4738 = vadd.f32 0.0, %v4737
    %v4739 = vpop.f32.mrb[0].mxu0
    %4740 = vmatprep.mubr.f32.mxu0 0.0
    %4741 = vmatmul.mubr.f32.gmra.mrb[0].mxu0 %v4611
    %v4742 = vpop.f32.mrb[0].mxu0
    %v4743 = vadd.f32 0.0, %v4742
    %v4744 = vpop.f32.mrb[0].mxu0
    %4745 = vmatprep.mubr.f32.mxu0 0.0
    %4746 = vmatmul.mubr.f32.gmra.mrb[0].mxu0 %v4614
    %v4747 = vpop.f32.mrb[0].mxu0
    %v4748 = vadd.f32 0.0, %v4747
    %v4749 = vpop.f32.mrb[0].mxu0
    %4750 = vmatprep.mubr.f32.mxu0 0.0
    %4751 = vmatmul.mubr.f32.gmra.mrb[0].mxu0 %v4617
    %v4752 = vpop.f32.mrb[0].mxu0
    %v4753 = vadd.f32 0.0, %v4752
    %v4754 = vpop.f32.mrb[0].mxu0
    %4755 = vmatprep.mubr.f32.mxu0 0.0
    %4756 = vmatmul.mubr.f32.gmra.mrb[0].mxu0 %v4620
    %v4757 = vpop.f32.mrb[0].mxu0
    %v4758 = vadd.f32 0.0, %v4757
    %v4759 = vpop.f32.mrb[0].mxu0
    %4760 = vmatprep.mubr.f32.mxu0 0.0
    %4761 = vmatmul.mubr.f32.gmra.mrb[0].mxu0 %v4623
    %v4762 = vpop.f32.mrb[0].mxu0
    %v4763 = vadd.f32 0.0, %v4762
    %v4764 = vpop.f32.mrb[0].mxu0
    %4765 = vmatprep.mubr.f32.mxu0 0.0
    %4766 = vmatmul.mubr.f32.gmra.mrb[0].mxu0 %v4626
    %v4767 = vpop.f32.mrb[0].mxu0
    %v4768 = vadd.f32 0.0, %v4767
    %v4769 = vpop.f32.mrb[0].mxu0
    %4770 = vmatprep.mubr.f32.mxu0 0.0
    %4771 = vmatmul.mubr.f32.gmra.mrb[0].mxu0 %v4629
    %v4772 = vpop.f32.mrb[0].mxu0
    %v4773 = vadd.f32 0.0, %v4772
    %v4774 = vpop.f32.mrb[0].mxu0
    %4775 = vdwg.mxu0
    %v4776 = vadd.f32 %v4564, %v4698
    %v4777 = vadd.f32 %v4565, %v4703
    %v4778 = vadd.f32 %v4566, %v4708
    %v4779 = vadd.f32 %v4567, %v4713
    %v4780 = vadd.f32 %v4568, %v4718
    %v4781 = vadd.f32 %v4569, %v4723
    %v4782 = vadd.f32 %v4570, %v4728
    %v4783 = vadd.f32 %v4571, %v4733
    %v4784 = vadd.f32 %v4572, %v4738
    %v4785 = vadd.f32 %v4573, %v4743
    %v4786 = vadd.f32 %v4574, %v4748
    %v4787 = vadd.f32 %v4575, %v4753
    %v4788 = vadd.f32 %v4576, %v4758
    %v4789 = vadd.f32 %v4577, %v4763
    %v4790 = vadd.f32 %v4578, %v4768
    %v4791 = vadd.f32 %v4579, %v4773
    %s4792 = scalar_lea.vmem [#allocation7], 112
    %v4793 = vld [vmem:[%s4792] sm:$0xff]
    %v4794 = vld [vmem:[%s4792 + $0x8] sm:$0xff]
    %v4796 = vsel %vm3345, %v1902, 0
    %v4799 = vsel %vm3345, %v1907, 0
    %v4802 = vsel %vm3345, %v1912, 0
    %v4805 = vsel %vm3345, %v1917, 0
    %v4808 = vsel %vm3345, %v1922, 0
    %v4811 = vsel %vm3345, %v1927, 0
    %v4814 = vsel %vm3345, %v1932, 0
    %v4817 = vsel %vm3345, %v1937, 0
    %v4820 = vsel %vm3345, %v1942, 0
    %v4823 = vsel %vm3345, %v1947, 0
    %v4826 = vsel %vm3345, %v1952, 0
    %v4829 = vsel %vm3345, %v1957, 0
    %v4832 = vsel %vm3345, %v1962, 0
    %v4835 = vsel %vm3345, %v1967, 0
    %v4838 = vsel %vm3345, %v1972, 0
    %v4841 = vsel %vm3345, %v1977, 0
    %4843 = vmatprep.subr.mxu0 0.0
    %4844 = vmatpush1.msra.mxu0 %v4793
    %4845 = vmatprep.subr.mxu0 0.0
    %4846 = vmatpush1.msra.mxu0 %v4794
    %4847 = vmatprep.subr.mxu0 0.0
    %4848 = vmatpush1.msra.mxu0 0.0
    %4849 = vmatprep.subr.mxu0 0.0
    %4850 = vmatpush1.msra.mxu0 0.0
    %4851 = vmatprep.subr.mxu0 0.0
    %4852 = vmatpush1.msra.mxu0 0.0
    %4853 = vmatprep.subr.mxu0 0.0
    %4854 = vmatpush1.msra.mxu0 0.0
    %4855 = vmatprep.subr.mxu0 0.0
    %4856 = vmatpush1.msra.mxu0 0.0
    %4857 = vmatprep.subr.mxu0 0.0
    %4858 = vmatpush1.msra.mxu0 0.0
    %4859 = vmatprep.subr.mxu0 0.0
    %4860 = vmatpush1.msra.mxu0 0.0
    %4861 = vmatprep.subr.mxu0 0.0
    %4862 = vmatpush1.msra.mxu0 0.0
    %4863 = vmatprep.subr.mxu0 0.0
    %4864 = vmatpush1.msra.mxu0 0.0
    %4865 = vmatprep.subr.mxu0 0.0
    %4866 = vmatpush1.msra.mxu0 0.0
    %4867 = vmatprep.subr.mxu0 0.0
    %4868 = vmatpush1.msra.mxu0 0.0
    %4869 = vmatprep.subr.mxu0 0.0
    %4870 = vmatpush1.msra.mxu0 0.0
    %4871 = vmatprep.subr.mxu0 0.0
    %4872 = vmatpush1.msra.mxu0 0.0
    %4873 = vmatprep.subr.mxu0 0.0
    %4874 = vmatpush1.msra.mxu0 0.0
    %4875 = vmatprep.subr.mxu0 0.0
    %4876 = vmatpush1.msra.mxu0 0.0
    %4877 = vmatprep.subr.mxu0 0.0
    %4878 = vmatpush1.msra.mxu0 0.0
    %4879 = vmatprep.subr.mxu0 0.0
    %4880 = vmatpush1.msra.mxu0 0.0
    %4881 = vmatprep.subr.mxu0 0.0
    %4882 = vmatpush1.msra.mxu0 0.0
    %4883 = vmatprep.subr.mxu0 0.0
    %4884 = vmatpush1.msra.mxu0 0.0
    %4885 = vmatprep.subr.mxu0 0.0
    %4886 = vmatpush1.msra.mxu0 0.0
    %4887 = vmatprep.subr.mxu0 0.0
    %4888 = vmatpush1.msra.mxu0 0.0
    %4889 = vmatprep.subr.mxu0 0.0
    %4890 = vmatpush1.msra.mxu0 0.0
    %4891 = vmatprep.subr.mxu0 0.0
    %4892 = vmatpush1.msra.mxu0 0.0
    %4893 = vmatprep.subr.mxu0 0.0
    %4894 = vmatpush1.msra.mxu0 0.0
    %4895 = vmatprep.subr.mxu0 0.0
    %4896 = vmatpush1.msra.mxu0 0.0
    %4897 = vmatprep.subr.mxu0 0.0
    %4898 = vmatpush1.msra.mxu0 0.0
    %4899 = vmatprep.subr.mxu0 0.0
    %4900 = vmatpush1.msra.mxu0 0.0
    %4901 = vmatprep.subr.mxu0 0.0
    %4902 = vmatpush1.msra.mxu0 0.0
    %4903 = vmatprep.subr.mxu0 0.0
    %4904 = vmatpush1.msra.mxu0 0.0
    %4905 = vmatprep.subr.mxu0 0.0
    %4906 = vmatpush1.msra.mxu0 0.0
    %4907 = vmatprep.mubr.f32.mxu0 0.0
    %4908 = vmatmul.mubr.f32.gmra.mrb[0].mxu0 %v4796
    %v4909 = vpop.f32.mrb[0].mxu0
    %v4910 = vadd.f32 0.0, %v4909
    %v4911 = vpop.f32.mrb[0].mxu0
    %4912 = vmatprep.mubr.f32.mxu0 0.0
    %4913 = vmatmul.mubr.f32.gmra.mrb[0].mxu0 %v4799
    %v4914 = vpop.f32.mrb[0].mxu0
    %v4915 = vadd.f32 0.0, %v4914
    %v4916 = vpop.f32.mrb[0].mxu0
    %4917 = vmatprep.mubr.f32.mxu0 0.0
    %4918 = vmatmul.mubr.f32.gmra.mrb[0].mxu0 %v4802
    %v4919 = vpop.f32.mrb[0].mxu0
    %v4920 = vadd.f32 0.0, %v4919
    %v4921 = vpop.f32.mrb[0].mxu0
    %4922 = vmatprep.mubr.f32.mxu0 0.0
    %4923 = vmatmul.mubr.f32.gmra.mrb[0].mxu0 %v4805
    %v4924 = vpop.f32.mrb[0].mxu0
    %v4925 = vadd.f32 0.0, %v4924
    %v4926 = vpop.f32.mrb[0].mxu0
    %4927 = vmatprep.mubr.f32.mxu0 0.0
    %4928 = vmatmul.mubr.f32.gmra.mrb[0].mxu0 %v4808
    %v4929 = vpop.f32.mrb[0].mxu0
    %v4930 = vadd.f32 0.0, %v4929
    %v4931 = vpop.f32.mrb[0].mxu0
    %4932 = vmatprep.mubr.f32.mxu0 0.0
    %4933 = vmatmul.mubr.f32.gmra.mrb[0].mxu0 %v4811
    %v4934 = vpop.f32.mrb[0].mxu0
    %v4935 = vadd.f32 0.0, %v4934
    %v4936 = vpop.f32.mrb[0].mxu0
    %4937 = vmatprep.mubr.f32.mxu0 0.0
    %4938 = vmatmul.mubr.f32.gmra.mrb[0].mxu0 %v4814
    %v4939 = vpop.f32.mrb[0].mxu0
    %v4940 = vadd.f32 0.0, %v4939
    %v4941 = vpop.f32.mrb[0].mxu0
    %4942 = vmatprep.mubr.f32.mxu0 0.0
    %4943 = vmatmul.mubr.f32.gmra.mrb[0].mxu0 %v4817
    %v4944 = vpop.f32.mrb[0].mxu0
    %v4945 = vadd.f32 0.0, %v4944
    %v4946 = vpop.f32.mrb[0].mxu0
    %4947 = vmatprep.mubr.f32.mxu0 0.0
    %4948 = vmatmul.mubr.f32.gmra.mrb[0].mxu0 %v4820
    %v4949 = vpop.f32.mrb[0].mxu0
    %v4950 = vadd.f32 0.0, %v4949
    %v4951 = vpop.f32.mrb[0].mxu0
    %4952 = vmatprep.mubr.f32.mxu0 0.0
    %4953 = vmatmul.mubr.f32.gmra.mrb[0].mxu0 %v4823
    %v4954 = vpop.f32.mrb[0].mxu0
    %v4955 = vadd.f32 0.0, %v4954
    %v4956 = vpop.f32.mrb[0].mxu0
    %4957 = vmatprep.mubr.f32.mxu0 0.0
    %4958 = vmatmul.mubr.f32.gmra.mrb[0].mxu0 %v4826
    %v4959 = vpop.f32.mrb[0].mxu0
    %v4960 = vadd.f32 0.0, %v4959
    %v4961 = vpop.f32.mrb[0].mxu0
    %4962 = vmatprep.mubr.f32.mxu0 0.0
    %4963 = vmatmul.mubr.f32.gmra.mrb[0].mxu0 %v4829
    %v4964 = vpop.f32.mrb[0].mxu0
    %v4965 = vadd.f32 0.0, %v4964
    %v4966 = vpop.f32.mrb[0].mxu0
    %4967 = vmatprep.mubr.f32.mxu0 0.0
    %4968 = vmatmul.mubr.f32.gmra.mrb[0].mxu0 %v4832
    %v4969 = vpop.f32.mrb[0].mxu0
    %v4970 = vadd.f32 0.0, %v4969
    %v4971 = vpop.f32.mrb[0].mxu0
    %4972 = vmatprep.mubr.f32.mxu0 0.0
    %4973 = vmatmul.mubr.f32.gmra.mrb[0].mxu0 %v4835
    %v4974 = vpop.f32.mrb[0].mxu0
    %v4975 = vadd.f32 0.0, %v4974
    %v4976 = vpop.f32.mrb[0].mxu0
    %4977 = vmatprep.mubr.f32.mxu0 0.0
    %4978 = vmatmul.mubr.f32.gmra.mrb[0].mxu0 %v4838
    %v4979 = vpop.f32.mrb[0].mxu0
    %v4980 = vadd.f32 0.0, %v4979
    %v4981 = vpop.f32.mrb[0].mxu0
    %4982 = vmatprep.mubr.f32.mxu0 0.0
    %4983 = vmatmul.mubr.f32.gmra.mrb[0].mxu0 %v4841
    %v4984 = vpop.f32.mrb[0].mxu0
    %v4985 = vadd.f32 0.0, %v4984
    %v4986 = vpop.f32.mrb[0].mxu0
    %4987 = vdwg.mxu0
    %v4988 = vadd.f32 %v4776, %v4910
    %v4989 = vadd.f32 %v4777, %v4915
    %v4990 = vadd.f32 %v4778, %v4920
    %v4991 = vadd.f32 %v4779, %v4925
    %v4992 = vadd.f32 %v4780, %v4930
    %v4993 = vadd.f32 %v4781, %v4935
    %v4994 = vadd.f32 %v4782, %v4940
    %v4995 = vadd.f32 %v4783, %v4945
    %v4996 = vadd.f32 %v4784, %v4950
    %v4997 = vadd.f32 %v4785, %v4955
    %v4998 = vadd.f32 %v4786, %v4960
    %v4999 = vadd.f32 %v4787, %v4965
    %v5000 = vadd.f32 %v4788, %v4970
    %v5001 = vadd.f32 %v4789, %v4975
    %v5002 = vadd.f32 %v4790, %v4980
    %v5003 = vadd.f32 %v4791, %v4985
    %s5004 = scalar_lea.vmem [#allocation7], 128
    %v5005 = vld [vmem:[%s5004] sm:$0xff]
    %v5006 = vld [vmem:[%s5004 + $0x8] sm:$0xff]
    %v5008 = vsel %vm3345, %v1982, 0
    %v5011 = vsel %vm3345, %v1987, 0
    %v5014 = vsel %vm3345, %v1992, 0
    %v5017 = vsel %vm3345, %v1997, 0
    %v5020 = vsel %vm3345, %v2002, 0
    %v5023 = vsel %vm3345, %v2007, 0
    %v5026 = vsel %vm3345, %v2012, 0
    %v5029 = vsel %vm3345, %v2017, 0
    %v5032 = vsel %vm3345, %v2022, 0
    %v5035 = vsel %vm3345, %v2027, 0
    %v5038 = vsel %vm3345, %v2032, 0
    %v5041 = vsel %vm3345, %v2037, 0
    %v5044 = vsel %vm3345, %v2042, 0
    %v5047 = vsel %vm3345, %v2047, 0
    %v5050 = vsel %vm3345, %v2052, 0
    %v5053 = vsel %vm3345, %v2057, 0
    %5055 = vmatprep.subr.mxu0 0.0
    %5056 = vmatpush1.msra.mxu0 %v5005
    %5057 = vmatprep.subr.mxu0 0.0
    %5058 = vmatpush1.msra.mxu0 %v5006
    %5059 = vmatprep.subr.mxu0 0.0
    %5060 = vmatpush1.msra.mxu0 0.0
    %5061 = vmatprep.subr.mxu0 0.0
    %5062 = vmatpush1.msra.mxu0 0.0
    %5063 = vmatprep.subr.mxu0 0.0
    %5064 = vmatpush1.msra.mxu0 0.0
    %5065 = vmatprep.subr.mxu0 0.0
    %5066 = vmatpush1.msra.mxu0 0.0
    %5067 = vmatprep.subr.mxu0 0.0
    %5068 = vmatpush1.msra.mxu0 0.0
    %5069 = vmatprep.subr.mxu0 0.0
    %5070 = vmatpush1.msra.mxu0 0.0
    %5071 = vmatprep.subr.mxu0 0.0
    %5072 = vmatpush1.msra.mxu0 0.0
    %5073 = vmatprep.subr.mxu0 0.0
    %5074 = vmatpush1.msra.mxu0 0.0
    %5075 = vmatprep.subr.mxu0 0.0
    %5076 = vmatpush1.msra.mxu0 0.0
    %5077 = vmatprep.subr.mxu0 0.0
    %5078 = vmatpush1.msra.mxu0 0.0
    %5079 = vmatprep.subr.mxu0 0.0
    %5080 = vmatpush1.msra.mxu0 0.0
    %5081 = vmatprep.subr.mxu0 0.0
    %5082 = vmatpush1.msra.mxu0 0.0
    %5083 = vmatprep.subr.mxu0 0.0
    %5084 = vmatpush1.msra.mxu0 0.0
    %5085 = vmatprep.subr.mxu0 0.0
    %5086 = vmatpush1.msra.mxu0 0.0
    %5087 = vmatprep.subr.mxu0 0.0
    %5088 = vmatpush1.msra.mxu0 0.0
    %5089 = vmatprep.subr.mxu0 0.0
    %5090 = vmatpush1.msra.mxu0 0.0
    %5091 = vmatprep.subr.mxu0 0.0
    %5092 = vmatpush1.msra.mxu0 0.0
    %5093 = vmatprep.subr.mxu0 0.0
    %5094 = vmatpush1.msra.mxu0 0.0
    %5095 = vmatprep.subr.mxu0 0.0
    %5096 = vmatpush1.msra.mxu0 0.0
    %5097 = vmatprep.subr.mxu0 0.0
    %5098 = vmatpush1.msra.mxu0 0.0
    %5099 = vmatprep.subr.mxu0 0.0
    %5100 = vmatpush1.msra.mxu0 0.0
    %5101 = vmatprep.subr.mxu0 0.0
    %5102 = vmatpush1.msra.mxu0 0.0
    %5103 = vmatprep.subr.mxu0 0.0
    %5104 = vmatpush1.msra.mxu0 0.0
    %5105 = vmatprep.subr.mxu0 0.0
    %5106 = vmatpush1.msra.mxu0 0.0
    %5107 = vmatprep.subr.mxu0 0.0
    %5108 = vmatpush1.msra.mxu0 0.0
    %5109 = vmatprep.subr.mxu0 0.0
    %5110 = vmatpush1.msra.mxu0 0.0
    %5111 = vmatprep.subr.mxu0 0.0
    %5112 = vmatpush1.msra.mxu0 0.0
    %5113 = vmatprep.subr.mxu0 0.0
    %5114 = vmatpush1.msra.mxu0 0.0
    %5115 = vmatprep.subr.mxu0 0.0
    %5116 = vmatpush1.msra.mxu0 0.0
    %5117 = vmatprep.subr.mxu0 0.0
    %5118 = vmatpush1.msra.mxu0 0.0
    %5119 = vmatprep.mubr.f32.mxu0 0.0
    %5120 = vmatmul.mubr.f32.gmra.mrb[0].mxu0 %v5008
    %v5121 = vpop.f32.mrb[0].mxu0
    %v5122 = vadd.f32 0.0, %v5121
    %v5123 = vpop.f32.mrb[0].mxu0
    %5124 = vmatprep.mubr.f32.mxu0 0.0
    %5125 = vmatmul.mubr.f32.gmra.mrb[0].mxu0 %v5011
    %v5126 = vpop.f32.mrb[0].mxu0
    %v5127 = vadd.f32 0.0, %v5126
    %v5128 = vpop.f32.mrb[0].mxu0
    %5129 = vmatprep.mubr.f32.mxu0 0.0
    %5130 = vmatmul.mubr.f32.gmra.mrb[0].mxu0 %v5014
    %v5131 = vpop.f32.mrb[0].mxu0
    %v5132 = vadd.f32 0.0, %v5131
    %v5133 = vpop.f32.mrb[0].mxu0
    %5134 = vmatprep.mubr.f32.mxu0 0.0
    %5135 = vmatmul.mubr.f32.gmra.mrb[0].mxu0 %v5017
    %v5136 = vpop.f32.mrb[0].mxu0
    %v5137 = vadd.f32 0.0, %v5136
    %v5138 = vpop.f32.mrb[0].mxu0
    %5139 = vmatprep.mubr.f32.mxu0 0.0
    %5140 = vmatmul.mubr.f32.gmra.mrb[0].mxu0 %v5020
    %v5141 = vpop.f32.mrb[0].mxu0
    %v5142 = vadd.f32 0.0, %v5141
    %v5143 = vpop.f32.mrb[0].mxu0
    %5144 = vmatprep.mubr.f32.mxu0 0.0
    %5145 = vmatmul.mubr.f32.gmra.mrb[0].mxu0 %v5023
    %v5146 = vpop.f32.mrb[0].mxu0
    %v5147 = vadd.f32 0.0, %v5146
    %v5148 = vpop.f32.mrb[0].mxu0
    %5149 = vmatprep.mubr.f32.mxu0 0.0
    %5150 = vmatmul.mubr.f32.gmra.mrb[0].mxu0 %v5026
    %v5151 = vpop.f32.mrb[0].mxu0
    %v5152 = vadd.f32 0.0, %v5151
    %v5153 = vpop.f32.mrb[0].mxu0
    %5154 = vmatprep.mubr.f32.mxu0 0.0
    %5155 = vmatmul.mubr.f32.gmra.mrb[0].mxu0 %v5029
    %v5156 = vpop.f32.mrb[0].mxu0
    %v5157 = vadd.f32 0.0, %v5156
    %v5158 = vpop.f32.mrb[0].mxu0
    %5159 = vmatprep.mubr.f32.mxu0 0.0
    %5160 = vmatmul.mubr.f32.gmra.mrb[0].mxu0 %v5032
    %v5161 = vpop.f32.mrb[0].mxu0
    %v5162 = vadd.f32 0.0, %v5161
    %v5163 = vpop.f32.mrb[0].mxu0
    %5164 = vmatprep.mubr.f32.mxu0 0.0
    %5165 = vmatmul.mubr.f32.gmra.mrb[0].mxu0 %v5035
    %v5166 = vpop.f32.mrb[0].mxu0
    %v5167 = vadd.f32 0.0, %v5166
    %v5168 = vpop.f32.mrb[0].mxu0
    %5169 = vmatprep.mubr.f32.mxu0 0.0
    %5170 = vmatmul.mubr.f32.gmra.mrb[0].mxu0 %v5038
    %v5171 = vpop.f32.mrb[0].mxu0
    %v5172 = vadd.f32 0.0, %v5171
    %v5173 = vpop.f32.mrb[0].mxu0
    %5174 = vmatprep.mubr.f32.mxu0 0.0
    %5175 = vmatmul.mubr.f32.gmra.mrb[0].mxu0 %v5041
    %v5176 = vpop.f32.mrb[0].mxu0
    %v5177 = vadd.f32 0.0, %v5176
    %v5178 = vpop.f32.mrb[0].mxu0
    %5179 = vmatprep.mubr.f32.mxu0 0.0
    %5180 = vmatmul.mubr.f32.gmra.mrb[0].mxu0 %v5044
    %v5181 = vpop.f32.mrb[0].mxu0
    %v5182 = vadd.f32 0.0, %v5181
    %v5183 = vpop.f32.mrb[0].mxu0
    %5184 = vmatprep.mubr.f32.mxu0 0.0
    %5185 = vmatmul.mubr.f32.gmra.mrb[0].mxu0 %v5047
    %v5186 = vpop.f32.mrb[0].mxu0
    %v5187 = vadd.f32 0.0, %v5186
    %v5188 = vpop.f32.mrb[0].mxu0
    %5189 = vmatprep.mubr.f32.mxu0 0.0
    %5190 = vmatmul.mubr.f32.gmra.mrb[0].mxu0 %v5050
    %v5191 = vpop.f32.mrb[0].mxu0
    %v5192 = vadd.f32 0.0, %v5191
    %v5193 = vpop.f32.mrb[0].mxu0
    %5194 = vmatprep.mubr.f32.mxu0 0.0
    %5195 = vmatmul.mubr.f32.gmra.mrb[0].mxu0 %v5053
    %v5196 = vpop.f32.mrb[0].mxu0
    %v5197 = vadd.f32 0.0, %v5196
    %v5198 = vpop.f32.mrb[0].mxu0
    %5199 = vdwg.mxu0
    %v5200 = vadd.f32 %v4988, %v5122
    %v5201 = vadd.f32 %v4989, %v5127
    %v5202 = vadd.f32 %v4990, %v5132
    %v5203 = vadd.f32 %v4991, %v5137
    %v5204 = vadd.f32 %v4992, %v5142
    %v5205 = vadd.f32 %v4993, %v5147
    %v5206 = vadd.f32 %v4994, %v5152
    %v5207 = vadd.f32 %v4995, %v5157
    %v5208 = vadd.f32 %v4996, %v5162
    %v5209 = vadd.f32 %v4997, %v5167
    %v5210 = vadd.f32 %v4998, %v5172
    %v5211 = vadd.f32 %v4999, %v5177
    %v5212 = vadd.f32 %v5000, %v5182
    %v5213 = vadd.f32 %v5001, %v5187
    %v5214 = vadd.f32 %v5002, %v5192
    %v5215 = vadd.f32 %v5003, %v5197
    %s5216 = scalar_lea.vmem [#allocation7], 144
    %v5217 = vld [vmem:[%s5216] sm:$0xff]
    %v5218 = vld [vmem:[%s5216 + $0x8] sm:$0xff]
    %v5220 = vsel %vm3345, %v2062, 0
    %v5223 = vsel %vm3345, %v2067, 0
    %v5226 = vsel %vm3345, %v2072, 0
    %v5229 = vsel %vm3345, %v2077, 0
    %v5232 = vsel %vm3345, %v2082, 0
    %v5235 = vsel %vm3345, %v2087, 0
    %v5238 = vsel %vm3345, %v2092, 0
    %v5241 = vsel %vm3345, %v2097, 0
    %v5244 = vsel %vm3345, %v2102, 0
    %v5247 = vsel %vm3345, %v2107, 0
    %v5250 = vsel %vm3345, %v2112, 0
    %v5253 = vsel %vm3345, %v2117, 0
    %v5256 = vsel %vm3345, %v2122, 0
    %v5259 = vsel %vm3345, %v2127, 0
    %v5262 = vsel %vm3345, %v2132, 0
    %v5265 = vsel %vm3345, %v2137, 0
    %5267 = vmatprep.subr.mxu0 0.0
    %5268 = vmatpush1.msra.mxu0 %v5217
    %5269 = vmatprep.subr.mxu0 0.0
    %5270 = vmatpush1.msra.mxu0 %v5218
    %5271 = vmatprep.subr.mxu0 0.0
    %5272 = vmatpush1.msra.mxu0 0.0
    %5273 = vmatprep.subr.mxu0 0.0
    %5274 = vmatpush1.msra.mxu0 0.0
    %5275 = vmatprep.subr.mxu0 0.0
    %5276 = vmatpush1.msra.mxu0 0.0
    %5277 = vmatprep.subr.mxu0 0.0
    %5278 = vmatpush1.msra.mxu0 0.0
    %5279 = vmatprep.subr.mxu0 0.0
    %5280 = vmatpush1.msra.mxu0 0.0
    %5281 = vmatprep.subr.mxu0 0.0
    %5282 = vmatpush1.msra.mxu0 0.0
    %5283 = vmatprep.subr.mxu0 0.0
    %5284 = vmatpush1.msra.mxu0 0.0
    %5285 = vmatprep.subr.mxu0 0.0
    %5286 = vmatpush1.msra.mxu0 0.0
    %5287 = vmatprep.subr.mxu0 0.0
    %5288 = vmatpush1.msra.mxu0 0.0
    %5289 = vmatprep.subr.mxu0 0.0
    %5290 = vmatpush1.msra.mxu0 0.0
    %5291 = vmatprep.subr.mxu0 0.0
    %5292 = vmatpush1.msra.mxu0 0.0
    %5293 = vmatprep.subr.mxu0 0.0
    %5294 = vmatpush1.msra.mxu0 0.0
    %5295 = vmatprep.subr.mxu0 0.0
    %5296 = vmatpush1.msra.mxu0 0.0
    %5297 = vmatprep.subr.mxu0 0.0
    %5298 = vmatpush1.msra.mxu0 0.0
    %5299 = vmatprep.subr.mxu0 0.0
    %5300 = vmatpush1.msra.mxu0 0.0
    %5301 = vmatprep.subr.mxu0 0.0
    %5302 = vmatpush1.msra.mxu0 0.0
    %5303 = vmatprep.subr.mxu0 0.0
    %5304 = vmatpush1.msra.mxu0 0.0
    %5305 = vmatprep.subr.mxu0 0.0
    %5306 = vmatpush1.msra.mxu0 0.0
    %5307 = vmatprep.subr.mxu0 0.0
    %5308 = vmatpush1.msra.mxu0 0.0
    %5309 = vmatprep.subr.mxu0 0.0
    %5310 = vmatpush1.msra.mxu0 0.0
    %5311 = vmatprep.subr.mxu0 0.0
    %5312 = vmatpush1.msra.mxu0 0.0
    %5313 = vmatprep.subr.mxu0 0.0
    %5314 = vmatpush1.msra.mxu0 0.0
    %5315 = vmatprep.subr.mxu0 0.0
    %5316 = vmatpush1.msra.mxu0 0.0
    %5317 = vmatprep.subr.mxu0 0.0
    %5318 = vmatpush1.msra.mxu0 0.0
    %5319 = vmatprep.subr.mxu0 0.0
    %5320 = vmatpush1.msra.mxu0 0.0
    %5321 = vmatprep.subr.mxu0 0.0
    %5322 = vmatpush1.msra.mxu0 0.0
    %5323 = vmatprep.subr.mxu0 0.0
    %5324 = vmatpush1.msra.mxu0 0.0
    %5325 = vmatprep.subr.mxu0 0.0
    %5326 = vmatpush1.msra.mxu0 0.0
    %5327 = vmatprep.subr.mxu0 0.0
    %5328 = vmatpush1.msra.mxu0 0.0
    %5329 = vmatprep.subr.mxu0 0.0
    %5330 = vmatpush1.msra.mxu0 0.0
    %5331 = vmatprep.mubr.f32.mxu0 0.0
    %5332 = vmatmul.mubr.f32.gmra.mrb[0].mxu0 %v5220
    %v5333 = vpop.f32.mrb[0].mxu0
    %v5334 = vadd.f32 0.0, %v5333
    %v5335 = vpop.f32.mrb[0].mxu0
    %5336 = vmatprep.mubr.f32.mxu0 0.0
    %5337 = vmatmul.mubr.f32.gmra.mrb[0].mxu0 %v5223
    %v5338 = vpop.f32.mrb[0].mxu0
    %v5339 = vadd.f32 0.0, %v5338
    %v5340 = vpop.f32.mrb[0].mxu0
    %5341 = vmatprep.mubr.f32.mxu0 0.0
    %5342 = vmatmul.mubr.f32.gmra.mrb[0].mxu0 %v5226
    %v5343 = vpop.f32.mrb[0].mxu0
    %v5344 = vadd.f32 0.0, %v5343
    %v5345 = vpop.f32.mrb[0].mxu0
    %5346 = vmatprep.mubr.f32.mxu0 0.0
    %5347 = vmatmul.mubr.f32.gmra.mrb[0].mxu0 %v5229
    %v5348 = vpop.f32.mrb[0].mxu0
    %v5349 = vadd.f32 0.0, %v5348
    %v5350 = vpop.f32.mrb[0].mxu0
    %5351 = vmatprep.mubr.f32.mxu0 0.0
    %5352 = vmatmul.mubr.f32.gmra.mrb[0].mxu0 %v5232
    %v5353 = vpop.f32.mrb[0].mxu0
    %v5354 = vadd.f32 0.0, %v5353
    %v5355 = vpop.f32.mrb[0].mxu0
    %5356 = vmatprep.mubr.f32.mxu0 0.0
    %5357 = vmatmul.mubr.f32.gmra.mrb[0].mxu0 %v5235
    %v5358 = vpop.f32.mrb[0].mxu0
    %v5359 = vadd.f32 0.0, %v5358
    %v5360 = vpop.f32.mrb[0].mxu0
    %5361 = vmatprep.mubr.f32.mxu0 0.0
    %5362 = vmatmul.mubr.f32.gmra.mrb[0].mxu0 %v5238
    %v5363 = vpop.f32.mrb[0].mxu0
    %v5364 = vadd.f32 0.0, %v5363
    %v5365 = vpop.f32.mrb[0].mxu0
    %5366 = vmatprep.mubr.f32.mxu0 0.0
    %5367 = vmatmul.mubr.f32.gmra.mrb[0].mxu0 %v5241
    %v5368 = vpop.f32.mrb[0].mxu0
    %v5369 = vadd.f32 0.0, %v5368
    %v5370 = vpop.f32.mrb[0].mxu0
    %5371 = vmatprep.mubr.f32.mxu0 0.0
    %5372 = vmatmul.mubr.f32.gmra.mrb[0].mxu0 %v5244
    %v5373 = vpop.f32.mrb[0].mxu0
    %v5374 = vadd.f32 0.0, %v5373
    %v5375 = vpop.f32.mrb[0].mxu0
    %5376 = vmatprep.mubr.f32.mxu0 0.0
    %5377 = vmatmul.mubr.f32.gmra.mrb[0].mxu0 %v5247
    %v5378 = vpop.f32.mrb[0].mxu0
    %v5379 = vadd.f32 0.0, %v5378
    %v5380 = vpop.f32.mrb[0].mxu0
    %5381 = vmatprep.mubr.f32.mxu0 0.0
    %5382 = vmatmul.mubr.f32.gmra.mrb[0].mxu0 %v5250
    %v5383 = vpop.f32.mrb[0].mxu0
    %v5384 = vadd.f32 0.0, %v5383
    %v5385 = vpop.f32.mrb[0].mxu0
    %5386 = vmatprep.mubr.f32.mxu0 0.0
    %5387 = vmatmul.mubr.f32.gmra.mrb[0].mxu0 %v5253
    %v5388 = vpop.f32.mrb[0].mxu0
    %v5389 = vadd.f32 0.0, %v5388
    %v5390 = vpop.f32.mrb[0].mxu0
    %5391 = vmatprep.mubr.f32.mxu0 0.0
    %5392 = vmatmul.mubr.f32.gmra.mrb[0].mxu0 %v5256
    %v5393 = vpop.f32.mrb[0].mxu0
    %v5394 = vadd.f32 0.0, %v5393
    %v5395 = vpop.f32.mrb[0].mxu0
    %5396 = vmatprep.mubr.f32.mxu0 0.0
    %5397 = vmatmul.mubr.f32.gmra.mrb[0].mxu0 %v5259
    %v5398 = vpop.f32.mrb[0].mxu0
    %v5399 = vadd.f32 0.0, %v5398
    %v5400 = vpop.f32.mrb[0].mxu0
    %5401 = vmatprep.mubr.f32.mxu0 0.0
    %5402 = vmatmul.mubr.f32.gmra.mrb[0].mxu0 %v5262
    %v5403 = vpop.f32.mrb[0].mxu0
    %v5404 = vadd.f32 0.0, %v5403
    %v5405 = vpop.f32.mrb[0].mxu0
    %5406 = vmatprep.mubr.f32.mxu0 0.0
    %5407 = vmatmul.mubr.f32.gmra.mrb[0].mxu0 %v5265
    %v5408 = vpop.f32.mrb[0].mxu0
    %v5409 = vadd.f32 0.0, %v5408
    %v5410 = vpop.f32.mrb[0].mxu0
    %5411 = vdwg.mxu0
    %v5412 = vadd.f32 %v5200, %v5334
    %v5413 = vadd.f32 %v5201, %v5339
    %v5414 = vadd.f32 %v5202, %v5344
    %v5415 = vadd.f32 %v5203, %v5349
    %v5416 = vadd.f32 %v5204, %v5354
    %v5417 = vadd.f32 %v5205, %v5359
    %v5418 = vadd.f32 %v5206, %v5364
    %v5419 = vadd.f32 %v5207, %v5369
    %v5420 = vadd.f32 %v5208, %v5374
    %v5421 = vadd.f32 %v5209, %v5379
    %v5422 = vadd.f32 %v5210, %v5384
    %v5423 = vadd.f32 %v5211, %v5389
    %v5424 = vadd.f32 %v5212, %v5394
    %v5425 = vadd.f32 %v5213, %v5399
    %v5426 = vadd.f32 %v5214, %v5404
    %v5427 = vadd.f32 %v5215, %v5409
    %s5428 = scalar_lea.vmem [#allocation7], 160
    %v5429 = vld [vmem:[%s5428] sm:$0xff]
    %v5430 = vld [vmem:[%s5428 + $0x8] sm:$0xff]
    %v5432 = vsel %vm3345, %v2142, 0
    %v5435 = vsel %vm3345, %v2147, 0
    %v5438 = vsel %vm3345, %v2152, 0
    %v5441 = vsel %vm3345, %v2157, 0
    %v5444 = vsel %vm3345, %v2162, 0
    %v5447 = vsel %vm3345, %v2167, 0
    %v5450 = vsel %vm3345, %v2172, 0
    %v5453 = vsel %vm3345, %v2177, 0
    %v5456 = vsel %vm3345, %v2182, 0
    %v5459 = vsel %vm3345, %v2187, 0
    %v5462 = vsel %vm3345, %v2192, 0
    %v5465 = vsel %vm3345, %v2197, 0
    %v5468 = vsel %vm3345, %v2202, 0
    %v5471 = vsel %vm3345, %v2207, 0
    %v5474 = vsel %vm3345, %v2212, 0
    %v5477 = vsel %vm3345, %v2217, 0
    %5479 = vmatprep.subr.mxu0 0.0
    %5480 = vmatpush1.msra.mxu0 %v5429
    %5481 = vmatprep.subr.mxu0 0.0
    %5482 = vmatpush1.msra.mxu0 %v5430
    %5483 = vmatprep.subr.mxu0 0.0
    %5484 = vmatpush1.msra.mxu0 0.0
    %5485 = vmatprep.subr.mxu0 0.0
    %5486 = vmatpush1.msra.mxu0 0.0
    %5487 = vmatprep.subr.mxu0 0.0
    %5488 = vmatpush1.msra.mxu0 0.0
    %5489 = vmatprep.subr.mxu0 0.0
    %5490 = vmatpush1.msra.mxu0 0.0
    %5491 = vmatprep.subr.mxu0 0.0
    %5492 = vmatpush1.msra.mxu0 0.0
    %5493 = vmatprep.subr.mxu0 0.0
    %5494 = vmatpush1.msra.mxu0 0.0
    %5495 = vmatprep.subr.mxu0 0.0
    %5496 = vmatpush1.msra.mxu0 0.0
    %5497 = vmatprep.subr.mxu0 0.0
    %5498 = vmatpush1.msra.mxu0 0.0
    %5499 = vmatprep.subr.mxu0 0.0
    %5500 = vmatpush1.msra.mxu0 0.0
    %5501 = vmatprep.subr.mxu0 0.0
    %5502 = vmatpush1.msra.mxu0 0.0
    %5503 = vmatprep.subr.mxu0 0.0
    %5504 = vmatpush1.msra.mxu0 0.0
    %5505 = vmatprep.subr.mxu0 0.0
    %5506 = vmatpush1.msra.mxu0 0.0
    %5507 = vmatprep.subr.mxu0 0.0
    %5508 = vmatpush1.msra.mxu0 0.0
    %5509 = vmatprep.subr.mxu0 0.0
    %5510 = vmatpush1.msra.mxu0 0.0
    %5511 = vmatprep.subr.mxu0 0.0
    %5512 = vmatpush1.msra.mxu0 0.0
    %5513 = vmatprep.subr.mxu0 0.0
    %5514 = vmatpush1.msra.mxu0 0.0
    %5515 = vmatprep.subr.mxu0 0.0
    %5516 = vmatpush1.msra.mxu0 0.0
    %5517 = vmatprep.subr.mxu0 0.0
    %5518 = vmatpush1.msra.mxu0 0.0
    %5519 = vmatprep.subr.mxu0 0.0
    %5520 = vmatpush1.msra.mxu0 0.0
    %5521 = vmatprep.subr.mxu0 0.0
    %5522 = vmatpush1.msra.mxu0 0.0
    %5523 = vmatprep.subr.mxu0 0.0
    %5524 = vmatpush1.msra.mxu0 0.0
    %5525 = vmatprep.subr.mxu0 0.0
    %5526 = vmatpush1.msra.mxu0 0.0
    %5527 = vmatprep.subr.mxu0 0.0
    %5528 = vmatpush1.msra.mxu0 0.0
    %5529 = vmatprep.subr.mxu0 0.0
    %5530 = vmatpush1.msra.mxu0 0.0
    %5531 = vmatprep.subr.mxu0 0.0
    %5532 = vmatpush1.msra.mxu0 0.0
    %5533 = vmatprep.subr.mxu0 0.0
    %5534 = vmatpush1.msra.mxu0 0.0
    %5535 = vmatprep.subr.mxu0 0.0
    %5536 = vmatpush1.msra.mxu0 0.0
    %5537 = vmatprep.subr.mxu0 0.0
    %5538 = vmatpush1.msra.mxu0 0.0
    %5539 = vmatprep.subr.mxu0 0.0
    %5540 = vmatpush1.msra.mxu0 0.0
    %5541 = vmatprep.subr.mxu0 0.0
    %5542 = vmatpush1.msra.mxu0 0.0
    %5543 = vmatprep.mubr.f32.mxu0 0.0
    %5544 = vmatmul.mubr.f32.gmra.mrb[0].mxu0 %v5432
    %v5545 = vpop.f32.mrb[0].mxu0
    %v5546 = vadd.f32 0.0, %v5545
    %v5547 = vpop.f32.mrb[0].mxu0
    %5548 = vmatprep.mubr.f32.mxu0 0.0
    %5549 = vmatmul.mubr.f32.gmra.mrb[0].mxu0 %v5435
    %v5550 = vpop.f32.mrb[0].mxu0
    %v5551 = vadd.f32 0.0, %v5550
    %v5552 = vpop.f32.mrb[0].mxu0
    %5553 = vmatprep.mubr.f32.mxu0 0.0
    %5554 = vmatmul.mubr.f32.gmra.mrb[0].mxu0 %v5438
    %v5555 = vpop.f32.mrb[0].mxu0
    %v5556 = vadd.f32 0.0, %v5555
    %v5557 = vpop.f32.mrb[0].mxu0
    %5558 = vmatprep.mubr.f32.mxu0 0.0
    %5559 = vmatmul.mubr.f32.gmra.mrb[0].mxu0 %v5441
    %v5560 = vpop.f32.mrb[0].mxu0
    %v5561 = vadd.f32 0.0, %v5560
    %v5562 = vpop.f32.mrb[0].mxu0
    %5563 = vmatprep.mubr.f32.mxu0 0.0
    %5564 = vmatmul.mubr.f32.gmra.mrb[0].mxu0 %v5444
    %v5565 = vpop.f32.mrb[0].mxu0
    %v5566 = vadd.f32 0.0, %v5565
    %v5567 = vpop.f32.mrb[0].mxu0
    %5568 = vmatprep.mubr.f32.mxu0 0.0
    %5569 = vmatmul.mubr.f32.gmra.mrb[0].mxu0 %v5447
    %v5570 = vpop.f32.mrb[0].mxu0
    %v5571 = vadd.f32 0.0, %v5570
    %v5572 = vpop.f32.mrb[0].mxu0
    %5573 = vmatprep.mubr.f32.mxu0 0.0
    %5574 = vmatmul.mubr.f32.gmra.mrb[0].mxu0 %v5450
    %v5575 = vpop.f32.mrb[0].mxu0
    %v5576 = vadd.f32 0.0, %v5575
    %v5577 = vpop.f32.mrb[0].mxu0
    %5578 = vmatprep.mubr.f32.mxu0 0.0
    %5579 = vmatmul.mubr.f32.gmra.mrb[0].mxu0 %v5453
    %v5580 = vpop.f32.mrb[0].mxu0
    %v5581 = vadd.f32 0.0, %v5580
    %v5582 = vpop.f32.mrb[0].mxu0
    %5583 = vmatprep.mubr.f32.mxu0 0.0
    %5584 = vmatmul.mubr.f32.gmra.mrb[0].mxu0 %v5456
    %v5585 = vpop.f32.mrb[0].mxu0
    %v5586 = vadd.f32 0.0, %v5585
    %v5587 = vpop.f32.mrb[0].mxu0
    %5588 = vmatprep.mubr.f32.mxu0 0.0
    %5589 = vmatmul.mubr.f32.gmra.mrb[0].mxu0 %v5459
    %v5590 = vpop.f32.mrb[0].mxu0
    %v5591 = vadd.f32 0.0, %v5590
    %v5592 = vpop.f32.mrb[0].mxu0
    %5593 = vmatprep.mubr.f32.mxu0 0.0
    %5594 = vmatmul.mubr.f32.gmra.mrb[0].mxu0 %v5462
    %v5595 = vpop.f32.mrb[0].mxu0
    %v5596 = vadd.f32 0.0, %v5595
    %v5597 = vpop.f32.mrb[0].mxu0
    %5598 = vmatprep.mubr.f32.mxu0 0.0
    %5599 = vmatmul.mubr.f32.gmra.mrb[0].mxu0 %v5465
    %v5600 = vpop.f32.mrb[0].mxu0
    %v5601 = vadd.f32 0.0, %v5600
    %v5602 = vpop.f32.mrb[0].mxu0
    %5603 = vmatprep.mubr.f32.mxu0 0.0
    %5604 = vmatmul.mubr.f32.gmra.mrb[0].mxu0 %v5468
    %v5605 = vpop.f32.mrb[0].mxu0
    %v5606 = vadd.f32 0.0, %v5605
    %v5607 = vpop.f32.mrb[0].mxu0
    %5608 = vmatprep.mubr.f32.mxu0 0.0
    %5609 = vmatmul.mubr.f32.gmra.mrb[0].mxu0 %v5471
    %v5610 = vpop.f32.mrb[0].mxu0
    %v5611 = vadd.f32 0.0, %v5610
    %v5612 = vpop.f32.mrb[0].mxu0
    %5613 = vmatprep.mubr.f32.mxu0 0.0
    %5614 = vmatmul.mubr.f32.gmra.mrb[0].mxu0 %v5474
    %v5615 = vpop.f32.mrb[0].mxu0
    %v5616 = vadd.f32 0.0, %v5615
    %v5617 = vpop.f32.mrb[0].mxu0
    %5618 = vmatprep.mubr.f32.mxu0 0.0
    %5619 = vmatmul.mubr.f32.gmra.mrb[0].mxu0 %v5477
    %v5620 = vpop.f32.mrb[0].mxu0
    %v5621 = vadd.f32 0.0, %v5620
    %v5622 = vpop.f32.mrb[0].mxu0
    %5623 = vdwg.mxu0
    %v5624 = vadd.f32 %v5412, %v5546
    %v5625 = vadd.f32 %v5413, %v5551
    %v5626 = vadd.f32 %v5414, %v5556
    %v5627 = vadd.f32 %v5415, %v5561
    %v5628 = vadd.f32 %v5416, %v5566
    %v5629 = vadd.f32 %v5417, %v5571
    %v5630 = vadd.f32 %v5418, %v5576
    %v5631 = vadd.f32 %v5419, %v5581
    %v5632 = vadd.f32 %v5420, %v5586
    %v5633 = vadd.f32 %v5421, %v5591
    %v5634 = vadd.f32 %v5422, %v5596
    %v5635 = vadd.f32 %v5423, %v5601
    %v5636 = vadd.f32 %v5424, %v5606
    %v5637 = vadd.f32 %v5425, %v5611
    %v5638 = vadd.f32 %v5426, %v5616
    %v5639 = vadd.f32 %v5427, %v5621
    %s5640 = scalar_lea.vmem [#allocation7], 176
    %v5641 = vld [vmem:[%s5640] sm:$0xff]
    %v5642 = vld [vmem:[%s5640 + $0x8] sm:$0xff]
    %v5644 = vsel %vm3345, %v2222, 0
    %v5647 = vsel %vm3345, %v2227, 0
    %v5650 = vsel %vm3345, %v2232, 0
    %v5653 = vsel %vm3345, %v2237, 0
    %v5656 = vsel %vm3345, %v2242, 0
    %v5659 = vsel %vm3345, %v2247, 0
    %v5662 = vsel %vm3345, %v2252, 0
    %v5665 = vsel %vm3345, %v2257, 0
    %v5668 = vsel %vm3345, %v2262, 0
    %v5671 = vsel %vm3345, %v2267, 0
    %v5674 = vsel %vm3345, %v2272, 0
    %v5677 = vsel %vm3345, %v2277, 0
    %v5680 = vsel %vm3345, %v2282, 0
    %v5683 = vsel %vm3345, %v2287, 0
    %v5686 = vsel %vm3345, %v2292, 0
    %v5689 = vsel %vm3345, %v2297, 0
    %5691 = vmatprep.subr.mxu0 0.0
    %5692 = vmatpush1.msra.mxu0 %v5641
    %5693 = vmatprep.subr.mxu0 0.0
    %5694 = vmatpush1.msra.mxu0 %v5642
    %5695 = vmatprep.subr.mxu0 0.0
    %5696 = vmatpush1.msra.mxu0 0.0
    %5697 = vmatprep.subr.mxu0 0.0
    %5698 = vmatpush1.msra.mxu0 0.0
    %5699 = vmatprep.subr.mxu0 0.0
    %5700 = vmatpush1.msra.mxu0 0.0
    %5701 = vmatprep.subr.mxu0 0.0
    %5702 = vmatpush1.msra.mxu0 0.0
    %5703 = vmatprep.subr.mxu0 0.0
    %5704 = vmatpush1.msra.mxu0 0.0
    %5705 = vmatprep.subr.mxu0 0.0
    %5706 = vmatpush1.msra.mxu0 0.0
    %5707 = vmatprep.subr.mxu0 0.0
    %5708 = vmatpush1.msra.mxu0 0.0
    %5709 = vmatprep.subr.mxu0 0.0
    %5710 = vmatpush1.msra.mxu0 0.0
    %5711 = vmatprep.subr.mxu0 0.0
    %5712 = vmatpush1.msra.mxu0 0.0
    %5713 = vmatprep.subr.mxu0 0.0
    %5714 = vmatpush1.msra.mxu0 0.0
    %5715 = vmatprep.subr.mxu0 0.0
    %5716 = vmatpush1.msra.mxu0 0.0
    %5717 = vmatprep.subr.mxu0 0.0
    %5718 = vmatpush1.msra.mxu0 0.0
    %5719 = vmatprep.subr.mxu0 0.0
    %5720 = vmatpush1.msra.mxu0 0.0
    %5721 = vmatprep.subr.mxu0 0.0
    %5722 = vmatpush1.msra.mxu0 0.0
    %5723 = vmatprep.subr.mxu0 0.0
    %5724 = vmatpush1.msra.mxu0 0.0
    %5725 = vmatprep.subr.mxu0 0.0
    %5726 = vmatpush1.msra.mxu0 0.0
    %5727 = vmatprep.subr.mxu0 0.0
    %5728 = vmatpush1.msra.mxu0 0.0
    %5729 = vmatprep.subr.mxu0 0.0
    %5730 = vmatpush1.msra.mxu0 0.0
    %5731 = vmatprep.subr.mxu0 0.0
    %5732 = vmatpush1.msra.mxu0 0.0
    %5733 = vmatprep.subr.mxu0 0.0
    %5734 = vmatpush1.msra.mxu0 0.0
    %5735 = vmatprep.subr.mxu0 0.0
    %5736 = vmatpush1.msra.mxu0 0.0
    %5737 = vmatprep.subr.mxu0 0.0
    %5738 = vmatpush1.msra.mxu0 0.0
    %5739 = vmatprep.subr.mxu0 0.0
    %5740 = vmatpush1.msra.mxu0 0.0
    %5741 = vmatprep.subr.mxu0 0.0
    %5742 = vmatpush1.msra.mxu0 0.0
    %5743 = vmatprep.subr.mxu0 0.0
    %5744 = vmatpush1.msra.mxu0 0.0
    %5745 = vmatprep.subr.mxu0 0.0
    %5746 = vmatpush1.msra.mxu0 0.0
    %5747 = vmatprep.subr.mxu0 0.0
    %5748 = vmatpush1.msra.mxu0 0.0
    %5749 = vmatprep.subr.mxu0 0.0
    %5750 = vmatpush1.msra.mxu0 0.0
    %5751 = vmatprep.subr.mxu0 0.0
    %5752 = vmatpush1.msra.mxu0 0.0
    %5753 = vmatprep.subr.mxu0 0.0
    %5754 = vmatpush1.msra.mxu0 0.0
    %5755 = vmatprep.mubr.f32.mxu0 0.0
    %5756 = vmatmul.mubr.f32.gmra.mrb[0].mxu0 %v5644
    %v5757 = vpop.f32.mrb[0].mxu0
    %v5758 = vadd.f32 0.0, %v5757
    %v5759 = vpop.f32.mrb[0].mxu0
    %5760 = vmatprep.mubr.f32.mxu0 0.0
    %5761 = vmatmul.mubr.f32.gmra.mrb[0].mxu0 %v5647
    %v5762 = vpop.f32.mrb[0].mxu0
    %v5763 = vadd.f32 0.0, %v5762
    %v5764 = vpop.f32.mrb[0].mxu0
    %5765 = vmatprep.mubr.f32.mxu0 0.0
    %5766 = vmatmul.mubr.f32.gmra.mrb[0].mxu0 %v5650
    %v5767 = vpop.f32.mrb[0].mxu0
    %v5768 = vadd.f32 0.0, %v5767
    %v5769 = vpop.f32.mrb[0].mxu0
    %5770 = vmatprep.mubr.f32.mxu0 0.0
    %5771 = vmatmul.mubr.f32.gmra.mrb[0].mxu0 %v5653
    %v5772 = vpop.f32.mrb[0].mxu0
    %v5773 = vadd.f32 0.0, %v5772
    %v5774 = vpop.f32.mrb[0].mxu0
    %5775 = vmatprep.mubr.f32.mxu0 0.0
    %5776 = vmatmul.mubr.f32.gmra.mrb[0].mxu0 %v5656
    %v5777 = vpop.f32.mrb[0].mxu0
    %v5778 = vadd.f32 0.0, %v5777
    %v5779 = vpop.f32.mrb[0].mxu0
    %5780 = vmatprep.mubr.f32.mxu0 0.0
    %5781 = vmatmul.mubr.f32.gmra.mrb[0].mxu0 %v5659
    %v5782 = vpop.f32.mrb[0].mxu0
    %v5783 = vadd.f32 0.0, %v5782
    %v5784 = vpop.f32.mrb[0].mxu0
    %5785 = vmatprep.mubr.f32.mxu0 0.0
    %5786 = vmatmul.mubr.f32.gmra.mrb[0].mxu0 %v5662
    %v5787 = vpop.f32.mrb[0].mxu0
    %v5788 = vadd.f32 0.0, %v5787
    %v5789 = vpop.f32.mrb[0].mxu0
    %5790 = vmatprep.mubr.f32.mxu0 0.0
    %5791 = vmatmul.mubr.f32.gmra.mrb[0].mxu0 %v5665
    %v5792 = vpop.f32.mrb[0].mxu0
    %v5793 = vadd.f32 0.0, %v5792
    %v5794 = vpop.f32.mrb[0].mxu0
    %5795 = vmatprep.mubr.f32.mxu0 0.0
    %5796 = vmatmul.mubr.f32.gmra.mrb[0].mxu0 %v5668
    %v5797 = vpop.f32.mrb[0].mxu0
    %v5798 = vadd.f32 0.0, %v5797
    %v5799 = vpop.f32.mrb[0].mxu0
    %5800 = vmatprep.mubr.f32.mxu0 0.0
    %5801 = vmatmul.mubr.f32.gmra.mrb[0].mxu0 %v5671
    %v5802 = vpop.f32.mrb[0].mxu0
    %v5803 = vadd.f32 0.0, %v5802
    %v5804 = vpop.f32.mrb[0].mxu0
    %5805 = vmatprep.mubr.f32.mxu0 0.0
    %5806 = vmatmul.mubr.f32.gmra.mrb[0].mxu0 %v5674
    %v5807 = vpop.f32.mrb[0].mxu0
    %v5808 = vadd.f32 0.0, %v5807
    %v5809 = vpop.f32.mrb[0].mxu0
    %5810 = vmatprep.mubr.f32.mxu0 0.0
    %5811 = vmatmul.mubr.f32.gmra.mrb[0].mxu0 %v5677
    %v5812 = vpop.f32.mrb[0].mxu0
    %v5813 = vadd.f32 0.0, %v5812
    %v5814 = vpop.f32.mrb[0].mxu0
    %5815 = vmatprep.mubr.f32.mxu0 0.0
    %5816 = vmatmul.mubr.f32.gmra.mrb[0].mxu0 %v5680
    %v5817 = vpop.f32.mrb[0].mxu0
    %v5818 = vadd.f32 0.0, %v5817
    %v5819 = vpop.f32.mrb[0].mxu0
    %5820 = vmatprep.mubr.f32.mxu0 0.0
    %5821 = vmatmul.mubr.f32.gmra.mrb[0].mxu0 %v5683
    %v5822 = vpop.f32.mrb[0].mxu0
    %v5823 = vadd.f32 0.0, %v5822
    %v5824 = vpop.f32.mrb[0].mxu0
    %5825 = vmatprep.mubr.f32.mxu0 0.0
    %5826 = vmatmul.mubr.f32.gmra.mrb[0].mxu0 %v5686
    %v5827 = vpop.f32.mrb[0].mxu0
    %v5828 = vadd.f32 0.0, %v5827
    %v5829 = vpop.f32.mrb[0].mxu0
    %5830 = vmatprep.mubr.f32.mxu0 0.0
    %5831 = vmatmul.mubr.f32.gmra.mrb[0].mxu0 %v5689
    %v5832 = vpop.f32.mrb[0].mxu0
    %v5833 = vadd.f32 0.0, %v5832
    %v5834 = vpop.f32.mrb[0].mxu0
    %5835 = vdwg.mxu0
    %v5836 = vadd.f32 %v5624, %v5758
    %v5837 = vadd.f32 %v5625, %v5763
    %v5838 = vadd.f32 %v5626, %v5768
    %v5839 = vadd.f32 %v5627, %v5773
    %v5840 = vadd.f32 %v5628, %v5778
    %v5841 = vadd.f32 %v5629, %v5783
    %v5842 = vadd.f32 %v5630, %v5788
    %v5843 = vadd.f32 %v5631, %v5793
    %v5844 = vadd.f32 %v5632, %v5798
    %v5845 = vadd.f32 %v5633, %v5803
    %v5846 = vadd.f32 %v5634, %v5808
    %v5847 = vadd.f32 %v5635, %v5813
    %v5848 = vadd.f32 %v5636, %v5818
    %v5849 = vadd.f32 %v5637, %v5823
    %v5850 = vadd.f32 %v5638, %v5828
    %v5851 = vadd.f32 %v5639, %v5833
    %s5852 = scalar_lea.vmem [#allocation7], 192
    %v5853 = vld [vmem:[%s5852] sm:$0xff]
    %v5854 = vld [vmem:[%s5852 + $0x8] sm:$0xff]
    %v5856 = vsel %vm3345, %v2302, 0
    %v5859 = vsel %vm3345, %v2307, 0
    %v5862 = vsel %vm3345, %v2312, 0
    %v5865 = vsel %vm3345, %v2317, 0
    %v5868 = vsel %vm3345, %v2322, 0
    %v5871 = vsel %vm3345, %v2327, 0
    %v5874 = vsel %vm3345, %v2332, 0
    %v5877 = vsel %vm3345, %v2337, 0
    %v5880 = vsel %vm3345, %v2342, 0
    %v5883 = vsel %vm3345, %v2347, 0
    %v5886 = vsel %vm3345, %v2352, 0
    %v5889 = vsel %vm3345, %v2357, 0
    %v5892 = vsel %vm3345, %v2362, 0
    %v5895 = vsel %vm3345, %v2367, 0
    %v5898 = vsel %vm3345, %v2372, 0
    %v5901 = vsel %vm3345, %v2377, 0
    %5903 = vmatprep.subr.mxu0 0.0
    %5904 = vmatpush1.msra.mxu0 %v5853
    %5905 = vmatprep.subr.mxu0 0.0
    %5906 = vmatpush1.msra.mxu0 %v5854
    %5907 = vmatprep.subr.mxu0 0.0
    %5908 = vmatpush1.msra.mxu0 0.0
    %5909 = vmatprep.subr.mxu0 0.0
    %5910 = vmatpush1.msra.mxu0 0.0
    %5911 = vmatprep.subr.mxu0 0.0
    %5912 = vmatpush1.msra.mxu0 0.0
    %5913 = vmatprep.subr.mxu0 0.0
    %5914 = vmatpush1.msra.mxu0 0.0
    %5915 = vmatprep.subr.mxu0 0.0
    %5916 = vmatpush1.msra.mxu0 0.0
    %5917 = vmatprep.subr.mxu0 0.0
    %5918 = vmatpush1.msra.mxu0 0.0
    %5919 = vmatprep.subr.mxu0 0.0
    %5920 = vmatpush1.msra.mxu0 0.0
    %5921 = vmatprep.subr.mxu0 0.0
    %5922 = vmatpush1.msra.mxu0 0.0
    %5923 = vmatprep.subr.mxu0 0.0
    %5924 = vmatpush1.msra.mxu0 0.0
    %5925 = vmatprep.subr.mxu0 0.0
    %5926 = vmatpush1.msra.mxu0 0.0
    %5927 = vmatprep.subr.mxu0 0.0
    %5928 = vmatpush1.msra.mxu0 0.0
    %5929 = vmatprep.subr.mxu0 0.0
    %5930 = vmatpush1.msra.mxu0 0.0
    %5931 = vmatprep.subr.mxu0 0.0
    %5932 = vmatpush1.msra.mxu0 0.0
    %5933 = vmatprep.subr.mxu0 0.0
    %5934 = vmatpush1.msra.mxu0 0.0
    %5935 = vmatprep.subr.mxu0 0.0
    %5936 = vmatpush1.msra.mxu0 0.0
    %5937 = vmatprep.subr.mxu0 0.0
    %5938 = vmatpush1.msra.mxu0 0.0
    %5939 = vmatprep.subr.mxu0 0.0
    %5940 = vmatpush1.msra.mxu0 0.0
    %5941 = vmatprep.subr.mxu0 0.0
    %5942 = vmatpush1.msra.mxu0 0.0
    %5943 = vmatprep.subr.mxu0 0.0
    %5944 = vmatpush1.msra.mxu0 0.0
    %5945 = vmatprep.subr.mxu0 0.0
    %5946 = vmatpush1.msra.mxu0 0.0
    %5947 = vmatprep.subr.mxu0 0.0
    %5948 = vmatpush1.msra.mxu0 0.0
    %5949 = vmatprep.subr.mxu0 0.0
    %5950 = vmatpush1.msra.mxu0 0.0
    %5951 = vmatprep.subr.mxu0 0.0
    %5952 = vmatpush1.msra.mxu0 0.0
    %5953 = vmatprep.subr.mxu0 0.0
    %5954 = vmatpush1.msra.mxu0 0.0
    %5955 = vmatprep.subr.mxu0 0.0
    %5956 = vmatpush1.msra.mxu0 0.0
    %5957 = vmatprep.subr.mxu0 0.0
    %5958 = vmatpush1.msra.mxu0 0.0
    %5959 = vmatprep.subr.mxu0 0.0
    %5960 = vmatpush1.msra.mxu0 0.0
    %5961 = vmatprep.subr.mxu0 0.0
    %5962 = vmatpush1.msra.mxu0 0.0
    %5963 = vmatprep.subr.mxu0 0.0
    %5964 = vmatpush1.msra.mxu0 0.0
    %5965 = vmatprep.subr.mxu0 0.0
    %5966 = vmatpush1.msra.mxu0 0.0
    %5967 = vmatprep.mubr.f32.mxu0 0.0
    %5968 = vmatmul.mubr.f32.gmra.mrb[0].mxu0 %v5856
    %v5969 = vpop.f32.mrb[0].mxu0
    %v5970 = vadd.f32 0.0, %v5969
    %v5971 = vpop.f32.mrb[0].mxu0
    %5972 = vmatprep.mubr.f32.mxu0 0.0
    %5973 = vmatmul.mubr.f32.gmra.mrb[0].mxu0 %v5859
    %v5974 = vpop.f32.mrb[0].mxu0
    %v5975 = vadd.f32 0.0, %v5974
    %v5976 = vpop.f32.mrb[0].mxu0
    %5977 = vmatprep.mubr.f32.mxu0 0.0
    %5978 = vmatmul.mubr.f32.gmra.mrb[0].mxu0 %v5862
    %v5979 = vpop.f32.mrb[0].mxu0
    %v5980 = vadd.f32 0.0, %v5979
    %v5981 = vpop.f32.mrb[0].mxu0
    %5982 = vmatprep.mubr.f32.mxu0 0.0
    %5983 = vmatmul.mubr.f32.gmra.mrb[0].mxu0 %v5865
    %v5984 = vpop.f32.mrb[0].mxu0
    %v5985 = vadd.f32 0.0, %v5984
    %v5986 = vpop.f32.mrb[0].mxu0
    %5987 = vmatprep.mubr.f32.mxu0 0.0
    %5988 = vmatmul.mubr.f32.gmra.mrb[0].mxu0 %v5868
    %v5989 = vpop.f32.mrb[0].mxu0
    %v5990 = vadd.f32 0.0, %v5989
    %v5991 = vpop.f32.mrb[0].mxu0
    %5992 = vmatprep.mubr.f32.mxu0 0.0
    %5993 = vmatmul.mubr.f32.gmra.mrb[0].mxu0 %v5871
    %v5994 = vpop.f32.mrb[0].mxu0
    %v5995 = vadd.f32 0.0, %v5994
    %v5996 = vpop.f32.mrb[0].mxu0
    %5997 = vmatprep.mubr.f32.mxu0 0.0
    %5998 = vmatmul.mubr.f32.gmra.mrb[0].mxu0 %v5874
    %v5999 = vpop.f32.mrb[0].mxu0
    %v6000 = vadd.f32 0.0, %v5999
    %v6001 = vpop.f32.mrb[0].mxu0
    %6002 = vmatprep.mubr.f32.mxu0 0.0
    %6003 = vmatmul.mubr.f32.gmra.mrb[0].mxu0 %v5877
    %v6004 = vpop.f32.mrb[0].mxu0
    %v6005 = vadd.f32 0.0, %v6004
    %v6006 = vpop.f32.mrb[0].mxu0
    %6007 = vmatprep.mubr.f32.mxu0 0.0
    %6008 = vmatmul.mubr.f32.gmra.mrb[0].mxu0 %v5880
    %v6009 = vpop.f32.mrb[0].mxu0
    %v6010 = vadd.f32 0.0, %v6009
    %v6011 = vpop.f32.mrb[0].mxu0
    %6012 = vmatprep.mubr.f32.mxu0 0.0
    %6013 = vmatmul.mubr.f32.gmra.mrb[0].mxu0 %v5883
    %v6014 = vpop.f32.mrb[0].mxu0
    %v6015 = vadd.f32 0.0, %v6014
    %v6016 = vpop.f32.mrb[0].mxu0
    %6017 = vmatprep.mubr.f32.mxu0 0.0
    %6018 = vmatmul.mubr.f32.gmra.mrb[0].mxu0 %v5886
    %v6019 = vpop.f32.mrb[0].mxu0
    %v6020 = vadd.f32 0.0, %v6019
    %v6021 = vpop.f32.mrb[0].mxu0
    %6022 = vmatprep.mubr.f32.mxu0 0.0
    %6023 = vmatmul.mubr.f32.gmra.mrb[0].mxu0 %v5889
    %v6024 = vpop.f32.mrb[0].mxu0
    %v6025 = vadd.f32 0.0, %v6024
    %v6026 = vpop.f32.mrb[0].mxu0
    %6027 = vmatprep.mubr.f32.mxu0 0.0
    %6028 = vmatmul.mubr.f32.gmra.mrb[0].mxu0 %v5892
    %v6029 = vpop.f32.mrb[0].mxu0
    %v6030 = vadd.f32 0.0, %v6029
    %v6031 = vpop.f32.mrb[0].mxu0
    %6032 = vmatprep.mubr.f32.mxu0 0.0
    %6033 = vmatmul.mubr.f32.gmra.mrb[0].mxu0 %v5895
    %v6034 = vpop.f32.mrb[0].mxu0
    %v6035 = vadd.f32 0.0, %v6034
    %v6036 = vpop.f32.mrb[0].mxu0
    %6037 = vmatprep.mubr.f32.mxu0 0.0
    %6038 = vmatmul.mubr.f32.gmra.mrb[0].mxu0 %v5898
    %v6039 = vpop.f32.mrb[0].mxu0
    %v6040 = vadd.f32 0.0, %v6039
    %v6041 = vpop.f32.mrb[0].mxu0
    %6042 = vmatprep.mubr.f32.mxu0 0.0
    %6043 = vmatmul.mubr.f32.gmra.mrb[0].mxu0 %v5901
    %v6044 = vpop.f32.mrb[0].mxu0
    %v6045 = vadd.f32 0.0, %v6044
    %v6046 = vpop.f32.mrb[0].mxu0
    %6047 = vdwg.mxu0
    %v6048 = vadd.f32 %v5836, %v5970
    %v6049 = vadd.f32 %v5837, %v5975
    %v6050 = vadd.f32 %v5838, %v5980
    %v6051 = vadd.f32 %v5839, %v5985
    %v6052 = vadd.f32 %v5840, %v5990
    %v6053 = vadd.f32 %v5841, %v5995
    %v6054 = vadd.f32 %v5842, %v6000
    %v6055 = vadd.f32 %v5843, %v6005
    %v6056 = vadd.f32 %v5844, %v6010
    %v6057 = vadd.f32 %v5845, %v6015
    %v6058 = vadd.f32 %v5846, %v6020
    %v6059 = vadd.f32 %v5847, %v6025
    %v6060 = vadd.f32 %v5848, %v6030
    %v6061 = vadd.f32 %v5849, %v6035
    %v6062 = vadd.f32 %v5850, %v6040
    %v6063 = vadd.f32 %v5851, %v6045
    %s6064 = scalar_lea.vmem [#allocation7], 208
    %v6065 = vld [vmem:[%s6064] sm:$0xff]
    %v6066 = vld [vmem:[%s6064 + $0x8] sm:$0xff]
    %v6068 = vsel %vm3345, %v2382, 0
    %v6071 = vsel %vm3345, %v2387, 0
    %v6074 = vsel %vm3345, %v2392, 0
    %v6077 = vsel %vm3345, %v2397, 0
    %v6080 = vsel %vm3345, %v2402, 0
    %v6083 = vsel %vm3345, %v2407, 0
    %v6086 = vsel %vm3345, %v2412, 0
    %v6089 = vsel %vm3345, %v2417, 0
    %v6092 = vsel %vm3345, %v2422, 0
    %v6095 = vsel %vm3345, %v2427, 0
    %v6098 = vsel %vm3345, %v2432, 0
    %v6101 = vsel %vm3345, %v2437, 0
    %v6104 = vsel %vm3345, %v2442, 0
    %v6107 = vsel %vm3345, %v2447, 0
    %v6110 = vsel %vm3345, %v2452, 0
    %v6113 = vsel %vm3345, %v2457, 0
    %6115 = vmatprep.subr.mxu0 0.0
    %6116 = vmatpush1.msra.mxu0 %v6065
    %6117 = vmatprep.subr.mxu0 0.0
    %6118 = vmatpush1.msra.mxu0 %v6066
    %6119 = vmatprep.subr.mxu0 0.0
    %6120 = vmatpush1.msra.mxu0 0.0
    %6121 = vmatprep.subr.mxu0 0.0
    %6122 = vmatpush1.msra.mxu0 0.0
    %6123 = vmatprep.subr.mxu0 0.0
    %6124 = vmatpush1.msra.mxu0 0.0
    %6125 = vmatprep.subr.mxu0 0.0
    %6126 = vmatpush1.msra.mxu0 0.0
    %6127 = vmatprep.subr.mxu0 0.0
    %6128 = vmatpush1.msra.mxu0 0.0
    %6129 = vmatprep.subr.mxu0 0.0
    %6130 = vmatpush1.msra.mxu0 0.0
    %6131 = vmatprep.subr.mxu0 0.0
    %6132 = vmatpush1.msra.mxu0 0.0
    %6133 = vmatprep.subr.mxu0 0.0
    %6134 = vmatpush1.msra.mxu0 0.0
    %6135 = vmatprep.subr.mxu0 0.0
    %6136 = vmatpush1.msra.mxu0 0.0
    %6137 = vmatprep.subr.mxu0 0.0
    %6138 = vmatpush1.msra.mxu0 0.0
    %6139 = vmatprep.subr.mxu0 0.0
    %6140 = vmatpush1.msra.mxu0 0.0
    %6141 = vmatprep.subr.mxu0 0.0
    %6142 = vmatpush1.msra.mxu0 0.0
    %6143 = vmatprep.subr.mxu0 0.0
    %6144 = vmatpush1.msra.mxu0 0.0
    %6145 = vmatprep.subr.mxu0 0.0
    %6146 = vmatpush1.msra.mxu0 0.0
    %6147 = vmatprep.subr.mxu0 0.0
    %6148 = vmatpush1.msra.mxu0 0.0
    %6149 = vmatprep.subr.mxu0 0.0
    %6150 = vmatpush1.msra.mxu0 0.0
    %6151 = vmatprep.subr.mxu0 0.0
    %6152 = vmatpush1.msra.mxu0 0.0
    %6153 = vmatprep.subr.mxu0 0.0
    %6154 = vmatpush1.msra.mxu0 0.0
    %6155 = vmatprep.subr.mxu0 0.0
    %6156 = vmatpush1.msra.mxu0 0.0
    %6157 = vmatprep.subr.mxu0 0.0
    %6158 = vmatpush1.msra.mxu0 0.0
    %6159 = vmatprep.subr.mxu0 0.0
    %6160 = vmatpush1.msra.mxu0 0.0
    %6161 = vmatprep.subr.mxu0 0.0
    %6162 = vmatpush1.msra.mxu0 0.0
    %6163 = vmatprep.subr.mxu0 0.0
    %6164 = vmatpush1.msra.mxu0 0.0
    %6165 = vmatprep.subr.mxu0 0.0
    %6166 = vmatpush1.msra.mxu0 0.0
    %6167 = vmatprep.subr.mxu0 0.0
    %6168 = vmatpush1.msra.mxu0 0.0
    %6169 = vmatprep.subr.mxu0 0.0
    %6170 = vmatpush1.msra.mxu0 0.0
    %6171 = vmatprep.subr.mxu0 0.0
    %6172 = vmatpush1.msra.mxu0 0.0
    %6173 = vmatprep.subr.mxu0 0.0
    %6174 = vmatpush1.msra.mxu0 0.0
    %6175 = vmatprep.subr.mxu0 0.0
    %6176 = vmatpush1.msra.mxu0 0.0
    %6177 = vmatprep.subr.mxu0 0.0
    %6178 = vmatpush1.msra.mxu0 0.0
    %6179 = vmatprep.mubr.f32.mxu0 0.0
    %6180 = vmatmul.mubr.f32.gmra.mrb[0].mxu0 %v6068
    %v6181 = vpop.f32.mrb[0].mxu0
    %v6182 = vadd.f32 0.0, %v6181
    %v6183 = vpop.f32.mrb[0].mxu0
    %6184 = vmatprep.mubr.f32.mxu0 0.0
    %6185 = vmatmul.mubr.f32.gmra.mrb[0].mxu0 %v6071
    %v6186 = vpop.f32.mrb[0].mxu0
    %v6187 = vadd.f32 0.0, %v6186
    %v6188 = vpop.f32.mrb[0].mxu0
    %6189 = vmatprep.mubr.f32.mxu0 0.0
    %6190 = vmatmul.mubr.f32.gmra.mrb[0].mxu0 %v6074
    %v6191 = vpop.f32.mrb[0].mxu0
    %v6192 = vadd.f32 0.0, %v6191
    %v6193 = vpop.f32.mrb[0].mxu0
    %6194 = vmatprep.mubr.f32.mxu0 0.0
    %6195 = vmatmul.mubr.f32.gmra.mrb[0].mxu0 %v6077
    %v6196 = vpop.f32.mrb[0].mxu0
    %v6197 = vadd.f32 0.0, %v6196
    %v6198 = vpop.f32.mrb[0].mxu0
    %6199 = vmatprep.mubr.f32.mxu0 0.0
    %6200 = vmatmul.mubr.f32.gmra.mrb[0].mxu0 %v6080
    %v6201 = vpop.f32.mrb[0].mxu0
    %v6202 = vadd.f32 0.0, %v6201
    %v6203 = vpop.f32.mrb[0].mxu0
    %6204 = vmatprep.mubr.f32.mxu0 0.0
    %6205 = vmatmul.mubr.f32.gmra.mrb[0].mxu0 %v6083
    %v6206 = vpop.f32.mrb[0].mxu0
    %v6207 = vadd.f32 0.0, %v6206
    %v6208 = vpop.f32.mrb[0].mxu0
    %6209 = vmatprep.mubr.f32.mxu0 0.0
    %6210 = vmatmul.mubr.f32.gmra.mrb[0].mxu0 %v6086
    %v6211 = vpop.f32.mrb[0].mxu0
    %v6212 = vadd.f32 0.0, %v6211
    %v6213 = vpop.f32.mrb[0].mxu0
    %6214 = vmatprep.mubr.f32.mxu0 0.0
    %6215 = vmatmul.mubr.f32.gmra.mrb[0].mxu0 %v6089
    %v6216 = vpop.f32.mrb[0].mxu0
    %v6217 = vadd.f32 0.0, %v6216
    %v6218 = vpop.f32.mrb[0].mxu0
    %6219 = vmatprep.mubr.f32.mxu0 0.0
    %6220 = vmatmul.mubr.f32.gmra.mrb[0].mxu0 %v6092
    %v6221 = vpop.f32.mrb[0].mxu0
    %v6222 = vadd.f32 0.0, %v6221
    %v6223 = vpop.f32.mrb[0].mxu0
    %6224 = vmatprep.mubr.f32.mxu0 0.0
    %6225 = vmatmul.mubr.f32.gmra.mrb[0].mxu0 %v6095
    %v6226 = vpop.f32.mrb[0].mxu0
    %v6227 = vadd.f32 0.0, %v6226
    %v6228 = vpop.f32.mrb[0].mxu0
    %6229 = vmatprep.mubr.f32.mxu0 0.0
    %6230 = vmatmul.mubr.f32.gmra.mrb[0].mxu0 %v6098
    %v6231 = vpop.f32.mrb[0].mxu0
    %v6232 = vadd.f32 0.0, %v6231
    %v6233 = vpop.f32.mrb[0].mxu0
    %6234 = vmatprep.mubr.f32.mxu0 0.0
    %6235 = vmatmul.mubr.f32.gmra.mrb[0].mxu0 %v6101
    %v6236 = vpop.f32.mrb[0].mxu0
    %v6237 = vadd.f32 0.0, %v6236
    %v6238 = vpop.f32.mrb[0].mxu0
    %6239 = vmatprep.mubr.f32.mxu0 0.0
    %6240 = vmatmul.mubr.f32.gmra.mrb[0].mxu0 %v6104
    %v6241 = vpop.f32.mrb[0].mxu0
    %v6242 = vadd.f32 0.0, %v6241
    %v6243 = vpop.f32.mrb[0].mxu0
    %6244 = vmatprep.mubr.f32.mxu0 0.0
    %6245 = vmatmul.mubr.f32.gmra.mrb[0].mxu0 %v6107
    %v6246 = vpop.f32.mrb[0].mxu0
    %v6247 = vadd.f32 0.0, %v6246
    %v6248 = vpop.f32.mrb[0].mxu0
    %6249 = vmatprep.mubr.f32.mxu0 0.0
    %6250 = vmatmul.mubr.f32.gmra.mrb[0].mxu0 %v6110
    %v6251 = vpop.f32.mrb[0].mxu0
    %v6252 = vadd.f32 0.0, %v6251
    %v6253 = vpop.f32.mrb[0].mxu0
    %6254 = vmatprep.mubr.f32.mxu0 0.0
    %6255 = vmatmul.mubr.f32.gmra.mrb[0].mxu0 %v6113
    %v6256 = vpop.f32.mrb[0].mxu0
    %v6257 = vadd.f32 0.0, %v6256
    %v6258 = vpop.f32.mrb[0].mxu0
    %6259 = vdwg.mxu0
    %v6260 = vadd.f32 %v6048, %v6182
    %v6261 = vadd.f32 %v6049, %v6187
    %v6262 = vadd.f32 %v6050, %v6192
    %v6263 = vadd.f32 %v6051, %v6197
    %v6264 = vadd.f32 %v6052, %v6202
    %v6265 = vadd.f32 %v6053, %v6207
    %v6266 = vadd.f32 %v6054, %v6212
    %v6267 = vadd.f32 %v6055, %v6217
    %v6268 = vadd.f32 %v6056, %v6222
    %v6269 = vadd.f32 %v6057, %v6227
    %v6270 = vadd.f32 %v6058, %v6232
    %v6271 = vadd.f32 %v6059, %v6237
    %v6272 = vadd.f32 %v6060, %v6242
    %v6273 = vadd.f32 %v6061, %v6247
    %v6274 = vadd.f32 %v6062, %v6252
    %v6275 = vadd.f32 %v6063, %v6257
    %s6276 = scalar_lea.vmem [#allocation7], 224
    %v6277 = vld [vmem:[%s6276] sm:$0xff]
    %v6278 = vld [vmem:[%s6276 + $0x8] sm:$0xff]
    %v6280 = vsel %vm3345, %v2462, 0
    %v6283 = vsel %vm3345, %v2467, 0
    %v6286 = vsel %vm3345, %v2472, 0
    %v6289 = vsel %vm3345, %v2477, 0
    %v6292 = vsel %vm3345, %v2482, 0
    %v6295 = vsel %vm3345, %v2487, 0
    %v6298 = vsel %vm3345, %v2492, 0
    %v6301 = vsel %vm3345, %v2497, 0
    %v6304 = vsel %vm3345, %v2502, 0
    %v6307 = vsel %vm3345, %v2507, 0
    %v6310 = vsel %vm3345, %v2512, 0
    %v6313 = vsel %vm3345, %v2517, 0
    %v6316 = vsel %vm3345, %v2522, 0
    %v6319 = vsel %vm3345, %v2527, 0
    %v6322 = vsel %vm3345, %v2532, 0
    %v6325 = vsel %vm3345, %v2537, 0
    %6327 = vmatprep.subr.mxu0 0.0
    %6328 = vmatpush1.msra.mxu0 %v6277
    %6329 = vmatprep.subr.mxu0 0.0
    %6330 = vmatpush1.msra.mxu0 %v6278
    %6331 = vmatprep.subr.mxu0 0.0
    %6332 = vmatpush1.msra.mxu0 0.0
    %6333 = vmatprep.subr.mxu0 0.0
    %6334 = vmatpush1.msra.mxu0 0.0
    %6335 = vmatprep.subr.mxu0 0.0
    %6336 = vmatpush1.msra.mxu0 0.0
    %6337 = vmatprep.subr.mxu0 0.0
    %6338 = vmatpush1.msra.mxu0 0.0
    %6339 = vmatprep.subr.mxu0 0.0
    %6340 = vmatpush1.msra.mxu0 0.0
    %6341 = vmatprep.subr.mxu0 0.0
    %6342 = vmatpush1.msra.mxu0 0.0
    %6343 = vmatprep.subr.mxu0 0.0
    %6344 = vmatpush1.msra.mxu0 0.0
    %6345 = vmatprep.subr.mxu0 0.0
    %6346 = vmatpush1.msra.mxu0 0.0
    %6347 = vmatprep.subr.mxu0 0.0
    %6348 = vmatpush1.msra.mxu0 0.0
    %6349 = vmatprep.subr.mxu0 0.0
    %6350 = vmatpush1.msra.mxu0 0.0
    %6351 = vmatprep.subr.mxu0 0.0
    %6352 = vmatpush1.msra.mxu0 0.0
    %6353 = vmatprep.subr.mxu0 0.0
    %6354 = vmatpush1.msra.mxu0 0.0
    %6355 = vmatprep.subr.mxu0 0.0
    %6356 = vmatpush1.msra.mxu0 0.0
    %6357 = vmatprep.subr.mxu0 0.0
    %6358 = vmatpush1.msra.mxu0 0.0
    %6359 = vmatprep.subr.mxu0 0.0
    %6360 = vmatpush1.msra.mxu0 0.0
    %6361 = vmatprep.subr.mxu0 0.0
    %6362 = vmatpush1.msra.mxu0 0.0
    %6363 = vmatprep.subr.mxu0 0.0
    %6364 = vmatpush1.msra.mxu0 0.0
    %6365 = vmatprep.subr.mxu0 0.0
    %6366 = vmatpush1.msra.mxu0 0.0
    %6367 = vmatprep.subr.mxu0 0.0
    %6368 = vmatpush1.msra.mxu0 0.0
    %6369 = vmatprep.subr.mxu0 0.0
    %6370 = vmatpush1.msra.mxu0 0.0
    %6371 = vmatprep.subr.mxu0 0.0
    %6372 = vmatpush1.msra.mxu0 0.0
    %6373 = vmatprep.subr.mxu0 0.0
    %6374 = vmatpush1.msra.mxu0 0.0
    %6375 = vmatprep.subr.mxu0 0.0
    %6376 = vmatpush1.msra.mxu0 0.0
    %6377 = vmatprep.subr.mxu0 0.0
    %6378 = vmatpush1.msra.mxu0 0.0
    %6379 = vmatprep.subr.mxu0 0.0
    %6380 = vmatpush1.msra.mxu0 0.0
    %6381 = vmatprep.subr.mxu0 0.0
    %6382 = vmatpush1.msra.mxu0 0.0
    %6383 = vmatprep.subr.mxu0 0.0
    %6384 = vmatpush1.msra.mxu0 0.0
    %6385 = vmatprep.subr.mxu0 0.0
    %6386 = vmatpush1.msra.mxu0 0.0
    %6387 = vmatprep.subr.mxu0 0.0
    %6388 = vmatpush1.msra.mxu0 0.0
    %6389 = vmatprep.subr.mxu0 0.0
    %6390 = vmatpush1.msra.mxu0 0.0
    %6391 = vmatprep.mubr.f32.mxu0 0.0
    %6392 = vmatmul.mubr.f32.gmra.mrb[0].mxu0 %v6280
    %v6393 = vpop.f32.mrb[0].mxu0
    %v6394 = vadd.f32 0.0, %v6393
    %v6395 = vpop.f32.mrb[0].mxu0
    %6396 = vmatprep.mubr.f32.mxu0 0.0
    %6397 = vmatmul.mubr.f32.gmra.mrb[0].mxu0 %v6283
    %v6398 = vpop.f32.mrb[0].mxu0
    %v6399 = vadd.f32 0.0, %v6398
    %v6400 = vpop.f32.mrb[0].mxu0
    %6401 = vmatprep.mubr.f32.mxu0 0.0
    %6402 = vmatmul.mubr.f32.gmra.mrb[0].mxu0 %v6286
    %v6403 = vpop.f32.mrb[0].mxu0
    %v6404 = vadd.f32 0.0, %v6403
    %v6405 = vpop.f32.mrb[0].mxu0
    %6406 = vmatprep.mubr.f32.mxu0 0.0
    %6407 = vmatmul.mubr.f32.gmra.mrb[0].mxu0 %v6289
    %v6408 = vpop.f32.mrb[0].mxu0
    %v6409 = vadd.f32 0.0, %v6408
    %v6410 = vpop.f32.mrb[0].mxu0
    %6411 = vmatprep.mubr.f32.mxu0 0.0
    %6412 = vmatmul.mubr.f32.gmra.mrb[0].mxu0 %v6292
    %v6413 = vpop.f32.mrb[0].mxu0
    %v6414 = vadd.f32 0.0, %v6413
    %v6415 = vpop.f32.mrb[0].mxu0
    %6416 = vmatprep.mubr.f32.mxu0 0.0
    %6417 = vmatmul.mubr.f32.gmra.mrb[0].mxu0 %v6295
    %v6418 = vpop.f32.mrb[0].mxu0
    %v6419 = vadd.f32 0.0, %v6418
    %v6420 = vpop.f32.mrb[0].mxu0
    %6421 = vmatprep.mubr.f32.mxu0 0.0
    %6422 = vmatmul.mubr.f32.gmra.mrb[0].mxu0 %v6298
    %v6423 = vpop.f32.mrb[0].mxu0
    %v6424 = vadd.f32 0.0, %v6423
    %v6425 = vpop.f32.mrb[0].mxu0
    %6426 = vmatprep.mubr.f32.mxu0 0.0
    %6427 = vmatmul.mubr.f32.gmra.mrb[0].mxu0 %v6301
    %v6428 = vpop.f32.mrb[0].mxu0
    %v6429 = vadd.f32 0.0, %v6428
    %v6430 = vpop.f32.mrb[0].mxu0
    %6431 = vmatprep.mubr.f32.mxu0 0.0
    %6432 = vmatmul.mubr.f32.gmra.mrb[0].mxu0 %v6304
    %v6433 = vpop.f32.mrb[0].mxu0
    %v6434 = vadd.f32 0.0, %v6433
    %v6435 = vpop.f32.mrb[0].mxu0
    %6436 = vmatprep.mubr.f32.mxu0 0.0
    %6437 = vmatmul.mubr.f32.gmra.mrb[0].mxu0 %v6307
    %v6438 = vpop.f32.mrb[0].mxu0
    %v6439 = vadd.f32 0.0, %v6438
    %v6440 = vpop.f32.mrb[0].mxu0
    %6441 = vmatprep.mubr.f32.mxu0 0.0
    %6442 = vmatmul.mubr.f32.gmra.mrb[0].mxu0 %v6310
    %v6443 = vpop.f32.mrb[0].mxu0
    %v6444 = vadd.f32 0.0, %v6443
    %v6445 = vpop.f32.mrb[0].mxu0
    %6446 = vmatprep.mubr.f32.mxu0 0.0
    %6447 = vmatmul.mubr.f32.gmra.mrb[0].mxu0 %v6313
    %v6448 = vpop.f32.mrb[0].mxu0
    %v6449 = vadd.f32 0.0, %v6448
    %v6450 = vpop.f32.mrb[0].mxu0
    %6451 = vmatprep.mubr.f32.mxu0 0.0
    %6452 = vmatmul.mubr.f32.gmra.mrb[0].mxu0 %v6316
    %v6453 = vpop.f32.mrb[0].mxu0
    %v6454 = vadd.f32 0.0, %v6453
    %v6455 = vpop.f32.mrb[0].mxu0
    %6456 = vmatprep.mubr.f32.mxu0 0.0
    %6457 = vmatmul.mubr.f32.gmra.mrb[0].mxu0 %v6319
    %v6458 = vpop.f32.mrb[0].mxu0
    %v6459 = vadd.f32 0.0, %v6458
    %v6460 = vpop.f32.mrb[0].mxu0
    %6461 = vmatprep.mubr.f32.mxu0 0.0
    %6462 = vmatmul.mubr.f32.gmra.mrb[0].mxu0 %v6322
    %v6463 = vpop.f32.mrb[0].mxu0
    %v6464 = vadd.f32 0.0, %v6463
    %v6465 = vpop.f32.mrb[0].mxu0
    %6466 = vmatprep.mubr.f32.mxu0 0.0
    %6467 = vmatmul.mubr.f32.gmra.mrb[0].mxu0 %v6325
    %v6468 = vpop.f32.mrb[0].mxu0
    %v6469 = vadd.f32 0.0, %v6468
    %v6470 = vpop.f32.mrb[0].mxu0
    %6471 = vdwg.mxu0
    %v6472 = vadd.f32 %v6260, %v6394
    %v6473 = vadd.f32 %v6261, %v6399
    %v6474 = vadd.f32 %v6262, %v6404
    %v6475 = vadd.f32 %v6263, %v6409
    %v6476 = vadd.f32 %v6264, %v6414
    %v6477 = vadd.f32 %v6265, %v6419
    %v6478 = vadd.f32 %v6266, %v6424
    %v6479 = vadd.f32 %v6267, %v6429
    %v6480 = vadd.f32 %v6268, %v6434
    %v6481 = vadd.f32 %v6269, %v6439
    %v6482 = vadd.f32 %v6270, %v6444
    %v6483 = vadd.f32 %v6271, %v6449
    %v6484 = vadd.f32 %v6272, %v6454
    %v6485 = vadd.f32 %v6273, %v6459
    %v6486 = vadd.f32 %v6274, %v6464
    %v6487 = vadd.f32 %v6275, %v6469
    %s6488 = scalar_lea.vmem [#allocation7], 240
    %v6489 = vld [vmem:[%s6488] sm:$0xff]
    %v6490 = vld [vmem:[%s6488 + $0x8] sm:$0xff]
    %v6492 = vsel %vm3345, %v2542, 0
    %v6495 = vsel %vm3345, %v2547, 0
    %v6498 = vsel %vm3345, %v2552, 0
    %v6501 = vsel %vm3345, %v2557, 0
    %v6504 = vsel %vm3345, %v2562, 0
    %v6507 = vsel %vm3345, %v2567, 0
    %v6510 = vsel %vm3345, %v2572, 0
    %v6513 = vsel %vm3345, %v2577, 0
    %v6516 = vsel %vm3345, %v2582, 0
    %v6519 = vsel %vm3345, %v2587, 0
    %v6522 = vsel %vm3345, %v2592, 0
    %v6525 = vsel %vm3345, %v2597, 0
    %v6528 = vsel %vm3345, %v2602, 0
    %v6531 = vsel %vm3345, %v2607, 0
    %v6534 = vsel %vm3345, %v2612, 0
    %v6537 = vsel %vm3345, %v2617, 0
    %6539 = vmatprep.subr.mxu0 0.0
    %6540 = vmatpush1.msra.mxu0 %v6489
    %6541 = vmatprep.subr.mxu0 0.0
    %6542 = vmatpush1.msra.mxu0 %v6490
    %6543 = vmatprep.subr.mxu0 0.0
    %6544 = vmatpush1.msra.mxu0 0.0
    %6545 = vmatprep.subr.mxu0 0.0
    %6546 = vmatpush1.msra.mxu0 0.0
    %6547 = vmatprep.subr.mxu0 0.0
    %6548 = vmatpush1.msra.mxu0 0.0
    %6549 = vmatprep.subr.mxu0 0.0
    %6550 = vmatpush1.msra.mxu0 0.0
    %6551 = vmatprep.subr.mxu0 0.0
    %6552 = vmatpush1.msra.mxu0 0.0
    %6553 = vmatprep.subr.mxu0 0.0
    %6554 = vmatpush1.msra.mxu0 0.0
    %6555 = vmatprep.subr.mxu0 0.0
    %6556 = vmatpush1.msra.mxu0 0.0
    %6557 = vmatprep.subr.mxu0 0.0
    %6558 = vmatpush1.msra.mxu0 0.0
    %6559 = vmatprep.subr.mxu0 0.0
    %6560 = vmatpush1.msra.mxu0 0.0
    %6561 = vmatprep.subr.mxu0 0.0
    %6562 = vmatpush1.msra.mxu0 0.0
    %6563 = vmatprep.subr.mxu0 0.0
    %6564 = vmatpush1.msra.mxu0 0.0
    %6565 = vmatprep.subr.mxu0 0.0
    %6566 = vmatpush1.msra.mxu0 0.0
    %6567 = vmatprep.subr.mxu0 0.0
    %6568 = vmatpush1.msra.mxu0 0.0
    %6569 = vmatprep.subr.mxu0 0.0
    %6570 = vmatpush1.msra.mxu0 0.0
    %6571 = vmatprep.subr.mxu0 0.0
    %6572 = vmatpush1.msra.mxu0 0.0
    %6573 = vmatprep.subr.mxu0 0.0
    %6574 = vmatpush1.msra.mxu0 0.0
    %6575 = vmatprep.subr.mxu0 0.0
    %6576 = vmatpush1.msra.mxu0 0.0
    %6577 = vmatprep.subr.mxu0 0.0
    %6578 = vmatpush1.msra.mxu0 0.0
    %6579 = vmatprep.subr.mxu0 0.0
    %6580 = vmatpush1.msra.mxu0 0.0
    %6581 = vmatprep.subr.mxu0 0.0
    %6582 = vmatpush1.msra.mxu0 0.0
    %6583 = vmatprep.subr.mxu0 0.0
    %6584 = vmatpush1.msra.mxu0 0.0
    %6585 = vmatprep.subr.mxu0 0.0
    %6586 = vmatpush1.msra.mxu0 0.0
    %6587 = vmatprep.subr.mxu0 0.0
    %6588 = vmatpush1.msra.mxu0 0.0
    %6589 = vmatprep.subr.mxu0 0.0
    %6590 = vmatpush1.msra.mxu0 0.0
    %6591 = vmatprep.subr.mxu0 0.0
    %6592 = vmatpush1.msra.mxu0 0.0
    %6593 = vmatprep.subr.mxu0 0.0
    %6594 = vmatpush1.msra.mxu0 0.0
    %6595 = vmatprep.subr.mxu0 0.0
    %6596 = vmatpush1.msra.mxu0 0.0
    %6597 = vmatprep.subr.mxu0 0.0
    %6598 = vmatpush1.msra.mxu0 0.0
    %6599 = vmatprep.subr.mxu0 0.0
    %6600 = vmatpush1.msra.mxu0 0.0
    %6601 = vmatprep.subr.mxu0 0.0
    %6602 = vmatpush1.msra.mxu0 0.0
    %6603 = vmatprep.mubr.f32.mxu0 0.0
    %6604 = vmatmul.mubr.f32.gmra.mrb[0].mxu0 %v6492
    %v6605 = vpop.f32.mrb[0].mxu0
    %v6606 = vadd.f32 0.0, %v6605
    %v6607 = vpop.f32.mrb[0].mxu0
    %6608 = vmatprep.mubr.f32.mxu0 0.0
    %6609 = vmatmul.mubr.f32.gmra.mrb[0].mxu0 %v6495
    %v6610 = vpop.f32.mrb[0].mxu0
    %v6611 = vadd.f32 0.0, %v6610
    %v6612 = vpop.f32.mrb[0].mxu0
    %6613 = vmatprep.mubr.f32.mxu0 0.0
    %6614 = vmatmul.mubr.f32.gmra.mrb[0].mxu0 %v6498
    %v6615 = vpop.f32.mrb[0].mxu0
    %v6616 = vadd.f32 0.0, %v6615
    %v6617 = vpop.f32.mrb[0].mxu0
    %6618 = vmatprep.mubr.f32.mxu0 0.0
    %6619 = vmatmul.mubr.f32.gmra.mrb[0].mxu0 %v6501
    %v6620 = vpop.f32.mrb[0].mxu0
    %v6621 = vadd.f32 0.0, %v6620
    %v6622 = vpop.f32.mrb[0].mxu0
    %6623 = vmatprep.mubr.f32.mxu0 0.0
    %6624 = vmatmul.mubr.f32.gmra.mrb[0].mxu0 %v6504
    %v6625 = vpop.f32.mrb[0].mxu0
    %v6626 = vadd.f32 0.0, %v6625
    %v6627 = vpop.f32.mrb[0].mxu0
    %6628 = vmatprep.mubr.f32.mxu0 0.0
    %6629 = vmatmul.mubr.f32.gmra.mrb[0].mxu0 %v6507
    %v6630 = vpop.f32.mrb[0].mxu0
    %v6631 = vadd.f32 0.0, %v6630
    %v6632 = vpop.f32.mrb[0].mxu0
    %6633 = vmatprep.mubr.f32.mxu0 0.0
    %6634 = vmatmul.mubr.f32.gmra.mrb[0].mxu0 %v6510
    %v6635 = vpop.f32.mrb[0].mxu0
    %v6636 = vadd.f32 0.0, %v6635
    %v6637 = vpop.f32.mrb[0].mxu0
    %6638 = vmatprep.mubr.f32.mxu0 0.0
    %6639 = vmatmul.mubr.f32.gmra.mrb[0].mxu0 %v6513
    %v6640 = vpop.f32.mrb[0].mxu0
    %v6641 = vadd.f32 0.0, %v6640
    %v6642 = vpop.f32.mrb[0].mxu0
    %6643 = vmatprep.mubr.f32.mxu0 0.0
    %6644 = vmatmul.mubr.f32.gmra.mrb[0].mxu0 %v6516
    %v6645 = vpop.f32.mrb[0].mxu0
    %v6646 = vadd.f32 0.0, %v6645
    %v6647 = vpop.f32.mrb[0].mxu0
    %6648 = vmatprep.mubr.f32.mxu0 0.0
    %6649 = vmatmul.mubr.f32.gmra.mrb[0].mxu0 %v6519
    %v6650 = vpop.f32.mrb[0].mxu0
    %v6651 = vadd.f32 0.0, %v6650
    %v6652 = vpop.f32.mrb[0].mxu0
    %6653 = vmatprep.mubr.f32.mxu0 0.0
    %6654 = vmatmul.mubr.f32.gmra.mrb[0].mxu0 %v6522
    %v6655 = vpop.f32.mrb[0].mxu0
    %v6656 = vadd.f32 0.0, %v6655
    %v6657 = vpop.f32.mrb[0].mxu0
    %6658 = vmatprep.mubr.f32.mxu0 0.0
    %6659 = vmatmul.mubr.f32.gmra.mrb[0].mxu0 %v6525
    %v6660 = vpop.f32.mrb[0].mxu0
    %v6661 = vadd.f32 0.0, %v6660
    %v6662 = vpop.f32.mrb[0].mxu0
    %6663 = vmatprep.mubr.f32.mxu0 0.0
    %6664 = vmatmul.mubr.f32.gmra.mrb[0].mxu0 %v6528
    %v6665 = vpop.f32.mrb[0].mxu0
    %v6666 = vadd.f32 0.0, %v6665
    %v6667 = vpop.f32.mrb[0].mxu0
    %6668 = vmatprep.mubr.f32.mxu0 0.0
    %6669 = vmatmul.mubr.f32.gmra.mrb[0].mxu0 %v6531
    %v6670 = vpop.f32.mrb[0].mxu0
    %v6671 = vadd.f32 0.0, %v6670
    %v6672 = vpop.f32.mrb[0].mxu0
    %6673 = vmatprep.mubr.f32.mxu0 0.0
    %6674 = vmatmul.mubr.f32.gmra.mrb[0].mxu0 %v6534
    %v6675 = vpop.f32.mrb[0].mxu0
    %v6676 = vadd.f32 0.0, %v6675
    %v6677 = vpop.f32.mrb[0].mxu0
    %6678 = vmatprep.mubr.f32.mxu0 0.0
    %6679 = vmatmul.mubr.f32.gmra.mrb[0].mxu0 %v6537
    %v6680 = vpop.f32.mrb[0].mxu0
    %v6681 = vadd.f32 0.0, %v6680
    %v6682 = vpop.f32.mrb[0].mxu0
    %6683 = vdwg.mxu0
    %v6684 = vadd.f32 %v6472, %v6606
    %v6685 = vadd.f32 %v6473, %v6611
    %v6686 = vadd.f32 %v6474, %v6616
    %v6687 = vadd.f32 %v6475, %v6621
    %v6688 = vadd.f32 %v6476, %v6626
    %v6689 = vadd.f32 %v6477, %v6631
    %v6690 = vadd.f32 %v6478, %v6636
    %v6691 = vadd.f32 %v6479, %v6641
    %v6692 = vadd.f32 %v6480, %v6646
    %v6693 = vadd.f32 %v6481, %v6651
    %v6694 = vadd.f32 %v6482, %v6656
    %v6695 = vadd.f32 %v6483, %v6661
    %v6696 = vadd.f32 %v6484, %v6666
    %v6697 = vadd.f32 %v6485, %v6671
    %v6698 = vadd.f32 %v6486, %v6676
    %v6699 = vadd.f32 %v6487, %v6681
    %s6700 = scalar_lea.vmem [#allocation7], 256
    %v6701 = vld [vmem:[%s6700] sm:$0xff]
    %v6702 = vld [vmem:[%s6700 + $0x8] sm:$0xff]
    %v6704 = vsel %vm3345, %v2622, 0
    %v6707 = vsel %vm3345, %v2627, 0
    %v6710 = vsel %vm3345, %v2632, 0
    %v6713 = vsel %vm3345, %v2637, 0
    %v6716 = vsel %vm3345, %v2642, 0
    %v6719 = vsel %vm3345, %v2647, 0
    %v6722 = vsel %vm3345, %v2652, 0
    %v6725 = vsel %vm3345, %v2657, 0
    %v6728 = vsel %vm3345, %v2662, 0
    %v6731 = vsel %vm3345, %v2667, 0
    %v6734 = vsel %vm3345, %v2672, 0
    %v6737 = vsel %vm3345, %v2677, 0
    %v6740 = vsel %vm3345, %v2682, 0
    %v6743 = vsel %vm3345, %v2687, 0
    %v6746 = vsel %vm3345, %v2692, 0
    %v6749 = vsel %vm3345, %v2697, 0
    %6751 = vmatprep.subr.mxu0 0.0
    %6752 = vmatpush1.msra.mxu0 %v6701
    %6753 = vmatprep.subr.mxu0 0.0
    %6754 = vmatpush1.msra.mxu0 %v6702
    %6755 = vmatprep.subr.mxu0 0.0
    %6756 = vmatpush1.msra.mxu0 0.0
    %6757 = vmatprep.subr.mxu0 0.0
    %6758 = vmatpush1.msra.mxu0 0.0
    %6759 = vmatprep.subr.mxu0 0.0
    %6760 = vmatpush1.msra.mxu0 0.0
    %6761 = vmatprep.subr.mxu0 0.0
    %6762 = vmatpush1.msra.mxu0 0.0
    %6763 = vmatprep.subr.mxu0 0.0
    %6764 = vmatpush1.msra.mxu0 0.0
    %6765 = vmatprep.subr.mxu0 0.0
    %6766 = vmatpush1.msra.mxu0 0.0
    %6767 = vmatprep.subr.mxu0 0.0
    %6768 = vmatpush1.msra.mxu0 0.0
    %6769 = vmatprep.subr.mxu0 0.0
    %6770 = vmatpush1.msra.mxu0 0.0
    %6771 = vmatprep.subr.mxu0 0.0
    %6772 = vmatpush1.msra.mxu0 0.0
    %6773 = vmatprep.subr.mxu0 0.0
    %6774 = vmatpush1.msra.mxu0 0.0
    %6775 = vmatprep.subr.mxu0 0.0
    %6776 = vmatpush1.msra.mxu0 0.0
    %6777 = vmatprep.subr.mxu0 0.0
    %6778 = vmatpush1.msra.mxu0 0.0
    %6779 = vmatprep.subr.mxu0 0.0
    %6780 = vmatpush1.msra.mxu0 0.0
    %6781 = vmatprep.subr.mxu0 0.0
    %6782 = vmatpush1.msra.mxu0 0.0
    %6783 = vmatprep.subr.mxu0 0.0
    %6784 = vmatpush1.msra.mxu0 0.0
    %6785 = vmatprep.subr.mxu0 0.0
    %6786 = vmatpush1.msra.mxu0 0.0
    %6787 = vmatprep.subr.mxu0 0.0
    %6788 = vmatpush1.msra.mxu0 0.0
    %6789 = vmatprep.subr.mxu0 0.0
    %6790 = vmatpush1.msra.mxu0 0.0
    %6791 = vmatprep.subr.mxu0 0.0
    %6792 = vmatpush1.msra.mxu0 0.0
    %6793 = vmatprep.subr.mxu0 0.0
    %6794 = vmatpush1.msra.mxu0 0.0
    %6795 = vmatprep.subr.mxu0 0.0
    %6796 = vmatpush1.msra.mxu0 0.0
    %6797 = vmatprep.subr.mxu0 0.0
    %6798 = vmatpush1.msra.mxu0 0.0
    %6799 = vmatprep.subr.mxu0 0.0
    %6800 = vmatpush1.msra.mxu0 0.0
    %6801 = vmatprep.subr.mxu0 0.0
    %6802 = vmatpush1.msra.mxu0 0.0
    %6803 = vmatprep.subr.mxu0 0.0
    %6804 = vmatpush1.msra.mxu0 0.0
    %6805 = vmatprep.subr.mxu0 0.0
    %6806 = vmatpush1.msra.mxu0 0.0
    %6807 = vmatprep.subr.mxu0 0.0
    %6808 = vmatpush1.msra.mxu0 0.0
    %6809 = vmatprep.subr.mxu0 0.0
    %6810 = vmatpush1.msra.mxu0 0.0
    %6811 = vmatprep.subr.mxu0 0.0
    %6812 = vmatpush1.msra.mxu0 0.0
    %6813 = vmatprep.subr.mxu0 0.0
    %6814 = vmatpush1.msra.mxu0 0.0
    %6815 = vmatprep.mubr.f32.mxu0 0.0
    %6816 = vmatmul.mubr.f32.gmra.mrb[0].mxu0 %v6704
    %v6817 = vpop.f32.mrb[0].mxu0
    %v6818 = vadd.f32 0.0, %v6817
    %v6819 = vpop.f32.mrb[0].mxu0
    %6820 = vmatprep.mubr.f32.mxu0 0.0
    %6821 = vmatmul.mubr.f32.gmra.mrb[0].mxu0 %v6707
    %v6822 = vpop.f32.mrb[0].mxu0
    %v6823 = vadd.f32 0.0, %v6822
    %v6824 = vpop.f32.mrb[0].mxu0
    %6825 = vmatprep.mubr.f32.mxu0 0.0
    %6826 = vmatmul.mubr.f32.gmra.mrb[0].mxu0 %v6710
    %v6827 = vpop.f32.mrb[0].mxu0
    %v6828 = vadd.f32 0.0, %v6827
    %v6829 = vpop.f32.mrb[0].mxu0
    %6830 = vmatprep.mubr.f32.mxu0 0.0
    %6831 = vmatmul.mubr.f32.gmra.mrb[0].mxu0 %v6713
    %v6832 = vpop.f32.mrb[0].mxu0
    %v6833 = vadd.f32 0.0, %v6832
    %v6834 = vpop.f32.mrb[0].mxu0
    %6835 = vmatprep.mubr.f32.mxu0 0.0
    %6836 = vmatmul.mubr.f32.gmra.mrb[0].mxu0 %v6716
    %v6837 = vpop.f32.mrb[0].mxu0
    %v6838 = vadd.f32 0.0, %v6837
    %v6839 = vpop.f32.mrb[0].mxu0
    %6840 = vmatprep.mubr.f32.mxu0 0.0
    %6841 = vmatmul.mubr.f32.gmra.mrb[0].mxu0 %v6719
    %v6842 = vpop.f32.mrb[0].mxu0
    %v6843 = vadd.f32 0.0, %v6842
    %v6844 = vpop.f32.mrb[0].mxu0
    %6845 = vmatprep.mubr.f32.mxu0 0.0
    %6846 = vmatmul.mubr.f32.gmra.mrb[0].mxu0 %v6722
    %v6847 = vpop.f32.mrb[0].mxu0
    %v6848 = vadd.f32 0.0, %v6847
    %v6849 = vpop.f32.mrb[0].mxu0
    %6850 = vmatprep.mubr.f32.mxu0 0.0
    %6851 = vmatmul.mubr.f32.gmra.mrb[0].mxu0 %v6725
    %v6852 = vpop.f32.mrb[0].mxu0
    %v6853 = vadd.f32 0.0, %v6852
    %v6854 = vpop.f32.mrb[0].mxu0
    %6855 = vmatprep.mubr.f32.mxu0 0.0
    %6856 = vmatmul.mubr.f32.gmra.mrb[0].mxu0 %v6728
    %v6857 = vpop.f32.mrb[0].mxu0
    %v6858 = vadd.f32 0.0, %v6857
    %v6859 = vpop.f32.mrb[0].mxu0
    %6860 = vmatprep.mubr.f32.mxu0 0.0
    %6861 = vmatmul.mubr.f32.gmra.mrb[0].mxu0 %v6731
    %v6862 = vpop.f32.mrb[0].mxu0
    %v6863 = vadd.f32 0.0, %v6862
    %v6864 = vpop.f32.mrb[0].mxu0
    %6865 = vmatprep.mubr.f32.mxu0 0.0
    %6866 = vmatmul.mubr.f32.gmra.mrb[0].mxu0 %v6734
    %v6867 = vpop.f32.mrb[0].mxu0
    %v6868 = vadd.f32 0.0, %v6867
    %v6869 = vpop.f32.mrb[0].mxu0
    %6870 = vmatprep.mubr.f32.mxu0 0.0
    %6871 = vmatmul.mubr.f32.gmra.mrb[0].mxu0 %v6737
    %v6872 = vpop.f32.mrb[0].mxu0
    %v6873 = vadd.f32 0.0, %v6872
    %v6874 = vpop.f32.mrb[0].mxu0
    %6875 = vmatprep.mubr.f32.mxu0 0.0
    %6876 = vmatmul.mubr.f32.gmra.mrb[0].mxu0 %v6740
    %v6877 = vpop.f32.mrb[0].mxu0
    %v6878 = vadd.f32 0.0, %v6877
    %v6879 = vpop.f32.mrb[0].mxu0
    %6880 = vmatprep.mubr.f32.mxu0 0.0
    %6881 = vmatmul.mubr.f32.gmra.mrb[0].mxu0 %v6743
    %v6882 = vpop.f32.mrb[0].mxu0
    %v6883 = vadd.f32 0.0, %v6882
    %v6884 = vpop.f32.mrb[0].mxu0
    %6885 = vmatprep.mubr.f32.mxu0 0.0
    %6886 = vmatmul.mubr.f32.gmra.mrb[0].mxu0 %v6746
    %v6887 = vpop.f32.mrb[0].mxu0
    %v6888 = vadd.f32 0.0, %v6887
    %v6889 = vpop.f32.mrb[0].mxu0
    %6890 = vmatprep.mubr.f32.mxu0 0.0
    %6891 = vmatmul.mubr.f32.gmra.mrb[0].mxu0 %v6749
    %v6892 = vpop.f32.mrb[0].mxu0
    %v6893 = vadd.f32 0.0, %v6892
    %v6894 = vpop.f32.mrb[0].mxu0
    %6895 = vdwg.mxu0
    %v6896 = vadd.f32 %v6684, %v6818
    %v6897 = vadd.f32 %v6685, %v6823
    %v6898 = vadd.f32 %v6686, %v6828
    %v6899 = vadd.f32 %v6687, %v6833
    %v6900 = vadd.f32 %v6688, %v6838
    %v6901 = vadd.f32 %v6689, %v6843
    %v6902 = vadd.f32 %v6690, %v6848
    %v6903 = vadd.f32 %v6691, %v6853
    %v6904 = vadd.f32 %v6692, %v6858
    %v6905 = vadd.f32 %v6693, %v6863
    %v6906 = vadd.f32 %v6694, %v6868
    %v6907 = vadd.f32 %v6695, %v6873
    %v6908 = vadd.f32 %v6696, %v6878
    %v6909 = vadd.f32 %v6697, %v6883
    %v6910 = vadd.f32 %v6698, %v6888
    %v6911 = vadd.f32 %v6699, %v6893
    %s6912 = scalar_lea.vmem [#allocation7], 272
    %v6913 = vld [vmem:[%s6912] sm:$0xff]
    %v6914 = vld [vmem:[%s6912 + $0x8] sm:$0xff]
    %v6916 = vsel %vm3345, %v2702, 0
    %v6919 = vsel %vm3345, %v2707, 0
    %v6922 = vsel %vm3345, %v2712, 0
    %v6925 = vsel %vm3345, %v2717, 0
    %v6928 = vsel %vm3345, %v2722, 0
    %v6931 = vsel %vm3345, %v2727, 0
    %v6934 = vsel %vm3345, %v2732, 0
    %v6937 = vsel %vm3345, %v2737, 0
    %v6940 = vsel %vm3345, %v2742, 0
    %v6943 = vsel %vm3345, %v2747, 0
    %v6946 = vsel %vm3345, %v2752, 0
    %v6949 = vsel %vm3345, %v2757, 0
    %v6952 = vsel %vm3345, %v2762, 0
    %v6955 = vsel %vm3345, %v2767, 0
    %v6958 = vsel %vm3345, %v2772, 0
    %v6961 = vsel %vm3345, %v2777, 0
    %6963 = vmatprep.subr.mxu0 0.0
    %6964 = vmatpush1.msra.mxu0 %v6913
    %6965 = vmatprep.subr.mxu0 0.0
    %6966 = vmatpush1.msra.mxu0 %v6914
    %6967 = vmatprep.subr.mxu0 0.0
    %6968 = vmatpush1.msra.mxu0 0.0
    %6969 = vmatprep.subr.mxu0 0.0
    %6970 = vmatpush1.msra.mxu0 0.0
    %6971 = vmatprep.subr.mxu0 0.0
    %6972 = vmatpush1.msra.mxu0 0.0
    %6973 = vmatprep.subr.mxu0 0.0
    %6974 = vmatpush1.msra.mxu0 0.0
    %6975 = vmatprep.subr.mxu0 0.0
    %6976 = vmatpush1.msra.mxu0 0.0
    %6977 = vmatprep.subr.mxu0 0.0
    %6978 = vmatpush1.msra.mxu0 0.0
    %6979 = vmatprep.subr.mxu0 0.0
    %6980 = vmatpush1.msra.mxu0 0.0
    %6981 = vmatprep.subr.mxu0 0.0
    %6982 = vmatpush1.msra.mxu0 0.0
    %6983 = vmatprep.subr.mxu0 0.0
    %6984 = vmatpush1.msra.mxu0 0.0
    %6985 = vmatprep.subr.mxu0 0.0
    %6986 = vmatpush1.msra.mxu0 0.0
    %6987 = vmatprep.subr.mxu0 0.0
    %6988 = vmatpush1.msra.mxu0 0.0
    %6989 = vmatprep.subr.mxu0 0.0
    %6990 = vmatpush1.msra.mxu0 0.0
    %6991 = vmatprep.subr.mxu0 0.0
    %6992 = vmatpush1.msra.mxu0 0.0
    %6993 = vmatprep.subr.mxu0 0.0
    %6994 = vmatpush1.msra.mxu0 0.0
    %6995 = vmatprep.subr.mxu0 0.0
    %6996 = vmatpush1.msra.mxu0 0.0
    %6997 = vmatprep.subr.mxu0 0.0
    %6998 = vmatpush1.msra.mxu0 0.0
    %6999 = vmatprep.subr.mxu0 0.0
    %7000 = vmatpush1.msra.mxu0 0.0
    %7001 = vmatprep.subr.mxu0 0.0
    %7002 = vmatpush1.msra.mxu0 0.0
    %7003 = vmatprep.subr.mxu0 0.0
    %7004 = vmatpush1.msra.mxu0 0.0
    %7005 = vmatprep.subr.mxu0 0.0
    %7006 = vmatpush1.msra.mxu0 0.0
    %7007 = vmatprep.subr.mxu0 0.0
    %7008 = vmatpush1.msra.mxu0 0.0
    %7009 = vmatprep.subr.mxu0 0.0
    %7010 = vmatpush1.msra.mxu0 0.0
    %7011 = vmatprep.subr.mxu0 0.0
    %7012 = vmatpush1.msra.mxu0 0.0
    %7013 = vmatprep.subr.mxu0 0.0
    %7014 = vmatpush1.msra.mxu0 0.0
    %7015 = vmatprep.subr.mxu0 0.0
    %7016 = vmatpush1.msra.mxu0 0.0
    %7017 = vmatprep.subr.mxu0 0.0
    %7018 = vmatpush1.msra.mxu0 0.0
    %7019 = vmatprep.subr.mxu0 0.0
    %7020 = vmatpush1.msra.mxu0 0.0
    %7021 = vmatprep.subr.mxu0 0.0
    %7022 = vmatpush1.msra.mxu0 0.0
    %7023 = vmatprep.subr.mxu0 0.0
    %7024 = vmatpush1.msra.mxu0 0.0
    %7025 = vmatprep.subr.mxu0 0.0
    %7026 = vmatpush1.msra.mxu0 0.0
    %7027 = vmatprep.mubr.f32.mxu0 0.0
    %7028 = vmatmul.mubr.f32.gmra.mrb[0].mxu0 %v6916
    %v7029 = vpop.f32.mrb[0].mxu0
    %v7030 = vadd.f32 0.0, %v7029
    %v7031 = vpop.f32.mrb[0].mxu0
    %7032 = vmatprep.mubr.f32.mxu0 0.0
    %7033 = vmatmul.mubr.f32.gmra.mrb[0].mxu0 %v6919
    %v7034 = vpop.f32.mrb[0].mxu0
    %v7035 = vadd.f32 0.0, %v7034
    %v7036 = vpop.f32.mrb[0].mxu0
    %7037 = vmatprep.mubr.f32.mxu0 0.0
    %7038 = vmatmul.mubr.f32.gmra.mrb[0].mxu0 %v6922
    %v7039 = vpop.f32.mrb[0].mxu0
    %v7040 = vadd.f32 0.0, %v7039
    %v7041 = vpop.f32.mrb[0].mxu0
    %7042 = vmatprep.mubr.f32.mxu0 0.0
    %7043 = vmatmul.mubr.f32.gmra.mrb[0].mxu0 %v6925
    %v7044 = vpop.f32.mrb[0].mxu0
    %v7045 = vadd.f32 0.0, %v7044
    %v7046 = vpop.f32.mrb[0].mxu0
    %7047 = vmatprep.mubr.f32.mxu0 0.0
    %7048 = vmatmul.mubr.f32.gmra.mrb[0].mxu0 %v6928
    %v7049 = vpop.f32.mrb[0].mxu0
    %v7050 = vadd.f32 0.0, %v7049
    %v7051 = vpop.f32.mrb[0].mxu0
    %7052 = vmatprep.mubr.f32.mxu0 0.0
    %7053 = vmatmul.mubr.f32.gmra.mrb[0].mxu0 %v6931
    %v7054 = vpop.f32.mrb[0].mxu0
    %v7055 = vadd.f32 0.0, %v7054
    %v7056 = vpop.f32.mrb[0].mxu0
    %7057 = vmatprep.mubr.f32.mxu0 0.0
    %7058 = vmatmul.mubr.f32.gmra.mrb[0].mxu0 %v6934
    %v7059 = vpop.f32.mrb[0].mxu0
    %v7060 = vadd.f32 0.0, %v7059
    %v7061 = vpop.f32.mrb[0].mxu0
    %7062 = vmatprep.mubr.f32.mxu0 0.0
    %7063 = vmatmul.mubr.f32.gmra.mrb[0].mxu0 %v6937
    %v7064 = vpop.f32.mrb[0].mxu0
    %v7065 = vadd.f32 0.0, %v7064
    %v7066 = vpop.f32.mrb[0].mxu0
    %7067 = vmatprep.mubr.f32.mxu0 0.0
    %7068 = vmatmul.mubr.f32.gmra.mrb[0].mxu0 %v6940
    %v7069 = vpop.f32.mrb[0].mxu0
    %v7070 = vadd.f32 0.0, %v7069
    %v7071 = vpop.f32.mrb[0].mxu0
    %7072 = vmatprep.mubr.f32.mxu0 0.0
    %7073 = vmatmul.mubr.f32.gmra.mrb[0].mxu0 %v6943
    %v7074 = vpop.f32.mrb[0].mxu0
    %v7075 = vadd.f32 0.0, %v7074
    %v7076 = vpop.f32.mrb[0].mxu0
    %7077 = vmatprep.mubr.f32.mxu0 0.0
    %7078 = vmatmul.mubr.f32.gmra.mrb[0].mxu0 %v6946
    %v7079 = vpop.f32.mrb[0].mxu0
    %v7080 = vadd.f32 0.0, %v7079
    %v7081 = vpop.f32.mrb[0].mxu0
    %7082 = vmatprep.mubr.f32.mxu0 0.0
    %7083 = vmatmul.mubr.f32.gmra.mrb[0].mxu0 %v6949
    %v7084 = vpop.f32.mrb[0].mxu0
    %v7085 = vadd.f32 0.0, %v7084
    %v7086 = vpop.f32.mrb[0].mxu0
    %7087 = vmatprep.mubr.f32.mxu0 0.0
    %7088 = vmatmul.mubr.f32.gmra.mrb[0].mxu0 %v6952
    %v7089 = vpop.f32.mrb[0].mxu0
    %v7090 = vadd.f32 0.0, %v7089
    %v7091 = vpop.f32.mrb[0].mxu0
    %7092 = vmatprep.mubr.f32.mxu0 0.0
    %7093 = vmatmul.mubr.f32.gmra.mrb[0].mxu0 %v6955
    %v7094 = vpop.f32.mrb[0].mxu0
    %v7095 = vadd.f32 0.0, %v7094
    %v7096 = vpop.f32.mrb[0].mxu0
    %7097 = vmatprep.mubr.f32.mxu0 0.0
    %7098 = vmatmul.mubr.f32.gmra.mrb[0].mxu0 %v6958
    %v7099 = vpop.f32.mrb[0].mxu0
    %v7100 = vadd.f32 0.0, %v7099
    %v7101 = vpop.f32.mrb[0].mxu0
    %7102 = vmatprep.mubr.f32.mxu0 0.0
    %7103 = vmatmul.mubr.f32.gmra.mrb[0].mxu0 %v6961
    %v7104 = vpop.f32.mrb[0].mxu0
    %v7105 = vadd.f32 0.0, %v7104
    %v7106 = vpop.f32.mrb[0].mxu0
    %7107 = vdwg.mxu0
    %v7108 = vadd.f32 %v6896, %v7030
    %v7109 = vadd.f32 %v6897, %v7035
    %v7110 = vadd.f32 %v6898, %v7040
    %v7111 = vadd.f32 %v6899, %v7045
    %v7112 = vadd.f32 %v6900, %v7050
    %v7113 = vadd.f32 %v6901, %v7055
    %v7114 = vadd.f32 %v6902, %v7060
    %v7115 = vadd.f32 %v6903, %v7065
    %v7116 = vadd.f32 %v6904, %v7070
    %v7117 = vadd.f32 %v6905, %v7075
    %v7118 = vadd.f32 %v6906, %v7080
    %v7119 = vadd.f32 %v6907, %v7085
    %v7120 = vadd.f32 %v6908, %v7090
    %v7121 = vadd.f32 %v6909, %v7095
    %v7122 = vadd.f32 %v6910, %v7100
    %v7123 = vadd.f32 %v6911, %v7105
    %s7124 = scalar_lea.vmem [#allocation7], 288
    %v7125 = vld [vmem:[%s7124] sm:$0xff]
    %v7126 = vld [vmem:[%s7124 + $0x8] sm:$0xff]
    %v7128 = vsel %vm3345, %v2782, 0
    %v7131 = vsel %vm3345, %v2787, 0
    %v7134 = vsel %vm3345, %v2792, 0
    %v7137 = vsel %vm3345, %v2797, 0
    %v7140 = vsel %vm3345, %v2802, 0
    %v7143 = vsel %vm3345, %v2807, 0
    %v7146 = vsel %vm3345, %v2812, 0
    %v7149 = vsel %vm3345, %v2817, 0
    %v7152 = vsel %vm3345, %v2822, 0
    %v7155 = vsel %vm3345, %v2827, 0
    %v7158 = vsel %vm3345, %v2832, 0
    %v7161 = vsel %vm3345, %v2837, 0
    %v7164 = vsel %vm3345, %v2842, 0
    %v7167 = vsel %vm3345, %v2847, 0
    %v7170 = vsel %vm3345, %v2852, 0
    %v7173 = vsel %vm3345, %v2857, 0
    %7175 = vmatprep.subr.mxu0 0.0
    %7176 = vmatpush1.msra.mxu0 %v7125
    %7177 = vmatprep.subr.mxu0 0.0
    %7178 = vmatpush1.msra.mxu0 %v7126
    %7179 = vmatprep.subr.mxu0 0.0
    %7180 = vmatpush1.msra.mxu0 0.0
    %7181 = vmatprep.subr.mxu0 0.0
    %7182 = vmatpush1.msra.mxu0 0.0
    %7183 = vmatprep.subr.mxu0 0.0
    %7184 = vmatpush1.msra.mxu0 0.0
    %7185 = vmatprep.subr.mxu0 0.0
    %7186 = vmatpush1.msra.mxu0 0.0
    %7187 = vmatprep.subr.mxu0 0.0
    %7188 = vmatpush1.msra.mxu0 0.0
    %7189 = vmatprep.subr.mxu0 0.0
    %7190 = vmatpush1.msra.mxu0 0.0
    %7191 = vmatprep.subr.mxu0 0.0
    %7192 = vmatpush1.msra.mxu0 0.0
    %7193 = vmatprep.subr.mxu0 0.0
    %7194 = vmatpush1.msra.mxu0 0.0
    %7195 = vmatprep.subr.mxu0 0.0
    %7196 = vmatpush1.msra.mxu0 0.0
    %7197 = vmatprep.subr.mxu0 0.0
    %7198 = vmatpush1.msra.mxu0 0.0
    %7199 = vmatprep.subr.mxu0 0.0
    %7200 = vmatpush1.msra.mxu0 0.0
    %7201 = vmatprep.subr.mxu0 0.0
    %7202 = vmatpush1.msra.mxu0 0.0
    %7203 = vmatprep.subr.mxu0 0.0
    %7204 = vmatpush1.msra.mxu0 0.0
    %7205 = vmatprep.subr.mxu0 0.0
    %7206 = vmatpush1.msra.mxu0 0.0
    %7207 = vmatprep.subr.mxu0 0.0
    %7208 = vmatpush1.msra.mxu0 0.0
    %7209 = vmatprep.subr.mxu0 0.0
    %7210 = vmatpush1.msra.mxu0 0.0
    %7211 = vmatprep.subr.mxu0 0.0
    %7212 = vmatpush1.msra.mxu0 0.0
    %7213 = vmatprep.subr.mxu0 0.0
    %7214 = vmatpush1.msra.mxu0 0.0
    %7215 = vmatprep.subr.mxu0 0.0
    %7216 = vmatpush1.msra.mxu0 0.0
    %7217 = vmatprep.subr.mxu0 0.0
    %7218 = vmatpush1.msra.mxu0 0.0
    %7219 = vmatprep.subr.mxu0 0.0
    %7220 = vmatpush1.msra.mxu0 0.0
    %7221 = vmatprep.subr.mxu0 0.0
    %7222 = vmatpush1.msra.mxu0 0.0
    %7223 = vmatprep.subr.mxu0 0.0
    %7224 = vmatpush1.msra.mxu0 0.0
    %7225 = vmatprep.subr.mxu0 0.0
    %7226 = vmatpush1.msra.mxu0 0.0
    %7227 = vmatprep.subr.mxu0 0.0
    %7228 = vmatpush1.msra.mxu0 0.0
    %7229 = vmatprep.subr.mxu0 0.0
    %7230 = vmatpush1.msra.mxu0 0.0
    %7231 = vmatprep.subr.mxu0 0.0
    %7232 = vmatpush1.msra.mxu0 0.0
    %7233 = vmatprep.subr.mxu0 0.0
    %7234 = vmatpush1.msra.mxu0 0.0
    %7235 = vmatprep.subr.mxu0 0.0
    %7236 = vmatpush1.msra.mxu0 0.0
    %7237 = vmatprep.subr.mxu0 0.0
    %7238 = vmatpush1.msra.mxu0 0.0
    %7239 = vmatprep.mubr.f32.mxu0 0.0
    %7240 = vmatmul.mubr.f32.gmra.mrb[0].mxu0 %v7128
    %v7241 = vpop.f32.mrb[0].mxu0
    %v7242 = vadd.f32 0.0, %v7241
    %v7243 = vpop.f32.mrb[0].mxu0
    %7244 = vmatprep.mubr.f32.mxu0 0.0
    %7245 = vmatmul.mubr.f32.gmra.mrb[0].mxu0 %v7131
    %v7246 = vpop.f32.mrb[0].mxu0
    %v7247 = vadd.f32 0.0, %v7246
    %v7248 = vpop.f32.mrb[0].mxu0
    %7249 = vmatprep.mubr.f32.mxu0 0.0
    %7250 = vmatmul.mubr.f32.gmra.mrb[0].mxu0 %v7134
    %v7251 = vpop.f32.mrb[0].mxu0
    %v7252 = vadd.f32 0.0, %v7251
    %v7253 = vpop.f32.mrb[0].mxu0
    %7254 = vmatprep.mubr.f32.mxu0 0.0
    %7255 = vmatmul.mubr.f32.gmra.mrb[0].mxu0 %v7137
    %v7256 = vpop.f32.mrb[0].mxu0
    %v7257 = vadd.f32 0.0, %v7256
    %v7258 = vpop.f32.mrb[0].mxu0
    %7259 = vmatprep.mubr.f32.mxu0 0.0
    %7260 = vmatmul.mubr.f32.gmra.mrb[0].mxu0 %v7140
    %v7261 = vpop.f32.mrb[0].mxu0
    %v7262 = vadd.f32 0.0, %v7261
    %v7263 = vpop.f32.mrb[0].mxu0
    %7264 = vmatprep.mubr.f32.mxu0 0.0
    %7265 = vmatmul.mubr.f32.gmra.mrb[0].mxu0 %v7143
    %v7266 = vpop.f32.mrb[0].mxu0
    %v7267 = vadd.f32 0.0, %v7266
    %v7268 = vpop.f32.mrb[0].mxu0
    %7269 = vmatprep.mubr.f32.mxu0 0.0
    %7270 = vmatmul.mubr.f32.gmra.mrb[0].mxu0 %v7146
    %v7271 = vpop.f32.mrb[0].mxu0
    %v7272 = vadd.f32 0.0, %v7271
    %v7273 = vpop.f32.mrb[0].mxu0
    %7274 = vmatprep.mubr.f32.mxu0 0.0
    %7275 = vmatmul.mubr.f32.gmra.mrb[0].mxu0 %v7149
    %v7276 = vpop.f32.mrb[0].mxu0
    %v7277 = vadd.f32 0.0, %v7276
    %v7278 = vpop.f32.mrb[0].mxu0
    %7279 = vmatprep.mubr.f32.mxu0 0.0
    %7280 = vmatmul.mubr.f32.gmra.mrb[0].mxu0 %v7152
    %v7281 = vpop.f32.mrb[0].mxu0
    %v7282 = vadd.f32 0.0, %v7281
    %v7283 = vpop.f32.mrb[0].mxu0
    %7284 = vmatprep.mubr.f32.mxu0 0.0
    %7285 = vmatmul.mubr.f32.gmra.mrb[0].mxu0 %v7155
    %v7286 = vpop.f32.mrb[0].mxu0
    %v7287 = vadd.f32 0.0, %v7286
    %v7288 = vpop.f32.mrb[0].mxu0
    %7289 = vmatprep.mubr.f32.mxu0 0.0
    %7290 = vmatmul.mubr.f32.gmra.mrb[0].mxu0 %v7158
    %v7291 = vpop.f32.mrb[0].mxu0
    %v7292 = vadd.f32 0.0, %v7291
    %v7293 = vpop.f32.mrb[0].mxu0
    %7294 = vmatprep.mubr.f32.mxu0 0.0
    %7295 = vmatmul.mubr.f32.gmra.mrb[0].mxu0 %v7161
    %v7296 = vpop.f32.mrb[0].mxu0
    %v7297 = vadd.f32 0.0, %v7296
    %v7298 = vpop.f32.mrb[0].mxu0
    %7299 = vmatprep.mubr.f32.mxu0 0.0
    %7300 = vmatmul.mubr.f32.gmra.mrb[0].mxu0 %v7164
    %v7301 = vpop.f32.mrb[0].mxu0
    %v7302 = vadd.f32 0.0, %v7301
    %v7303 = vpop.f32.mrb[0].mxu0
    %7304 = vmatprep.mubr.f32.mxu0 0.0
    %7305 = vmatmul.mubr.f32.gmra.mrb[0].mxu0 %v7167
    %v7306 = vpop.f32.mrb[0].mxu0
    %v7307 = vadd.f32 0.0, %v7306
    %v7308 = vpop.f32.mrb[0].mxu0
    %7309 = vmatprep.mubr.f32.mxu0 0.0
    %7310 = vmatmul.mubr.f32.gmra.mrb[0].mxu0 %v7170
    %v7311 = vpop.f32.mrb[0].mxu0
    %v7312 = vadd.f32 0.0, %v7311
    %v7313 = vpop.f32.mrb[0].mxu0
    %7314 = vmatprep.mubr.f32.mxu0 0.0
    %7315 = vmatmul.mubr.f32.gmra.mrb[0].mxu0 %v7173
    %v7316 = vpop.f32.mrb[0].mxu0
    %v7317 = vadd.f32 0.0, %v7316
    %v7318 = vpop.f32.mrb[0].mxu0
    %7319 = vdwg.mxu0
    %v7320 = vadd.f32 %v7108, %v7242
    %v7321 = vadd.f32 %v7109, %v7247
    %v7322 = vadd.f32 %v7110, %v7252
    %v7323 = vadd.f32 %v7111, %v7257
    %v7324 = vadd.f32 %v7112, %v7262
    %v7325 = vadd.f32 %v7113, %v7267
    %v7326 = vadd.f32 %v7114, %v7272
    %v7327 = vadd.f32 %v7115, %v7277
    %v7328 = vadd.f32 %v7116, %v7282
    %v7329 = vadd.f32 %v7117, %v7287
    %v7330 = vadd.f32 %v7118, %v7292
    %v7331 = vadd.f32 %v7119, %v7297
    %v7332 = vadd.f32 %v7120, %v7302
    %v7333 = vadd.f32 %v7121, %v7307
    %v7334 = vadd.f32 %v7122, %v7312
    %v7335 = vadd.f32 %v7123, %v7317
    %s7336 = scalar_lea.vmem [#allocation7], 304
    %v7337 = vld [vmem:[%s7336] sm:$0xff]
    %v7338 = vld [vmem:[%s7336 + $0x8] sm:$0xff]
    %v7340 = vsel %vm3345, %v2862, 0
    %v7343 = vsel %vm3345, %v2867, 0
    %v7346 = vsel %vm3345, %v2872, 0
    %v7349 = vsel %vm3345, %v2877, 0
    %v7352 = vsel %vm3345, %v2882, 0
    %v7355 = vsel %vm3345, %v2887, 0
    %v7358 = vsel %vm3345, %v2892, 0
    %v7361 = vsel %vm3345, %v2897, 0
    %v7364 = vsel %vm3345, %v2902, 0
    %v7367 = vsel %vm3345, %v2907, 0
    %v7370 = vsel %vm3345, %v2912, 0
    %v7373 = vsel %vm3345, %v2917, 0
    %v7376 = vsel %vm3345, %v2922, 0
    %v7379 = vsel %vm3345, %v2927, 0
    %v7382 = vsel %vm3345, %v2932, 0
    %v7385 = vsel %vm3345, %v2937, 0
    %7387 = vmatprep.subr.mxu0 0.0
    %7388 = vmatpush1.msra.mxu0 %v7337
    %7389 = vmatprep.subr.mxu0 0.0
    %7390 = vmatpush1.msra.mxu0 %v7338
    %7391 = vmatprep.subr.mxu0 0.0
    %7392 = vmatpush1.msra.mxu0 0.0
    %7393 = vmatprep.subr.mxu0 0.0
    %7394 = vmatpush1.msra.mxu0 0.0
    %7395 = vmatprep.subr.mxu0 0.0
    %7396 = vmatpush1.msra.mxu0 0.0
    %7397 = vmatprep.subr.mxu0 0.0
    %7398 = vmatpush1.msra.mxu0 0.0
    %7399 = vmatprep.subr.mxu0 0.0
    %7400 = vmatpush1.msra.mxu0 0.0
    %7401 = vmatprep.subr.mxu0 0.0
    %7402 = vmatpush1.msra.mxu0 0.0
    %7403 = vmatprep.subr.mxu0 0.0
    %7404 = vmatpush1.msra.mxu0 0.0
    %7405 = vmatprep.subr.mxu0 0.0
    %7406 = vmatpush1.msra.mxu0 0.0
    %7407 = vmatprep.subr.mxu0 0.0
    %7408 = vmatpush1.msra.mxu0 0.0
    %7409 = vmatprep.subr.mxu0 0.0
    %7410 = vmatpush1.msra.mxu0 0.0
    %7411 = vmatprep.subr.mxu0 0.0
    %7412 = vmatpush1.msra.mxu0 0.0
    %7413 = vmatprep.subr.mxu0 0.0
    %7414 = vmatpush1.msra.mxu0 0.0
    %7415 = vmatprep.subr.mxu0 0.0
    %7416 = vmatpush1.msra.mxu0 0.0
    %7417 = vmatprep.subr.mxu0 0.0
    %7418 = vmatpush1.msra.mxu0 0.0
    %7419 = vmatprep.subr.mxu0 0.0
    %7420 = vmatpush1.msra.mxu0 0.0
    %7421 = vmatprep.subr.mxu0 0.0
    %7422 = vmatpush1.msra.mxu0 0.0
    %7423 = vmatprep.subr.mxu0 0.0
    %7424 = vmatpush1.msra.mxu0 0.0
    %7425 = vmatprep.subr.mxu0 0.0
    %7426 = vmatpush1.msra.mxu0 0.0
    %7427 = vmatprep.subr.mxu0 0.0
    %7428 = vmatpush1.msra.mxu0 0.0
    %7429 = vmatprep.subr.mxu0 0.0
    %7430 = vmatpush1.msra.mxu0 0.0
    %7431 = vmatprep.subr.mxu0 0.0
    %7432 = vmatpush1.msra.mxu0 0.0
    %7433 = vmatprep.subr.mxu0 0.0
    %7434 = vmatpush1.msra.mxu0 0.0
    %7435 = vmatprep.subr.mxu0 0.0
    %7436 = vmatpush1.msra.mxu0 0.0
    %7437 = vmatprep.subr.mxu0 0.0
    %7438 = vmatpush1.msra.mxu0 0.0
    %7439 = vmatprep.subr.mxu0 0.0
    %7440 = vmatpush1.msra.mxu0 0.0
    %7441 = vmatprep.subr.mxu0 0.0
    %7442 = vmatpush1.msra.mxu0 0.0
    %7443 = vmatprep.subr.mxu0 0.0
    %7444 = vmatpush1.msra.mxu0 0.0
    %7445 = vmatprep.subr.mxu0 0.0
    %7446 = vmatpush1.msra.mxu0 0.0
    %7447 = vmatprep.subr.mxu0 0.0
    %7448 = vmatpush1.msra.mxu0 0.0
    %7449 = vmatprep.subr.mxu0 0.0
    %7450 = vmatpush1.msra.mxu0 0.0
    %7451 = vmatprep.mubr.f32.mxu0 0.0
    %7452 = vmatmul.mubr.f32.gmra.mrb[0].mxu0 %v7340
    %v7453 = vpop.f32.mrb[0].mxu0
    %v7454 = vadd.f32 0.0, %v7453
    %v7455 = vpop.f32.mrb[0].mxu0
    %7456 = vmatprep.mubr.f32.mxu0 0.0
    %7457 = vmatmul.mubr.f32.gmra.mrb[0].mxu0 %v7343
    %v7458 = vpop.f32.mrb[0].mxu0
    %v7459 = vadd.f32 0.0, %v7458
    %v7460 = vpop.f32.mrb[0].mxu0
    %7461 = vmatprep.mubr.f32.mxu0 0.0
    %7462 = vmatmul.mubr.f32.gmra.mrb[0].mxu0 %v7346
    %v7463 = vpop.f32.mrb[0].mxu0
    %v7464 = vadd.f32 0.0, %v7463
    %v7465 = vpop.f32.mrb[0].mxu0
    %7466 = vmatprep.mubr.f32.mxu0 0.0
    %7467 = vmatmul.mubr.f32.gmra.mrb[0].mxu0 %v7349
    %v7468 = vpop.f32.mrb[0].mxu0
    %v7469 = vadd.f32 0.0, %v7468
    %v7470 = vpop.f32.mrb[0].mxu0
    %7471 = vmatprep.mubr.f32.mxu0 0.0
    %7472 = vmatmul.mubr.f32.gmra.mrb[0].mxu0 %v7352
    %v7473 = vpop.f32.mrb[0].mxu0
    %v7474 = vadd.f32 0.0, %v7473
    %v7475 = vpop.f32.mrb[0].mxu0
    %7476 = vmatprep.mubr.f32.mxu0 0.0
    %7477 = vmatmul.mubr.f32.gmra.mrb[0].mxu0 %v7355
    %v7478 = vpop.f32.mrb[0].mxu0
    %v7479 = vadd.f32 0.0, %v7478
    %v7480 = vpop.f32.mrb[0].mxu0
    %7481 = vmatprep.mubr.f32.mxu0 0.0
    %7482 = vmatmul.mubr.f32.gmra.mrb[0].mxu0 %v7358
    %v7483 = vpop.f32.mrb[0].mxu0
    %v7484 = vadd.f32 0.0, %v7483
    %v7485 = vpop.f32.mrb[0].mxu0
    %7486 = vmatprep.mubr.f32.mxu0 0.0
    %7487 = vmatmul.mubr.f32.gmra.mrb[0].mxu0 %v7361
    %v7488 = vpop.f32.mrb[0].mxu0
    %v7489 = vadd.f32 0.0, %v7488
    %v7490 = vpop.f32.mrb[0].mxu0
    %7491 = vmatprep.mubr.f32.mxu0 0.0
    %7492 = vmatmul.mubr.f32.gmra.mrb[0].mxu0 %v7364
    %v7493 = vpop.f32.mrb[0].mxu0
    %v7494 = vadd.f32 0.0, %v7493
    %v7495 = vpop.f32.mrb[0].mxu0
    %7496 = vmatprep.mubr.f32.mxu0 0.0
    %7497 = vmatmul.mubr.f32.gmra.mrb[0].mxu0 %v7367
    %v7498 = vpop.f32.mrb[0].mxu0
    %v7499 = vadd.f32 0.0, %v7498
    %v7500 = vpop.f32.mrb[0].mxu0
    %7501 = vmatprep.mubr.f32.mxu0 0.0
    %7502 = vmatmul.mubr.f32.gmra.mrb[0].mxu0 %v7370
    %v7503 = vpop.f32.mrb[0].mxu0
    %v7504 = vadd.f32 0.0, %v7503
    %v7505 = vpop.f32.mrb[0].mxu0
    %7506 = vmatprep.mubr.f32.mxu0 0.0
    %7507 = vmatmul.mubr.f32.gmra.mrb[0].mxu0 %v7373
    %v7508 = vpop.f32.mrb[0].mxu0
    %v7509 = vadd.f32 0.0, %v7508
    %v7510 = vpop.f32.mrb[0].mxu0
    %7511 = vmatprep.mubr.f32.mxu0 0.0
    %7512 = vmatmul.mubr.f32.gmra.mrb[0].mxu0 %v7376
    %v7513 = vpop.f32.mrb[0].mxu0
    %v7514 = vadd.f32 0.0, %v7513
    %v7515 = vpop.f32.mrb[0].mxu0
    %7516 = vmatprep.mubr.f32.mxu0 0.0
    %7517 = vmatmul.mubr.f32.gmra.mrb[0].mxu0 %v7379
    %v7518 = vpop.f32.mrb[0].mxu0
    %v7519 = vadd.f32 0.0, %v7518
    %v7520 = vpop.f32.mrb[0].mxu0
    %7521 = vmatprep.mubr.f32.mxu0 0.0
    %7522 = vmatmul.mubr.f32.gmra.mrb[0].mxu0 %v7382
    %v7523 = vpop.f32.mrb[0].mxu0
    %v7524 = vadd.f32 0.0, %v7523
    %v7525 = vpop.f32.mrb[0].mxu0
    %7526 = vmatprep.mubr.f32.mxu0 0.0
    %7527 = vmatmul.mubr.f32.gmra.mrb[0].mxu0 %v7385
    %v7528 = vpop.f32.mrb[0].mxu0
    %v7529 = vadd.f32 0.0, %v7528
    %v7530 = vpop.f32.mrb[0].mxu0
    %7531 = vdwg.mxu0
    %v7532 = vadd.f32 %v7320, %v7454
    %v7533 = vadd.f32 %v7321, %v7459
    %v7534 = vadd.f32 %v7322, %v7464
    %v7535 = vadd.f32 %v7323, %v7469
    %v7536 = vadd.f32 %v7324, %v7474
    %v7537 = vadd.f32 %v7325, %v7479
    %v7538 = vadd.f32 %v7326, %v7484
    %v7539 = vadd.f32 %v7327, %v7489
    %v7540 = vadd.f32 %v7328, %v7494
    %v7541 = vadd.f32 %v7329, %v7499
    %v7542 = vadd.f32 %v7330, %v7504
    %v7543 = vadd.f32 %v7331, %v7509
    %v7544 = vadd.f32 %v7332, %v7514
    %v7545 = vadd.f32 %v7333, %v7519
    %v7546 = vadd.f32 %v7334, %v7524
    %v7547 = vadd.f32 %v7335, %v7529
    %s7548 = scalar_lea.vmem [#allocation7], 320
    %v7549 = vld [vmem:[%s7548] sm:$0xff]
    %v7550 = vld [vmem:[%s7548 + $0x8] sm:$0xff]
    %v7552 = vsel %vm3345, %v2942, 0
    %v7555 = vsel %vm3345, %v2947, 0
    %v7558 = vsel %vm3345, %v2952, 0
    %v7561 = vsel %vm3345, %v2957, 0
    %v7564 = vsel %vm3345, %v2962, 0
    %v7567 = vsel %vm3345, %v2967, 0
    %v7570 = vsel %vm3345, %v2972, 0
    %v7573 = vsel %vm3345, %v2977, 0
    %v7576 = vsel %vm3345, %v2982, 0
    %v7579 = vsel %vm3345, %v2987, 0
    %v7582 = vsel %vm3345, %v2992, 0
    %v7585 = vsel %vm3345, %v2997, 0
    %v7588 = vsel %vm3345, %v3002, 0
    %v7591 = vsel %vm3345, %v3007, 0
    %v7594 = vsel %vm3345, %v3012, 0
    %v7597 = vsel %vm3345, %v3017, 0
    %7599 = vmatprep.subr.mxu0 0.0
    %7600 = vmatpush1.msra.mxu0 %v7549
    %7601 = vmatprep.subr.mxu0 0.0
    %7602 = vmatpush1.msra.mxu0 %v7550
    %7603 = vmatprep.subr.mxu0 0.0
    %7604 = vmatpush1.msra.mxu0 0.0
    %7605 = vmatprep.subr.mxu0 0.0
    %7606 = vmatpush1.msra.mxu0 0.0
    %7607 = vmatprep.subr.mxu0 0.0
    %7608 = vmatpush1.msra.mxu0 0.0
    %7609 = vmatprep.subr.mxu0 0.0
    %7610 = vmatpush1.msra.mxu0 0.0
    %7611 = vmatprep.subr.mxu0 0.0
    %7612 = vmatpush1.msra.mxu0 0.0
    %7613 = vmatprep.subr.mxu0 0.0
    %7614 = vmatpush1.msra.mxu0 0.0
    %7615 = vmatprep.subr.mxu0 0.0
    %7616 = vmatpush1.msra.mxu0 0.0
    %7617 = vmatprep.subr.mxu0 0.0
    %7618 = vmatpush1.msra.mxu0 0.0
    %7619 = vmatprep.subr.mxu0 0.0
    %7620 = vmatpush1.msra.mxu0 0.0
    %7621 = vmatprep.subr.mxu0 0.0
    %7622 = vmatpush1.msra.mxu0 0.0
    %7623 = vmatprep.subr.mxu0 0.0
    %7624 = vmatpush1.msra.mxu0 0.0
    %7625 = vmatprep.subr.mxu0 0.0
    %7626 = vmatpush1.msra.mxu0 0.0
    %7627 = vmatprep.subr.mxu0 0.0
    %7628 = vmatpush1.msra.mxu0 0.0
    %7629 = vmatprep.subr.mxu0 0.0
    %7630 = vmatpush1.msra.mxu0 0.0
    %7631 = vmatprep.subr.mxu0 0.0
    %7632 = vmatpush1.msra.mxu0 0.0
    %7633 = vmatprep.subr.mxu0 0.0
    %7634 = vmatpush1.msra.mxu0 0.0
    %7635 = vmatprep.subr.mxu0 0.0
    %7636 = vmatpush1.msra.mxu0 0.0
    %7637 = vmatprep.subr.mxu0 0.0
    %7638 = vmatpush1.msra.mxu0 0.0
    %7639 = vmatprep.subr.mxu0 0.0
    %7640 = vmatpush1.msra.mxu0 0.0
    %7641 = vmatprep.subr.mxu0 0.0
    %7642 = vmatpush1.msra.mxu0 0.0
    %7643 = vmatprep.subr.mxu0 0.0
    %7644 = vmatpush1.msra.mxu0 0.0
    %7645 = vmatprep.subr.mxu0 0.0
    %7646 = vmatpush1.msra.mxu0 0.0
    %7647 = vmatprep.subr.mxu0 0.0
    %7648 = vmatpush1.msra.mxu0 0.0
    %7649 = vmatprep.subr.mxu0 0.0
    %7650 = vmatpush1.msra.mxu0 0.0
    %7651 = vmatprep.subr.mxu0 0.0
    %7652 = vmatpush1.msra.mxu0 0.0
    %7653 = vmatprep.subr.mxu0 0.0
    %7654 = vmatpush1.msra.mxu0 0.0
    %7655 = vmatprep.subr.mxu0 0.0
    %7656 = vmatpush1.msra.mxu0 0.0
    %7657 = vmatprep.subr.mxu0 0.0
    %7658 = vmatpush1.msra.mxu0 0.0
    %7659 = vmatprep.subr.mxu0 0.0
    %7660 = vmatpush1.msra.mxu0 0.0
    %7661 = vmatprep.subr.mxu0 0.0
    %7662 = vmatpush1.msra.mxu0 0.0
    %7663 = vmatprep.mubr.f32.mxu0 0.0
    %7664 = vmatmul.mubr.f32.gmra.mrb[0].mxu0 %v7552
    %v7665 = vpop.f32.mrb[0].mxu0
    %v7666 = vadd.f32 0.0, %v7665
    %v7667 = vpop.f32.mrb[0].mxu0
    %7668 = vmatprep.mubr.f32.mxu0 0.0
    %7669 = vmatmul.mubr.f32.gmra.mrb[0].mxu0 %v7555
    %v7670 = vpop.f32.mrb[0].mxu0
    %v7671 = vadd.f32 0.0, %v7670
    %v7672 = vpop.f32.mrb[0].mxu0
    %7673 = vmatprep.mubr.f32.mxu0 0.0
    %7674 = vmatmul.mubr.f32.gmra.mrb[0].mxu0 %v7558
    %v7675 = vpop.f32.mrb[0].mxu0
    %v7676 = vadd.f32 0.0, %v7675
    %v7677 = vpop.f32.mrb[0].mxu0
    %7678 = vmatprep.mubr.f32.mxu0 0.0
    %7679 = vmatmul.mubr.f32.gmra.mrb[0].mxu0 %v7561
    %v7680 = vpop.f32.mrb[0].mxu0
    %v7681 = vadd.f32 0.0, %v7680
    %v7682 = vpop.f32.mrb[0].mxu0
    %7683 = vmatprep.mubr.f32.mxu0 0.0
    %7684 = vmatmul.mubr.f32.gmra.mrb[0].mxu0 %v7564
    %v7685 = vpop.f32.mrb[0].mxu0
    %v7686 = vadd.f32 0.0, %v7685
    %v7687 = vpop.f32.mrb[0].mxu0
    %7688 = vmatprep.mubr.f32.mxu0 0.0
    %7689 = vmatmul.mubr.f32.gmra.mrb[0].mxu0 %v7567
    %v7690 = vpop.f32.mrb[0].mxu0
    %v7691 = vadd.f32 0.0, %v7690
    %v7692 = vpop.f32.mrb[0].mxu0
    %7693 = vmatprep.mubr.f32.mxu0 0.0
    %7694 = vmatmul.mubr.f32.gmra.mrb[0].mxu0 %v7570
    %v7695 = vpop.f32.mrb[0].mxu0
    %v7696 = vadd.f32 0.0, %v7695
    %v7697 = vpop.f32.mrb[0].mxu0
    %7698 = vmatprep.mubr.f32.mxu0 0.0
    %7699 = vmatmul.mubr.f32.gmra.mrb[0].mxu0 %v7573
    %v7700 = vpop.f32.mrb[0].mxu0
    %v7701 = vadd.f32 0.0, %v7700
    %v7702 = vpop.f32.mrb[0].mxu0
    %7703 = vmatprep.mubr.f32.mxu0 0.0
    %7704 = vmatmul.mubr.f32.gmra.mrb[0].mxu0 %v7576
    %v7705 = vpop.f32.mrb[0].mxu0
    %v7706 = vadd.f32 0.0, %v7705
    %v7707 = vpop.f32.mrb[0].mxu0
    %7708 = vmatprep.mubr.f32.mxu0 0.0
    %7709 = vmatmul.mubr.f32.gmra.mrb[0].mxu0 %v7579
    %v7710 = vpop.f32.mrb[0].mxu0
    %v7711 = vadd.f32 0.0, %v7710
    %v7712 = vpop.f32.mrb[0].mxu0
    %7713 = vmatprep.mubr.f32.mxu0 0.0
    %7714 = vmatmul.mubr.f32.gmra.mrb[0].mxu0 %v7582
    %v7715 = vpop.f32.mrb[0].mxu0
    %v7716 = vadd.f32 0.0, %v7715
    %v7717 = vpop.f32.mrb[0].mxu0
    %7718 = vmatprep.mubr.f32.mxu0 0.0
    %7719 = vmatmul.mubr.f32.gmra.mrb[0].mxu0 %v7585
    %v7720 = vpop.f32.mrb[0].mxu0
    %v7721 = vadd.f32 0.0, %v7720
    %v7722 = vpop.f32.mrb[0].mxu0
    %7723 = vmatprep.mubr.f32.mxu0 0.0
    %7724 = vmatmul.mubr.f32.gmra.mrb[0].mxu0 %v7588
    %v7725 = vpop.f32.mrb[0].mxu0
    %v7726 = vadd.f32 0.0, %v7725
    %v7727 = vpop.f32.mrb[0].mxu0
    %7728 = vmatprep.mubr.f32.mxu0 0.0
    %7729 = vmatmul.mubr.f32.gmra.mrb[0].mxu0 %v7591
    %v7730 = vpop.f32.mrb[0].mxu0
    %v7731 = vadd.f32 0.0, %v7730
    %v7732 = vpop.f32.mrb[0].mxu0
    %7733 = vmatprep.mubr.f32.mxu0 0.0
    %7734 = vmatmul.mubr.f32.gmra.mrb[0].mxu0 %v7594
    %v7735 = vpop.f32.mrb[0].mxu0
    %v7736 = vadd.f32 0.0, %v7735
    %v7737 = vpop.f32.mrb[0].mxu0
    %7738 = vmatprep.mubr.f32.mxu0 0.0
    %7739 = vmatmul.mubr.f32.gmra.mrb[0].mxu0 %v7597
    %v7740 = vpop.f32.mrb[0].mxu0
    %v7741 = vadd.f32 0.0, %v7740
    %v7742 = vpop.f32.mrb[0].mxu0
    %7743 = vdwg.mxu0
    %v7744 = vadd.f32 %v7532, %v7666
    %v7745 = vadd.f32 %v7533, %v7671
    %v7746 = vadd.f32 %v7534, %v7676
    %v7747 = vadd.f32 %v7535, %v7681
    %v7748 = vadd.f32 %v7536, %v7686
    %v7749 = vadd.f32 %v7537, %v7691
    %v7750 = vadd.f32 %v7538, %v7696
    %v7751 = vadd.f32 %v7539, %v7701
    %v7752 = vadd.f32 %v7540, %v7706
    %v7753 = vadd.f32 %v7541, %v7711
    %v7754 = vadd.f32 %v7542, %v7716
    %v7755 = vadd.f32 %v7543, %v7721
    %v7756 = vadd.f32 %v7544, %v7726
    %v7757 = vadd.f32 %v7545, %v7731
    %v7758 = vadd.f32 %v7546, %v7736
    %v7759 = vadd.f32 %v7547, %v7741
    %s7760 = scalar_lea.vmem [#allocation7], 336
    %v7761 = vld [vmem:[%s7760] sm:$0xff]
    %v7762 = vld [vmem:[%s7760 + $0x8] sm:$0xff]
    %v7764 = vsel %vm3345, %v3022, 0
    %v7767 = vsel %vm3345, %v3027, 0
    %v7770 = vsel %vm3345, %v3032, 0
    %v7773 = vsel %vm3345, %v3037, 0
    %v7776 = vsel %vm3345, %v3042, 0
    %v7779 = vsel %vm3345, %v3047, 0
    %v7782 = vsel %vm3345, %v3052, 0
    %v7785 = vsel %vm3345, %v3057, 0
    %v7788 = vsel %vm3345, %v3062, 0
    %v7791 = vsel %vm3345, %v3067, 0
    %v7794 = vsel %vm3345, %v3072, 0
    %v7797 = vsel %vm3345, %v3077, 0
    %v7800 = vsel %vm3345, %v3082, 0
    %v7803 = vsel %vm3345, %v3087, 0
    %v7806 = vsel %vm3345, %v3092, 0
    %v7809 = vsel %vm3345, %v3097, 0
    %7811 = vmatprep.subr.mxu0 0.0
    %7812 = vmatpush1.msra.mxu0 %v7761
    %7813 = vmatprep.subr.mxu0 0.0
    %7814 = vmatpush1.msra.mxu0 %v7762
    %7815 = vmatprep.subr.mxu0 0.0
    %7816 = vmatpush1.msra.mxu0 0.0
    %7817 = vmatprep.subr.mxu0 0.0
    %7818 = vmatpush1.msra.mxu0 0.0
    %7819 = vmatprep.subr.mxu0 0.0
    %7820 = vmatpush1.msra.mxu0 0.0
    %7821 = vmatprep.subr.mxu0 0.0
    %7822 = vmatpush1.msra.mxu0 0.0
    %7823 = vmatprep.subr.mxu0 0.0
    %7824 = vmatpush1.msra.mxu0 0.0
    %7825 = vmatprep.subr.mxu0 0.0
    %7826 = vmatpush1.msra.mxu0 0.0
    %7827 = vmatprep.subr.mxu0 0.0
    %7828 = vmatpush1.msra.mxu0 0.0
    %7829 = vmatprep.subr.mxu0 0.0
    %7830 = vmatpush1.msra.mxu0 0.0
    %7831 = vmatprep.subr.mxu0 0.0
    %7832 = vmatpush1.msra.mxu0 0.0
    %7833 = vmatprep.subr.mxu0 0.0
    %7834 = vmatpush1.msra.mxu0 0.0
    %7835 = vmatprep.subr.mxu0 0.0
    %7836 = vmatpush1.msra.mxu0 0.0
    %7837 = vmatprep.subr.mxu0 0.0
    %7838 = vmatpush1.msra.mxu0 0.0
    %7839 = vmatprep.subr.mxu0 0.0
    %7840 = vmatpush1.msra.mxu0 0.0
    %7841 = vmatprep.subr.mxu0 0.0
    %7842 = vmatpush1.msra.mxu0 0.0
    %7843 = vmatprep.subr.mxu0 0.0
    %7844 = vmatpush1.msra.mxu0 0.0
    %7845 = vmatprep.subr.mxu0 0.0
    %7846 = vmatpush1.msra.mxu0 0.0
    %7847 = vmatprep.subr.mxu0 0.0
    %7848 = vmatpush1.msra.mxu0 0.0
    %7849 = vmatprep.subr.mxu0 0.0
    %7850 = vmatpush1.msra.mxu0 0.0
    %7851 = vmatprep.subr.mxu0 0.0
    %7852 = vmatpush1.msra.mxu0 0.0
    %7853 = vmatprep.subr.mxu0 0.0
    %7854 = vmatpush1.msra.mxu0 0.0
    %7855 = vmatprep.subr.mxu0 0.0
    %7856 = vmatpush1.msra.mxu0 0.0
    %7857 = vmatprep.subr.mxu0 0.0
    %7858 = vmatpush1.msra.mxu0 0.0
    %7859 = vmatprep.subr.mxu0 0.0
    %7860 = vmatpush1.msra.mxu0 0.0
    %7861 = vmatprep.subr.mxu0 0.0
    %7862 = vmatpush1.msra.mxu0 0.0
    %7863 = vmatprep.subr.mxu0 0.0
    %7864 = vmatpush1.msra.mxu0 0.0
    %7865 = vmatprep.subr.mxu0 0.0
    %7866 = vmatpush1.msra.mxu0 0.0
    %7867 = vmatprep.subr.mxu0 0.0
    %7868 = vmatpush1.msra.mxu0 0.0
    %7869 = vmatprep.subr.mxu0 0.0
    %7870 = vmatpush1.msra.mxu0 0.0
    %7871 = vmatprep.subr.mxu0 0.0
    %7872 = vmatpush1.msra.mxu0 0.0
    %7873 = vmatprep.subr.mxu0 0.0
    %7874 = vmatpush1.msra.mxu0 0.0
    %7875 = vmatprep.mubr.f32.mxu0 0.0
    %7876 = vmatmul.mubr.f32.gmra.mrb[0].mxu0 %v7764
    %v7877 = vpop.f32.mrb[0].mxu0
    %v7878 = vadd.f32 0.0, %v7877
    %v7879 = vpop.f32.mrb[0].mxu0
    %7880 = vmatprep.mubr.f32.mxu0 0.0
    %7881 = vmatmul.mubr.f32.gmra.mrb[0].mxu0 %v7767
    %v7882 = vpop.f32.mrb[0].mxu0
    %v7883 = vadd.f32 0.0, %v7882
    %v7884 = vpop.f32.mrb[0].mxu0
    %7885 = vmatprep.mubr.f32.mxu0 0.0
    %7886 = vmatmul.mubr.f32.gmra.mrb[0].mxu0 %v7770
    %v7887 = vpop.f32.mrb[0].mxu0
    %v7888 = vadd.f32 0.0, %v7887
    %v7889 = vpop.f32.mrb[0].mxu0
    %7890 = vmatprep.mubr.f32.mxu0 0.0
    %7891 = vmatmul.mubr.f32.gmra.mrb[0].mxu0 %v7773
    %v7892 = vpop.f32.mrb[0].mxu0
    %v7893 = vadd.f32 0.0, %v7892
    %v7894 = vpop.f32.mrb[0].mxu0
    %7895 = vmatprep.mubr.f32.mxu0 0.0
    %7896 = vmatmul.mubr.f32.gmra.mrb[0].mxu0 %v7776
    %v7897 = vpop.f32.mrb[0].mxu0
    %v7898 = vadd.f32 0.0, %v7897
    %v7899 = vpop.f32.mrb[0].mxu0
    %7900 = vmatprep.mubr.f32.mxu0 0.0
    %7901 = vmatmul.mubr.f32.gmra.mrb[0].mxu0 %v7779
    %v7902 = vpop.f32.mrb[0].mxu0
    %v7903 = vadd.f32 0.0, %v7902
    %v7904 = vpop.f32.mrb[0].mxu0
    %7905 = vmatprep.mubr.f32.mxu0 0.0
    %7906 = vmatmul.mubr.f32.gmra.mrb[0].mxu0 %v7782
    %v7907 = vpop.f32.mrb[0].mxu0
    %v7908 = vadd.f32 0.0, %v7907
    %v7909 = vpop.f32.mrb[0].mxu0
    %7910 = vmatprep.mubr.f32.mxu0 0.0
    %7911 = vmatmul.mubr.f32.gmra.mrb[0].mxu0 %v7785
    %v7912 = vpop.f32.mrb[0].mxu0
    %v7913 = vadd.f32 0.0, %v7912
    %v7914 = vpop.f32.mrb[0].mxu0
    %7915 = vmatprep.mubr.f32.mxu0 0.0
    %7916 = vmatmul.mubr.f32.gmra.mrb[0].mxu0 %v7788
    %v7917 = vpop.f32.mrb[0].mxu0
    %v7918 = vadd.f32 0.0, %v7917
    %v7919 = vpop.f32.mrb[0].mxu0
    %7920 = vmatprep.mubr.f32.mxu0 0.0
    %7921 = vmatmul.mubr.f32.gmra.mrb[0].mxu0 %v7791
    %v7922 = vpop.f32.mrb[0].mxu0
    %v7923 = vadd.f32 0.0, %v7922
    %v7924 = vpop.f32.mrb[0].mxu0
    %7925 = vmatprep.mubr.f32.mxu0 0.0
    %7926 = vmatmul.mubr.f32.gmra.mrb[0].mxu0 %v7794
    %v7927 = vpop.f32.mrb[0].mxu0
    %v7928 = vadd.f32 0.0, %v7927
    %v7929 = vpop.f32.mrb[0].mxu0
    %7930 = vmatprep.mubr.f32.mxu0 0.0
    %7931 = vmatmul.mubr.f32.gmra.mrb[0].mxu0 %v7797
    %v7932 = vpop.f32.mrb[0].mxu0
    %v7933 = vadd.f32 0.0, %v7932
    %v7934 = vpop.f32.mrb[0].mxu0
    %7935 = vmatprep.mubr.f32.mxu0 0.0
    %7936 = vmatmul.mubr.f32.gmra.mrb[0].mxu0 %v7800
    %v7937 = vpop.f32.mrb[0].mxu0
    %v7938 = vadd.f32 0.0, %v7937
    %v7939 = vpop.f32.mrb[0].mxu0
    %7940 = vmatprep.mubr.f32.mxu0 0.0
    %7941 = vmatmul.mubr.f32.gmra.mrb[0].mxu0 %v7803
    %v7942 = vpop.f32.mrb[0].mxu0
    %v7943 = vadd.f32 0.0, %v7942
    %v7944 = vpop.f32.mrb[0].mxu0
    %7945 = vmatprep.mubr.f32.mxu0 0.0
    %7946 = vmatmul.mubr.f32.gmra.mrb[0].mxu0 %v7806
    %v7947 = vpop.f32.mrb[0].mxu0
    %v7948 = vadd.f32 0.0, %v7947
    %v7949 = vpop.f32.mrb[0].mxu0
    %7950 = vmatprep.mubr.f32.mxu0 0.0
    %7951 = vmatmul.mubr.f32.gmra.mrb[0].mxu0 %v7809
    %v7952 = vpop.f32.mrb[0].mxu0
    %v7953 = vadd.f32 0.0, %v7952
    %v7954 = vpop.f32.mrb[0].mxu0
    %7955 = vdwg.mxu0
    %v7956 = vadd.f32 %v7744, %v7878
    %v7957 = vadd.f32 %v7745, %v7883
    %v7958 = vadd.f32 %v7746, %v7888
    %v7959 = vadd.f32 %v7747, %v7893
    %v7960 = vadd.f32 %v7748, %v7898
    %v7961 = vadd.f32 %v7749, %v7903
    %v7962 = vadd.f32 %v7750, %v7908
    %v7963 = vadd.f32 %v7751, %v7913
    %v7964 = vadd.f32 %v7752, %v7918
    %v7965 = vadd.f32 %v7753, %v7923
    %v7966 = vadd.f32 %v7754, %v7928
    %v7967 = vadd.f32 %v7755, %v7933
    %v7968 = vadd.f32 %v7756, %v7938
    %v7969 = vadd.f32 %v7757, %v7943
    %v7970 = vadd.f32 %v7758, %v7948
    %v7971 = vadd.f32 %v7759, %v7953
    %s7972 = scalar_lea.vmem [#allocation7], 352
    %v7973 = vld [vmem:[%s7972] sm:$0xff]
    %v7974 = vld [vmem:[%s7972 + $0x8] sm:$0xff]
    %v7976 = vsel %vm3345, %v3102, 0
    %v7979 = vsel %vm3345, %v3107, 0
    %v7982 = vsel %vm3345, %v3112, 0
    %v7985 = vsel %vm3345, %v3117, 0
    %v7988 = vsel %vm3345, %v3122, 0
    %v7991 = vsel %vm3345, %v3127, 0
    %v7994 = vsel %vm3345, %v3132, 0
    %v7997 = vsel %vm3345, %v3137, 0
    %v8000 = vsel %vm3345, %v3142, 0
    %v8003 = vsel %vm3345, %v3147, 0
    %v8006 = vsel %vm3345, %v3152, 0
    %v8009 = vsel %vm3345, %v3157, 0
    %v8012 = vsel %vm3345, %v3162, 0
    %v8015 = vsel %vm3345, %v3167, 0
    %v8018 = vsel %vm3345, %v3172, 0
    %v8021 = vsel %vm3345, %v3177, 0
    %8023 = vmatprep.subr.mxu0 0.0
    %8024 = vmatpush1.msra.mxu0 %v7973
    %8025 = vmatprep.subr.mxu0 0.0
    %8026 = vmatpush1.msra.mxu0 %v7974
    %8027 = vmatprep.subr.mxu0 0.0
    %8028 = vmatpush1.msra.mxu0 0.0
    %8029 = vmatprep.subr.mxu0 0.0
    %8030 = vmatpush1.msra.mxu0 0.0
    %8031 = vmatprep.subr.mxu0 0.0
    %8032 = vmatpush1.msra.mxu0 0.0
    %8033 = vmatprep.subr.mxu0 0.0
    %8034 = vmatpush1.msra.mxu0 0.0
    %8035 = vmatprep.subr.mxu0 0.0
    %8036 = vmatpush1.msra.mxu0 0.0
    %8037 = vmatprep.subr.mxu0 0.0
    %8038 = vmatpush1.msra.mxu0 0.0
    %8039 = vmatprep.subr.mxu0 0.0
    %8040 = vmatpush1.msra.mxu0 0.0
    %8041 = vmatprep.subr.mxu0 0.0
    %8042 = vmatpush1.msra.mxu0 0.0
    %8043 = vmatprep.subr.mxu0 0.0
    %8044 = vmatpush1.msra.mxu0 0.0
    %8045 = vmatprep.subr.mxu0 0.0
    %8046 = vmatpush1.msra.mxu0 0.0
    %8047 = vmatprep.subr.mxu0 0.0
    %8048 = vmatpush1.msra.mxu0 0.0
    %8049 = vmatprep.subr.mxu0 0.0
    %8050 = vmatpush1.msra.mxu0 0.0
    %8051 = vmatprep.subr.mxu0 0.0
    %8052 = vmatpush1.msra.mxu0 0.0
    %8053 = vmatprep.subr.mxu0 0.0
    %8054 = vmatpush1.msra.mxu0 0.0
    %8055 = vmatprep.subr.mxu0 0.0
    %8056 = vmatpush1.msra.mxu0 0.0
    %8057 = vmatprep.subr.mxu0 0.0
    %8058 = vmatpush1.msra.mxu0 0.0
    %8059 = vmatprep.subr.mxu0 0.0
    %8060 = vmatpush1.msra.mxu0 0.0
    %8061 = vmatprep.subr.mxu0 0.0
    %8062 = vmatpush1.msra.mxu0 0.0
    %8063 = vmatprep.subr.mxu0 0.0
    %8064 = vmatpush1.msra.mxu0 0.0
    %8065 = vmatprep.subr.mxu0 0.0
    %8066 = vmatpush1.msra.mxu0 0.0
    %8067 = vmatprep.subr.mxu0 0.0
    %8068 = vmatpush1.msra.mxu0 0.0
    %8069 = vmatprep.subr.mxu0 0.0
    %8070 = vmatpush1.msra.mxu0 0.0
    %8071 = vmatprep.subr.mxu0 0.0
    %8072 = vmatpush1.msra.mxu0 0.0
    %8073 = vmatprep.subr.mxu0 0.0
    %8074 = vmatpush1.msra.mxu0 0.0
    %8075 = vmatprep.subr.mxu0 0.0
    %8076 = vmatpush1.msra.mxu0 0.0
    %8077 = vmatprep.subr.mxu0 0.0
    %8078 = vmatpush1.msra.mxu0 0.0
    %8079 = vmatprep.subr.mxu0 0.0
    %8080 = vmatpush1.msra.mxu0 0.0
    %8081 = vmatprep.subr.mxu0 0.0
    %8082 = vmatpush1.msra.mxu0 0.0
    %8083 = vmatprep.subr.mxu0 0.0
    %8084 = vmatpush1.msra.mxu0 0.0
    %8085 = vmatprep.subr.mxu0 0.0
    %8086 = vmatpush1.msra.mxu0 0.0
    %8087 = vmatprep.mubr.f32.mxu0 0.0
    %8088 = vmatmul.mubr.f32.gmra.mrb[0].mxu0 %v7976
    %v8089 = vpop.f32.mrb[0].mxu0
    %v8090 = vadd.f32 0.0, %v8089
    %v8091 = vpop.f32.mrb[0].mxu0
    %8092 = vmatprep.mubr.f32.mxu0 0.0
    %8093 = vmatmul.mubr.f32.gmra.mrb[0].mxu0 %v7979
    %v8094 = vpop.f32.mrb[0].mxu0
    %v8095 = vadd.f32 0.0, %v8094
    %v8096 = vpop.f32.mrb[0].mxu0
    %8097 = vmatprep.mubr.f32.mxu0 0.0
    %8098 = vmatmul.mubr.f32.gmra.mrb[0].mxu0 %v7982
    %v8099 = vpop.f32.mrb[0].mxu0
    %v8100 = vadd.f32 0.0, %v8099
    %v8101 = vpop.f32.mrb[0].mxu0
    %8102 = vmatprep.mubr.f32.mxu0 0.0
    %8103 = vmatmul.mubr.f32.gmra.mrb[0].mxu0 %v7985
    %v8104 = vpop.f32.mrb[0].mxu0
    %v8105 = vadd.f32 0.0, %v8104
    %v8106 = vpop.f32.mrb[0].mxu0
    %8107 = vmatprep.mubr.f32.mxu0 0.0
    %8108 = vmatmul.mubr.f32.gmra.mrb[0].mxu0 %v7988
    %v8109 = vpop.f32.mrb[0].mxu0
    %v8110 = vadd.f32 0.0, %v8109
    %v8111 = vpop.f32.mrb[0].mxu0
    %8112 = vmatprep.mubr.f32.mxu0 0.0
    %8113 = vmatmul.mubr.f32.gmra.mrb[0].mxu0 %v7991
    %v8114 = vpop.f32.mrb[0].mxu0
    %v8115 = vadd.f32 0.0, %v8114
    %v8116 = vpop.f32.mrb[0].mxu0
    %8117 = vmatprep.mubr.f32.mxu0 0.0
    %8118 = vmatmul.mubr.f32.gmra.mrb[0].mxu0 %v7994
    %v8119 = vpop.f32.mrb[0].mxu0
    %v8120 = vadd.f32 0.0, %v8119
    %v8121 = vpop.f32.mrb[0].mxu0
    %8122 = vmatprep.mubr.f32.mxu0 0.0
    %8123 = vmatmul.mubr.f32.gmra.mrb[0].mxu0 %v7997
    %v8124 = vpop.f32.mrb[0].mxu0
    %v8125 = vadd.f32 0.0, %v8124
    %v8126 = vpop.f32.mrb[0].mxu0
    %8127 = vmatprep.mubr.f32.mxu0 0.0
    %8128 = vmatmul.mubr.f32.gmra.mrb[0].mxu0 %v8000
    %v8129 = vpop.f32.mrb[0].mxu0
    %v8130 = vadd.f32 0.0, %v8129
    %v8131 = vpop.f32.mrb[0].mxu0
    %8132 = vmatprep.mubr.f32.mxu0 0.0
    %8133 = vmatmul.mubr.f32.gmra.mrb[0].mxu0 %v8003
    %v8134 = vpop.f32.mrb[0].mxu0
    %v8135 = vadd.f32 0.0, %v8134
    %v8136 = vpop.f32.mrb[0].mxu0
    %8137 = vmatprep.mubr.f32.mxu0 0.0
    %8138 = vmatmul.mubr.f32.gmra.mrb[0].mxu0 %v8006
    %v8139 = vpop.f32.mrb[0].mxu0
    %v8140 = vadd.f32 0.0, %v8139
    %v8141 = vpop.f32.mrb[0].mxu0
    %8142 = vmatprep.mubr.f32.mxu0 0.0
    %8143 = vmatmul.mubr.f32.gmra.mrb[0].mxu0 %v8009
    %v8144 = vpop.f32.mrb[0].mxu0
    %v8145 = vadd.f32 0.0, %v8144
    %v8146 = vpop.f32.mrb[0].mxu0
    %8147 = vmatprep.mubr.f32.mxu0 0.0
    %8148 = vmatmul.mubr.f32.gmra.mrb[0].mxu0 %v8012
    %v8149 = vpop.f32.mrb[0].mxu0
    %v8150 = vadd.f32 0.0, %v8149
    %v8151 = vpop.f32.mrb[0].mxu0
    %8152 = vmatprep.mubr.f32.mxu0 0.0
    %8153 = vmatmul.mubr.f32.gmra.mrb[0].mxu0 %v8015
    %v8154 = vpop.f32.mrb[0].mxu0
    %v8155 = vadd.f32 0.0, %v8154
    %v8156 = vpop.f32.mrb[0].mxu0
    %8157 = vmatprep.mubr.f32.mxu0 0.0
    %8158 = vmatmul.mubr.f32.gmra.mrb[0].mxu0 %v8018
    %v8159 = vpop.f32.mrb[0].mxu0
    %v8160 = vadd.f32 0.0, %v8159
    %v8161 = vpop.f32.mrb[0].mxu0
    %8162 = vmatprep.mubr.f32.mxu0 0.0
    %8163 = vmatmul.mubr.f32.gmra.mrb[0].mxu0 %v8021
    %v8164 = vpop.f32.mrb[0].mxu0
    %v8165 = vadd.f32 0.0, %v8164
    %v8166 = vpop.f32.mrb[0].mxu0
    %8167 = vdwg.mxu0
    %v8168 = vadd.f32 %v7956, %v8090
    %v8169 = vadd.f32 %v7957, %v8095
    %v8170 = vadd.f32 %v7958, %v8100
    %v8171 = vadd.f32 %v7959, %v8105
    %v8172 = vadd.f32 %v7960, %v8110
    %v8173 = vadd.f32 %v7961, %v8115
    %v8174 = vadd.f32 %v7962, %v8120
    %v8175 = vadd.f32 %v7963, %v8125
    %v8176 = vadd.f32 %v7964, %v8130
    %v8177 = vadd.f32 %v7965, %v8135
    %v8178 = vadd.f32 %v7966, %v8140
    %v8179 = vadd.f32 %v7967, %v8145
    %v8180 = vadd.f32 %v7968, %v8150
    %v8181 = vadd.f32 %v7969, %v8155
    %v8182 = vadd.f32 %v7970, %v8160
    %v8183 = vadd.f32 %v7971, %v8165
    %s8184 = scalar_lea.vmem [#allocation7], 368
    %v8185 = vld [vmem:[%s8184] sm:$0xff]
    %v8186 = vld [vmem:[%s8184 + $0x8] sm:$0xff]
    %v8188 = vsel %vm3345, %v3182, 0
    %v8191 = vsel %vm3345, %v3187, 0
    %v8194 = vsel %vm3345, %v3192, 0
    %v8197 = vsel %vm3345, %v3197, 0
    %v8200 = vsel %vm3345, %v3202, 0
    %v8203 = vsel %vm3345, %v3207, 0
    %v8206 = vsel %vm3345, %v3212, 0
    %v8209 = vsel %vm3345, %v3217, 0
    %v8212 = vsel %vm3345, %v3222, 0
    %v8215 = vsel %vm3345, %v3227, 0
    %v8218 = vsel %vm3345, %v3232, 0
    %v8221 = vsel %vm3345, %v3237, 0
    %v8224 = vsel %vm3345, %v3242, 0
    %v8227 = vsel %vm3345, %v3247, 0
    %v8230 = vsel %vm3345, %v3252, 0
    %v8233 = vsel %vm3345, %v3257, 0
    %8235 = vmatprep.subr.mxu0 0.0
    %8236 = vmatpush1.msra.mxu0 %v8185
    %8237 = vmatprep.subr.mxu0 0.0
    %8238 = vmatpush1.msra.mxu0 %v8186
    %8239 = vmatprep.subr.mxu0 0.0
    %8240 = vmatpush1.msra.mxu0 0.0
    %8241 = vmatprep.subr.mxu0 0.0
    %8242 = vmatpush1.msra.mxu0 0.0
    %8243 = vmatprep.subr.mxu0 0.0
    %8244 = vmatpush1.msra.mxu0 0.0
    %8245 = vmatprep.subr.mxu0 0.0
    %8246 = vmatpush1.msra.mxu0 0.0
    %8247 = vmatprep.subr.mxu0 0.0
    %8248 = vmatpush1.msra.mxu0 0.0
    %8249 = vmatprep.subr.mxu0 0.0
    %8250 = vmatpush1.msra.mxu0 0.0
    %8251 = vmatprep.subr.mxu0 0.0
    %8252 = vmatpush1.msra.mxu0 0.0
    %8253 = vmatprep.subr.mxu0 0.0
    %8254 = vmatpush1.msra.mxu0 0.0
    %8255 = vmatprep.subr.mxu0 0.0
    %8256 = vmatpush1.msra.mxu0 0.0
    %8257 = vmatprep.subr.mxu0 0.0
    %8258 = vmatpush1.msra.mxu0 0.0
    %8259 = vmatprep.subr.mxu0 0.0
    %8260 = vmatpush1.msra.mxu0 0.0
    %8261 = vmatprep.subr.mxu0 0.0
    %8262 = vmatpush1.msra.mxu0 0.0
    %8263 = vmatprep.subr.mxu0 0.0
    %8264 = vmatpush1.msra.mxu0 0.0
    %8265 = vmatprep.subr.mxu0 0.0
    %8266 = vmatpush1.msra.mxu0 0.0
    %8267 = vmatprep.subr.mxu0 0.0
    %8268 = vmatpush1.msra.mxu0 0.0
    %8269 = vmatprep.subr.mxu0 0.0
    %8270 = vmatpush1.msra.mxu0 0.0
    %8271 = vmatprep.subr.mxu0 0.0
    %8272 = vmatpush1.msra.mxu0 0.0
    %8273 = vmatprep.subr.mxu0 0.0
    %8274 = vmatpush1.msra.mxu0 0.0
    %8275 = vmatprep.subr.mxu0 0.0
    %8276 = vmatpush1.msra.mxu0 0.0
    %8277 = vmatprep.subr.mxu0 0.0
    %8278 = vmatpush1.msra.mxu0 0.0
    %8279 = vmatprep.subr.mxu0 0.0
    %8280 = vmatpush1.msra.mxu0 0.0
    %8281 = vmatprep.subr.mxu0 0.0
    %8282 = vmatpush1.msra.mxu0 0.0
    %8283 = vmatprep.subr.mxu0 0.0
    %8284 = vmatpush1.msra.mxu0 0.0
    %8285 = vmatprep.subr.mxu0 0.0
    %8286 = vmatpush1.msra.mxu0 0.0
    %8287 = vmatprep.subr.mxu0 0.0
    %8288 = vmatpush1.msra.mxu0 0.0
    %8289 = vmatprep.subr.mxu0 0.0
    %8290 = vmatpush1.msra.mxu0 0.0
    %8291 = vmatprep.subr.mxu0 0.0
    %8292 = vmatpush1.msra.mxu0 0.0
    %8293 = vmatprep.subr.mxu0 0.0
    %8294 = vmatpush1.msra.mxu0 0.0
    %8295 = vmatprep.subr.mxu0 0.0
    %8296 = vmatpush1.msra.mxu0 0.0
    %8297 = vmatprep.subr.mxu0 0.0
    %8298 = vmatpush1.msra.mxu0 0.0
    %8299 = vmatprep.mubr.f32.mxu0 0.0
    %8300 = vmatmul.mubr.f32.gmra.mrb[0].mxu0 %v8188
    %v8301 = vpop.f32.mrb[0].mxu0
    %v8302 = vadd.f32 0.0, %v8301
    %v8303 = vpop.f32.mrb[0].mxu0
    %8304 = vmatprep.mubr.f32.mxu0 0.0
    %8305 = vmatmul.mubr.f32.gmra.mrb[0].mxu0 %v8191
    %v8306 = vpop.f32.mrb[0].mxu0
    %v8307 = vadd.f32 0.0, %v8306
    %v8308 = vpop.f32.mrb[0].mxu0
    %8309 = vmatprep.mubr.f32.mxu0 0.0
    %8310 = vmatmul.mubr.f32.gmra.mrb[0].mxu0 %v8194
    %v8311 = vpop.f32.mrb[0].mxu0
    %v8312 = vadd.f32 0.0, %v8311
    %v8313 = vpop.f32.mrb[0].mxu0
    %8314 = vmatprep.mubr.f32.mxu0 0.0
    %8315 = vmatmul.mubr.f32.gmra.mrb[0].mxu0 %v8197
    %v8316 = vpop.f32.mrb[0].mxu0
    %v8317 = vadd.f32 0.0, %v8316
    %v8318 = vpop.f32.mrb[0].mxu0
    %8319 = vmatprep.mubr.f32.mxu0 0.0
    %8320 = vmatmul.mubr.f32.gmra.mrb[0].mxu0 %v8200
    %v8321 = vpop.f32.mrb[0].mxu0
    %v8322 = vadd.f32 0.0, %v8321
    %v8323 = vpop.f32.mrb[0].mxu0
    %8324 = vmatprep.mubr.f32.mxu0 0.0
    %8325 = vmatmul.mubr.f32.gmra.mrb[0].mxu0 %v8203
    %v8326 = vpop.f32.mrb[0].mxu0
    %v8327 = vadd.f32 0.0, %v8326
    %v8328 = vpop.f32.mrb[0].mxu0
    %8329 = vmatprep.mubr.f32.mxu0 0.0
    %8330 = vmatmul.mubr.f32.gmra.mrb[0].mxu0 %v8206
    %v8331 = vpop.f32.mrb[0].mxu0
    %v8332 = vadd.f32 0.0, %v8331
    %v8333 = vpop.f32.mrb[0].mxu0
    %8334 = vmatprep.mubr.f32.mxu0 0.0
    %8335 = vmatmul.mubr.f32.gmra.mrb[0].mxu0 %v8209
    %v8336 = vpop.f32.mrb[0].mxu0
    %v8337 = vadd.f32 0.0, %v8336
    %v8338 = vpop.f32.mrb[0].mxu0
    %8339 = vmatprep.mubr.f32.mxu0 0.0
    %8340 = vmatmul.mubr.f32.gmra.mrb[0].mxu0 %v8212
    %v8341 = vpop.f32.mrb[0].mxu0
    %v8342 = vadd.f32 0.0, %v8341
    %v8343 = vpop.f32.mrb[0].mxu0
    %8344 = vmatprep.mubr.f32.mxu0 0.0
    %8345 = vmatmul.mubr.f32.gmra.mrb[0].mxu0 %v8215
    %v8346 = vpop.f32.mrb[0].mxu0
    %v8347 = vadd.f32 0.0, %v8346
    %v8348 = vpop.f32.mrb[0].mxu0
    %8349 = vmatprep.mubr.f32.mxu0 0.0
    %8350 = vmatmul.mubr.f32.gmra.mrb[0].mxu0 %v8218
    %v8351 = vpop.f32.mrb[0].mxu0
    %v8352 = vadd.f32 0.0, %v8351
    %v8353 = vpop.f32.mrb[0].mxu0
    %8354 = vmatprep.mubr.f32.mxu0 0.0
    %8355 = vmatmul.mubr.f32.gmra.mrb[0].mxu0 %v8221
    %v8356 = vpop.f32.mrb[0].mxu0
    %v8357 = vadd.f32 0.0, %v8356
    %v8358 = vpop.f32.mrb[0].mxu0
    %8359 = vmatprep.mubr.f32.mxu0 0.0
    %8360 = vmatmul.mubr.f32.gmra.mrb[0].mxu0 %v8224
    %v8361 = vpop.f32.mrb[0].mxu0
    %v8362 = vadd.f32 0.0, %v8361
    %v8363 = vpop.f32.mrb[0].mxu0
    %8364 = vmatprep.mubr.f32.mxu0 0.0
    %8365 = vmatmul.mubr.f32.gmra.mrb[0].mxu0 %v8227
    %v8366 = vpop.f32.mrb[0].mxu0
    %v8367 = vadd.f32 0.0, %v8366
    %v8368 = vpop.f32.mrb[0].mxu0
    %8369 = vmatprep.mubr.f32.mxu0 0.0
    %8370 = vmatmul.mubr.f32.gmra.mrb[0].mxu0 %v8230
    %v8371 = vpop.f32.mrb[0].mxu0
    %v8372 = vadd.f32 0.0, %v8371
    %v8373 = vpop.f32.mrb[0].mxu0
    %8374 = vmatprep.mubr.f32.mxu0 0.0
    %8375 = vmatmul.mubr.f32.gmra.mrb[0].mxu0 %v8233
    %v8376 = vpop.f32.mrb[0].mxu0
    %v8377 = vadd.f32 0.0, %v8376
    %v8378 = vpop.f32.mrb[0].mxu0
    %8379 = vdwg.mxu0
    %v8380 = vadd.f32 %v8168, %v8302
    %v8381 = vadd.f32 %v8169, %v8307
    %v8382 = vadd.f32 %v8170, %v8312
    %v8383 = vadd.f32 %v8171, %v8317
    %v8384 = vadd.f32 %v8172, %v8322
    %v8385 = vadd.f32 %v8173, %v8327
    %v8386 = vadd.f32 %v8174, %v8332
    %v8387 = vadd.f32 %v8175, %v8337
    %v8388 = vadd.f32 %v8176, %v8342
    %v8389 = vadd.f32 %v8177, %v8347
    %v8390 = vadd.f32 %v8178, %v8352
    %v8391 = vadd.f32 %v8179, %v8357
    %v8392 = vadd.f32 %v8180, %v8362
    %v8393 = vadd.f32 %v8181, %v8367
    %v8394 = vadd.f32 %v8182, %v8372
    %v8395 = vadd.f32 %v8183, %v8377
    %s8396 = scalar_lea.vmem [#allocation7], 384
    %v8397 = vld [vmem:[%s8396] sm:$0xff]
    %v8398 = vld [vmem:[%s8396 + $0x8] sm:$0xff]
    %v8400 = vsel %vm3345, %v3262, 0
    %v8403 = vsel %vm3345, %v3267, 0
    %v8406 = vsel %vm3345, %v3272, 0
    %v8409 = vsel %vm3345, %v3277, 0
    %v8412 = vsel %vm3345, %v3282, 0
    %v8415 = vsel %vm3345, %v3287, 0
    %v8418 = vsel %vm3345, %v3292, 0
    %v8421 = vsel %vm3345, %v3297, 0
    %v8424 = vsel %vm3345, %v3302, 0
    %v8427 = vsel %vm3345, %v3307, 0
    %v8430 = vsel %vm3345, %v3312, 0
    %v8433 = vsel %vm3345, %v3317, 0
    %v8436 = vsel %vm3345, %v3322, 0
    %v8439 = vsel %vm3345, %v3327, 0
    %v8442 = vsel %vm3345, %v3332, 0
    %v8445 = vsel %vm3345, %v3337, 0
    %8447 = vmatprep.subr.mxu0 0.0
    %8448 = vmatpush1.msra.mxu0 %v8397
    %8449 = vmatprep.subr.mxu0 0.0
    %8450 = vmatpush1.msra.mxu0 %v8398
    %8451 = vmatprep.subr.mxu0 0.0
    %8452 = vmatpush1.msra.mxu0 0.0
    %8453 = vmatprep.subr.mxu0 0.0
    %8454 = vmatpush1.msra.mxu0 0.0
    %8455 = vmatprep.subr.mxu0 0.0
    %8456 = vmatpush1.msra.mxu0 0.0
    %8457 = vmatprep.subr.mxu0 0.0
    %8458 = vmatpush1.msra.mxu0 0.0
    %8459 = vmatprep.subr.mxu0 0.0
    %8460 = vmatpush1.msra.mxu0 0.0
    %8461 = vmatprep.subr.mxu0 0.0
    %8462 = vmatpush1.msra.mxu0 0.0
    %8463 = vmatprep.subr.mxu0 0.0
    %8464 = vmatpush1.msra.mxu0 0.0
    %8465 = vmatprep.subr.mxu0 0.0
    %8466 = vmatpush1.msra.mxu0 0.0
    %8467 = vmatprep.subr.mxu0 0.0
    %8468 = vmatpush1.msra.mxu0 0.0
    %8469 = vmatprep.subr.mxu0 0.0
    %8470 = vmatpush1.msra.mxu0 0.0
    %8471 = vmatprep.subr.mxu0 0.0
    %8472 = vmatpush1.msra.mxu0 0.0
    %8473 = vmatprep.subr.mxu0 0.0
    %8474 = vmatpush1.msra.mxu0 0.0
    %8475 = vmatprep.subr.mxu0 0.0
    %8476 = vmatpush1.msra.mxu0 0.0
    %8477 = vmatprep.subr.mxu0 0.0
    %8478 = vmatpush1.msra.mxu0 0.0
    %8479 = vmatprep.subr.mxu0 0.0
    %8480 = vmatpush1.msra.mxu0 0.0
    %8481 = vmatprep.subr.mxu0 0.0
    %8482 = vmatpush1.msra.mxu0 0.0
    %8483 = vmatprep.subr.mxu0 0.0
    %8484 = vmatpush1.msra.mxu0 0.0
    %8485 = vmatprep.subr.mxu0 0.0
    %8486 = vmatpush1.msra.mxu0 0.0
    %8487 = vmatprep.subr.mxu0 0.0
    %8488 = vmatpush1.msra.mxu0 0.0
    %8489 = vmatprep.subr.mxu0 0.0
    %8490 = vmatpush1.msra.mxu0 0.0
    %8491 = vmatprep.subr.mxu0 0.0
    %8492 = vmatpush1.msra.mxu0 0.0
    %8493 = vmatprep.subr.mxu0 0.0
    %8494 = vmatpush1.msra.mxu0 0.0
    %8495 = vmatprep.subr.mxu0 0.0
    %8496 = vmatpush1.msra.mxu0 0.0
    %8497 = vmatprep.subr.mxu0 0.0
    %8498 = vmatpush1.msra.mxu0 0.0
    %8499 = vmatprep.subr.mxu0 0.0
    %8500 = vmatpush1.msra.mxu0 0.0
    %8501 = vmatprep.subr.mxu0 0.0
    %8502 = vmatpush1.msra.mxu0 0.0
    %8503 = vmatprep.subr.mxu0 0.0
    %8504 = vmatpush1.msra.mxu0 0.0
    %8505 = vmatprep.subr.mxu0 0.0
    %8506 = vmatpush1.msra.mxu0 0.0
    %8507 = vmatprep.subr.mxu0 0.0
    %8508 = vmatpush1.msra.mxu0 0.0
    %8509 = vmatprep.subr.mxu0 0.0
    %8510 = vmatpush1.msra.mxu0 0.0
    %8511 = vmatprep.mubr.f32.mxu0 0.0
    %8512 = vmatmul.mubr.f32.gmra.mrb[0].mxu0 %v8400
    %v8513 = vpop.f32.mrb[0].mxu0
    %v8514 = vadd.f32 0.0, %v8513
    %v8515 = vpop.f32.mrb[0].mxu0
    %8516 = vmatprep.mubr.f32.mxu0 0.0
    %8517 = vmatmul.mubr.f32.gmra.mrb[0].mxu0 %v8403
    %v8518 = vpop.f32.mrb[0].mxu0
    %v8519 = vadd.f32 0.0, %v8518
    %v8520 = vpop.f32.mrb[0].mxu0
    %8521 = vmatprep.mubr.f32.mxu0 0.0
    %8522 = vmatmul.mubr.f32.gmra.mrb[0].mxu0 %v8406
    %v8523 = vpop.f32.mrb[0].mxu0
    %v8524 = vadd.f32 0.0, %v8523
    %v8525 = vpop.f32.mrb[0].mxu0
    %8526 = vmatprep.mubr.f32.mxu0 0.0
    %8527 = vmatmul.mubr.f32.gmra.mrb[0].mxu0 %v8409
    %v8528 = vpop.f32.mrb[0].mxu0
    %v8529 = vadd.f32 0.0, %v8528
    %v8530 = vpop.f32.mrb[0].mxu0
    %8531 = vmatprep.mubr.f32.mxu0 0.0
    %8532 = vmatmul.mubr.f32.gmra.mrb[0].mxu0 %v8412
    %v8533 = vpop.f32.mrb[0].mxu0
    %v8534 = vadd.f32 0.0, %v8533
    %v8535 = vpop.f32.mrb[0].mxu0
    %8536 = vmatprep.mubr.f32.mxu0 0.0
    %8537 = vmatmul.mubr.f32.gmra.mrb[0].mxu0 %v8415
    %v8538 = vpop.f32.mrb[0].mxu0
    %v8539 = vadd.f32 0.0, %v8538
    %v8540 = vpop.f32.mrb[0].mxu0
    %8541 = vmatprep.mubr.f32.mxu0 0.0
    %8542 = vmatmul.mubr.f32.gmra.mrb[0].mxu0 %v8418
    %v8543 = vpop.f32.mrb[0].mxu0
    %v8544 = vadd.f32 0.0, %v8543
    %v8545 = vpop.f32.mrb[0].mxu0
    %8546 = vmatprep.mubr.f32.mxu0 0.0
    %8547 = vmatmul.mubr.f32.gmra.mrb[0].mxu0 %v8421
    %v8548 = vpop.f32.mrb[0].mxu0
    %v8549 = vadd.f32 0.0, %v8548
    %v8550 = vpop.f32.mrb[0].mxu0
    %8551 = vmatprep.mubr.f32.mxu0 0.0
    %8552 = vmatmul.mubr.f32.gmra.mrb[0].mxu0 %v8424
    %v8553 = vpop.f32.mrb[0].mxu0
    %v8554 = vadd.f32 0.0, %v8553
    %v8555 = vpop.f32.mrb[0].mxu0
    %8556 = vmatprep.mubr.f32.mxu0 0.0
    %8557 = vmatmul.mubr.f32.gmra.mrb[0].mxu0 %v8427
    %v8558 = vpop.f32.mrb[0].mxu0
    %v8559 = vadd.f32 0.0, %v8558
    %v8560 = vpop.f32.mrb[0].mxu0
    %8561 = vmatprep.mubr.f32.mxu0 0.0
    %8562 = vmatmul.mubr.f32.gmra.mrb[0].mxu0 %v8430
    %v8563 = vpop.f32.mrb[0].mxu0
    %v8564 = vadd.f32 0.0, %v8563
    %v8565 = vpop.f32.mrb[0].mxu0
    %8566 = vmatprep.mubr.f32.mxu0 0.0
    %8567 = vmatmul.mubr.f32.gmra.mrb[0].mxu0 %v8433
    %v8568 = vpop.f32.mrb[0].mxu0
    %v8569 = vadd.f32 0.0, %v8568
    %v8570 = vpop.f32.mrb[0].mxu0
    %8571 = vmatprep.mubr.f32.mxu0 0.0
    %8572 = vmatmul.mubr.f32.gmra.mrb[0].mxu0 %v8436
    %v8573 = vpop.f32.mrb[0].mxu0
    %v8574 = vadd.f32 0.0, %v8573
    %v8575 = vpop.f32.mrb[0].mxu0
    %8576 = vmatprep.mubr.f32.mxu0 0.0
    %8577 = vmatmul.mubr.f32.gmra.mrb[0].mxu0 %v8439
    %v8578 = vpop.f32.mrb[0].mxu0
    %v8579 = vadd.f32 0.0, %v8578
    %v8580 = vpop.f32.mrb[0].mxu0
    %8581 = vmatprep.mubr.f32.mxu0 0.0
    %8582 = vmatmul.mubr.f32.gmra.mrb[0].mxu0 %v8442
    %v8583 = vpop.f32.mrb[0].mxu0
    %v8584 = vadd.f32 0.0, %v8583
    %v8585 = vpop.f32.mrb[0].mxu0
    %8586 = vmatprep.mubr.f32.mxu0 0.0
    %8587 = vmatmul.mubr.f32.gmra.mrb[0].mxu0 %v8445
    %v8588 = vpop.f32.mrb[0].mxu0
    %v8589 = vadd.f32 0.0, %v8588
    %v8590 = vpop.f32.mrb[0].mxu0
    %8591 = vdwg.mxu0
    %v8592 = vadd.f32 %v8380, %v8514
    %v8593 = vadd.f32 %v8381, %v8519
    %v8594 = vadd.f32 %v8382, %v8524
    %v8595 = vadd.f32 %v8383, %v8529
    %v8596 = vadd.f32 %v8384, %v8534
    %v8597 = vadd.f32 %v8385, %v8539
    %v8598 = vadd.f32 %v8386, %v8544
    %v8599 = vadd.f32 %v8387, %v8549
    %v8600 = vadd.f32 %v8388, %v8554
    %v8601 = vadd.f32 %v8389, %v8559
    %v8602 = vadd.f32 %v8390, %v8564
    %v8603 = vadd.f32 %v8391, %v8569
    %v8604 = vadd.f32 %v8392, %v8574
    %v8605 = vadd.f32 %v8393, %v8579
    %v8606 = vadd.f32 %v8394, %v8584
    %v8607 = vadd.f32 %v8395, %v8589
    %v8608 = vld [vmem:[#allocation8] sm:$0x1]
    %v8610 = vlaneseq
    %v8611 = vshrl.u32 %v8610, 7
    %v8612 = vsub.s32 0, %v8611
    %v8613 = vrot.slane %v8608, %v8612
    %v8615 = vadd.f32 %v8592, %v8613
    %v8616 = vadd.f32 %v8593, %v8613
    %v8617 = vadd.f32 %v8594, %v8613
    %v8618 = vadd.f32 %v8595, %v8613
    %v8619 = vadd.f32 %v8596, %v8613
    %v8620 = vadd.f32 %v8597, %v8613
    %v8621 = vadd.f32 %v8598, %v8613
    %v8622 = vadd.f32 %v8599, %v8613
    %v8623 = vadd.f32 %v8600, %v8613
    %v8624 = vadd.f32 %v8601, %v8613
    %v8625 = vadd.f32 %v8602, %v8613
    %v8626 = vadd.f32 %v8603, %v8613
    %v8627 = vadd.f32 %v8604, %v8613
    %v8628 = vadd.f32 %v8605, %v8613
    %v8629 = vadd.f32 %v8606, %v8613
    %v8630 = vadd.f32 %v8607, %v8613
    %v8631 = vmax.f32 %v8615, 0.0
    %v8632 = vmax.f32 %v8616, 0.0
    %v8633 = vmax.f32 %v8617, 0.0
    %v8634 = vmax.f32 %v8618, 0.0
    %v8635 = vmax.f32 %v8619, 0.0
    %v8636 = vmax.f32 %v8620, 0.0
    %v8637 = vmax.f32 %v8621, 0.0
    %v8638 = vmax.f32 %v8622, 0.0
    %v8639 = vmax.f32 %v8623, 0.0
    %v8640 = vmax.f32 %v8624, 0.0
    %v8641 = vmax.f32 %v8625, 0.0
    %v8642 = vmax.f32 %v8626, 0.0
    %v8643 = vmax.f32 %v8627, 0.0
    %v8644 = vmax.f32 %v8628, 0.0
    %v8645 = vmax.f32 %v8629, 0.0
    %v8646 = vmax.f32 %v8630, 0.0
    %v8647 = vmax.f32 %v8631, %v8635
    %v8648 = vmax.f32 %v8632, %v8636
    %v8649 = vmax.f32 %v8633, %v8637
    %v8650 = vmax.f32 %v8634, %v8638
    %v8651 = vmax.f32 %v8639, %v8643
    %v8652 = vmax.f32 %v8640, %v8644
    %v8653 = vmax.f32 %v8641, %v8645
    %v8654 = vmax.f32 %v8642, %v8646
    %v8655 = vmax.f32 %v8647, %v8651
    %v8656 = vmax.f32 %v8648, %v8652
    %v8657 = vmax.f32 %v8649, %v8653
    %v8658 = vmax.f32 %v8650, %v8654
    %v8659 = vld [vmem:[#allocation10] sm:$0xff]
    %v8660 = vld [vmem:[#allocation10 + $0x8] sm:$0xff]
    %v8661 = vld [vmem:[#allocation10 + $0x10] sm:$0xff]
    %v8662 = vld [vmem:[#allocation10 + $0x18] sm:$0xff]
    %s8663 = scalar_lea.vmem [#allocation10], 32
    %v8664 = vld [vmem:[%s8663] sm:$0xff]
    %v8665 = vld [vmem:[%s8663 + $0x8] sm:$0xff]
    %v8666 = vld [vmem:[%s8663 + $0x10] sm:$0xff]
    %v8667 = vld [vmem:[%s8663 + $0x18] sm:$0xff]
    %v8669 = vrot.slane %v8655, 2
    %vm8670 = vcmask 261120
    %v8671 = vsel %vm8670, %v8669, 0
    %8673 = vmatprep.subr.mxu0 0.0
    %8674 = vmatpush1.msra.mxu0 %v8664
    %8675 = vmatprep.subr.mxu0 0.0
    %8676 = vmatpush1.msra.mxu0 %v8665
    %8677 = vmatprep.subr.mxu0 0.0
    %8678 = vmatpush1.msra.mxu0 %v8666
    %8679 = vmatprep.subr.mxu0 0.0
    %8680 = vmatpush1.msra.mxu0 %v8667
    %8681 = vmatprep.subr.mxu0 0.0
    %8682 = vmatpush1.msra.mxu0 0.0
    %8683 = vmatprep.subr.mxu0 0.0
    %8684 = vmatpush1.msra.mxu0 0.0
    %8685 = vmatprep.subr.mxu0 0.0
    %8686 = vmatpush1.msra.mxu0 0.0
    %8687 = vmatprep.subr.mxu0 0.0
    %8688 = vmatpush1.msra.mxu0 0.0
    %8689 = vmatprep.subr.mxu0 0.0
    %8690 = vmatpush1.msra.mxu0 0.0
    %8691 = vmatprep.subr.mxu0 0.0
    %8692 = vmatpush1.msra.mxu0 0.0
    %8693 = vmatprep.subr.mxu0 0.0
    %8694 = vmatpush1.msra.mxu0 0.0
    %8695 = vmatprep.subr.mxu0 0.0
    %8696 = vmatpush1.msra.mxu0 0.0
    %8697 = vmatprep.subr.mxu0 0.0
    %8698 = vmatpush1.msra.mxu0 0.0
    %8699 = vmatprep.subr.mxu0 0.0
    %8700 = vmatpush1.msra.mxu0 0.0
    %8701 = vmatprep.subr.mxu0 0.0
    %8702 = vmatpush1.msra.mxu0 0.0
    %8703 = vmatprep.subr.mxu0 0.0
    %8704 = vmatpush1.msra.mxu0 0.0
    %8705 = vmatprep.subr.mxu0 0.0
    %8706 = vmatpush1.msra.mxu0 0.0
    %8707 = vmatprep.subr.mxu0 0.0
    %8708 = vmatpush1.msra.mxu0 0.0
    %8709 = vmatprep.subr.mxu0 0.0
    %8710 = vmatpush1.msra.mxu0 0.0
    %8711 = vmatprep.subr.mxu0 0.0
    %8712 = vmatpush1.msra.mxu0 0.0
    %8713 = vmatprep.subr.mxu0 0.0
    %8714 = vmatpush1.msra.mxu0 0.0
    %8715 = vmatprep.subr.mxu0 0.0
    %8716 = vmatpush1.msra.mxu0 0.0
    %8717 = vmatprep.subr.mxu0 0.0
    %8718 = vmatpush1.msra.mxu0 0.0
    %8719 = vmatprep.subr.mxu0 0.0
    %8720 = vmatpush1.msra.mxu0 0.0
    %8721 = vmatprep.subr.mxu0 0.0
    %8722 = vmatpush1.msra.mxu0 0.0
    %8723 = vmatprep.subr.mxu0 0.0
    %8724 = vmatpush1.msra.mxu0 0.0
    %8725 = vmatprep.subr.mxu0 0.0
    %8726 = vmatpush1.msra.mxu0 0.0
    %8727 = vmatprep.subr.mxu0 0.0
    %8728 = vmatpush1.msra.mxu0 0.0
    %8729 = vmatprep.subr.mxu0 0.0
    %8730 = vmatpush1.msra.mxu0 0.0
    %8731 = vmatprep.subr.mxu0 0.0
    %8732 = vmatpush1.msra.mxu0 0.0
    %8733 = vmatprep.subr.mxu0 0.0
    %8734 = vmatpush1.msra.mxu0 0.0
    %8735 = vmatprep.subr.mxu0 0.0
    %8736 = vmatpush1.msra.mxu0 0.0
    %8737 = vmatprep.mubr.f32.mxu0 0.0
    %8738 = vmatmul.mubr.f32.gmra.mrb[0].mxu0 %v8671
    %v8739 = vpop.f32.mrb[0].mxu0
    %v8740 = vadd.f32 0.0, %v8739
    %v8741 = vpop.f32.mrb[0].mxu0
    %8742 = vdwg.mxu0
    %v8743 = vsel %vm8670, %v8655, 0
    %8745 = vmatprep.subr.mxu0 0.0
    %8746 = vmatpush1.msra.mxu0 %v8659
    %8747 = vmatprep.subr.mxu0 0.0
    %8748 = vmatpush1.msra.mxu0 %v8660
    %8749 = vmatprep.subr.mxu0 0.0
    %8750 = vmatpush1.msra.mxu0 %v8661
    %8751 = vmatprep.subr.mxu0 0.0
    %8752 = vmatpush1.msra.mxu0 %v8662
    %8753 = vmatprep.subr.mxu0 0.0
    %8754 = vmatpush1.msra.mxu0 0.0
    %8755 = vmatprep.subr.mxu0 0.0
    %8756 = vmatpush1.msra.mxu0 0.0
    %8757 = vmatprep.subr.mxu0 0.0
    %8758 = vmatpush1.msra.mxu0 0.0
    %8759 = vmatprep.subr.mxu0 0.0
    %8760 = vmatpush1.msra.mxu0 0.0
    %8761 = vmatprep.subr.mxu0 0.0
    %8762 = vmatpush1.msra.mxu0 0.0
    %8763 = vmatprep.subr.mxu0 0.0
    %8764 = vmatpush1.msra.mxu0 0.0
    %8765 = vmatprep.subr.mxu0 0.0
    %8766 = vmatpush1.msra.mxu0 0.0
    %8767 = vmatprep.subr.mxu0 0.0
    %8768 = vmatpush1.msra.mxu0 0.0
    %8769 = vmatprep.subr.mxu0 0.0
    %8770 = vmatpush1.msra.mxu0 0.0
    %8771 = vmatprep.subr.mxu0 0.0
    %8772 = vmatpush1.msra.mxu0 0.0
    %8773 = vmatprep.subr.mxu0 0.0
    %8774 = vmatpush1.msra.mxu0 0.0
    %8775 = vmatprep.subr.mxu0 0.0
    %8776 = vmatpush1.msra.mxu0 0.0
    %8777 = vmatprep.subr.mxu0 0.0
    %8778 = vmatpush1.msra.mxu0 0.0
    %8779 = vmatprep.subr.mxu0 0.0
    %8780 = vmatpush1.msra.mxu0 0.0
    %8781 = vmatprep.subr.mxu0 0.0
    %8782 = vmatpush1.msra.mxu0 0.0
    %8783 = vmatprep.subr.mxu0 0.0
    %8784 = vmatpush1.msra.mxu0 0.0
    %8785 = vmatprep.subr.mxu0 0.0
    %8786 = vmatpush1.msra.mxu0 0.0
    %8787 = vmatprep.subr.mxu0 0.0
    %8788 = vmatpush1.msra.mxu0 0.0
    %8789 = vmatprep.subr.mxu0 0.0
    %8790 = vmatpush1.msra.mxu0 0.0
    %8791 = vmatprep.subr.mxu0 0.0
    %8792 = vmatpush1.msra.mxu0 0.0
    %8793 = vmatprep.subr.mxu0 0.0
    %8794 = vmatpush1.msra.mxu0 0.0
    %8795 = vmatprep.subr.mxu0 0.0
    %8796 = vmatpush1.msra.mxu0 0.0
    %8797 = vmatprep.subr.mxu0 0.0
    %8798 = vmatpush1.msra.mxu0 0.0
    %8799 = vmatprep.subr.mxu0 0.0
    %8800 = vmatpush1.msra.mxu0 0.0
    %8801 = vmatprep.subr.mxu0 0.0
    %8802 = vmatpush1.msra.mxu0 0.0
    %8803 = vmatprep.subr.mxu0 0.0
    %8804 = vmatpush1.msra.mxu0 0.0
    %8805 = vmatprep.subr.mxu0 0.0
    %8806 = vmatpush1.msra.mxu0 0.0
    %8807 = vmatprep.subr.mxu0 0.0
    %8808 = vmatpush1.msra.mxu0 0.0
    %8809 = vmatprep.mubr.f32.mxu0 0.0
    %8810 = vmatmul.mubr.f32.gmra.mrb[0].mxu0 %v8743
    %v8811 = vpop.f32.mrb[0].mxu0
    %v8812 = vadd.f32 %v8740, %v8811
    %v8813 = vpop.f32.mrb[0].mxu0
    %8814 = vdwg.mxu0
    %s8815 = scalar_lea.vmem [#allocation10], 64
    %v8816 = vld [vmem:[%s8815] sm:$0xff]
    %v8817 = vld [vmem:[%s8815 + $0x8] sm:$0xff]
    %v8818 = vld [vmem:[%s8815 + $0x10] sm:$0xff]
    %v8819 = vld [vmem:[%s8815 + $0x18] sm:$0xff]
    %v8820 = vrot.slane %v8655, 4
    %v8821 = vsel %vm8670, %v8820, 0
    %8823 = vmatprep.subr.mxu0 0.0
    %8824 = vmatpush1.msra.mxu0 %v8816
    %8825 = vmatprep.subr.mxu0 0.0
    %8826 = vmatpush1.msra.mxu0 %v8817
    %8827 = vmatprep.subr.mxu0 0.0
    %8828 = vmatpush1.msra.mxu0 %v8818
    %8829 = vmatprep.subr.mxu0 0.0
    %8830 = vmatpush1.msra.mxu0 %v8819
    %8831 = vmatprep.subr.mxu0 0.0
    %8832 = vmatpush1.msra.mxu0 0.0
    %8833 = vmatprep.subr.mxu0 0.0
    %8834 = vmatpush1.msra.mxu0 0.0
    %8835 = vmatprep.subr.mxu0 0.0
    %8836 = vmatpush1.msra.mxu0 0.0
    %8837 = vmatprep.subr.mxu0 0.0
    %8838 = vmatpush1.msra.mxu0 0.0
    %8839 = vmatprep.subr.mxu0 0.0
    %8840 = vmatpush1.msra.mxu0 0.0
    %8841 = vmatprep.subr.mxu0 0.0
    %8842 = vmatpush1.msra.mxu0 0.0
    %8843 = vmatprep.subr.mxu0 0.0
    %8844 = vmatpush1.msra.mxu0 0.0
    %8845 = vmatprep.subr.mxu0 0.0
    %8846 = vmatpush1.msra.mxu0 0.0
    %8847 = vmatprep.subr.mxu0 0.0
    %8848 = vmatpush1.msra.mxu0 0.0
    %8849 = vmatprep.subr.mxu0 0.0
    %8850 = vmatpush1.msra.mxu0 0.0
    %8851 = vmatprep.subr.mxu0 0.0
    %8852 = vmatpush1.msra.mxu0 0.0
    %8853 = vmatprep.subr.mxu0 0.0
    %8854 = vmatpush1.msra.mxu0 0.0
    %8855 = vmatprep.subr.mxu0 0.0
    %8856 = vmatpush1.msra.mxu0 0.0
    %8857 = vmatprep.subr.mxu0 0.0
    %8858 = vmatpush1.msra.mxu0 0.0
    %8859 = vmatprep.subr.mxu0 0.0
    %8860 = vmatpush1.msra.mxu0 0.0
    %8861 = vmatprep.subr.mxu0 0.0
    %8862 = vmatpush1.msra.mxu0 0.0
    %8863 = vmatprep.subr.mxu0 0.0
    %8864 = vmatpush1.msra.mxu0 0.0
    %8865 = vmatprep.subr.mxu0 0.0
    %8866 = vmatpush1.msra.mxu0 0.0
    %8867 = vmatprep.subr.mxu0 0.0
    %8868 = vmatpush1.msra.mxu0 0.0
    %8869 = vmatprep.subr.mxu0 0.0
    %8870 = vmatpush1.msra.mxu0 0.0
    %8871 = vmatprep.subr.mxu0 0.0
    %8872 = vmatpush1.msra.mxu0 0.0
    %8873 = vmatprep.subr.mxu0 0.0
    %8874 = vmatpush1.msra.mxu0 0.0
    %8875 = vmatprep.subr.mxu0 0.0
    %8876 = vmatpush1.msra.mxu0 0.0
    %8877 = vmatprep.subr.mxu0 0.0
    %8878 = vmatpush1.msra.mxu0 0.0
    %8879 = vmatprep.subr.mxu0 0.0
    %8880 = vmatpush1.msra.mxu0 0.0
    %8881 = vmatprep.subr.mxu0 0.0
    %8882 = vmatpush1.msra.mxu0 0.0
    %8883 = vmatprep.subr.mxu0 0.0
    %8884 = vmatpush1.msra.mxu0 0.0
    %8885 = vmatprep.subr.mxu0 0.0
    %8886 = vmatpush1.msra.mxu0 0.0
    %8887 = vmatprep.mubr.f32.mxu0 0.0
    %8888 = vmatmul.mubr.f32.gmra.mrb[0].mxu0 %v8821
    %v8889 = vpop.f32.mrb[0].mxu0
    %v8890 = vadd.f32 0.0, %v8889
    %v8891 = vpop.f32.mrb[0].mxu0
    %8892 = vdwg.mxu0
    %v8893 = vadd.f32 %v8812, %v8890
    %s8894 = scalar_lea.vmem [#allocation10], 96
    %v8895 = vld [vmem:[%s8894] sm:$0xff]
    %v8896 = vld [vmem:[%s8894 + $0x8] sm:$0xff]
    %v8897 = vld [vmem:[%s8894 + $0x10] sm:$0xff]
    %v8898 = vld [vmem:[%s8894 + $0x18] sm:$0xff]
    %v8899 = vrot.slane %v8655, 6
    %v8900 = vsel %vm8670, %v8899, 0
    %8902 = vmatprep.subr.mxu0 0.0
    %8903 = vmatpush1.msra.mxu0 %v8895
    %8904 = vmatprep.subr.mxu0 0.0
    %8905 = vmatpush1.msra.mxu0 %v8896
    %8906 = vmatprep.subr.mxu0 0.0
    %8907 = vmatpush1.msra.mxu0 %v8897
    %8908 = vmatprep.subr.mxu0 0.0
    %8909 = vmatpush1.msra.mxu0 %v8898
    %8910 = vmatprep.subr.mxu0 0.0
    %8911 = vmatpush1.msra.mxu0 0.0
    %8912 = vmatprep.subr.mxu0 0.0
    %8913 = vmatpush1.msra.mxu0 0.0
    %8914 = vmatprep.subr.mxu0 0.0
    %8915 = vmatpush1.msra.mxu0 0.0
    %8916 = vmatprep.subr.mxu0 0.0
    %8917 = vmatpush1.msra.mxu0 0.0
    %8918 = vmatprep.subr.mxu0 0.0
    %8919 = vmatpush1.msra.mxu0 0.0
    %8920 = vmatprep.subr.mxu0 0.0
    %8921 = vmatpush1.msra.mxu0 0.0
    %8922 = vmatprep.subr.mxu0 0.0
    %8923 = vmatpush1.msra.mxu0 0.0
    %8924 = vmatprep.subr.mxu0 0.0
    %8925 = vmatpush1.msra.mxu0 0.0
    %8926 = vmatprep.subr.mxu0 0.0
    %8927 = vmatpush1.msra.mxu0 0.0
    %8928 = vmatprep.subr.mxu0 0.0
    %8929 = vmatpush1.msra.mxu0 0.0
    %8930 = vmatprep.subr.mxu0 0.0
    %8931 = vmatpush1.msra.mxu0 0.0
    %8932 = vmatprep.subr.mxu0 0.0
    %8933 = vmatpush1.msra.mxu0 0.0
    %8934 = vmatprep.subr.mxu0 0.0
    %8935 = vmatpush1.msra.mxu0 0.0
    %8936 = vmatprep.subr.mxu0 0.0
    %8937 = vmatpush1.msra.mxu0 0.0
    %8938 = vmatprep.subr.mxu0 0.0
    %8939 = vmatpush1.msra.mxu0 0.0
    %8940 = vmatprep.subr.mxu0 0.0
    %8941 = vmatpush1.msra.mxu0 0.0
    %8942 = vmatprep.subr.mxu0 0.0
    %8943 = vmatpush1.msra.mxu0 0.0
    %8944 = vmatprep.subr.mxu0 0.0
    %8945 = vmatpush1.msra.mxu0 0.0
    %8946 = vmatprep.subr.mxu0 0.0
    %8947 = vmatpush1.msra.mxu0 0.0
    %8948 = vmatprep.subr.mxu0 0.0
    %8949 = vmatpush1.msra.mxu0 0.0
    %8950 = vmatprep.subr.mxu0 0.0
    %8951 = vmatpush1.msra.mxu0 0.0
    %8952 = vmatprep.subr.mxu0 0.0
    %8953 = vmatpush1.msra.mxu0 0.0
    %8954 = vmatprep.subr.mxu0 0.0
    %8955 = vmatpush1.msra.mxu0 0.0
    %8956 = vmatprep.subr.mxu0 0.0
    %8957 = vmatpush1.msra.mxu0 0.0
    %8958 = vmatprep.subr.mxu0 0.0
    %8959 = vmatpush1.msra.mxu0 0.0
    %8960 = vmatprep.subr.mxu0 0.0
    %8961 = vmatpush1.msra.mxu0 0.0
    %8962 = vmatprep.subr.mxu0 0.0
    %8963 = vmatpush1.msra.mxu0 0.0
    %8964 = vmatprep.subr.mxu0 0.0
    %8965 = vmatpush1.msra.mxu0 0.0
    %8966 = vmatprep.mubr.f32.mxu0 0.0
    %8967 = vmatmul.mubr.f32.gmra.mrb[0].mxu0 %v8900
    %v8968 = vpop.f32.mrb[0].mxu0
    %v8969 = vadd.f32 0.0, %v8968
    %v8970 = vpop.f32.mrb[0].mxu0
    %8971 = vdwg.mxu0
    %v8972 = vadd.f32 %v8893, %v8969
    %s8973 = scalar_lea.vmem [#allocation10], 128
    %v8974 = vld [vmem:[%s8973] sm:$0xff]
    %v8975 = vld [vmem:[%s8973 + $0x8] sm:$0xff]
    %v8976 = vld [vmem:[%s8973 + $0x10] sm:$0xff]
    %v8977 = vld [vmem:[%s8973 + $0x18] sm:$0xff]
    %v8979 = vsel %vm8670, %v8656, 0
    %8981 = vmatprep.subr.mxu0 0.0
    %8982 = vmatpush1.msra.mxu0 %v8974
    %8983 = vmatprep.subr.mxu0 0.0
    %8984 = vmatpush1.msra.mxu0 %v8975
    %8985 = vmatprep.subr.mxu0 0.0
    %8986 = vmatpush1.msra.mxu0 %v8976
    %8987 = vmatprep.subr.mxu0 0.0
    %8988 = vmatpush1.msra.mxu0 %v8977
    %8989 = vmatprep.subr.mxu0 0.0
    %8990 = vmatpush1.msra.mxu0 0.0
    %8991 = vmatprep.subr.mxu0 0.0
    %8992 = vmatpush1.msra.mxu0 0.0
    %8993 = vmatprep.subr.mxu0 0.0
    %8994 = vmatpush1.msra.mxu0 0.0
    %8995 = vmatprep.subr.mxu0 0.0
    %8996 = vmatpush1.msra.mxu0 0.0
    %8997 = vmatprep.subr.mxu0 0.0
    %8998 = vmatpush1.msra.mxu0 0.0
    %8999 = vmatprep.subr.mxu0 0.0
    %9000 = vmatpush1.msra.mxu0 0.0
    %9001 = vmatprep.subr.mxu0 0.0
    %9002 = vmatpush1.msra.mxu0 0.0
    %9003 = vmatprep.subr.mxu0 0.0
    %9004 = vmatpush1.msra.mxu0 0.0
    %9005 = vmatprep.subr.mxu0 0.0
    %9006 = vmatpush1.msra.mxu0 0.0
    %9007 = vmatprep.subr.mxu0 0.0
    %9008 = vmatpush1.msra.mxu0 0.0
    %9009 = vmatprep.subr.mxu0 0.0
    %9010 = vmatpush1.msra.mxu0 0.0
    %9011 = vmatprep.subr.mxu0 0.0
    %9012 = vmatpush1.msra.mxu0 0.0
    %9013 = vmatprep.subr.mxu0 0.0
    %9014 = vmatpush1.msra.mxu0 0.0
    %9015 = vmatprep.subr.mxu0 0.0
    %9016 = vmatpush1.msra.mxu0 0.0
    %9017 = vmatprep.subr.mxu0 0.0
    %9018 = vmatpush1.msra.mxu0 0.0
    %9019 = vmatprep.subr.mxu0 0.0
    %9020 = vmatpush1.msra.mxu0 0.0
    %9021 = vmatprep.subr.mxu0 0.0
    %9022 = vmatpush1.msra.mxu0 0.0
    %9023 = vmatprep.subr.mxu0 0.0
    %9024 = vmatpush1.msra.mxu0 0.0
    %9025 = vmatprep.subr.mxu0 0.0
    %9026 = vmatpush1.msra.mxu0 0.0
    %9027 = vmatprep.subr.mxu0 0.0
    %9028 = vmatpush1.msra.mxu0 0.0
    %9029 = vmatprep.subr.mxu0 0.0
    %9030 = vmatpush1.msra.mxu0 0.0
    %9031 = vmatprep.subr.mxu0 0.0
    %9032 = vmatpush1.msra.mxu0 0.0
    %9033 = vmatprep.subr.mxu0 0.0
    %9034 = vmatpush1.msra.mxu0 0.0
    %9035 = vmatprep.subr.mxu0 0.0
    %9036 = vmatpush1.msra.mxu0 0.0
    %9037 = vmatprep.subr.mxu0 0.0
    %9038 = vmatpush1.msra.mxu0 0.0
    %9039 = vmatprep.subr.mxu0 0.0
    %9040 = vmatpush1.msra.mxu0 0.0
    %9041 = vmatprep.subr.mxu0 0.0
    %9042 = vmatpush1.msra.mxu0 0.0
    %9043 = vmatprep.subr.mxu0 0.0
    %9044 = vmatpush1.msra.mxu0 0.0
    %9045 = vmatprep.mubr.f32.mxu0 0.0
    %9046 = vmatmul.mubr.f32.gmra.mrb[0].mxu0 %v8979
    %v9047 = vpop.f32.mrb[0].mxu0
    %v9048 = vadd.f32 0.0, %v9047
    %v9049 = vpop.f32.mrb[0].mxu0
    %9050 = vdwg.mxu0
    %v9051 = vadd.f32 %v8972, %v9048
    %s9052 = scalar_lea.vmem [#allocation10], 160
    %v9053 = vld [vmem:[%s9052] sm:$0xff]
    %v9054 = vld [vmem:[%s9052 + $0x8] sm:$0xff]
    %v9055 = vld [vmem:[%s9052 + $0x10] sm:$0xff]
    %v9056 = vld [vmem:[%s9052 + $0x18] sm:$0xff]
    %v9057 = vrot.slane %v8656, 2
    %v9058 = vsel %vm8670, %v9057, 0
    %9060 = vmatprep.subr.mxu0 0.0
    %9061 = vmatpush1.msra.mxu0 %v9053
    %9062 = vmatprep.subr.mxu0 0.0
    %9063 = vmatpush1.msra.mxu0 %v9054
    %9064 = vmatprep.subr.mxu0 0.0
    %9065 = vmatpush1.msra.mxu0 %v9055
    %9066 = vmatprep.subr.mxu0 0.0
    %9067 = vmatpush1.msra.mxu0 %v9056
    %9068 = vmatprep.subr.mxu0 0.0
    %9069 = vmatpush1.msra.mxu0 0.0
    %9070 = vmatprep.subr.mxu0 0.0
    %9071 = vmatpush1.msra.mxu0 0.0
    %9072 = vmatprep.subr.mxu0 0.0
    %9073 = vmatpush1.msra.mxu0 0.0
    %9074 = vmatprep.subr.mxu0 0.0
    %9075 = vmatpush1.msra.mxu0 0.0
    %9076 = vmatprep.subr.mxu0 0.0
    %9077 = vmatpush1.msra.mxu0 0.0
    %9078 = vmatprep.subr.mxu0 0.0
    %9079 = vmatpush1.msra.mxu0 0.0
    %9080 = vmatprep.subr.mxu0 0.0
    %9081 = vmatpush1.msra.mxu0 0.0
    %9082 = vmatprep.subr.mxu0 0.0
    %9083 = vmatpush1.msra.mxu0 0.0
    %9084 = vmatprep.subr.mxu0 0.0
    %9085 = vmatpush1.msra.mxu0 0.0
    %9086 = vmatprep.subr.mxu0 0.0
    %9087 = vmatpush1.msra.mxu0 0.0
    %9088 = vmatprep.subr.mxu0 0.0
    %9089 = vmatpush1.msra.mxu0 0.0
    %9090 = vmatprep.subr.mxu0 0.0
    %9091 = vmatpush1.msra.mxu0 0.0
    %9092 = vmatprep.subr.mxu0 0.0
    %9093 = vmatpush1.msra.mxu0 0.0
    %9094 = vmatprep.subr.mxu0 0.0
    %9095 = vmatpush1.msra.mxu0 0.0
    %9096 = vmatprep.subr.mxu0 0.0
    %9097 = vmatpush1.msra.mxu0 0.0
    %9098 = vmatprep.subr.mxu0 0.0
    %9099 = vmatpush1.msra.mxu0 0.0
    %9100 = vmatprep.subr.mxu0 0.0
    %9101 = vmatpush1.msra.mxu0 0.0
    %9102 = vmatprep.subr.mxu0 0.0
    %9103 = vmatpush1.msra.mxu0 0.0
    %9104 = vmatprep.subr.mxu0 0.0
    %9105 = vmatpush1.msra.mxu0 0.0
    %9106 = vmatprep.subr.mxu0 0.0
    %9107 = vmatpush1.msra.mxu0 0.0
    %9108 = vmatprep.subr.mxu0 0.0
    %9109 = vmatpush1.msra.mxu0 0.0
    %9110 = vmatprep.subr.mxu0 0.0
    %9111 = vmatpush1.msra.mxu0 0.0
    %9112 = vmatprep.subr.mxu0 0.0
    %9113 = vmatpush1.msra.mxu0 0.0
    %9114 = vmatprep.subr.mxu0 0.0
    %9115 = vmatpush1.msra.mxu0 0.0
    %9116 = vmatprep.subr.mxu0 0.0
    %9117 = vmatpush1.msra.mxu0 0.0
    %9118 = vmatprep.subr.mxu0 0.0
    %9119 = vmatpush1.msra.mxu0 0.0
    %9120 = vmatprep.subr.mxu0 0.0
    %9121 = vmatpush1.msra.mxu0 0.0
    %9122 = vmatprep.subr.mxu0 0.0
    %9123 = vmatpush1.msra.mxu0 0.0
    %9124 = vmatprep.mubr.f32.mxu0 0.0
    %9125 = vmatmul.mubr.f32.gmra.mrb[0].mxu0 %v9058
    %v9126 = vpop.f32.mrb[0].mxu0
    %v9127 = vadd.f32 0.0, %v9126
    %v9128 = vpop.f32.mrb[0].mxu0
    %9129 = vdwg.mxu0
    %v9130 = vadd.f32 %v9051, %v9127
    %s9131 = scalar_lea.vmem [#allocation10], 192
    %v9132 = vld [vmem:[%s9131] sm:$0xff]
    %v9133 = vld [vmem:[%s9131 + $0x8] sm:$0xff]
    %v9134 = vld [vmem:[%s9131 + $0x10] sm:$0xff]
    %v9135 = vld [vmem:[%s9131 + $0x18] sm:$0xff]
    %v9136 = vrot.slane %v8656, 4
    %v9137 = vsel %vm8670, %v9136, 0
    %9139 = vmatprep.subr.mxu0 0.0
    %9140 = vmatpush1.msra.mxu0 %v9132
    %9141 = vmatprep.subr.mxu0 0.0
    %9142 = vmatpush1.msra.mxu0 %v9133
    %9143 = vmatprep.subr.mxu0 0.0
    %9144 = vmatpush1.msra.mxu0 %v9134
    %9145 = vmatprep.subr.mxu0 0.0
    %9146 = vmatpush1.msra.mxu0 %v9135
    %9147 = vmatprep.subr.mxu0 0.0
    %9148 = vmatpush1.msra.mxu0 0.0
    %9149 = vmatprep.subr.mxu0 0.0
    %9150 = vmatpush1.msra.mxu0 0.0
    %9151 = vmatprep.subr.mxu0 0.0
    %9152 = vmatpush1.msra.mxu0 0.0
    %9153 = vmatprep.subr.mxu0 0.0
    %9154 = vmatpush1.msra.mxu0 0.0
    %9155 = vmatprep.subr.mxu0 0.0
    %9156 = vmatpush1.msra.mxu0 0.0
    %9157 = vmatprep.subr.mxu0 0.0
    %9158 = vmatpush1.msra.mxu0 0.0
    %9159 = vmatprep.subr.mxu0 0.0
    %9160 = vmatpush1.msra.mxu0 0.0
    %9161 = vmatprep.subr.mxu0 0.0
    %9162 = vmatpush1.msra.mxu0 0.0
    %9163 = vmatprep.subr.mxu0 0.0
    %9164 = vmatpush1.msra.mxu0 0.0
    %9165 = vmatprep.subr.mxu0 0.0
    %9166 = vmatpush1.msra.mxu0 0.0
    %9167 = vmatprep.subr.mxu0 0.0
    %9168 = vmatpush1.msra.mxu0 0.0
    %9169 = vmatprep.subr.mxu0 0.0
    %9170 = vmatpush1.msra.mxu0 0.0
    %9171 = vmatprep.subr.mxu0 0.0
    %9172 = vmatpush1.msra.mxu0 0.0
    %9173 = vmatprep.subr.mxu0 0.0
    %9174 = vmatpush1.msra.mxu0 0.0
    %9175 = vmatprep.subr.mxu0 0.0
    %9176 = vmatpush1.msra.mxu0 0.0
    %9177 = vmatprep.subr.mxu0 0.0
    %9178 = vmatpush1.msra.mxu0 0.0
    %9179 = vmatprep.subr.mxu0 0.0
    %9180 = vmatpush1.msra.mxu0 0.0
    %9181 = vmatprep.subr.mxu0 0.0
    %9182 = vmatpush1.msra.mxu0 0.0
    %9183 = vmatprep.subr.mxu0 0.0
    %9184 = vmatpush1.msra.mxu0 0.0
    %9185 = vmatprep.subr.mxu0 0.0
    %9186 = vmatpush1.msra.mxu0 0.0
    %9187 = vmatprep.subr.mxu0 0.0
    %9188 = vmatpush1.msra.mxu0 0.0
    %9189 = vmatprep.subr.mxu0 0.0
    %9190 = vmatpush1.msra.mxu0 0.0
    %9191 = vmatprep.subr.mxu0 0.0
    %9192 = vmatpush1.msra.mxu0 0.0
    %9193 = vmatprep.subr.mxu0 0.0
    %9194 = vmatpush1.msra.mxu0 0.0
    %9195 = vmatprep.subr.mxu0 0.0
    %9196 = vmatpush1.msra.mxu0 0.0
    %9197 = vmatprep.subr.mxu0 0.0
    %9198 = vmatpush1.msra.mxu0 0.0
    %9199 = vmatprep.subr.mxu0 0.0
    %9200 = vmatpush1.msra.mxu0 0.0
    %9201 = vmatprep.subr.mxu0 0.0
    %9202 = vmatpush1.msra.mxu0 0.0
    %9203 = vmatprep.mubr.f32.mxu0 0.0
    %9204 = vmatmul.mubr.f32.gmra.mrb[0].mxu0 %v9137
    %v9205 = vpop.f32.mrb[0].mxu0
    %v9206 = vadd.f32 0.0, %v9205
    %v9207 = vpop.f32.mrb[0].mxu0
    %9208 = vdwg.mxu0
    %v9209 = vadd.f32 %v9130, %v9206
    %s9210 = scalar_lea.vmem [#allocation10], 224
    %v9211 = vld [vmem:[%s9210] sm:$0xff]
    %v9212 = vld [vmem:[%s9210 + $0x8] sm:$0xff]
    %v9213 = vld [vmem:[%s9210 + $0x10] sm:$0xff]
    %v9214 = vld [vmem:[%s9210 + $0x18] sm:$0xff]
    %v9215 = vrot.slane %v8656, 6
    %v9216 = vsel %vm8670, %v9215, 0
    %9218 = vmatprep.subr.mxu0 0.0
    %9219 = vmatpush1.msra.mxu0 %v9211
    %9220 = vmatprep.subr.mxu0 0.0
    %9221 = vmatpush1.msra.mxu0 %v9212
    %9222 = vmatprep.subr.mxu0 0.0
    %9223 = vmatpush1.msra.mxu0 %v9213
    %9224 = vmatprep.subr.mxu0 0.0
    %9225 = vmatpush1.msra.mxu0 %v9214
    %9226 = vmatprep.subr.mxu0 0.0
    %9227 = vmatpush1.msra.mxu0 0.0
    %9228 = vmatprep.subr.mxu0 0.0
    %9229 = vmatpush1.msra.mxu0 0.0
    %9230 = vmatprep.subr.mxu0 0.0
    %9231 = vmatpush1.msra.mxu0 0.0
    %9232 = vmatprep.subr.mxu0 0.0
    %9233 = vmatpush1.msra.mxu0 0.0
    %9234 = vmatprep.subr.mxu0 0.0
    %9235 = vmatpush1.msra.mxu0 0.0
    %9236 = vmatprep.subr.mxu0 0.0
    %9237 = vmatpush1.msra.mxu0 0.0
    %9238 = vmatprep.subr.mxu0 0.0
    %9239 = vmatpush1.msra.mxu0 0.0
    %9240 = vmatprep.subr.mxu0 0.0
    %9241 = vmatpush1.msra.mxu0 0.0
    %9242 = vmatprep.subr.mxu0 0.0
    %9243 = vmatpush1.msra.mxu0 0.0
    %9244 = vmatprep.subr.mxu0 0.0
    %9245 = vmatpush1.msra.mxu0 0.0
    %9246 = vmatprep.subr.mxu0 0.0
    %9247 = vmatpush1.msra.mxu0 0.0
    %9248 = vmatprep.subr.mxu0 0.0
    %9249 = vmatpush1.msra.mxu0 0.0
    %9250 = vmatprep.subr.mxu0 0.0
    %9251 = vmatpush1.msra.mxu0 0.0
    %9252 = vmatprep.subr.mxu0 0.0
    %9253 = vmatpush1.msra.mxu0 0.0
    %9254 = vmatprep.subr.mxu0 0.0
    %9255 = vmatpush1.msra.mxu0 0.0
    %9256 = vmatprep.subr.mxu0 0.0
    %9257 = vmatpush1.msra.mxu0 0.0
    %9258 = vmatprep.subr.mxu0 0.0
    %9259 = vmatpush1.msra.mxu0 0.0
    %9260 = vmatprep.subr.mxu0 0.0
    %9261 = vmatpush1.msra.mxu0 0.0
    %9262 = vmatprep.subr.mxu0 0.0
    %9263 = vmatpush1.msra.mxu0 0.0
    %9264 = vmatprep.subr.mxu0 0.0
    %9265 = vmatpush1.msra.mxu0 0.0
    %9266 = vmatprep.subr.mxu0 0.0
    %9267 = vmatpush1.msra.mxu0 0.0
    %9268 = vmatprep.subr.mxu0 0.0
    %9269 = vmatpush1.msra.mxu0 0.0
    %9270 = vmatprep.subr.mxu0 0.0
    %9271 = vmatpush1.msra.mxu0 0.0
    %9272 = vmatprep.subr.mxu0 0.0
    %9273 = vmatpush1.msra.mxu0 0.0
    %9274 = vmatprep.subr.mxu0 0.0
    %9275 = vmatpush1.msra.mxu0 0.0
    %9276 = vmatprep.subr.mxu0 0.0
    %9277 = vmatpush1.msra.mxu0 0.0
    %9278 = vmatprep.subr.mxu0 0.0
    %9279 = vmatpush1.msra.mxu0 0.0
    %9280 = vmatprep.subr.mxu0 0.0
    %9281 = vmatpush1.msra.mxu0 0.0
    %9282 = vmatprep.mubr.f32.mxu0 0.0
    %9283 = vmatmul.mubr.f32.gmra.mrb[0].mxu0 %v9216
    %v9284 = vpop.f32.mrb[0].mxu0
    %v9285 = vadd.f32 0.0, %v9284
    %v9286 = vpop.f32.mrb[0].mxu0
    %9287 = vdwg.mxu0
    %v9288 = vadd.f32 %v9209, %v9285
    %s9289 = scalar_lea.vmem [#allocation10], 256
    %v9290 = vld [vmem:[%s9289] sm:$0xff]
    %v9291 = vld [vmem:[%s9289 + $0x8] sm:$0xff]
    %v9292 = vld [vmem:[%s9289 + $0x10] sm:$0xff]
    %v9293 = vld [vmem:[%s9289 + $0x18] sm:$0xff]
    %v9295 = vsel %vm8670, %v8657, 0
    %9297 = vmatprep.subr.mxu0 0.0
    %9298 = vmatpush1.msra.mxu0 %v9290
    %9299 = vmatprep.subr.mxu0 0.0
    %9300 = vmatpush1.msra.mxu0 %v9291
    %9301 = vmatprep.subr.mxu0 0.0
    %9302 = vmatpush1.msra.mxu0 %v9292
    %9303 = vmatprep.subr.mxu0 0.0
    %9304 = vmatpush1.msra.mxu0 %v9293
    %9305 = vmatprep.subr.mxu0 0.0
    %9306 = vmatpush1.msra.mxu0 0.0
    %9307 = vmatprep.subr.mxu0 0.0
    %9308 = vmatpush1.msra.mxu0 0.0
    %9309 = vmatprep.subr.mxu0 0.0
    %9310 = vmatpush1.msra.mxu0 0.0
    %9311 = vmatprep.subr.mxu0 0.0
    %9312 = vmatpush1.msra.mxu0 0.0
    %9313 = vmatprep.subr.mxu0 0.0
    %9314 = vmatpush1.msra.mxu0 0.0
    %9315 = vmatprep.subr.mxu0 0.0
    %9316 = vmatpush1.msra.mxu0 0.0
    %9317 = vmatprep.subr.mxu0 0.0
    %9318 = vmatpush1.msra.mxu0 0.0
    %9319 = vmatprep.subr.mxu0 0.0
    %9320 = vmatpush1.msra.mxu0 0.0
    %9321 = vmatprep.subr.mxu0 0.0
    %9322 = vmatpush1.msra.mxu0 0.0
    %9323 = vmatprep.subr.mxu0 0.0
    %9324 = vmatpush1.msra.mxu0 0.0
    %9325 = vmatprep.subr.mxu0 0.0
    %9326 = vmatpush1.msra.mxu0 0.0
    %9327 = vmatprep.subr.mxu0 0.0
    %9328 = vmatpush1.msra.mxu0 0.0
    %9329 = vmatprep.subr.mxu0 0.0
    %9330 = vmatpush1.msra.mxu0 0.0
    %9331 = vmatprep.subr.mxu0 0.0
    %9332 = vmatpush1.msra.mxu0 0.0
    %9333 = vmatprep.subr.mxu0 0.0
    %9334 = vmatpush1.msra.mxu0 0.0
    %9335 = vmatprep.subr.mxu0 0.0
    %9336 = vmatpush1.msra.mxu0 0.0
    %9337 = vmatprep.subr.mxu0 0.0
    %9338 = vmatpush1.msra.mxu0 0.0
    %9339 = vmatprep.subr.mxu0 0.0
    %9340 = vmatpush1.msra.mxu0 0.0
    %9341 = vmatprep.subr.mxu0 0.0
    %9342 = vmatpush1.msra.mxu0 0.0
    %9343 = vmatprep.subr.mxu0 0.0
    %9344 = vmatpush1.msra.mxu0 0.0
    %9345 = vmatprep.subr.mxu0 0.0
    %9346 = vmatpush1.msra.mxu0 0.0
    %9347 = vmatprep.subr.mxu0 0.0
    %9348 = vmatpush1.msra.mxu0 0.0
    %9349 = vmatprep.subr.mxu0 0.0
    %9350 = vmatpush1.msra.mxu0 0.0
    %9351 = vmatprep.subr.mxu0 0.0
    %9352 = vmatpush1.msra.mxu0 0.0
    %9353 = vmatprep.subr.mxu0 0.0
    %9354 = vmatpush1.msra.mxu0 0.0
    %9355 = vmatprep.subr.mxu0 0.0
    %9356 = vmatpush1.msra.mxu0 0.0
    %9357 = vmatprep.subr.mxu0 0.0
    %9358 = vmatpush1.msra.mxu0 0.0
    %9359 = vmatprep.subr.mxu0 0.0
    %9360 = vmatpush1.msra.mxu0 0.0
    %9361 = vmatprep.mubr.f32.mxu0 0.0
    %9362 = vmatmul.mubr.f32.gmra.mrb[0].mxu0 %v9295
    %v9363 = vpop.f32.mrb[0].mxu0
    %v9364 = vadd.f32 0.0, %v9363
    %v9365 = vpop.f32.mrb[0].mxu0
    %9366 = vdwg.mxu0
    %v9367 = vadd.f32 %v9288, %v9364
    %s9368 = scalar_lea.vmem [#allocation10], 288
    %v9369 = vld [vmem:[%s9368] sm:$0xff]
    %v9370 = vld [vmem:[%s9368 + $0x8] sm:$0xff]
    %v9371 = vld [vmem:[%s9368 + $0x10] sm:$0xff]
    %v9372 = vld [vmem:[%s9368 + $0x18] sm:$0xff]
    %v9373 = vrot.slane %v8657, 2
    %v9374 = vsel %vm8670, %v9373, 0
    %9376 = vmatprep.subr.mxu0 0.0
    %9377 = vmatpush1.msra.mxu0 %v9369
    %9378 = vmatprep.subr.mxu0 0.0
    %9379 = vmatpush1.msra.mxu0 %v9370
    %9380 = vmatprep.subr.mxu0 0.0
    %9381 = vmatpush1.msra.mxu0 %v9371
    %9382 = vmatprep.subr.mxu0 0.0
    %9383 = vmatpush1.msra.mxu0 %v9372
    %9384 = vmatprep.subr.mxu0 0.0
    %9385 = vmatpush1.msra.mxu0 0.0
    %9386 = vmatprep.subr.mxu0 0.0
    %9387 = vmatpush1.msra.mxu0 0.0
    %9388 = vmatprep.subr.mxu0 0.0
    %9389 = vmatpush1.msra.mxu0 0.0
    %9390 = vmatprep.subr.mxu0 0.0
    %9391 = vmatpush1.msra.mxu0 0.0
    %9392 = vmatprep.subr.mxu0 0.0
    %9393 = vmatpush1.msra.mxu0 0.0
    %9394 = vmatprep.subr.mxu0 0.0
    %9395 = vmatpush1.msra.mxu0 0.0
    %9396 = vmatprep.subr.mxu0 0.0
    %9397 = vmatpush1.msra.mxu0 0.0
    %9398 = vmatprep.subr.mxu0 0.0
    %9399 = vmatpush1.msra.mxu0 0.0
    %9400 = vmatprep.subr.mxu0 0.0
    %9401 = vmatpush1.msra.mxu0 0.0
    %9402 = vmatprep.subr.mxu0 0.0
    %9403 = vmatpush1.msra.mxu0 0.0
    %9404 = vmatprep.subr.mxu0 0.0
    %9405 = vmatpush1.msra.mxu0 0.0
    %9406 = vmatprep.subr.mxu0 0.0
    %9407 = vmatpush1.msra.mxu0 0.0
    %9408 = vmatprep.subr.mxu0 0.0
    %9409 = vmatpush1.msra.mxu0 0.0
    %9410 = vmatprep.subr.mxu0 0.0
    %9411 = vmatpush1.msra.mxu0 0.0
    %9412 = vmatprep.subr.mxu0 0.0
    %9413 = vmatpush1.msra.mxu0 0.0
    %9414 = vmatprep.subr.mxu0 0.0
    %9415 = vmatpush1.msra.mxu0 0.0
    %9416 = vmatprep.subr.mxu0 0.0
    %9417 = vmatpush1.msra.mxu0 0.0
    %9418 = vmatprep.subr.mxu0 0.0
    %9419 = vmatpush1.msra.mxu0 0.0
    %9420 = vmatprep.subr.mxu0 0.0
    %9421 = vmatpush1.msra.mxu0 0.0
    %9422 = vmatprep.subr.mxu0 0.0
    %9423 = vmatpush1.msra.mxu0 0.0
    %9424 = vmatprep.subr.mxu0 0.0
    %9425 = vmatpush1.msra.mxu0 0.0
    %9426 = vmatprep.subr.mxu0 0.0
    %9427 = vmatpush1.msra.mxu0 0.0
    %9428 = vmatprep.subr.mxu0 0.0
    %9429 = vmatpush1.msra.mxu0 0.0
    %9430 = vmatprep.subr.mxu0 0.0
    %9431 = vmatpush1.msra.mxu0 0.0
    %9432 = vmatprep.subr.mxu0 0.0
    %9433 = vmatpush1.msra.mxu0 0.0
    %9434 = vmatprep.subr.mxu0 0.0
    %9435 = vmatpush1.msra.mxu0 0.0
    %9436 = vmatprep.subr.mxu0 0.0
    %9437 = vmatpush1.msra.mxu0 0.0
    %9438 = vmatprep.subr.mxu0 0.0
    %9439 = vmatpush1.msra.mxu0 0.0
    %9440 = vmatprep.mubr.f32.mxu0 0.0
    %9441 = vmatmul.mubr.f32.gmra.mrb[0].mxu0 %v9374
    %v9442 = vpop.f32.mrb[0].mxu0
    %v9443 = vadd.f32 0.0, %v9442
    %v9444 = vpop.f32.mrb[0].mxu0
    %9445 = vdwg.mxu0
    %v9446 = vadd.f32 %v9367, %v9443
    %s9447 = scalar_lea.vmem [#allocation10], 320
    %v9448 = vld [vmem:[%s9447] sm:$0xff]
    %v9449 = vld [vmem:[%s9447 + $0x8] sm:$0xff]
    %v9450 = vld [vmem:[%s9447 + $0x10] sm:$0xff]
    %v9451 = vld [vmem:[%s9447 + $0x18] sm:$0xff]
    %v9452 = vrot.slane %v8657, 4
    %v9453 = vsel %vm8670, %v9452, 0
    %9455 = vmatprep.subr.mxu0 0.0
    %9456 = vmatpush1.msra.mxu0 %v9448
    %9457 = vmatprep.subr.mxu0 0.0
    %9458 = vmatpush1.msra.mxu0 %v9449
    %9459 = vmatprep.subr.mxu0 0.0
    %9460 = vmatpush1.msra.mxu0 %v9450
    %9461 = vmatprep.subr.mxu0 0.0
    %9462 = vmatpush1.msra.mxu0 %v9451
    %9463 = vmatprep.subr.mxu0 0.0
    %9464 = vmatpush1.msra.mxu0 0.0
    %9465 = vmatprep.subr.mxu0 0.0
    %9466 = vmatpush1.msra.mxu0 0.0
    %9467 = vmatprep.subr.mxu0 0.0
    %9468 = vmatpush1.msra.mxu0 0.0
    %9469 = vmatprep.subr.mxu0 0.0
    %9470 = vmatpush1.msra.mxu0 0.0
    %9471 = vmatprep.subr.mxu0 0.0
    %9472 = vmatpush1.msra.mxu0 0.0
    %9473 = vmatprep.subr.mxu0 0.0
    %9474 = vmatpush1.msra.mxu0 0.0
    %9475 = vmatprep.subr.mxu0 0.0
    %9476 = vmatpush1.msra.mxu0 0.0
    %9477 = vmatprep.subr.mxu0 0.0
    %9478 = vmatpush1.msra.mxu0 0.0
    %9479 = vmatprep.subr.mxu0 0.0
    %9480 = vmatpush1.msra.mxu0 0.0
    %9481 = vmatprep.subr.mxu0 0.0
    %9482 = vmatpush1.msra.mxu0 0.0
    %9483 = vmatprep.subr.mxu0 0.0
    %9484 = vmatpush1.msra.mxu0 0.0
    %9485 = vmatprep.subr.mxu0 0.0
    %9486 = vmatpush1.msra.mxu0 0.0
    %9487 = vmatprep.subr.mxu0 0.0
    %9488 = vmatpush1.msra.mxu0 0.0
    %9489 = vmatprep.subr.mxu0 0.0
    %9490 = vmatpush1.msra.mxu0 0.0
    %9491 = vmatprep.subr.mxu0 0.0
    %9492 = vmatpush1.msra.mxu0 0.0
    %9493 = vmatprep.subr.mxu0 0.0
    %9494 = vmatpush1.msra.mxu0 0.0
    %9495 = vmatprep.subr.mxu0 0.0
    %9496 = vmatpush1.msra.mxu0 0.0
    %9497 = vmatprep.subr.mxu0 0.0
    %9498 = vmatpush1.msra.mxu0 0.0
    %9499 = vmatprep.subr.mxu0 0.0
    %9500 = vmatpush1.msra.mxu0 0.0
    %9501 = vmatprep.subr.mxu0 0.0
    %9502 = vmatpush1.msra.mxu0 0.0
    %9503 = vmatprep.subr.mxu0 0.0
    %9504 = vmatpush1.msra.mxu0 0.0
    %9505 = vmatprep.subr.mxu0 0.0
    %9506 = vmatpush1.msra.mxu0 0.0
    %9507 = vmatprep.subr.mxu0 0.0
    %9508 = vmatpush1.msra.mxu0 0.0
    %9509 = vmatprep.subr.mxu0 0.0
    %9510 = vmatpush1.msra.mxu0 0.0
    %9511 = vmatprep.subr.mxu0 0.0
    %9512 = vmatpush1.msra.mxu0 0.0
    %9513 = vmatprep.subr.mxu0 0.0
    %9514 = vmatpush1.msra.mxu0 0.0
    %9515 = vmatprep.subr.mxu0 0.0
    %9516 = vmatpush1.msra.mxu0 0.0
    %9517 = vmatprep.subr.mxu0 0.0
    %9518 = vmatpush1.msra.mxu0 0.0
    %9519 = vmatprep.mubr.f32.mxu0 0.0
    %9520 = vmatmul.mubr.f32.gmra.mrb[0].mxu0 %v9453
    %v9521 = vpop.f32.mrb[0].mxu0
    %v9522 = vadd.f32 0.0, %v9521
    %v9523 = vpop.f32.mrb[0].mxu0
    %9524 = vdwg.mxu0
    %v9525 = vadd.f32 %v9446, %v9522
    %s9526 = scalar_lea.vmem [#allocation10], 352
    %v9527 = vld [vmem:[%s9526] sm:$0xff]
    %v9528 = vld [vmem:[%s9526 + $0x8] sm:$0xff]
    %v9529 = vld [vmem:[%s9526 + $0x10] sm:$0xff]
    %v9530 = vld [vmem:[%s9526 + $0x18] sm:$0xff]
    %v9531 = vrot.slane %v8657, 6
    %v9532 = vsel %vm8670, %v9531, 0
    %9534 = vmatprep.subr.mxu0 0.0
    %9535 = vmatpush1.msra.mxu0 %v9527
    %9536 = vmatprep.subr.mxu0 0.0
    %9537 = vmatpush1.msra.mxu0 %v9528
    %9538 = vmatprep.subr.mxu0 0.0
    %9539 = vmatpush1.msra.mxu0 %v9529
    %9540 = vmatprep.subr.mxu0 0.0
    %9541 = vmatpush1.msra.mxu0 %v9530
    %9542 = vmatprep.subr.mxu0 0.0
    %9543 = vmatpush1.msra.mxu0 0.0
    %9544 = vmatprep.subr.mxu0 0.0
    %9545 = vmatpush1.msra.mxu0 0.0
    %9546 = vmatprep.subr.mxu0 0.0
    %9547 = vmatpush1.msra.mxu0 0.0
    %9548 = vmatprep.subr.mxu0 0.0
    %9549 = vmatpush1.msra.mxu0 0.0
    %9550 = vmatprep.subr.mxu0 0.0
    %9551 = vmatpush1.msra.mxu0 0.0
    %9552 = vmatprep.subr.mxu0 0.0
    %9553 = vmatpush1.msra.mxu0 0.0
    %9554 = vmatprep.subr.mxu0 0.0
    %9555 = vmatpush1.msra.mxu0 0.0
    %9556 = vmatprep.subr.mxu0 0.0
    %9557 = vmatpush1.msra.mxu0 0.0
    %9558 = vmatprep.subr.mxu0 0.0
    %9559 = vmatpush1.msra.mxu0 0.0
    %9560 = vmatprep.subr.mxu0 0.0
    %9561 = vmatpush1.msra.mxu0 0.0
    %9562 = vmatprep.subr.mxu0 0.0
    %9563 = vmatpush1.msra.mxu0 0.0
    %9564 = vmatprep.subr.mxu0 0.0
    %9565 = vmatpush1.msra.mxu0 0.0
    %9566 = vmatprep.subr.mxu0 0.0
    %9567 = vmatpush1.msra.mxu0 0.0
    %9568 = vmatprep.subr.mxu0 0.0
    %9569 = vmatpush1.msra.mxu0 0.0
    %9570 = vmatprep.subr.mxu0 0.0
    %9571 = vmatpush1.msra.mxu0 0.0
    %9572 = vmatprep.subr.mxu0 0.0
    %9573 = vmatpush1.msra.mxu0 0.0
    %9574 = vmatprep.subr.mxu0 0.0
    %9575 = vmatpush1.msra.mxu0 0.0
    %9576 = vmatprep.subr.mxu0 0.0
    %9577 = vmatpush1.msra.mxu0 0.0
    %9578 = vmatprep.subr.mxu0 0.0
    %9579 = vmatpush1.msra.mxu0 0.0
    %9580 = vmatprep.subr.mxu0 0.0
    %9581 = vmatpush1.msra.mxu0 0.0
    %9582 = vmatprep.subr.mxu0 0.0
    %9583 = vmatpush1.msra.mxu0 0.0
    %9584 = vmatprep.subr.mxu0 0.0
    %9585 = vmatpush1.msra.mxu0 0.0
    %9586 = vmatprep.subr.mxu0 0.0
    %9587 = vmatpush1.msra.mxu0 0.0
    %9588 = vmatprep.subr.mxu0 0.0
    %9589 = vmatpush1.msra.mxu0 0.0
    %9590 = vmatprep.subr.mxu0 0.0
    %9591 = vmatpush1.msra.mxu0 0.0
    %9592 = vmatprep.subr.mxu0 0.0
    %9593 = vmatpush1.msra.mxu0 0.0
    %9594 = vmatprep.subr.mxu0 0.0
    %9595 = vmatpush1.msra.mxu0 0.0
    %9596 = vmatprep.subr.mxu0 0.0
    %9597 = vmatpush1.msra.mxu0 0.0
    %9598 = vmatprep.mubr.f32.mxu0 0.0
    %9599 = vmatmul.mubr.f32.gmra.mrb[0].mxu0 %v9532
    %v9600 = vpop.f32.mrb[0].mxu0
    %v9601 = vadd.f32 0.0, %v9600
    %v9602 = vpop.f32.mrb[0].mxu0
    %9603 = vdwg.mxu0
    %v9604 = vadd.f32 %v9525, %v9601
    %s9605 = scalar_lea.vmem [#allocation10], 384
    %v9606 = vld [vmem:[%s9605] sm:$0xff]
    %v9607 = vld [vmem:[%s9605 + $0x8] sm:$0xff]
    %v9608 = vld [vmem:[%s9605 + $0x10] sm:$0xff]
    %v9609 = vld [vmem:[%s9605 + $0x18] sm:$0xff]
    %v9611 = vsel %vm8670, %v8658, 0
    %9613 = vmatprep.subr.mxu0 0.0
    %9614 = vmatpush1.msra.mxu0 %v9606
    %9615 = vmatprep.subr.mxu0 0.0
    %9616 = vmatpush1.msra.mxu0 %v9607
    %9617 = vmatprep.subr.mxu0 0.0
    %9618 = vmatpush1.msra.mxu0 %v9608
    %9619 = vmatprep.subr.mxu0 0.0
    %9620 = vmatpush1.msra.mxu0 %v9609
    %9621 = vmatprep.subr.mxu0 0.0
    %9622 = vmatpush1.msra.mxu0 0.0
    %9623 = vmatprep.subr.mxu0 0.0
    %9624 = vmatpush1.msra.mxu0 0.0
    %9625 = vmatprep.subr.mxu0 0.0
    %9626 = vmatpush1.msra.mxu0 0.0
    %9627 = vmatprep.subr.mxu0 0.0
    %9628 = vmatpush1.msra.mxu0 0.0
    %9629 = vmatprep.subr.mxu0 0.0
    %9630 = vmatpush1.msra.mxu0 0.0
    %9631 = vmatprep.subr.mxu0 0.0
    %9632 = vmatpush1.msra.mxu0 0.0
    %9633 = vmatprep.subr.mxu0 0.0
    %9634 = vmatpush1.msra.mxu0 0.0
    %9635 = vmatprep.subr.mxu0 0.0
    %9636 = vmatpush1.msra.mxu0 0.0
    %9637 = vmatprep.subr.mxu0 0.0
    %9638 = vmatpush1.msra.mxu0 0.0
    %9639 = vmatprep.subr.mxu0 0.0
    %9640 = vmatpush1.msra.mxu0 0.0
    %9641 = vmatprep.subr.mxu0 0.0
    %9642 = vmatpush1.msra.mxu0 0.0
    %9643 = vmatprep.subr.mxu0 0.0
    %9644 = vmatpush1.msra.mxu0 0.0
    %9645 = vmatprep.subr.mxu0 0.0
    %9646 = vmatpush1.msra.mxu0 0.0
    %9647 = vmatprep.subr.mxu0 0.0
    %9648 = vmatpush1.msra.mxu0 0.0
    %9649 = vmatprep.subr.mxu0 0.0
    %9650 = vmatpush1.msra.mxu0 0.0
    %9651 = vmatprep.subr.mxu0 0.0
    %9652 = vmatpush1.msra.mxu0 0.0
    %9653 = vmatprep.subr.mxu0 0.0
    %9654 = vmatpush1.msra.mxu0 0.0
    %9655 = vmatprep.subr.mxu0 0.0
    %9656 = vmatpush1.msra.mxu0 0.0
    %9657 = vmatprep.subr.mxu0 0.0
    %9658 = vmatpush1.msra.mxu0 0.0
    %9659 = vmatprep.subr.mxu0 0.0
    %9660 = vmatpush1.msra.mxu0 0.0
    %9661 = vmatprep.subr.mxu0 0.0
    %9662 = vmatpush1.msra.mxu0 0.0
    %9663 = vmatprep.subr.mxu0 0.0
    %9664 = vmatpush1.msra.mxu0 0.0
    %9665 = vmatprep.subr.mxu0 0.0
    %9666 = vmatpush1.msra.mxu0 0.0
    %9667 = vmatprep.subr.mxu0 0.0
    %9668 = vmatpush1.msra.mxu0 0.0
    %9669 = vmatprep.subr.mxu0 0.0
    %9670 = vmatpush1.msra.mxu0 0.0
    %9671 = vmatprep.subr.mxu0 0.0
    %9672 = vmatpush1.msra.mxu0 0.0
    %9673 = vmatprep.subr.mxu0 0.0
    %9674 = vmatpush1.msra.mxu0 0.0
    %9675 = vmatprep.subr.mxu0 0.0
    %9676 = vmatpush1.msra.mxu0 0.0
    %9677 = vmatprep.mubr.f32.mxu0 0.0
    %9678 = vmatmul.mubr.f32.gmra.mrb[0].mxu0 %v9611
    %v9679 = vpop.f32.mrb[0].mxu0
    %v9680 = vadd.f32 0.0, %v9679
    %v9681 = vpop.f32.mrb[0].mxu0
    %9682 = vdwg.mxu0
    %v9683 = vadd.f32 %v9604, %v9680
    %s9684 = scalar_lea.vmem [#allocation10], 416
    %v9685 = vld [vmem:[%s9684] sm:$0xff]
    %v9686 = vld [vmem:[%s9684 + $0x8] sm:$0xff]
    %v9687 = vld [vmem:[%s9684 + $0x10] sm:$0xff]
    %v9688 = vld [vmem:[%s9684 + $0x18] sm:$0xff]
    %v9689 = vrot.slane %v8658, 2
    %v9690 = vsel %vm8670, %v9689, 0
    %9692 = vmatprep.subr.mxu0 0.0
    %9693 = vmatpush1.msra.mxu0 %v9685
    %9694 = vmatprep.subr.mxu0 0.0
    %9695 = vmatpush1.msra.mxu0 %v9686
    %9696 = vmatprep.subr.mxu0 0.0
    %9697 = vmatpush1.msra.mxu0 %v9687
    %9698 = vmatprep.subr.mxu0 0.0
    %9699 = vmatpush1.msra.mxu0 %v9688
    %9700 = vmatprep.subr.mxu0 0.0
    %9701 = vmatpush1.msra.mxu0 0.0
    %9702 = vmatprep.subr.mxu0 0.0
    %9703 = vmatpush1.msra.mxu0 0.0
    %9704 = vmatprep.subr.mxu0 0.0
    %9705 = vmatpush1.msra.mxu0 0.0
    %9706 = vmatprep.subr.mxu0 0.0
    %9707 = vmatpush1.msra.mxu0 0.0
    %9708 = vmatprep.subr.mxu0 0.0
    %9709 = vmatpush1.msra.mxu0 0.0
    %9710 = vmatprep.subr.mxu0 0.0
    %9711 = vmatpush1.msra.mxu0 0.0
    %9712 = vmatprep.subr.mxu0 0.0
    %9713 = vmatpush1.msra.mxu0 0.0
    %9714 = vmatprep.subr.mxu0 0.0
    %9715 = vmatpush1.msra.mxu0 0.0
    %9716 = vmatprep.subr.mxu0 0.0
    %9717 = vmatpush1.msra.mxu0 0.0
    %9718 = vmatprep.subr.mxu0 0.0
    %9719 = vmatpush1.msra.mxu0 0.0
    %9720 = vmatprep.subr.mxu0 0.0
    %9721 = vmatpush1.msra.mxu0 0.0
    %9722 = vmatprep.subr.mxu0 0.0
    %9723 = vmatpush1.msra.mxu0 0.0
    %9724 = vmatprep.subr.mxu0 0.0
    %9725 = vmatpush1.msra.mxu0 0.0
    %9726 = vmatprep.subr.mxu0 0.0
    %9727 = vmatpush1.msra.mxu0 0.0
    %9728 = vmatprep.subr.mxu0 0.0
    %9729 = vmatpush1.msra.mxu0 0.0
    %9730 = vmatprep.subr.mxu0 0.0
    %9731 = vmatpush1.msra.mxu0 0.0
    %9732 = vmatprep.subr.mxu0 0.0
    %9733 = vmatpush1.msra.mxu0 0.0
    %9734 = vmatprep.subr.mxu0 0.0
    %9735 = vmatpush1.msra.mxu0 0.0
    %9736 = vmatprep.subr.mxu0 0.0
    %9737 = vmatpush1.msra.mxu0 0.0
    %9738 = vmatprep.subr.mxu0 0.0
    %9739 = vmatpush1.msra.mxu0 0.0
    %9740 = vmatprep.subr.mxu0 0.0
    %9741 = vmatpush1.msra.mxu0 0.0
    %9742 = vmatprep.subr.mxu0 0.0
    %9743 = vmatpush1.msra.mxu0 0.0
    %9744 = vmatprep.subr.mxu0 0.0
    %9745 = vmatpush1.msra.mxu0 0.0
    %9746 = vmatprep.subr.mxu0 0.0
    %9747 = vmatpush1.msra.mxu0 0.0
    %9748 = vmatprep.subr.mxu0 0.0
    %9749 = vmatpush1.msra.mxu0 0.0
    %9750 = vmatprep.subr.mxu0 0.0
    %9751 = vmatpush1.msra.mxu0 0.0
    %9752 = vmatprep.subr.mxu0 0.0
    %9753 = vmatpush1.msra.mxu0 0.0
    %9754 = vmatprep.subr.mxu0 0.0
    %9755 = vmatpush1.msra.mxu0 0.0
    %9756 = vmatprep.mubr.f32.mxu0 0.0
    %9757 = vmatmul.mubr.f32.gmra.mrb[0].mxu0 %v9690
    %v9758 = vpop.f32.mrb[0].mxu0
    %v9759 = vadd.f32 0.0, %v9758
    %v9760 = vpop.f32.mrb[0].mxu0
    %9761 = vdwg.mxu0
    %v9762 = vadd.f32 %v9683, %v9759
    %s9763 = scalar_lea.vmem [#allocation10], 448
    %v9764 = vld [vmem:[%s9763] sm:$0xff]
    %v9765 = vld [vmem:[%s9763 + $0x8] sm:$0xff]
    %v9766 = vld [vmem:[%s9763 + $0x10] sm:$0xff]
    %v9767 = vld [vmem:[%s9763 + $0x18] sm:$0xff]
    %v9768 = vrot.slane %v8658, 4
    %v9769 = vsel %vm8670, %v9768, 0
    %9771 = vmatprep.subr.mxu0 0.0
    %9772 = vmatpush1.msra.mxu0 %v9764
    %9773 = vmatprep.subr.mxu0 0.0
    %9774 = vmatpush1.msra.mxu0 %v9765
    %9775 = vmatprep.subr.mxu0 0.0
    %9776 = vmatpush1.msra.mxu0 %v9766
    %9777 = vmatprep.subr.mxu0 0.0
    %9778 = vmatpush1.msra.mxu0 %v9767
    %9779 = vmatprep.subr.mxu0 0.0
    %9780 = vmatpush1.msra.mxu0 0.0
    %9781 = vmatprep.subr.mxu0 0.0
    %9782 = vmatpush1.msra.mxu0 0.0
    %9783 = vmatprep.subr.mxu0 0.0
    %9784 = vmatpush1.msra.mxu0 0.0
    %9785 = vmatprep.subr.mxu0 0.0
    %9786 = vmatpush1.msra.mxu0 0.0
    %9787 = vmatprep.subr.mxu0 0.0
    %9788 = vmatpush1.msra.mxu0 0.0
    %9789 = vmatprep.subr.mxu0 0.0
    %9790 = vmatpush1.msra.mxu0 0.0
    %9791 = vmatprep.subr.mxu0 0.0
    %9792 = vmatpush1.msra.mxu0 0.0
    %9793 = vmatprep.subr.mxu0 0.0
    %9794 = vmatpush1.msra.mxu0 0.0
    %9795 = vmatprep.subr.mxu0 0.0
    %9796 = vmatpush1.msra.mxu0 0.0
    %9797 = vmatprep.subr.mxu0 0.0
    %9798 = vmatpush1.msra.mxu0 0.0
    %9799 = vmatprep.subr.mxu0 0.0
    %9800 = vmatpush1.msra.mxu0 0.0
    %9801 = vmatprep.subr.mxu0 0.0
    %9802 = vmatpush1.msra.mxu0 0.0
    %9803 = vmatprep.subr.mxu0 0.0
    %9804 = vmatpush1.msra.mxu0 0.0
    %9805 = vmatprep.subr.mxu0 0.0
    %9806 = vmatpush1.msra.mxu0 0.0
    %9807 = vmatprep.subr.mxu0 0.0
    %9808 = vmatpush1.msra.mxu0 0.0
    %9809 = vmatprep.subr.mxu0 0.0
    %9810 = vmatpush1.msra.mxu0 0.0
    %9811 = vmatprep.subr.mxu0 0.0
    %9812 = vmatpush1.msra.mxu0 0.0
    %9813 = vmatprep.subr.mxu0 0.0
    %9814 = vmatpush1.msra.mxu0 0.0
    %9815 = vmatprep.subr.mxu0 0.0
    %9816 = vmatpush1.msra.mxu0 0.0
    %9817 = vmatprep.subr.mxu0 0.0
    %9818 = vmatpush1.msra.mxu0 0.0
    %9819 = vmatprep.subr.mxu0 0.0
    %9820 = vmatpush1.msra.mxu0 0.0
    %9821 = vmatprep.subr.mxu0 0.0
    %9822 = vmatpush1.msra.mxu0 0.0
    %9823 = vmatprep.subr.mxu0 0.0
    %9824 = vmatpush1.msra.mxu0 0.0
    %9825 = vmatprep.subr.mxu0 0.0
    %9826 = vmatpush1.msra.mxu0 0.0
    %9827 = vmatprep.subr.mxu0 0.0
    %9828 = vmatpush1.msra.mxu0 0.0
    %9829 = vmatprep.subr.mxu0 0.0
    %9830 = vmatpush1.msra.mxu0 0.0
    %9831 = vmatprep.subr.mxu0 0.0
    %9832 = vmatpush1.msra.mxu0 0.0
    %9833 = vmatprep.subr.mxu0 0.0
    %9834 = vmatpush1.msra.mxu0 0.0
    %9835 = vmatprep.mubr.f32.mxu0 0.0
    %9836 = vmatmul.mubr.f32.gmra.mrb[0].mxu0 %v9769
    %v9837 = vpop.f32.mrb[0].mxu0
    %v9838 = vadd.f32 0.0, %v9837
    %v9839 = vpop.f32.mrb[0].mxu0
    %9840 = vdwg.mxu0
    %v9841 = vadd.f32 %v9762, %v9838
    %s9842 = scalar_lea.vmem [#allocation10], 480
    %v9843 = vld [vmem:[%s9842] sm:$0xff]
    %v9844 = vld [vmem:[%s9842 + $0x8] sm:$0xff]
    %v9845 = vld [vmem:[%s9842 + $0x10] sm:$0xff]
    %v9846 = vld [vmem:[%s9842 + $0x18] sm:$0xff]
    %v9847 = vrot.slane %v8658, 6
    %v9848 = vsel %vm8670, %v9847, 0
    %9850 = vmatprep.subr.mxu0 0.0
    %9851 = vmatpush1.msra.mxu0 %v9843
    %9852 = vmatprep.subr.mxu0 0.0
    %9853 = vmatpush1.msra.mxu0 %v9844
    %9854 = vmatprep.subr.mxu0 0.0
    %9855 = vmatpush1.msra.mxu0 %v9845
    %9856 = vmatprep.subr.mxu0 0.0
    %9857 = vmatpush1.msra.mxu0 %v9846
    %9858 = vmatprep.subr.mxu0 0.0
    %9859 = vmatpush1.msra.mxu0 0.0
    %9860 = vmatprep.subr.mxu0 0.0
    %9861 = vmatpush1.msra.mxu0 0.0
    %9862 = vmatprep.subr.mxu0 0.0
    %9863 = vmatpush1.msra.mxu0 0.0
    %9864 = vmatprep.subr.mxu0 0.0
    %9865 = vmatpush1.msra.mxu0 0.0
    %9866 = vmatprep.subr.mxu0 0.0
    %9867 = vmatpush1.msra.mxu0 0.0
    %9868 = vmatprep.subr.mxu0 0.0
    %9869 = vmatpush1.msra.mxu0 0.0
    %9870 = vmatprep.subr.mxu0 0.0
    %9871 = vmatpush1.msra.mxu0 0.0
    %9872 = vmatprep.subr.mxu0 0.0
    %9873 = vmatpush1.msra.mxu0 0.0
    %9874 = vmatprep.subr.mxu0 0.0
    %9875 = vmatpush1.msra.mxu0 0.0
    %9876 = vmatprep.subr.mxu0 0.0
    %9877 = vmatpush1.msra.mxu0 0.0
    %9878 = vmatprep.subr.mxu0 0.0
    %9879 = vmatpush1.msra.mxu0 0.0
    %9880 = vmatprep.subr.mxu0 0.0
    %9881 = vmatpush1.msra.mxu0 0.0
    %9882 = vmatprep.subr.mxu0 0.0
    %9883 = vmatpush1.msra.mxu0 0.0
    %9884 = vmatprep.subr.mxu0 0.0
    %9885 = vmatpush1.msra.mxu0 0.0
    %9886 = vmatprep.subr.mxu0 0.0
    %9887 = vmatpush1.msra.mxu0 0.0
    %9888 = vmatprep.subr.mxu0 0.0
    %9889 = vmatpush1.msra.mxu0 0.0
    %9890 = vmatprep.subr.mxu0 0.0
    %9891 = vmatpush1.msra.mxu0 0.0
    %9892 = vmatprep.subr.mxu0 0.0
    %9893 = vmatpush1.msra.mxu0 0.0
    %9894 = vmatprep.subr.mxu0 0.0
    %9895 = vmatpush1.msra.mxu0 0.0
    %9896 = vmatprep.subr.mxu0 0.0
    %9897 = vmatpush1.msra.mxu0 0.0
    %9898 = vmatprep.subr.mxu0 0.0
    %9899 = vmatpush1.msra.mxu0 0.0
    %9900 = vmatprep.subr.mxu0 0.0
    %9901 = vmatpush1.msra.mxu0 0.0
    %9902 = vmatprep.subr.mxu0 0.0
    %9903 = vmatpush1.msra.mxu0 0.0
    %9904 = vmatprep.subr.mxu0 0.0
    %9905 = vmatpush1.msra.mxu0 0.0
    %9906 = vmatprep.subr.mxu0 0.0
    %9907 = vmatpush1.msra.mxu0 0.0
    %9908 = vmatprep.subr.mxu0 0.0
    %9909 = vmatpush1.msra.mxu0 0.0
    %9910 = vmatprep.subr.mxu0 0.0
    %9911 = vmatpush1.msra.mxu0 0.0
    %9912 = vmatprep.subr.mxu0 0.0
    %9913 = vmatpush1.msra.mxu0 0.0
    %9914 = vmatprep.mubr.f32.mxu0 0.0
    %9915 = vmatmul.mubr.f32.gmra.mrb[0].mxu0 %v9848
    %v9916 = vpop.f32.mrb[0].mxu0
    %v9917 = vadd.f32 0.0, %v9916
    %v9918 = vpop.f32.mrb[0].mxu0
    %9919 = vdwg.mxu0
    %v9920 = vadd.f32 %v9841, %v9917
    %v9921 = vld [vmem:[#allocation11] sm:$0x1]
    %v9923 = vlaneseq
    %v9924 = vshrl.u32 %v9923, 7
    %v9925 = vsub.s32 0, %v9924
    %v9926 = vrot.slane %v9921, %v9925
    %v9928 = vadd.f32 %v9920, %v9926
    %vm9929 = vcmask 254976
    %9930 = vst.msk [vmem:[#allocation13] sm:$0x3] %vm9929, %v9928
    // Predicated region
    $region58: #{tpu_custom_call.1} parent=1 // pred_check
      _
    $region59: #{tpu_custom_call.1} parent=1 // pred_check_branch
      %9932 = sbr.rel (0) target = $region61
    $region60: #{tpu_custom_call.1} parent=1 // pred_region
      %s9934 = ssub.s32 32, 32
      %9935 = vsyncadd [#allocation4], %s9934
      %s9937 = sshll.u32 [#allocation13], 4
      %s9938 = int_to_ptr.vmem [resolvable:$true] %s9937
      %9940 = dma.vmem_to_hbm [thread:$0]  %s9938, 32, %s8, [#allocation4]
    $region61: #{tpu_custom_call.1} parent=1 // pred_fallthru
      _
    // Predicated region
    $region62: #{tpu_custom_call.1} parent=1 // pred_check
      _
    $region63: #{tpu_custom_call.1} parent=1 // pred_check_branch
      %9942 = sbr.rel (0) target = $region65
    $region64: #{tpu_custom_call.1} parent=1 // pred_region
      %9943 = dma.done [#allocation4], 32
    $region65: #{tpu_custom_call.1} parent=1 // pred_fallthru
      _
    %9944 = vsyncpa [#allocation3], 1
    %9945 = vsyncpa [#allocation6], 1
    %9946 = vsyncpa [#allocation9], 1
    %9947 = vsyncpa [#allocation12], 1
    %9948 = vsyncpa [#allocation4], 1

</llo_original>
